<compile_context>
chip_gen: v6e
topology: v6e:2x2x1
jax: 0.10.0
libtpu: 0.0.40
codegen_flags: <defaults>
</compile_context>

<pallas_src>
import functools

import jax
import jax.numpy as jnp
from jax.experimental import pallas as pl
from jax.experimental.pallas import tpu as pltpu


LINEAR_INPUT_SIZE = 6 * 390 + 1   # 2341, hardcoded in the PyTorch module
HIDDEN = 1000


def _round_up(x, m):
    return (x + m - 1) // m * m


def dqn_kernel(x_ref, w1_ref, b1_ref, w2_ref, b2_ref, w3_ref, b3_ref, out_ref):
    # fc1 + ReLU  (bf16 operands, f32 accumulate, f32 bias/ReLU)
    h1 = jnp.dot(x_ref[...], w1_ref[...], preferred_element_type=jnp.float32)
    h1 = jnp.maximum(h1 + b1_ref[...], 0.0)
    # fc2 + ReLU
    h2 = jnp.dot(h1.astype(jnp.bfloat16), w2_ref[...],
                 preferred_element_type=jnp.float32)
    h2 = jnp.maximum(h2 + b2_ref[...], 0.0)
    # fc3 (no activation); x.view(B, -1) in the reference is a no-op for 2-D input
    out = jnp.dot(h2.astype(jnp.bfloat16), w3_ref[...],
                  preferred_element_type=jnp.float32)
    out_ref[...] = out + b3_ref[...]


def prepare_params(params, outputs):
    """One-time pad + cast of the weights. Do NOT call per forward step."""
    d_in_p = _round_up(LINEAR_INPUT_SIZE, 128)   # 2432
    h_p = _round_up(HIDDEN, 128)                 # 1024
    out_p = _round_up(outputs, 128)              # >= 128

    w1 = jnp.pad(params["w1"], ((0, d_in_p - LINEAR_INPUT_SIZE), (0, h_p - HIDDEN)))
    w2 = jnp.pad(params["w2"], ((0, h_p - HIDDEN), (0, h_p - HIDDEN)))
    w3 = jnp.pad(params["w3"], ((0, h_p - HIDDEN), (0, out_p - outputs)))
    b1 = jnp.pad(params["b1"], ((0, h_p - HIDDEN),)).reshape(1, h_p)
    b2 = jnp.pad(params["b2"], ((0, h_p - HIDDEN),)).reshape(1, h_p)
    b3 = jnp.pad(params["b3"], ((0, out_p - outputs),)).reshape(1, out_p)

    return {
        # bf16 weights: halves HBM traffic, native MXU dtype on v5e/v6e/v7x.
        "w1": w1.astype(jnp.bfloat16),
        "w2": w2.astype(jnp.bfloat16),
        "w3": w3.astype(jnp.bfloat16),
        # biases stay f32 (added to the f32 accumulator).
        "b1": b1.astype(jnp.float32),
        "b2": b2.astype(jnp.float32),
        "b3": b3.astype(jnp.float32),
    }
    # TODO(synk): for rollout loops at tiny batch, pin the (bf16) weights in VMEM
    # across calls (manual make_async_copy + pl.ANY weights, or cross-call futures)
    # so the ~7 MB weight DMA is amortized over many inferences.


@functools.partial(jax.jit, static_argnames=("outputs",))
def dqn_forward(x, prepared, *, outputs):
    """x: (B, LINEAR_INPUT_SIZE) float32. prepared: output of prepare_params."""
    w1, b1 = prepared["w1"], prepared["b1"]
    w2, b2 = prepared["w2"], prepared["b2"]
    w3, b3 = prepared["w3"], prepared["b3"]

    B, d_in = x.shape
    assert d_in == LINEAR_INPUT_SIZE
    d_in_p = w1.shape[0]
    h_p = w2.shape[0]
    out_p = w3.shape[1]

    # Batch tile: 256 rows (MXU-friendly on v6e/v7x) once the batch is large,
    # otherwise a single sublane-aligned tile covering the whole batch.
    tm = 256 if B >= 256 else _round_up(B, 8)
    b_p = _round_up(B, tm)

    # Only the activation is padded per call; cast to bf16 for the MXU.
    x_p = jnp.pad(x, ((0, b_p - B), (0, d_in_p - d_in))).astype(jnp.bfloat16)

    grid = (b_p // tm,)

    out_padded = pl.pallas_call(
        dqn_kernel,
        out_shape=jax.ShapeDtypeStruct((b_p, out_p), jnp.float32),
        grid_spec=pltpu.PrefetchScalarGridSpec(
            num_scalar_prefetch=0,
            grid=grid,
            in_specs=[
                pl.BlockSpec((tm, d_in_p), lambda i: (i, 0)),   # x tile per grid step
                pl.BlockSpec((d_in_p, h_p), lambda i: (0, 0)),  # weights resident
                pl.BlockSpec((1, h_p), lambda i: (0, 0)),
                pl.BlockSpec((h_p, h_p), lambda i: (0, 0)),
                pl.BlockSpec((1, h_p), lambda i: (0, 0)),
                pl.BlockSpec((h_p, out_p), lambda i: (0, 0)),
                pl.BlockSpec((1, out_p), lambda i: (0, 0)),
            ],
            out_specs=pl.BlockSpec((tm, out_p), lambda i: (i, 0)),
        ),
        compiler_params=pltpu.CompilerParams(
            dimension_semantics=("parallel",),
            vmem_limit_bytes=32 * 1024 * 1024,   # fits v7x's 64 MiB physical VMEM
        ),
    )(x_p, w1, b1, w2, b2, w3, b3)

    return out_padded[:B, :outputs]


def init_params(key, outputs):
    """Deterministic init mimicking PyTorch nn.Linear (uniform +/- 1/sqrt(fan_in))."""
    ks = jax.random.split(key, 6)

    def linear(kw, kb, fan_in, fan_out):
        bound = 1.0 / jnp.sqrt(fan_in)
        w = jax.random.uniform(kw, (fan_in, fan_out), jnp.float32, -bound, bound)
        b = jax.random.uniform(kb, (fan_out,), jnp.float32, -bound, bound)
        return w, b

    w1, b1 = linear(ks[0], ks[1], LINEAR_INPUT_SIZE, HIDDEN)
    w2, b2 = linear(ks[2], ks[3], HIDDEN, HIDDEN)
    w3, b3 = linear(ks[4], ks[5], HIDDEN, outputs)
    return {"w1": w1, "b1": b1, "w2": w2, "b2": b2, "w3": w3, "b3": b3}


def dqn_reference(x, params):
    h1 = jnp.maximum(x @ params["w1"] + params["b1"], 0.0)
    h2 = jnp.maximum(h1 @ params["w2"] + params["b2"], 0.0)
    return h2 @ params["w3"] + params["b3"]


if __name__ == "__main__":
    key = jax.random.PRNGKey(0)
    k_param, k_x = jax.random.split(key)

    batch = 2
    outputs = 4

    params = init_params(k_param, outputs)
    prepared = prepare_params(params, outputs)   # one-time pad + bf16 cast
    x = jax.random.normal(k_x, (batch, LINEAR_INPUT_SIZE), jnp.float32)

    y = dqn_forward(x, prepared, outputs=outputs)
    jax.block_until_ready(y)

    y_ref = dqn_reference(x, params)             # f32 reference
    assert y.shape == (batch, outputs), y.shape
    # bf16 weights/activations -> ~1e-2 relative error vs f32 reference.
    assert jnp.allclose(y, y_ref, rtol=3e-2, atol=3e-2), "mismatch vs reference"

    print("KERNEL_OK")
</pallas_src>

<mosaic_0001>
module attributes {stable_mosaic.version = 11 : i64} {
  func.func @dqn_kernel(%arg0: i32, %arg1: memref<8x2432xbf16, #tpu.memory_space<vmem>>, %arg2: memref<2432x1024xbf16, #tpu.memory_space<vmem>>, %arg3: memref<1x1024xf32, #tpu.memory_space<vmem>>, %arg4: memref<1024x1024xbf16, #tpu.memory_space<vmem>>, %arg5: memref<1x1024xf32, #tpu.memory_space<vmem>>, %arg6: memref<1024x128xbf16, #tpu.memory_space<vmem>>, %arg7: memref<1x128xf32, #tpu.memory_space<vmem>>, %arg8: memref<8x128xf32, #tpu.memory_space<vmem>>) attributes {dimension_semantics = [#tpu.dimension_semantics<parallel>], iteration_bounds = array<i64: 1>, scalar_prefetch = 0 : i64, scratch_operands = 0 : i64, tpu.core_type = #tpu.core_type<tc>, window_params = [{transform_indices = @transform_0, window_bounds = array<i64: 8, 2432>}, {pipeline_mode = #tpu.pipeline_mode<synchronous>, transform_indices = @transform_1, window_bounds = array<i64: 2432, 1024>}, {pipeline_mode = #tpu.pipeline_mode<synchronous>, transform_indices = @transform_2, window_bounds = array<i64: 1, 1024>}, {pipeline_mode = #tpu.pipeline_mode<synchronous>, transform_indices = @transform_3, window_bounds = array<i64: 1024, 1024>}, {pipeline_mode = #tpu.pipeline_mode<synchronous>, transform_indices = @transform_4, window_bounds = array<i64: 1, 1024>}, {pipeline_mode = #tpu.pipeline_mode<synchronous>, transform_indices = @transform_5, window_bounds = array<i64: 1024, 128>}, {pipeline_mode = #tpu.pipeline_mode<synchronous>, transform_indices = @transform_6, window_bounds = array<i64: 1, 128>}, {transform_indices = @transform_7, window_bounds = array<i64: 8, 128>}]} {
    %c0 = arith.constant 0 : index
    %c0_0 = arith.constant 0 : index
    %0 = vector.load %arg1[%c0, %c0_0] : memref<8x2432xbf16, #tpu.memory_space<vmem>>, vector<8x2432xbf16>
    %c0_1 = arith.constant 0 : index
    %c0_2 = arith.constant 0 : index
    %1 = vector.load %arg2[%c0_1, %c0_2] : memref<2432x1024xbf16, #tpu.memory_space<vmem>>, vector<2432x1024xbf16>
    %cst = arith.constant dense<0.000000e+00> : vector<8x1024xf32>
    %2 = tpu.matmul %0, %1, %cst {dimension_numbers = #tpu.dot_dimension_numbers<[1], [0], [0], [1], [0, 0, 1, 1], [], []>} : vector<8x2432xbf16>, vector<2432x1024xbf16>, vector<8x1024xf32> -> vector<8x1024xf32>
    %c0_3 = arith.constant 0 : index
    %c0_4 = arith.constant 0 : index
    %3 = vector.load %arg3[%c0_3, %c0_4] : memref<1x1024xf32, #tpu.memory_space<vmem>>, vector<1x1024xf32>
    %4 = vector.broadcast %3 : vector<1x1024xf32> to vector<8x1024xf32>
    %5 = arith.addf %2, %4 : vector<8x1024xf32>
    %cst_5 = arith.constant 0.000000e+00 : f32
    %6 = vector.broadcast %cst_5 : f32 to vector<8x1024xf32>
    %7 = arith.maximumf %5, %6 : vector<8x1024xf32>
    %8 = arith.truncf %7 : vector<8x1024xf32> to vector<8x1024xbf16>
    %c0_6 = arith.constant 0 : index
    %c0_7 = arith.constant 0 : index
    %9 = vector.load %arg4[%c0_6, %c0_7] : memref<1024x1024xbf16, #tpu.memory_space<vmem>>, vector<1024x1024xbf16>
    %cst_8 = arith.constant dense<0.000000e+00> : vector<8x1024xf32>
    %10 = tpu.matmul %8, %9, %cst_8 {dimension_numbers = #tpu.dot_dimension_numbers<[1], [0], [0], [1], [0, 0, 1, 1], [], []>} : vector<8x1024xbf16>, vector<1024x1024xbf16>, vector<8x1024xf32> -> vector<8x1024xf32>
    %c0_9 = arith.constant 0 : index
    %c0_10 = arith.constant 0 : index
    %11 = vector.load %arg5[%c0_9, %c0_10] : memref<1x1024xf32, #tpu.memory_space<vmem>>, vector<1x1024xf32>
    %12 = vector.broadcast %11 : vector<1x1024xf32> to vector<8x1024xf32>
    %13 = arith.addf %10, %12 : vector<8x1024xf32>
    %cst_11 = arith.constant 0.000000e+00 : f32
    %14 = vector.broadcast %cst_11 : f32 to vector<8x1024xf32>
    %15 = arith.maximumf %13, %14 : vector<8x1024xf32>
    %16 = arith.truncf %15 : vector<8x1024xf32> to vector<8x1024xbf16>
    %c0_12 = arith.constant 0 : index
    %c0_13 = arith.constant 0 : index
    %17 = vector.load %arg6[%c0_12, %c0_13] : memref<1024x128xbf16, #tpu.memory_space<vmem>>, vector<1024x128xbf16>
    %cst_14 = arith.constant dense<0.000000e+00> : vector<8x128xf32>
    %18 = tpu.matmul %16, %17, %cst_14 {dimension_numbers = #tpu.dot_dimension_numbers<[1], [0], [0], [1], [0, 0, 1, 1], [], []>} : vector<8x1024xbf16>, vector<1024x128xbf16>, vector<8x128xf32> -> vector<8x128xf32>
    %c0_15 = arith.constant 0 : index
    %c0_16 = arith.constant 0 : index
    %19 = vector.load %arg7[%c0_15, %c0_16] : memref<1x128xf32, #tpu.memory_space<vmem>>, vector<1x128xf32>
    %20 = vector.broadcast %19 : vector<1x128xf32> to vector<8x128xf32>
    %21 = arith.addf %18, %20 : vector<8x128xf32>
    %c0_17 = arith.constant 0 : index
    %c0_18 = arith.constant 0 : index
    %22 = vector.load %arg8[%c0_17, %c0_18] : memref<8x128xf32, #tpu.memory_space<vmem>>, vector<8x128xf32>
    tpu.vector_store %arg8[%c0_17, %c0_18], %21 {strides = array<i32>} : memref<8x128xf32, #tpu.memory_space<vmem>>, vector<8x128xf32>,
    return
  }
  func.func @transform_0(%arg0: i32) -> (i32, i32) {
    %c0_i32 = arith.constant 0 : i32
    %c0_i32_0 = arith.constant 0 : i32
    return %arg0, %c0_i32 : i32, i32
  }
  func.func @transform_1(%arg0: i32) -> (i32, i32) {
    %c0_i32 = arith.constant 0 : i32
    %c0_i32_0 = arith.constant 0 : i32
    %c0_i32_1 = arith.constant 0 : i32
    return %c0_i32, %c0_i32_0 : i32, i32
  }
  func.func @transform_2(%arg0: i32) -> (i32, i32) {
    %c0_i32 = arith.constant 0 : i32
    %c0_i32_0 = arith.constant 0 : i32
    %c0_i32_1 = arith.constant 0 : i32
    return %c0_i32, %c0_i32_0 : i32, i32
  }
  func.func @transform_3(%arg0: i32) -> (i32, i32) {
    %c0_i32 = arith.constant 0 : i32
    %c0_i32_0 = arith.constant 0 : i32
    %c0_i32_1 = arith.constant 0 : i32
    return %c0_i32, %c0_i32_0 : i32, i32
  }
  func.func @transform_4(%arg0: i32) -> (i32, i32) {
    %c0_i32 = arith.constant 0 : i32
    %c0_i32_0 = arith.constant 0 : i32
    %c0_i32_1 = arith.constant 0 : i32
    return %c0_i32, %c0_i32_0 : i32, i32
  }
  func.func @transform_5(%arg0: i32) -> (i32, i32) {
    %c0_i32 = arith.constant 0 : i32
    %c0_i32_0 = arith.constant 0 : i32
    %c0_i32_1 = arith.constant 0 : i32
    return %c0_i32, %c0_i32_0 : i32, i32
  }
  func.func @transform_6(%arg0: i32) -> (i32, i32) {
    %c0_i32 = arith.constant 0 : i32
    %c0_i32_0 = arith.constant 0 : i32
    %c0_i32_1 = arith.constant 0 : i32
    return %c0_i32, %c0_i32_0 : i32, i32
  }
  func.func @transform_7(%arg0: i32) -> (i32, i32) {
    %c0_i32 = arith.constant 0 : i32
    %c0_i32_0 = arith.constant 0 : i32
    return %arg0, %c0_i32 : i32, i32
  }
}

</mosaic_0001>

<llo_original>
// kernel: dqn_forward.1
$region0: #{dqn_forward.1}
  #allocation0 [shape = 'u32[]', space=smem, size = 0x4, offset = 0x4, fixed_abs, tag = 'smem constant byte address 0x4 - core index']
  #allocation1 [shape = 'u32[144,128]{1,0:T(1,128)}', space=vmem, size = 0x12000, scoped, tag = 'internal scratch']
  %s0 = inlined_call_operand.vmem [shape: bf16[8,2432], index: 0, kind: input, shape index: {}]
  %s1 = inlined_call_operand.hbm [shape: bf16[2432,1024], index: 1, kind: input, shape index: {}]
  %s2 = inlined_call_operand.hbm [shape: f32[1,1024], index: 2, kind: input, shape index: {}]
  %s3 = inlined_call_operand.hbm [shape: bf16[1024,1024], index: 3, kind: input, shape index: {}]
  %s4 = inlined_call_operand.hbm [shape: f32[1,1024], index: 4, kind: input, shape index: {}]
  %s5 = inlined_call_operand.hbm [shape: bf16[1024,128], index: 5, kind: input, shape index: {}]
  %s6 = inlined_call_operand.hbm [shape: f32[1,128], index: 6, kind: input, shape index: {}]
  %s7 = inlined_call_operand.vmem [shape: f32[8,128], index: 7, kind: output, shape index: {}]
  %s8 = sld [smem:[#allocation0]]
  $region62: #{dqn_forward.1} parent=0
    _
  %s10 = ssub.s32 1, %s8
  %s11 = scalar_select 0, %s10, %s8
  $region1: #{dqn_forward.1} parent=0
    #allocation2 [shape = 'u8[4980736]{0}', space=vmem, size = 0x4c0000, scoped, tag = 'input window, operand 1, single buffered']
    #allocation3 [shape = 's32[1]{0}', space=sflag, size = 0x4, scoped, tag = 'scoped memory for dqn_forward.1']
    #allocation4 [shape = 'u8[4096]{0}', space=vmem, size = 0x1000, scoped, tag = 'input window, operand 2, single buffered']
    #allocation5 [shape = 's32[1]{0}', space=sflag, size = 0x4, scoped, tag = 'scoped memory for dqn_forward.1']
    #allocation6 [shape = 'u8[2097152]{0}', space=vmem, size = 0x200000, scoped, tag = 'input window, operand 3, single buffered']
    #allocation7 [shape = 'u8[4096]{0}', space=vmem, size = 0x1000, scoped, tag = 'input window, operand 4, single buffered']
    #allocation8 [shape = 's32[1]{0}', space=sflag, size = 0x4, scoped, tag = 'scoped memory for dqn_forward.1']
    #allocation9 [shape = 'u8[262144]{0}', space=vmem, size = 0x40000, scoped, tag = 'input window, operand 5, single buffered']
    #allocation10 [shape = 'u8[512]{0}', space=vmem, size = 0x400, scoped, tag = 'input window, operand 6, single buffered']
    #allocation11 [shape = 's32[1]{0}', space=sflag, size = 0x4, scoped, tag = 'scoped memory for dqn_forward.1']
    %12 = vsyncpa [#allocation3], 0
    %13 = vsyncpa [#allocation5], 0
    %14 = vsyncpa [#allocation8], 0
    %15 = vsyncpa [#allocation11], 0
    // Predicated region
    $region2: #{dqn_forward.1} parent=1 // pred_check
      _
    $region3: #{dqn_forward.1} parent=1 // pred_check_branch
      %17 = sbr.rel (0) target = $region5
    $region4: #{dqn_forward.1} parent=1 // pred_region
      _
    $region5: #{dqn_forward.1} parent=1 // pred_fallthru
      _
    // Predicated region
    $region6: #{dqn_forward.1} parent=1 // pred_check
      _
    $region7: #{dqn_forward.1} parent=1 // pred_check_branch
      %19 = sbr.rel (0) target = $region9
    $region8: #{dqn_forward.1} parent=1 // pred_region
      %s21 = ssub.s32 155648, 155648
      %22 = vsyncadd [#allocation3], %s21
      %s23 = sshll.u32 [#allocation2], 4
      %s24 = int_to_ptr.vmem [resolvable:$true] %s23
      %29 = dma.hbm_to_vmem [thread:$0]  %s1, 155648, %s24, [#allocation3], 512, 512, 32
    $region9: #{dqn_forward.1} parent=1 // pred_fallthru
      _
    // Predicated region
    $region10: #{dqn_forward.1} parent=1 // pred_check
      _
    $region11: #{dqn_forward.1} parent=1 // pred_check_branch
      %31 = sbr.rel (0) target = $region13
    $region12: #{dqn_forward.1} parent=1 // pred_region
      %s33 = ssub.s32 128, 128
      %34 = vsyncadd [#allocation5], %s33
      %s36 = sshll.u32 [#allocation4], 4
      %s37 = int_to_ptr.vmem [resolvable:$true] %s36
      %39 = dma.hbm_to_vmem [thread:$0]  %s2, 128, %s37, [#allocation5]
    $region13: #{dqn_forward.1} parent=1 // pred_fallthru
      _
    // Predicated region
    $region14: #{dqn_forward.1} parent=1 // pred_check
      _
    $region15: #{dqn_forward.1} parent=1 // pred_check_branch
      %41 = sbr.rel (0) target = $region17
    $region16: #{dqn_forward.1} parent=1 // pred_region
      %s43 = ssub.s32 65536, 65536
      %44 = vsyncadd [#allocation5], %s43
      %s45 = sshll.u32 [#allocation6], 4
      %s46 = int_to_ptr.vmem [resolvable:$true] %s45
      %51 = dma.hbm_to_vmem [thread:$0]  %s3, 65536, %s46, [#allocation5], 512, 512, 32
    $region17: #{dqn_forward.1} parent=1 // pred_fallthru
      _
    // Predicated region
    $region18: #{dqn_forward.1} parent=1 // pred_check
      _
    $region19: #{dqn_forward.1} parent=1 // pred_check_branch
      %53 = sbr.rel (0) target = $region21
    $region20: #{dqn_forward.1} parent=1 // pred_region
      %s55 = ssub.s32 128, 128
      %56 = vsyncadd [#allocation8], %s55
      %s58 = sshll.u32 [#allocation7], 4
      %s59 = int_to_ptr.vmem [resolvable:$true] %s58
      %61 = dma.hbm_to_vmem [thread:$0]  %s4, 128, %s59, [#allocation8]
    $region21: #{dqn_forward.1} parent=1 // pred_fallthru
      _
    // Predicated region
    $region22: #{dqn_forward.1} parent=1 // pred_check
      _
    $region23: #{dqn_forward.1} parent=1 // pred_check_branch
      %63 = sbr.rel (0) target = $region25
    $region24: #{dqn_forward.1} parent=1 // pred_region
      %s65 = ssub.s32 8192, 8192
      %66 = vsyncadd [#allocation8], %s65
      %s67 = sshll.u32 [#allocation9], 4
      %s68 = int_to_ptr.vmem [resolvable:$true] %s67
      %73 = dma.hbm_to_vmem [thread:$0]  %s5, 8192, %s68, [#allocation8], 64, 64, 4
    $region25: #{dqn_forward.1} parent=1 // pred_fallthru
      _
    // Predicated region
    $region26: #{dqn_forward.1} parent=1 // pred_check
      _
    $region27: #{dqn_forward.1} parent=1 // pred_check_branch
      %75 = sbr.rel (0) target = $region29
    $region28: #{dqn_forward.1} parent=1 // pred_region
      %s77 = ssub.s32 16, 16
      %78 = vsyncadd [#allocation11], %s77
      %s80 = sshll.u32 [#allocation10], 4
      %s81 = int_to_ptr.vmem [resolvable:$true] %s80
      %83 = dma.hbm_to_vmem [thread:$0]  %s6, 16, %s81, [#allocation11]
    $region29: #{dqn_forward.1} parent=1 // pred_fallthru
      _
    // Predicated region
    $region30: #{dqn_forward.1} parent=1 // pred_check
      _
    $region31: #{dqn_forward.1} parent=1 // pred_check_branch
      %85 = sbr.rel (0) target = $region33
    $region32: #{dqn_forward.1} parent=1 // pred_region
      %86 = dma.done [#allocation3], 155648
    $region33: #{dqn_forward.1} parent=1 // pred_fallthru
      _
    // Predicated region
    $region34: #{dqn_forward.1} parent=1 // pred_check
      _
    $region35: #{dqn_forward.1} parent=1 // pred_check_branch
      %88 = sbr.rel (0) target = $region37
    $region36: #{dqn_forward.1} parent=1 // pred_region
      %89 = dma.done [#allocation5], 128
    $region37: #{dqn_forward.1} parent=1 // pred_fallthru
      _
    // Predicated region
    $region38: #{dqn_forward.1} parent=1 // pred_check
      _
    $region39: #{dqn_forward.1} parent=1 // pred_check_branch
      %91 = sbr.rel (0) target = $region41
    $region40: #{dqn_forward.1} parent=1 // pred_region
      %92 = dma.done [#allocation5], 65536
    $region41: #{dqn_forward.1} parent=1 // pred_fallthru
      _
    // Predicated region
    $region42: #{dqn_forward.1} parent=1 // pred_check
      _
    $region43: #{dqn_forward.1} parent=1 // pred_check_branch
      %94 = sbr.rel (0) target = $region45
    $region44: #{dqn_forward.1} parent=1 // pred_region
      %95 = dma.done [#allocation8], 128
    $region45: #{dqn_forward.1} parent=1 // pred_fallthru
      _
    // Predicated region
    $region46: #{dqn_forward.1} parent=1 // pred_check
      _
    $region47: #{dqn_forward.1} parent=1 // pred_check_branch
      %97 = sbr.rel (0) target = $region49
    $region48: #{dqn_forward.1} parent=1 // pred_region
      %98 = dma.done [#allocation8], 8192
    $region49: #{dqn_forward.1} parent=1 // pred_fallthru
      _
    // Predicated region
    $region50: #{dqn_forward.1} parent=1 // pred_check
      _
    $region51: #{dqn_forward.1} parent=1 // pred_check_branch
      %100 = sbr.rel (0) target = $region53
    $region52: #{dqn_forward.1} parent=1 // pred_region
      %101 = dma.done [#allocation11], 16
    $region53: #{dqn_forward.1} parent=1 // pred_fallthru
      _
    %v103 = vld [vmem:[%s0] sm:$0xff]
    %v104 = vld [vmem:[%s0 + $0x8] sm:$0xff]
    %v105 = vld [vmem:[%s0 + $0x10] sm:$0xff]
    %v106 = vld [vmem:[%s0 + $0x18] sm:$0xff]
    %v107 = vld [vmem:[%s0 + $0x20] sm:$0xff]
    %v108 = vld [vmem:[%s0 + $0x28] sm:$0xff]
    %v109 = vld [vmem:[%s0 + $0x30] sm:$0xff]
    %v110 = vld [vmem:[%s0 + $0x38] sm:$0xff]
    %v111 = vld [vmem:[%s0 + $0x40] sm:$0xff]
    %v112 = vld [vmem:[%s0 + $0x48] sm:$0xf]
    %v113 = vld [vmem:[#allocation2] sm:$0xff]
    %v114 = vld [vmem:[#allocation2 + $0x8] sm:$0xff]
    %v115 = vld [vmem:[#allocation2 + $0x10] sm:$0xff]
    %v116 = vld [vmem:[#allocation2 + $0x18] sm:$0xff]
    %v117 = vld [vmem:[#allocation2 + $0x20] sm:$0xff]
    %v118 = vld [vmem:[#allocation2 + $0x28] sm:$0xff]
    %v119 = vld [vmem:[#allocation2 + $0x30] sm:$0xff]
    %v120 = vld [vmem:[#allocation2 + $0x38] sm:$0xff]
    %v121 = vld [vmem:[#allocation2 + $0x40] sm:$0xff]
    %v122 = vld [vmem:[#allocation2 + $0x48] sm:$0xff]
    %v123 = vld [vmem:[#allocation2 + $0x50] sm:$0xff]
    %v124 = vld [vmem:[#allocation2 + $0x58] sm:$0xff]
    %v125 = vld [vmem:[#allocation2 + $0x60] sm:$0xff]
    %v126 = vld [vmem:[#allocation2 + $0x68] sm:$0xff]
    %v127 = vld [vmem:[#allocation2 + $0x70] sm:$0xff]
    %v128 = vld [vmem:[#allocation2 + $0x78] sm:$0xff]
    %v129 = vld [vmem:[#allocation2 + $0x80] sm:$0xff]
    %v130 = vld [vmem:[#allocation2 + $0x88] sm:$0xff]
    %v131 = vld [vmem:[#allocation2 + $0x90] sm:$0xff]
    %v132 = vld [vmem:[#allocation2 + $0x98] sm:$0xff]
    %v133 = vld [vmem:[#allocation2 + $0xa0] sm:$0xff]
    %v134 = vld [vmem:[#allocation2 + $0xa8] sm:$0xff]
    %v135 = vld [vmem:[#allocation2 + $0xb0] sm:$0xff]
    %v136 = vld [vmem:[#allocation2 + $0xb8] sm:$0xff]
    %v137 = vld [vmem:[#allocation2 + $0xc0] sm:$0xff]
    %v138 = vld [vmem:[#allocation2 + $0xc8] sm:$0xff]
    %v139 = vld [vmem:[#allocation2 + $0xd0] sm:$0xff]
    %v140 = vld [vmem:[#allocation2 + $0xd8] sm:$0xff]
    %v141 = vld [vmem:[#allocation2 + $0xe0] sm:$0xff]
    %v142 = vld [vmem:[#allocation2 + $0xe8] sm:$0xff]
    %v143 = vld [vmem:[#allocation2 + $0xf0] sm:$0xff]
    %v144 = vld [vmem:[#allocation2 + $0xf8] sm:$0xff]
    %v145 = vld [vmem:[#allocation2 + $0x100] sm:$0xff]
    %v146 = vld [vmem:[#allocation2 + $0x108] sm:$0xff]
    %v147 = vld [vmem:[#allocation2 + $0x110] sm:$0xff]
    %v148 = vld [vmem:[#allocation2 + $0x118] sm:$0xff]
    %v149 = vld [vmem:[#allocation2 + $0x120] sm:$0xff]
    %v150 = vld [vmem:[#allocation2 + $0x128] sm:$0xff]
    %v151 = vld [vmem:[#allocation2 + $0x130] sm:$0xff]
    %v152 = vld [vmem:[#allocation2 + $0x138] sm:$0xff]
    %v153 = vld [vmem:[#allocation2 + $0x140] sm:$0xff]
    %v154 = vld [vmem:[#allocation2 + $0x148] sm:$0xff]
    %v155 = vld [vmem:[#allocation2 + $0x150] sm:$0xff]
    %v156 = vld [vmem:[#allocation2 + $0x158] sm:$0xff]
    %v157 = vld [vmem:[#allocation2 + $0x160] sm:$0xff]
    %v158 = vld [vmem:[#allocation2 + $0x168] sm:$0xff]
    %v159 = vld [vmem:[#allocation2 + $0x170] sm:$0xff]
    %v160 = vld [vmem:[#allocation2 + $0x178] sm:$0xff]
    %v161 = vld [vmem:[#allocation2 + $0x180] sm:$0xff]
    %v162 = vld [vmem:[#allocation2 + $0x188] sm:$0xff]
    %v163 = vld [vmem:[#allocation2 + $0x190] sm:$0xff]
    %v164 = vld [vmem:[#allocation2 + $0x198] sm:$0xff]
    %v165 = vld [vmem:[#allocation2 + $0x1a0] sm:$0xff]
    %v166 = vld [vmem:[#allocation2 + $0x1a8] sm:$0xff]
    %v167 = vld [vmem:[#allocation2 + $0x1b0] sm:$0xff]
    %v168 = vld [vmem:[#allocation2 + $0x1b8] sm:$0xff]
    %v169 = vld [vmem:[#allocation2 + $0x1c0] sm:$0xff]
    %v170 = vld [vmem:[#allocation2 + $0x1c8] sm:$0xff]
    %v171 = vld [vmem:[#allocation2 + $0x1d0] sm:$0xff]
    %v172 = vld [vmem:[#allocation2 + $0x1d8] sm:$0xff]
    %v173 = vld [vmem:[#allocation2 + $0x1e0] sm:$0xff]
    %v174 = vld [vmem:[#allocation2 + $0x1e8] sm:$0xff]
    %v175 = vld [vmem:[#allocation2 + $0x1f0] sm:$0xff]
    %v176 = vld [vmem:[#allocation2 + $0x1f8] sm:$0xff]
    %v177 = vld [vmem:[#allocation2 + $0x200] sm:$0xff]
    %v178 = vld [vmem:[#allocation2 + $0x208] sm:$0xff]
    %v179 = vld [vmem:[#allocation2 + $0x210] sm:$0xff]
    %v180 = vld [vmem:[#allocation2 + $0x218] sm:$0xff]
    %v181 = vld [vmem:[#allocation2 + $0x220] sm:$0xff]
    %v182 = vld [vmem:[#allocation2 + $0x228] sm:$0xff]
    %v183 = vld [vmem:[#allocation2 + $0x230] sm:$0xff]
    %v184 = vld [vmem:[#allocation2 + $0x238] sm:$0xff]
    %v185 = vld [vmem:[#allocation2 + $0x240] sm:$0xff]
    %v186 = vld [vmem:[#allocation2 + $0x248] sm:$0xff]
    %v187 = vld [vmem:[#allocation2 + $0x250] sm:$0xff]
    %v188 = vld [vmem:[#allocation2 + $0x258] sm:$0xff]
    %v189 = vld [vmem:[#allocation2 + $0x260] sm:$0xff]
    %v190 = vld [vmem:[#allocation2 + $0x268] sm:$0xff]
    %v191 = vld [vmem:[#allocation2 + $0x270] sm:$0xff]
    %v192 = vld [vmem:[#allocation2 + $0x278] sm:$0xff]
    %v193 = vld [vmem:[#allocation2 + $0x280] sm:$0xff]
    %v194 = vld [vmem:[#allocation2 + $0x288] sm:$0xff]
    %v195 = vld [vmem:[#allocation2 + $0x290] sm:$0xff]
    %v196 = vld [vmem:[#allocation2 + $0x298] sm:$0xff]
    %v197 = vld [vmem:[#allocation2 + $0x2a0] sm:$0xff]
    %v198 = vld [vmem:[#allocation2 + $0x2a8] sm:$0xff]
    %v199 = vld [vmem:[#allocation2 + $0x2b0] sm:$0xff]
    %v200 = vld [vmem:[#allocation2 + $0x2b8] sm:$0xff]
    %v201 = vld [vmem:[#allocation2 + $0x2c0] sm:$0xff]
    %v202 = vld [vmem:[#allocation2 + $0x2c8] sm:$0xff]
    %v203 = vld [vmem:[#allocation2 + $0x2d0] sm:$0xff]
    %v204 = vld [vmem:[#allocation2 + $0x2d8] sm:$0xff]
    %v205 = vld [vmem:[#allocation2 + $0x2e0] sm:$0xff]
    %v206 = vld [vmem:[#allocation2 + $0x2e8] sm:$0xff]
    %v207 = vld [vmem:[#allocation2 + $0x2f0] sm:$0xff]
    %v208 = vld [vmem:[#allocation2 + $0x2f8] sm:$0xff]
    %v209 = vld [vmem:[#allocation2 + $0x300] sm:$0xff]
    %v210 = vld [vmem:[#allocation2 + $0x308] sm:$0xff]
    %v211 = vld [vmem:[#allocation2 + $0x310] sm:$0xff]
    %v212 = vld [vmem:[#allocation2 + $0x318] sm:$0xff]
    %v213 = vld [vmem:[#allocation2 + $0x320] sm:$0xff]
    %v214 = vld [vmem:[#allocation2 + $0x328] sm:$0xff]
    %v215 = vld [vmem:[#allocation2 + $0x330] sm:$0xff]
    %v216 = vld [vmem:[#allocation2 + $0x338] sm:$0xff]
    %v217 = vld [vmem:[#allocation2 + $0x340] sm:$0xff]
    %v218 = vld [vmem:[#allocation2 + $0x348] sm:$0xff]
    %v219 = vld [vmem:[#allocation2 + $0x350] sm:$0xff]
    %v220 = vld [vmem:[#allocation2 + $0x358] sm:$0xff]
    %v221 = vld [vmem:[#allocation2 + $0x360] sm:$0xff]
    %v222 = vld [vmem:[#allocation2 + $0x368] sm:$0xff]
    %v223 = vld [vmem:[#allocation2 + $0x370] sm:$0xff]
    %v224 = vld [vmem:[#allocation2 + $0x378] sm:$0xff]
    %v225 = vld [vmem:[#allocation2 + $0x380] sm:$0xff]
    %v226 = vld [vmem:[#allocation2 + $0x388] sm:$0xff]
    %v227 = vld [vmem:[#allocation2 + $0x390] sm:$0xff]
    %v228 = vld [vmem:[#allocation2 + $0x398] sm:$0xff]
    %v229 = vld [vmem:[#allocation2 + $0x3a0] sm:$0xff]
    %v230 = vld [vmem:[#allocation2 + $0x3a8] sm:$0xff]
    %v231 = vld [vmem:[#allocation2 + $0x3b0] sm:$0xff]
    %v232 = vld [vmem:[#allocation2 + $0x3b8] sm:$0xff]
    %v233 = vld [vmem:[#allocation2 + $0x3c0] sm:$0xff]
    %v234 = vld [vmem:[#allocation2 + $0x3c8] sm:$0xff]
    %v235 = vld [vmem:[#allocation2 + $0x3d0] sm:$0xff]
    %v236 = vld [vmem:[#allocation2 + $0x3d8] sm:$0xff]
    %v237 = vld [vmem:[#allocation2 + $0x3e0] sm:$0xff]
    %v238 = vld [vmem:[#allocation2 + $0x3e8] sm:$0xff]
    %v239 = vld [vmem:[#allocation2 + $0x3f0] sm:$0xff]
    %v240 = vld [vmem:[#allocation2 + $0x3f8] sm:$0xff]
    %v241 = vld [vmem:[#allocation2 + $0x400] sm:$0xff]
    %v242 = vld [vmem:[#allocation2 + $0x408] sm:$0xff]
    %v243 = vld [vmem:[#allocation2 + $0x410] sm:$0xff]
    %v244 = vld [vmem:[#allocation2 + $0x418] sm:$0xff]
    %v245 = vld [vmem:[#allocation2 + $0x420] sm:$0xff]
    %v246 = vld [vmem:[#allocation2 + $0x428] sm:$0xff]
    %v247 = vld [vmem:[#allocation2 + $0x430] sm:$0xff]
    %v248 = vld [vmem:[#allocation2 + $0x438] sm:$0xff]
    %v249 = vld [vmem:[#allocation2 + $0x440] sm:$0xff]
    %v250 = vld [vmem:[#allocation2 + $0x448] sm:$0xff]
    %v251 = vld [vmem:[#allocation2 + $0x450] sm:$0xff]
    %v252 = vld [vmem:[#allocation2 + $0x458] sm:$0xff]
    %v253 = vld [vmem:[#allocation2 + $0x460] sm:$0xff]
    %v254 = vld [vmem:[#allocation2 + $0x468] sm:$0xff]
    %v255 = vld [vmem:[#allocation2 + $0x470] sm:$0xff]
    %v256 = vld [vmem:[#allocation2 + $0x478] sm:$0xff]
    %v257 = vld [vmem:[#allocation2 + $0x480] sm:$0xff]
    %v258 = vld [vmem:[#allocation2 + $0x488] sm:$0xff]
    %v259 = vld [vmem:[#allocation2 + $0x490] sm:$0xff]
    %v260 = vld [vmem:[#allocation2 + $0x498] sm:$0xff]
    %v261 = vld [vmem:[#allocation2 + $0x4a0] sm:$0xff]
    %v262 = vld [vmem:[#allocation2 + $0x4a8] sm:$0xff]
    %v263 = vld [vmem:[#allocation2 + $0x4b0] sm:$0xff]
    %v264 = vld [vmem:[#allocation2 + $0x4b8] sm:$0xff]
    %v265 = vld [vmem:[#allocation2 + $0x4c0] sm:$0xff]
    %v266 = vld [vmem:[#allocation2 + $0x4c8] sm:$0xff]
    %v267 = vld [vmem:[#allocation2 + $0x4d0] sm:$0xff]
    %v268 = vld [vmem:[#allocation2 + $0x4d8] sm:$0xff]
    %v269 = vld [vmem:[#allocation2 + $0x4e0] sm:$0xff]
    %v270 = vld [vmem:[#allocation2 + $0x4e8] sm:$0xff]
    %v271 = vld [vmem:[#allocation2 + $0x4f0] sm:$0xff]
    %v272 = vld [vmem:[#allocation2 + $0x4f8] sm:$0xff]
    %v273 = vld [vmem:[#allocation2 + $0x500] sm:$0xff]
    %v274 = vld [vmem:[#allocation2 + $0x508] sm:$0xff]
    %v275 = vld [vmem:[#allocation2 + $0x510] sm:$0xff]
    %v276 = vld [vmem:[#allocation2 + $0x518] sm:$0xff]
    %v277 = vld [vmem:[#allocation2 + $0x520] sm:$0xff]
    %v278 = vld [vmem:[#allocation2 + $0x528] sm:$0xff]
    %v279 = vld [vmem:[#allocation2 + $0x530] sm:$0xff]
    %v280 = vld [vmem:[#allocation2 + $0x538] sm:$0xff]
    %v281 = vld [vmem:[#allocation2 + $0x540] sm:$0xff]
    %v282 = vld [vmem:[#allocation2 + $0x548] sm:$0xff]
    %v283 = vld [vmem:[#allocation2 + $0x550] sm:$0xff]
    %v284 = vld [vmem:[#allocation2 + $0x558] sm:$0xff]
    %v285 = vld [vmem:[#allocation2 + $0x560] sm:$0xff]
    %v286 = vld [vmem:[#allocation2 + $0x568] sm:$0xff]
    %v287 = vld [vmem:[#allocation2 + $0x570] sm:$0xff]
    %v288 = vld [vmem:[#allocation2 + $0x578] sm:$0xff]
    %v289 = vld [vmem:[#allocation2 + $0x580] sm:$0xff]
    %v290 = vld [vmem:[#allocation2 + $0x588] sm:$0xff]
    %v291 = vld [vmem:[#allocation2 + $0x590] sm:$0xff]
    %v292 = vld [vmem:[#allocation2 + $0x598] sm:$0xff]
    %v293 = vld [vmem:[#allocation2 + $0x5a0] sm:$0xff]
    %v294 = vld [vmem:[#allocation2 + $0x5a8] sm:$0xff]
    %v295 = vld [vmem:[#allocation2 + $0x5b0] sm:$0xff]
    %v296 = vld [vmem:[#allocation2 + $0x5b8] sm:$0xff]
    %v297 = vld [vmem:[#allocation2 + $0x5c0] sm:$0xff]
    %v298 = vld [vmem:[#allocation2 + $0x5c8] sm:$0xff]
    %v299 = vld [vmem:[#allocation2 + $0x5d0] sm:$0xff]
    %v300 = vld [vmem:[#allocation2 + $0x5d8] sm:$0xff]
    %v301 = vld [vmem:[#allocation2 + $0x5e0] sm:$0xff]
    %v302 = vld [vmem:[#allocation2 + $0x5e8] sm:$0xff]
    %v303 = vld [vmem:[#allocation2 + $0x5f0] sm:$0xff]
    %v304 = vld [vmem:[#allocation2 + $0x5f8] sm:$0xff]
    %v305 = vld [vmem:[#allocation2 + $0x600] sm:$0xff]
    %v306 = vld [vmem:[#allocation2 + $0x608] sm:$0xff]
    %v307 = vld [vmem:[#allocation2 + $0x610] sm:$0xff]
    %v308 = vld [vmem:[#allocation2 + $0x618] sm:$0xff]
    %v309 = vld [vmem:[#allocation2 + $0x620] sm:$0xff]
    %v310 = vld [vmem:[#allocation2 + $0x628] sm:$0xff]
    %v311 = vld [vmem:[#allocation2 + $0x630] sm:$0xff]
    %v312 = vld [vmem:[#allocation2 + $0x638] sm:$0xff]
    %v313 = vld [vmem:[#allocation2 + $0x640] sm:$0xff]
    %v314 = vld [vmem:[#allocation2 + $0x648] sm:$0xff]
    %v315 = vld [vmem:[#allocation2 + $0x650] sm:$0xff]
    %v316 = vld [vmem:[#allocation2 + $0x658] sm:$0xff]
    %v317 = vld [vmem:[#allocation2 + $0x660] sm:$0xff]
    %v318 = vld [vmem:[#allocation2 + $0x668] sm:$0xff]
    %v319 = vld [vmem:[#allocation2 + $0x670] sm:$0xff]
    %v320 = vld [vmem:[#allocation2 + $0x678] sm:$0xff]
    %v321 = vld [vmem:[#allocation2 + $0x680] sm:$0xff]
    %v322 = vld [vmem:[#allocation2 + $0x688] sm:$0xff]
    %v323 = vld [vmem:[#allocation2 + $0x690] sm:$0xff]
    %v324 = vld [vmem:[#allocation2 + $0x698] sm:$0xff]
    %v325 = vld [vmem:[#allocation2 + $0x6a0] sm:$0xff]
    %v326 = vld [vmem:[#allocation2 + $0x6a8] sm:$0xff]
    %v327 = vld [vmem:[#allocation2 + $0x6b0] sm:$0xff]
    %v328 = vld [vmem:[#allocation2 + $0x6b8] sm:$0xff]
    %v329 = vld [vmem:[#allocation2 + $0x6c0] sm:$0xff]
    %v330 = vld [vmem:[#allocation2 + $0x6c8] sm:$0xff]
    %v331 = vld [vmem:[#allocation2 + $0x6d0] sm:$0xff]
    %v332 = vld [vmem:[#allocation2 + $0x6d8] sm:$0xff]
    %v333 = vld [vmem:[#allocation2 + $0x6e0] sm:$0xff]
    %v334 = vld [vmem:[#allocation2 + $0x6e8] sm:$0xff]
    %v335 = vld [vmem:[#allocation2 + $0x6f0] sm:$0xff]
    %v336 = vld [vmem:[#allocation2 + $0x6f8] sm:$0xff]
    %v337 = vld [vmem:[#allocation2 + $0x700] sm:$0xff]
    %v338 = vld [vmem:[#allocation2 + $0x708] sm:$0xff]
    %v339 = vld [vmem:[#allocation2 + $0x710] sm:$0xff]
    %v340 = vld [vmem:[#allocation2 + $0x718] sm:$0xff]
    %v341 = vld [vmem:[#allocation2 + $0x720] sm:$0xff]
    %v342 = vld [vmem:[#allocation2 + $0x728] sm:$0xff]
    %v343 = vld [vmem:[#allocation2 + $0x730] sm:$0xff]
    %v344 = vld [vmem:[#allocation2 + $0x738] sm:$0xff]
    %v345 = vld [vmem:[#allocation2 + $0x740] sm:$0xff]
    %v346 = vld [vmem:[#allocation2 + $0x748] sm:$0xff]
    %v347 = vld [vmem:[#allocation2 + $0x750] sm:$0xff]
    %v348 = vld [vmem:[#allocation2 + $0x758] sm:$0xff]
    %v349 = vld [vmem:[#allocation2 + $0x760] sm:$0xff]
    %v350 = vld [vmem:[#allocation2 + $0x768] sm:$0xff]
    %v351 = vld [vmem:[#allocation2 + $0x770] sm:$0xff]
    %v352 = vld [vmem:[#allocation2 + $0x778] sm:$0xff]
    %v353 = vld [vmem:[#allocation2 + $0x780] sm:$0xff]
    %v354 = vld [vmem:[#allocation2 + $0x788] sm:$0xff]
    %v355 = vld [vmem:[#allocation2 + $0x790] sm:$0xff]
    %v356 = vld [vmem:[#allocation2 + $0x798] sm:$0xff]
    %v357 = vld [vmem:[#allocation2 + $0x7a0] sm:$0xff]
    %v358 = vld [vmem:[#allocation2 + $0x7a8] sm:$0xff]
    %v359 = vld [vmem:[#allocation2 + $0x7b0] sm:$0xff]
    %v360 = vld [vmem:[#allocation2 + $0x7b8] sm:$0xff]
    %v361 = vld [vmem:[#allocation2 + $0x7c0] sm:$0xff]
    %v362 = vld [vmem:[#allocation2 + $0x7c8] sm:$0xff]
    %v363 = vld [vmem:[#allocation2 + $0x7d0] sm:$0xff]
    %v364 = vld [vmem:[#allocation2 + $0x7d8] sm:$0xff]
    %v365 = vld [vmem:[#allocation2 + $0x7e0] sm:$0xff]
    %v366 = vld [vmem:[#allocation2 + $0x7e8] sm:$0xff]
    %v367 = vld [vmem:[#allocation2 + $0x7f0] sm:$0xff]
    %v368 = vld [vmem:[#allocation2 + $0x7f8] sm:$0xff]
    %v369 = vld [vmem:[#allocation2 + $0x800] sm:$0xff]
    %v370 = vld [vmem:[#allocation2 + $0x808] sm:$0xff]
    %v371 = vld [vmem:[#allocation2 + $0x810] sm:$0xff]
    %v372 = vld [vmem:[#allocation2 + $0x818] sm:$0xff]
    %v373 = vld [vmem:[#allocation2 + $0x820] sm:$0xff]
    %v374 = vld [vmem:[#allocation2 + $0x828] sm:$0xff]
    %v375 = vld [vmem:[#allocation2 + $0x830] sm:$0xff]
    %v376 = vld [vmem:[#allocation2 + $0x838] sm:$0xff]
    %v377 = vld [vmem:[#allocation2 + $0x840] sm:$0xff]
    %v378 = vld [vmem:[#allocation2 + $0x848] sm:$0xff]
    %v379 = vld [vmem:[#allocation2 + $0x850] sm:$0xff]
    %v380 = vld [vmem:[#allocation2 + $0x858] sm:$0xff]
    %v381 = vld [vmem:[#allocation2 + $0x860] sm:$0xff]
    %v382 = vld [vmem:[#allocation2 + $0x868] sm:$0xff]
    %v383 = vld [vmem:[#allocation2 + $0x870] sm:$0xff]
    %v384 = vld [vmem:[#allocation2 + $0x878] sm:$0xff]
    %v385 = vld [vmem:[#allocation2 + $0x880] sm:$0xff]
    %v386 = vld [vmem:[#allocation2 + $0x888] sm:$0xff]
    %v387 = vld [vmem:[#allocation2 + $0x890] sm:$0xff]
    %v388 = vld [vmem:[#allocation2 + $0x898] sm:$0xff]
    %v389 = vld [vmem:[#allocation2 + $0x8a0] sm:$0xff]
    %v390 = vld [vmem:[#allocation2 + $0x8a8] sm:$0xff]
    %v391 = vld [vmem:[#allocation2 + $0x8b0] sm:$0xff]
    %v392 = vld [vmem:[#allocation2 + $0x8b8] sm:$0xff]
    %v393 = vld [vmem:[#allocation2 + $0x8c0] sm:$0xff]
    %v394 = vld [vmem:[#allocation2 + $0x8c8] sm:$0xff]
    %v395 = vld [vmem:[#allocation2 + $0x8d0] sm:$0xff]
    %v396 = vld [vmem:[#allocation2 + $0x8d8] sm:$0xff]
    %v397 = vld [vmem:[#allocation2 + $0x8e0] sm:$0xff]
    %v398 = vld [vmem:[#allocation2 + $0x8e8] sm:$0xff]
    %v399 = vld [vmem:[#allocation2 + $0x8f0] sm:$0xff]
    %v400 = vld [vmem:[#allocation2 + $0x8f8] sm:$0xff]
    %v401 = vld [vmem:[#allocation2 + $0x900] sm:$0xff]
    %v402 = vld [vmem:[#allocation2 + $0x908] sm:$0xff]
    %v403 = vld [vmem:[#allocation2 + $0x910] sm:$0xff]
    %v404 = vld [vmem:[#allocation2 + $0x918] sm:$0xff]
    %v405 = vld [vmem:[#allocation2 + $0x920] sm:$0xff]
    %v406 = vld [vmem:[#allocation2 + $0x928] sm:$0xff]
    %v407 = vld [vmem:[#allocation2 + $0x930] sm:$0xff]
    %v408 = vld [vmem:[#allocation2 + $0x938] sm:$0xff]
    %v409 = vld [vmem:[#allocation2 + $0x940] sm:$0xff]
    %v410 = vld [vmem:[#allocation2 + $0x948] sm:$0xff]
    %v411 = vld [vmem:[#allocation2 + $0x950] sm:$0xff]
    %v412 = vld [vmem:[#allocation2 + $0x958] sm:$0xff]
    %v413 = vld [vmem:[#allocation2 + $0x960] sm:$0xff]
    %v414 = vld [vmem:[#allocation2 + $0x968] sm:$0xff]
    %v415 = vld [vmem:[#allocation2 + $0x970] sm:$0xff]
    %v416 = vld [vmem:[#allocation2 + $0x978] sm:$0xff]
    %v417 = vld [vmem:[#allocation2 + $0x980] sm:$0xff]
    %v418 = vld [vmem:[#allocation2 + $0x988] sm:$0xff]
    %v419 = vld [vmem:[#allocation2 + $0x990] sm:$0xff]
    %v420 = vld [vmem:[#allocation2 + $0x998] sm:$0xff]
    %v421 = vld [vmem:[#allocation2 + $0x9a0] sm:$0xff]
    %v422 = vld [vmem:[#allocation2 + $0x9a8] sm:$0xff]
    %v423 = vld [vmem:[#allocation2 + $0x9b0] sm:$0xff]
    %v424 = vld [vmem:[#allocation2 + $0x9b8] sm:$0xff]
    %v425 = vld [vmem:[#allocation2 + $0x9c0] sm:$0xff]
    %v426 = vld [vmem:[#allocation2 + $0x9c8] sm:$0xff]
    %v427 = vld [vmem:[#allocation2 + $0x9d0] sm:$0xff]
    %v428 = vld [vmem:[#allocation2 + $0x9d8] sm:$0xff]
    %v429 = vld [vmem:[#allocation2 + $0x9e0] sm:$0xff]
    %v430 = vld [vmem:[#allocation2 + $0x9e8] sm:$0xff]
    %v431 = vld [vmem:[#allocation2 + $0x9f0] sm:$0xff]
    %v432 = vld [vmem:[#allocation2 + $0x9f8] sm:$0xff]
    %v433 = vld [vmem:[#allocation2 + $0xa00] sm:$0xff]
    %v434 = vld [vmem:[#allocation2 + $0xa08] sm:$0xff]
    %v435 = vld [vmem:[#allocation2 + $0xa10] sm:$0xff]
    %v436 = vld [vmem:[#allocation2 + $0xa18] sm:$0xff]
    %v437 = vld [vmem:[#allocation2 + $0xa20] sm:$0xff]
    %v438 = vld [vmem:[#allocation2 + $0xa28] sm:$0xff]
    %v439 = vld [vmem:[#allocation2 + $0xa30] sm:$0xff]
    %v440 = vld [vmem:[#allocation2 + $0xa38] sm:$0xff]
    %v441 = vld [vmem:[#allocation2 + $0xa40] sm:$0xff]
    %v442 = vld [vmem:[#allocation2 + $0xa48] sm:$0xff]
    %v443 = vld [vmem:[#allocation2 + $0xa50] sm:$0xff]
    %v444 = vld [vmem:[#allocation2 + $0xa58] sm:$0xff]
    %v445 = vld [vmem:[#allocation2 + $0xa60] sm:$0xff]
    %v446 = vld [vmem:[#allocation2 + $0xa68] sm:$0xff]
    %v447 = vld [vmem:[#allocation2 + $0xa70] sm:$0xff]
    %v448 = vld [vmem:[#allocation2 + $0xa78] sm:$0xff]
    %v449 = vld [vmem:[#allocation2 + $0xa80] sm:$0xff]
    %v450 = vld [vmem:[#allocation2 + $0xa88] sm:$0xff]
    %v451 = vld [vmem:[#allocation2 + $0xa90] sm:$0xff]
    %v452 = vld [vmem:[#allocation2 + $0xa98] sm:$0xff]
    %v453 = vld [vmem:[#allocation2 + $0xaa0] sm:$0xff]
    %v454 = vld [vmem:[#allocation2 + $0xaa8] sm:$0xff]
    %v455 = vld [vmem:[#allocation2 + $0xab0] sm:$0xff]
    %v456 = vld [vmem:[#allocation2 + $0xab8] sm:$0xff]
    %v457 = vld [vmem:[#allocation2 + $0xac0] sm:$0xff]
    %v458 = vld [vmem:[#allocation2 + $0xac8] sm:$0xff]
    %v459 = vld [vmem:[#allocation2 + $0xad0] sm:$0xff]
    %v460 = vld [vmem:[#allocation2 + $0xad8] sm:$0xff]
    %v461 = vld [vmem:[#allocation2 + $0xae0] sm:$0xff]
    %v462 = vld [vmem:[#allocation2 + $0xae8] sm:$0xff]
    %v463 = vld [vmem:[#allocation2 + $0xaf0] sm:$0xff]
    %v464 = vld [vmem:[#allocation2 + $0xaf8] sm:$0xff]
    %v465 = vld [vmem:[#allocation2 + $0xb00] sm:$0xff]
    %v466 = vld [vmem:[#allocation2 + $0xb08] sm:$0xff]
    %v467 = vld [vmem:[#allocation2 + $0xb10] sm:$0xff]
    %v468 = vld [vmem:[#allocation2 + $0xb18] sm:$0xff]
    %v469 = vld [vmem:[#allocation2 + $0xb20] sm:$0xff]
    %v470 = vld [vmem:[#allocation2 + $0xb28] sm:$0xff]
    %v471 = vld [vmem:[#allocation2 + $0xb30] sm:$0xff]
    %v472 = vld [vmem:[#allocation2 + $0xb38] sm:$0xff]
    %v473 = vld [vmem:[#allocation2 + $0xb40] sm:$0xff]
    %v474 = vld [vmem:[#allocation2 + $0xb48] sm:$0xff]
    %v475 = vld [vmem:[#allocation2 + $0xb50] sm:$0xff]
    %v476 = vld [vmem:[#allocation2 + $0xb58] sm:$0xff]
    %v477 = vld [vmem:[#allocation2 + $0xb60] sm:$0xff]
    %v478 = vld [vmem:[#allocation2 + $0xb68] sm:$0xff]
    %v479 = vld [vmem:[#allocation2 + $0xb70] sm:$0xff]
    %v480 = vld [vmem:[#allocation2 + $0xb78] sm:$0xff]
    %v481 = vld [vmem:[#allocation2 + $0xb80] sm:$0xff]
    %v482 = vld [vmem:[#allocation2 + $0xb88] sm:$0xff]
    %v483 = vld [vmem:[#allocation2 + $0xb90] sm:$0xff]
    %v484 = vld [vmem:[#allocation2 + $0xb98] sm:$0xff]
    %v485 = vld [vmem:[#allocation2 + $0xba0] sm:$0xff]
    %v486 = vld [vmem:[#allocation2 + $0xba8] sm:$0xff]
    %v487 = vld [vmem:[#allocation2 + $0xbb0] sm:$0xff]
    %v488 = vld [vmem:[#allocation2 + $0xbb8] sm:$0xff]
    %v489 = vld [vmem:[#allocation2 + $0xbc0] sm:$0xff]
    %v490 = vld [vmem:[#allocation2 + $0xbc8] sm:$0xff]
    %v491 = vld [vmem:[#allocation2 + $0xbd0] sm:$0xff]
    %v492 = vld [vmem:[#allocation2 + $0xbd8] sm:$0xff]
    %v493 = vld [vmem:[#allocation2 + $0xbe0] sm:$0xff]
    %v494 = vld [vmem:[#allocation2 + $0xbe8] sm:$0xff]
    %v495 = vld [vmem:[#allocation2 + $0xbf0] sm:$0xff]
    %v496 = vld [vmem:[#allocation2 + $0xbf8] sm:$0xff]
    %v497 = vld [vmem:[#allocation2 + $0xc00] sm:$0xff]
    %v498 = vld [vmem:[#allocation2 + $0xc08] sm:$0xff]
    %v499 = vld [vmem:[#allocation2 + $0xc10] sm:$0xff]
    %v500 = vld [vmem:[#allocation2 + $0xc18] sm:$0xff]
    %v501 = vld [vmem:[#allocation2 + $0xc20] sm:$0xff]
    %v502 = vld [vmem:[#allocation2 + $0xc28] sm:$0xff]
    %v503 = vld [vmem:[#allocation2 + $0xc30] sm:$0xff]
    %v504 = vld [vmem:[#allocation2 + $0xc38] sm:$0xff]
    %v505 = vld [vmem:[#allocation2 + $0xc40] sm:$0xff]
    %v506 = vld [vmem:[#allocation2 + $0xc48] sm:$0xff]
    %v507 = vld [vmem:[#allocation2 + $0xc50] sm:$0xff]
    %v508 = vld [vmem:[#allocation2 + $0xc58] sm:$0xff]
    %v509 = vld [vmem:[#allocation2 + $0xc60] sm:$0xff]
    %v510 = vld [vmem:[#allocation2 + $0xc68] sm:$0xff]
    %v511 = vld [vmem:[#allocation2 + $0xc70] sm:$0xff]
    %v512 = vld [vmem:[#allocation2 + $0xc78] sm:$0xff]
    %v513 = vld [vmem:[#allocation2 + $0xc80] sm:$0xff]
    %v514 = vld [vmem:[#allocation2 + $0xc88] sm:$0xff]
    %v515 = vld [vmem:[#allocation2 + $0xc90] sm:$0xff]
    %v516 = vld [vmem:[#allocation2 + $0xc98] sm:$0xff]
    %v517 = vld [vmem:[#allocation2 + $0xca0] sm:$0xff]
    %v518 = vld [vmem:[#allocation2 + $0xca8] sm:$0xff]
    %v519 = vld [vmem:[#allocation2 + $0xcb0] sm:$0xff]
    %v520 = vld [vmem:[#allocation2 + $0xcb8] sm:$0xff]
    %v521 = vld [vmem:[#allocation2 + $0xcc0] sm:$0xff]
    %v522 = vld [vmem:[#allocation2 + $0xcc8] sm:$0xff]
    %v523 = vld [vmem:[#allocation2 + $0xcd0] sm:$0xff]
    %v524 = vld [vmem:[#allocation2 + $0xcd8] sm:$0xff]
    %v525 = vld [vmem:[#allocation2 + $0xce0] sm:$0xff]
    %v526 = vld [vmem:[#allocation2 + $0xce8] sm:$0xff]
    %v527 = vld [vmem:[#allocation2 + $0xcf0] sm:$0xff]
    %v528 = vld [vmem:[#allocation2 + $0xcf8] sm:$0xff]
    %v529 = vld [vmem:[#allocation2 + $0xd00] sm:$0xff]
    %v530 = vld [vmem:[#allocation2 + $0xd08] sm:$0xff]
    %v531 = vld [vmem:[#allocation2 + $0xd10] sm:$0xff]
    %v532 = vld [vmem:[#allocation2 + $0xd18] sm:$0xff]
    %v533 = vld [vmem:[#allocation2 + $0xd20] sm:$0xff]
    %v534 = vld [vmem:[#allocation2 + $0xd28] sm:$0xff]
    %v535 = vld [vmem:[#allocation2 + $0xd30] sm:$0xff]
    %v536 = vld [vmem:[#allocation2 + $0xd38] sm:$0xff]
    %v537 = vld [vmem:[#allocation2 + $0xd40] sm:$0xff]
    %v538 = vld [vmem:[#allocation2 + $0xd48] sm:$0xff]
    %v539 = vld [vmem:[#allocation2 + $0xd50] sm:$0xff]
    %v540 = vld [vmem:[#allocation2 + $0xd58] sm:$0xff]
    %v541 = vld [vmem:[#allocation2 + $0xd60] sm:$0xff]
    %v542 = vld [vmem:[#allocation2 + $0xd68] sm:$0xff]
    %v543 = vld [vmem:[#allocation2 + $0xd70] sm:$0xff]
    %v544 = vld [vmem:[#allocation2 + $0xd78] sm:$0xff]
    %v545 = vld [vmem:[#allocation2 + $0xd80] sm:$0xff]
    %v546 = vld [vmem:[#allocation2 + $0xd88] sm:$0xff]
    %v547 = vld [vmem:[#allocation2 + $0xd90] sm:$0xff]
    %v548 = vld [vmem:[#allocation2 + $0xd98] sm:$0xff]
    %v549 = vld [vmem:[#allocation2 + $0xda0] sm:$0xff]
    %v550 = vld [vmem:[#allocation2 + $0xda8] sm:$0xff]
    %v551 = vld [vmem:[#allocation2 + $0xdb0] sm:$0xff]
    %v552 = vld [vmem:[#allocation2 + $0xdb8] sm:$0xff]
    %v553 = vld [vmem:[#allocation2 + $0xdc0] sm:$0xff]
    %v554 = vld [vmem:[#allocation2 + $0xdc8] sm:$0xff]
    %v555 = vld [vmem:[#allocation2 + $0xdd0] sm:$0xff]
    %v556 = vld [vmem:[#allocation2 + $0xdd8] sm:$0xff]
    %v557 = vld [vmem:[#allocation2 + $0xde0] sm:$0xff]
    %v558 = vld [vmem:[#allocation2 + $0xde8] sm:$0xff]
    %v559 = vld [vmem:[#allocation2 + $0xdf0] sm:$0xff]
    %v560 = vld [vmem:[#allocation2 + $0xdf8] sm:$0xff]
    %v561 = vld [vmem:[#allocation2 + $0xe00] sm:$0xff]
    %v562 = vld [vmem:[#allocation2 + $0xe08] sm:$0xff]
    %v563 = vld [vmem:[#allocation2 + $0xe10] sm:$0xff]
    %v564 = vld [vmem:[#allocation2 + $0xe18] sm:$0xff]
    %v565 = vld [vmem:[#allocation2 + $0xe20] sm:$0xff]
    %v566 = vld [vmem:[#allocation2 + $0xe28] sm:$0xff]
    %v567 = vld [vmem:[#allocation2 + $0xe30] sm:$0xff]
    %v568 = vld [vmem:[#allocation2 + $0xe38] sm:$0xff]
    %v569 = vld [vmem:[#allocation2 + $0xe40] sm:$0xff]
    %v570 = vld [vmem:[#allocation2 + $0xe48] sm:$0xff]
    %v571 = vld [vmem:[#allocation2 + $0xe50] sm:$0xff]
    %v572 = vld [vmem:[#allocation2 + $0xe58] sm:$0xff]
    %v573 = vld [vmem:[#allocation2 + $0xe60] sm:$0xff]
    %v574 = vld [vmem:[#allocation2 + $0xe68] sm:$0xff]
    %v575 = vld [vmem:[#allocation2 + $0xe70] sm:$0xff]
    %v576 = vld [vmem:[#allocation2 + $0xe78] sm:$0xff]
    %v577 = vld [vmem:[#allocation2 + $0xe80] sm:$0xff]
    %v578 = vld [vmem:[#allocation2 + $0xe88] sm:$0xff]
    %v579 = vld [vmem:[#allocation2 + $0xe90] sm:$0xff]
    %v580 = vld [vmem:[#allocation2 + $0xe98] sm:$0xff]
    %v581 = vld [vmem:[#allocation2 + $0xea0] sm:$0xff]
    %v582 = vld [vmem:[#allocation2 + $0xea8] sm:$0xff]
    %v583 = vld [vmem:[#allocation2 + $0xeb0] sm:$0xff]
    %v584 = vld [vmem:[#allocation2 + $0xeb8] sm:$0xff]
    %v585 = vld [vmem:[#allocation2 + $0xec0] sm:$0xff]
    %v586 = vld [vmem:[#allocation2 + $0xec8] sm:$0xff]
    %v587 = vld [vmem:[#allocation2 + $0xed0] sm:$0xff]
    %v588 = vld [vmem:[#allocation2 + $0xed8] sm:$0xff]
    %v589 = vld [vmem:[#allocation2 + $0xee0] sm:$0xff]
    %v590 = vld [vmem:[#allocation2 + $0xee8] sm:$0xff]
    %v591 = vld [vmem:[#allocation2 + $0xef0] sm:$0xff]
    %v592 = vld [vmem:[#allocation2 + $0xef8] sm:$0xff]
    %v593 = vld [vmem:[#allocation2 + $0xf00] sm:$0xff]
    %v594 = vld [vmem:[#allocation2 + $0xf08] sm:$0xff]
    %v595 = vld [vmem:[#allocation2 + $0xf10] sm:$0xff]
    %v596 = vld [vmem:[#allocation2 + $0xf18] sm:$0xff]
    %v597 = vld [vmem:[#allocation2 + $0xf20] sm:$0xff]
    %v598 = vld [vmem:[#allocation2 + $0xf28] sm:$0xff]
    %v599 = vld [vmem:[#allocation2 + $0xf30] sm:$0xff]
    %v600 = vld [vmem:[#allocation2 + $0xf38] sm:$0xff]
    %v601 = vld [vmem:[#allocation2 + $0xf40] sm:$0xff]
    %v602 = vld [vmem:[#allocation2 + $0xf48] sm:$0xff]
    %v603 = vld [vmem:[#allocation2 + $0xf50] sm:$0xff]
    %v604 = vld [vmem:[#allocation2 + $0xf58] sm:$0xff]
    %v605 = vld [vmem:[#allocation2 + $0xf60] sm:$0xff]
    %v606 = vld [vmem:[#allocation2 + $0xf68] sm:$0xff]
    %v607 = vld [vmem:[#allocation2 + $0xf70] sm:$0xff]
    %v608 = vld [vmem:[#allocation2 + $0xf78] sm:$0xff]
    %v609 = vld [vmem:[#allocation2 + $0xf80] sm:$0xff]
    %v610 = vld [vmem:[#allocation2 + $0xf88] sm:$0xff]
    %v611 = vld [vmem:[#allocation2 + $0xf90] sm:$0xff]
    %v612 = vld [vmem:[#allocation2 + $0xf98] sm:$0xff]
    %v613 = vld [vmem:[#allocation2 + $0xfa0] sm:$0xff]
    %v614 = vld [vmem:[#allocation2 + $0xfa8] sm:$0xff]
    %v615 = vld [vmem:[#allocation2 + $0xfb0] sm:$0xff]
    %v616 = vld [vmem:[#allocation2 + $0xfb8] sm:$0xff]
    %v617 = vld [vmem:[#allocation2 + $0xfc0] sm:$0xff]
    %v618 = vld [vmem:[#allocation2 + $0xfc8] sm:$0xff]
    %v619 = vld [vmem:[#allocation2 + $0xfd0] sm:$0xff]
    %v620 = vld [vmem:[#allocation2 + $0xfd8] sm:$0xff]
    %v621 = vld [vmem:[#allocation2 + $0xfe0] sm:$0xff]
    %v622 = vld [vmem:[#allocation2 + $0xfe8] sm:$0xff]
    %v623 = vld [vmem:[#allocation2 + $0xff0] sm:$0xff]
    %v624 = vld [vmem:[#allocation2 + $0xff8] sm:$0xff]
    %v625 = vld [vmem:[#allocation2 + $0x1000] sm:$0xff]
    %v626 = vld [vmem:[#allocation2 + $0x1008] sm:$0xff]
    %v627 = vld [vmem:[#allocation2 + $0x1010] sm:$0xff]
    %v628 = vld [vmem:[#allocation2 + $0x1018] sm:$0xff]
    %v629 = vld [vmem:[#allocation2 + $0x1020] sm:$0xff]
    %v630 = vld [vmem:[#allocation2 + $0x1028] sm:$0xff]
    %v631 = vld [vmem:[#allocation2 + $0x1030] sm:$0xff]
    %v632 = vld [vmem:[#allocation2 + $0x1038] sm:$0xff]
    %v633 = vld [vmem:[#allocation2 + $0x1040] sm:$0xff]
    %v634 = vld [vmem:[#allocation2 + $0x1048] sm:$0xff]
    %v635 = vld [vmem:[#allocation2 + $0x1050] sm:$0xff]
    %v636 = vld [vmem:[#allocation2 + $0x1058] sm:$0xff]
    %v637 = vld [vmem:[#allocation2 + $0x1060] sm:$0xff]
    %v638 = vld [vmem:[#allocation2 + $0x1068] sm:$0xff]
    %v639 = vld [vmem:[#allocation2 + $0x1070] sm:$0xff]
    %v640 = vld [vmem:[#allocation2 + $0x1078] sm:$0xff]
    %v641 = vld [vmem:[#allocation2 + $0x1080] sm:$0xff]
    %v642 = vld [vmem:[#allocation2 + $0x1088] sm:$0xff]
    %v643 = vld [vmem:[#allocation2 + $0x1090] sm:$0xff]
    %v644 = vld [vmem:[#allocation2 + $0x1098] sm:$0xff]
    %v645 = vld [vmem:[#allocation2 + $0x10a0] sm:$0xff]
    %v646 = vld [vmem:[#allocation2 + $0x10a8] sm:$0xff]
    %v647 = vld [vmem:[#allocation2 + $0x10b0] sm:$0xff]
    %v648 = vld [vmem:[#allocation2 + $0x10b8] sm:$0xff]
    %v649 = vld [vmem:[#allocation2 + $0x10c0] sm:$0xff]
    %v650 = vld [vmem:[#allocation2 + $0x10c8] sm:$0xff]
    %v651 = vld [vmem:[#allocation2 + $0x10d0] sm:$0xff]
    %v652 = vld [vmem:[#allocation2 + $0x10d8] sm:$0xff]
    %v653 = vld [vmem:[#allocation2 + $0x10e0] sm:$0xff]
    %v654 = vld [vmem:[#allocation2 + $0x10e8] sm:$0xff]
    %v655 = vld [vmem:[#allocation2 + $0x10f0] sm:$0xff]
    %v656 = vld [vmem:[#allocation2 + $0x10f8] sm:$0xff]
    %v657 = vld [vmem:[#allocation2 + $0x1100] sm:$0xff]
    %v658 = vld [vmem:[#allocation2 + $0x1108] sm:$0xff]
    %v659 = vld [vmem:[#allocation2 + $0x1110] sm:$0xff]
    %v660 = vld [vmem:[#allocation2 + $0x1118] sm:$0xff]
    %v661 = vld [vmem:[#allocation2 + $0x1120] sm:$0xff]
    %v662 = vld [vmem:[#allocation2 + $0x1128] sm:$0xff]
    %v663 = vld [vmem:[#allocation2 + $0x1130] sm:$0xff]
    %v664 = vld [vmem:[#allocation2 + $0x1138] sm:$0xff]
    %v665 = vld [vmem:[#allocation2 + $0x1140] sm:$0xff]
    %v666 = vld [vmem:[#allocation2 + $0x1148] sm:$0xff]
    %v667 = vld [vmem:[#allocation2 + $0x1150] sm:$0xff]
    %v668 = vld [vmem:[#allocation2 + $0x1158] sm:$0xff]
    %v669 = vld [vmem:[#allocation2 + $0x1160] sm:$0xff]
    %v670 = vld [vmem:[#allocation2 + $0x1168] sm:$0xff]
    %v671 = vld [vmem:[#allocation2 + $0x1170] sm:$0xff]
    %v672 = vld [vmem:[#allocation2 + $0x1178] sm:$0xff]
    %v673 = vld [vmem:[#allocation2 + $0x1180] sm:$0xff]
    %v674 = vld [vmem:[#allocation2 + $0x1188] sm:$0xff]
    %v675 = vld [vmem:[#allocation2 + $0x1190] sm:$0xff]
    %v676 = vld [vmem:[#allocation2 + $0x1198] sm:$0xff]
    %v677 = vld [vmem:[#allocation2 + $0x11a0] sm:$0xff]
    %v678 = vld [vmem:[#allocation2 + $0x11a8] sm:$0xff]
    %v679 = vld [vmem:[#allocation2 + $0x11b0] sm:$0xff]
    %v680 = vld [vmem:[#allocation2 + $0x11b8] sm:$0xff]
    %v681 = vld [vmem:[#allocation2 + $0x11c0] sm:$0xff]
    %v682 = vld [vmem:[#allocation2 + $0x11c8] sm:$0xff]
    %v683 = vld [vmem:[#allocation2 + $0x11d0] sm:$0xff]
    %v684 = vld [vmem:[#allocation2 + $0x11d8] sm:$0xff]
    %v685 = vld [vmem:[#allocation2 + $0x11e0] sm:$0xff]
    %v686 = vld [vmem:[#allocation2 + $0x11e8] sm:$0xff]
    %v687 = vld [vmem:[#allocation2 + $0x11f0] sm:$0xff]
    %v688 = vld [vmem:[#allocation2 + $0x11f8] sm:$0xff]
    %v689 = vld [vmem:[#allocation2 + $0x1200] sm:$0xff]
    %v690 = vld [vmem:[#allocation2 + $0x1208] sm:$0xff]
    %v691 = vld [vmem:[#allocation2 + $0x1210] sm:$0xff]
    %v692 = vld [vmem:[#allocation2 + $0x1218] sm:$0xff]
    %v693 = vld [vmem:[#allocation2 + $0x1220] sm:$0xff]
    %v694 = vld [vmem:[#allocation2 + $0x1228] sm:$0xff]
    %v695 = vld [vmem:[#allocation2 + $0x1230] sm:$0xff]
    %v696 = vld [vmem:[#allocation2 + $0x1238] sm:$0xff]
    %v697 = vld [vmem:[#allocation2 + $0x1240] sm:$0xff]
    %v698 = vld [vmem:[#allocation2 + $0x1248] sm:$0xff]
    %v699 = vld [vmem:[#allocation2 + $0x1250] sm:$0xff]
    %v700 = vld [vmem:[#allocation2 + $0x1258] sm:$0xff]
    %v701 = vld [vmem:[#allocation2 + $0x1260] sm:$0xff]
    %v702 = vld [vmem:[#allocation2 + $0x1268] sm:$0xff]
    %v703 = vld [vmem:[#allocation2 + $0x1270] sm:$0xff]
    %v704 = vld [vmem:[#allocation2 + $0x1278] sm:$0xff]
    %v705 = vld [vmem:[#allocation2 + $0x1280] sm:$0xff]
    %v706 = vld [vmem:[#allocation2 + $0x1288] sm:$0xff]
    %v707 = vld [vmem:[#allocation2 + $0x1290] sm:$0xff]
    %v708 = vld [vmem:[#allocation2 + $0x1298] sm:$0xff]
    %v709 = vld [vmem:[#allocation2 + $0x12a0] sm:$0xff]
    %v710 = vld [vmem:[#allocation2 + $0x12a8] sm:$0xff]
    %v711 = vld [vmem:[#allocation2 + $0x12b0] sm:$0xff]
    %v712 = vld [vmem:[#allocation2 + $0x12b8] sm:$0xff]
    %v713 = vld [vmem:[#allocation2 + $0x12c0] sm:$0xff]
    %v714 = vld [vmem:[#allocation2 + $0x12c8] sm:$0xff]
    %v715 = vld [vmem:[#allocation2 + $0x12d0] sm:$0xff]
    %v716 = vld [vmem:[#allocation2 + $0x12d8] sm:$0xff]
    %v717 = vld [vmem:[#allocation2 + $0x12e0] sm:$0xff]
    %v718 = vld [vmem:[#allocation2 + $0x12e8] sm:$0xff]
    %v719 = vld [vmem:[#allocation2 + $0x12f0] sm:$0xff]
    %v720 = vld [vmem:[#allocation2 + $0x12f8] sm:$0xff]
    %v721 = vld [vmem:[#allocation2 + $0x1300] sm:$0xff]
    %v722 = vld [vmem:[#allocation2 + $0x1308] sm:$0xff]
    %v723 = vld [vmem:[#allocation2 + $0x1310] sm:$0xff]
    %v724 = vld [vmem:[#allocation2 + $0x1318] sm:$0xff]
    %v725 = vld [vmem:[#allocation2 + $0x1320] sm:$0xff]
    %v726 = vld [vmem:[#allocation2 + $0x1328] sm:$0xff]
    %v727 = vld [vmem:[#allocation2 + $0x1330] sm:$0xff]
    %v728 = vld [vmem:[#allocation2 + $0x1338] sm:$0xff]
    %v729 = vld [vmem:[#allocation2 + $0x1340] sm:$0xff]
    %v730 = vld [vmem:[#allocation2 + $0x1348] sm:$0xff]
    %v731 = vld [vmem:[#allocation2 + $0x1350] sm:$0xff]
    %v732 = vld [vmem:[#allocation2 + $0x1358] sm:$0xff]
    %v733 = vld [vmem:[#allocation2 + $0x1360] sm:$0xff]
    %v734 = vld [vmem:[#allocation2 + $0x1368] sm:$0xff]
    %v735 = vld [vmem:[#allocation2 + $0x1370] sm:$0xff]
    %v736 = vld [vmem:[#allocation2 + $0x1378] sm:$0xff]
    %v737 = vld [vmem:[#allocation2 + $0x1380] sm:$0xff]
    %v738 = vld [vmem:[#allocation2 + $0x1388] sm:$0xff]
    %v739 = vld [vmem:[#allocation2 + $0x1390] sm:$0xff]
    %v740 = vld [vmem:[#allocation2 + $0x1398] sm:$0xff]
    %v741 = vld [vmem:[#allocation2 + $0x13a0] sm:$0xff]
    %v742 = vld [vmem:[#allocation2 + $0x13a8] sm:$0xff]
    %v743 = vld [vmem:[#allocation2 + $0x13b0] sm:$0xff]
    %v744 = vld [vmem:[#allocation2 + $0x13b8] sm:$0xff]
    %v745 = vld [vmem:[#allocation2 + $0x13c0] sm:$0xff]
    %v746 = vld [vmem:[#allocation2 + $0x13c8] sm:$0xff]
    %v747 = vld [vmem:[#allocation2 + $0x13d0] sm:$0xff]
    %v748 = vld [vmem:[#allocation2 + $0x13d8] sm:$0xff]
    %v749 = vld [vmem:[#allocation2 + $0x13e0] sm:$0xff]
    %v750 = vld [vmem:[#allocation2 + $0x13e8] sm:$0xff]
    %v751 = vld [vmem:[#allocation2 + $0x13f0] sm:$0xff]
    %v752 = vld [vmem:[#allocation2 + $0x13f8] sm:$0xff]
    %v753 = vld [vmem:[#allocation2 + $0x1400] sm:$0xff]
    %v754 = vld [vmem:[#allocation2 + $0x1408] sm:$0xff]
    %v755 = vld [vmem:[#allocation2 + $0x1410] sm:$0xff]
    %v756 = vld [vmem:[#allocation2 + $0x1418] sm:$0xff]
    %v757 = vld [vmem:[#allocation2 + $0x1420] sm:$0xff]
    %v758 = vld [vmem:[#allocation2 + $0x1428] sm:$0xff]
    %v759 = vld [vmem:[#allocation2 + $0x1430] sm:$0xff]
    %v760 = vld [vmem:[#allocation2 + $0x1438] sm:$0xff]
    %v761 = vld [vmem:[#allocation2 + $0x1440] sm:$0xff]
    %v762 = vld [vmem:[#allocation2 + $0x1448] sm:$0xff]
    %v763 = vld [vmem:[#allocation2 + $0x1450] sm:$0xff]
    %v764 = vld [vmem:[#allocation2 + $0x1458] sm:$0xff]
    %v765 = vld [vmem:[#allocation2 + $0x1460] sm:$0xff]
    %v766 = vld [vmem:[#allocation2 + $0x1468] sm:$0xff]
    %v767 = vld [vmem:[#allocation2 + $0x1470] sm:$0xff]
    %v768 = vld [vmem:[#allocation2 + $0x1478] sm:$0xff]
    %v769 = vld [vmem:[#allocation2 + $0x1480] sm:$0xff]
    %v770 = vld [vmem:[#allocation2 + $0x1488] sm:$0xff]
    %v771 = vld [vmem:[#allocation2 + $0x1490] sm:$0xff]
    %v772 = vld [vmem:[#allocation2 + $0x1498] sm:$0xff]
    %v773 = vld [vmem:[#allocation2 + $0x14a0] sm:$0xff]
    %v774 = vld [vmem:[#allocation2 + $0x14a8] sm:$0xff]
    %v775 = vld [vmem:[#allocation2 + $0x14b0] sm:$0xff]
    %v776 = vld [vmem:[#allocation2 + $0x14b8] sm:$0xff]
    %v777 = vld [vmem:[#allocation2 + $0x14c0] sm:$0xff]
    %v778 = vld [vmem:[#allocation2 + $0x14c8] sm:$0xff]
    %v779 = vld [vmem:[#allocation2 + $0x14d0] sm:$0xff]
    %v780 = vld [vmem:[#allocation2 + $0x14d8] sm:$0xff]
    %v781 = vld [vmem:[#allocation2 + $0x14e0] sm:$0xff]
    %v782 = vld [vmem:[#allocation2 + $0x14e8] sm:$0xff]
    %v783 = vld [vmem:[#allocation2 + $0x14f0] sm:$0xff]
    %v784 = vld [vmem:[#allocation2 + $0x14f8] sm:$0xff]
    %v785 = vld [vmem:[#allocation2 + $0x1500] sm:$0xff]
    %v786 = vld [vmem:[#allocation2 + $0x1508] sm:$0xff]
    %v787 = vld [vmem:[#allocation2 + $0x1510] sm:$0xff]
    %v788 = vld [vmem:[#allocation2 + $0x1518] sm:$0xff]
    %v789 = vld [vmem:[#allocation2 + $0x1520] sm:$0xff]
    %v790 = vld [vmem:[#allocation2 + $0x1528] sm:$0xff]
    %v791 = vld [vmem:[#allocation2 + $0x1530] sm:$0xff]
    %v792 = vld [vmem:[#allocation2 + $0x1538] sm:$0xff]
    %v793 = vld [vmem:[#allocation2 + $0x1540] sm:$0xff]
    %v794 = vld [vmem:[#allocation2 + $0x1548] sm:$0xff]
    %v795 = vld [vmem:[#allocation2 + $0x1550] sm:$0xff]
    %v796 = vld [vmem:[#allocation2 + $0x1558] sm:$0xff]
    %v797 = vld [vmem:[#allocation2 + $0x1560] sm:$0xff]
    %v798 = vld [vmem:[#allocation2 + $0x1568] sm:$0xff]
    %v799 = vld [vmem:[#allocation2 + $0x1570] sm:$0xff]
    %v800 = vld [vmem:[#allocation2 + $0x1578] sm:$0xff]
    %v801 = vld [vmem:[#allocation2 + $0x1580] sm:$0xff]
    %v802 = vld [vmem:[#allocation2 + $0x1588] sm:$0xff]
    %v803 = vld [vmem:[#allocation2 + $0x1590] sm:$0xff]
    %v804 = vld [vmem:[#allocation2 + $0x1598] sm:$0xff]
    %v805 = vld [vmem:[#allocation2 + $0x15a0] sm:$0xff]
    %v806 = vld [vmem:[#allocation2 + $0x15a8] sm:$0xff]
    %v807 = vld [vmem:[#allocation2 + $0x15b0] sm:$0xff]
    %v808 = vld [vmem:[#allocation2 + $0x15b8] sm:$0xff]
    %v809 = vld [vmem:[#allocation2 + $0x15c0] sm:$0xff]
    %v810 = vld [vmem:[#allocation2 + $0x15c8] sm:$0xff]
    %v811 = vld [vmem:[#allocation2 + $0x15d0] sm:$0xff]
    %v812 = vld [vmem:[#allocation2 + $0x15d8] sm:$0xff]
    %v813 = vld [vmem:[#allocation2 + $0x15e0] sm:$0xff]
    %v814 = vld [vmem:[#allocation2 + $0x15e8] sm:$0xff]
    %v815 = vld [vmem:[#allocation2 + $0x15f0] sm:$0xff]
    %v816 = vld [vmem:[#allocation2 + $0x15f8] sm:$0xff]
    %v817 = vld [vmem:[#allocation2 + $0x1600] sm:$0xff]
    %v818 = vld [vmem:[#allocation2 + $0x1608] sm:$0xff]
    %v819 = vld [vmem:[#allocation2 + $0x1610] sm:$0xff]
    %v820 = vld [vmem:[#allocation2 + $0x1618] sm:$0xff]
    %v821 = vld [vmem:[#allocation2 + $0x1620] sm:$0xff]
    %v822 = vld [vmem:[#allocation2 + $0x1628] sm:$0xff]
    %v823 = vld [vmem:[#allocation2 + $0x1630] sm:$0xff]
    %v824 = vld [vmem:[#allocation2 + $0x1638] sm:$0xff]
    %v825 = vld [vmem:[#allocation2 + $0x1640] sm:$0xff]
    %v826 = vld [vmem:[#allocation2 + $0x1648] sm:$0xff]
    %v827 = vld [vmem:[#allocation2 + $0x1650] sm:$0xff]
    %v828 = vld [vmem:[#allocation2 + $0x1658] sm:$0xff]
    %v829 = vld [vmem:[#allocation2 + $0x1660] sm:$0xff]
    %v830 = vld [vmem:[#allocation2 + $0x1668] sm:$0xff]
    %v831 = vld [vmem:[#allocation2 + $0x1670] sm:$0xff]
    %v832 = vld [vmem:[#allocation2 + $0x1678] sm:$0xff]
    %v833 = vld [vmem:[#allocation2 + $0x1680] sm:$0xff]
    %v834 = vld [vmem:[#allocation2 + $0x1688] sm:$0xff]
    %v835 = vld [vmem:[#allocation2 + $0x1690] sm:$0xff]
    %v836 = vld [vmem:[#allocation2 + $0x1698] sm:$0xff]
    %v837 = vld [vmem:[#allocation2 + $0x16a0] sm:$0xff]
    %v838 = vld [vmem:[#allocation2 + $0x16a8] sm:$0xff]
    %v839 = vld [vmem:[#allocation2 + $0x16b0] sm:$0xff]
    %v840 = vld [vmem:[#allocation2 + $0x16b8] sm:$0xff]
    %v841 = vld [vmem:[#allocation2 + $0x16c0] sm:$0xff]
    %v842 = vld [vmem:[#allocation2 + $0x16c8] sm:$0xff]
    %v843 = vld [vmem:[#allocation2 + $0x16d0] sm:$0xff]
    %v844 = vld [vmem:[#allocation2 + $0x16d8] sm:$0xff]
    %v845 = vld [vmem:[#allocation2 + $0x16e0] sm:$0xff]
    %v846 = vld [vmem:[#allocation2 + $0x16e8] sm:$0xff]
    %v847 = vld [vmem:[#allocation2 + $0x16f0] sm:$0xff]
    %v848 = vld [vmem:[#allocation2 + $0x16f8] sm:$0xff]
    %v849 = vld [vmem:[#allocation2 + $0x1700] sm:$0xff]
    %v850 = vld [vmem:[#allocation2 + $0x1708] sm:$0xff]
    %v851 = vld [vmem:[#allocation2 + $0x1710] sm:$0xff]
    %v852 = vld [vmem:[#allocation2 + $0x1718] sm:$0xff]
    %v853 = vld [vmem:[#allocation2 + $0x1720] sm:$0xff]
    %v854 = vld [vmem:[#allocation2 + $0x1728] sm:$0xff]
    %v855 = vld [vmem:[#allocation2 + $0x1730] sm:$0xff]
    %v856 = vld [vmem:[#allocation2 + $0x1738] sm:$0xff]
    %v857 = vld [vmem:[#allocation2 + $0x1740] sm:$0xff]
    %v858 = vld [vmem:[#allocation2 + $0x1748] sm:$0xff]
    %v859 = vld [vmem:[#allocation2 + $0x1750] sm:$0xff]
    %v860 = vld [vmem:[#allocation2 + $0x1758] sm:$0xff]
    %v861 = vld [vmem:[#allocation2 + $0x1760] sm:$0xff]
    %v862 = vld [vmem:[#allocation2 + $0x1768] sm:$0xff]
    %v863 = vld [vmem:[#allocation2 + $0x1770] sm:$0xff]
    %v864 = vld [vmem:[#allocation2 + $0x1778] sm:$0xff]
    %v865 = vld [vmem:[#allocation2 + $0x1780] sm:$0xff]
    %v866 = vld [vmem:[#allocation2 + $0x1788] sm:$0xff]
    %v867 = vld [vmem:[#allocation2 + $0x1790] sm:$0xff]
    %v868 = vld [vmem:[#allocation2 + $0x1798] sm:$0xff]
    %v869 = vld [vmem:[#allocation2 + $0x17a0] sm:$0xff]
    %v870 = vld [vmem:[#allocation2 + $0x17a8] sm:$0xff]
    %v871 = vld [vmem:[#allocation2 + $0x17b0] sm:$0xff]
    %v872 = vld [vmem:[#allocation2 + $0x17b8] sm:$0xff]
    %v873 = vld [vmem:[#allocation2 + $0x17c0] sm:$0xff]
    %v874 = vld [vmem:[#allocation2 + $0x17c8] sm:$0xff]
    %v875 = vld [vmem:[#allocation2 + $0x17d0] sm:$0xff]
    %v876 = vld [vmem:[#allocation2 + $0x17d8] sm:$0xff]
    %v877 = vld [vmem:[#allocation2 + $0x17e0] sm:$0xff]
    %v878 = vld [vmem:[#allocation2 + $0x17e8] sm:$0xff]
    %v879 = vld [vmem:[#allocation2 + $0x17f0] sm:$0xff]
    %v880 = vld [vmem:[#allocation2 + $0x17f8] sm:$0xff]
    %v881 = vld [vmem:[#allocation2 + $0x1800] sm:$0xff]
    %v882 = vld [vmem:[#allocation2 + $0x1808] sm:$0xff]
    %v883 = vld [vmem:[#allocation2 + $0x1810] sm:$0xff]
    %v884 = vld [vmem:[#allocation2 + $0x1818] sm:$0xff]
    %v885 = vld [vmem:[#allocation2 + $0x1820] sm:$0xff]
    %v886 = vld [vmem:[#allocation2 + $0x1828] sm:$0xff]
    %v887 = vld [vmem:[#allocation2 + $0x1830] sm:$0xff]
    %v888 = vld [vmem:[#allocation2 + $0x1838] sm:$0xff]
    %v889 = vld [vmem:[#allocation2 + $0x1840] sm:$0xff]
    %v890 = vld [vmem:[#allocation2 + $0x1848] sm:$0xff]
    %v891 = vld [vmem:[#allocation2 + $0x1850] sm:$0xff]
    %v892 = vld [vmem:[#allocation2 + $0x1858] sm:$0xff]
    %v893 = vld [vmem:[#allocation2 + $0x1860] sm:$0xff]
    %v894 = vld [vmem:[#allocation2 + $0x1868] sm:$0xff]
    %v895 = vld [vmem:[#allocation2 + $0x1870] sm:$0xff]
    %v896 = vld [vmem:[#allocation2 + $0x1878] sm:$0xff]
    %v897 = vld [vmem:[#allocation2 + $0x1880] sm:$0xff]
    %v898 = vld [vmem:[#allocation2 + $0x1888] sm:$0xff]
    %v899 = vld [vmem:[#allocation2 + $0x1890] sm:$0xff]
    %v900 = vld [vmem:[#allocation2 + $0x1898] sm:$0xff]
    %v901 = vld [vmem:[#allocation2 + $0x18a0] sm:$0xff]
    %v902 = vld [vmem:[#allocation2 + $0x18a8] sm:$0xff]
    %v903 = vld [vmem:[#allocation2 + $0x18b0] sm:$0xff]
    %v904 = vld [vmem:[#allocation2 + $0x18b8] sm:$0xff]
    %v905 = vld [vmem:[#allocation2 + $0x18c0] sm:$0xff]
    %v906 = vld [vmem:[#allocation2 + $0x18c8] sm:$0xff]
    %v907 = vld [vmem:[#allocation2 + $0x18d0] sm:$0xff]
    %v908 = vld [vmem:[#allocation2 + $0x18d8] sm:$0xff]
    %v909 = vld [vmem:[#allocation2 + $0x18e0] sm:$0xff]
    %v910 = vld [vmem:[#allocation2 + $0x18e8] sm:$0xff]
    %v911 = vld [vmem:[#allocation2 + $0x18f0] sm:$0xff]
    %v912 = vld [vmem:[#allocation2 + $0x18f8] sm:$0xff]
    %v913 = vld [vmem:[#allocation2 + $0x1900] sm:$0xff]
    %v914 = vld [vmem:[#allocation2 + $0x1908] sm:$0xff]
    %v915 = vld [vmem:[#allocation2 + $0x1910] sm:$0xff]
    %v916 = vld [vmem:[#allocation2 + $0x1918] sm:$0xff]
    %v917 = vld [vmem:[#allocation2 + $0x1920] sm:$0xff]
    %v918 = vld [vmem:[#allocation2 + $0x1928] sm:$0xff]
    %v919 = vld [vmem:[#allocation2 + $0x1930] sm:$0xff]
    %v920 = vld [vmem:[#allocation2 + $0x1938] sm:$0xff]
    %v921 = vld [vmem:[#allocation2 + $0x1940] sm:$0xff]
    %v922 = vld [vmem:[#allocation2 + $0x1948] sm:$0xff]
    %v923 = vld [vmem:[#allocation2 + $0x1950] sm:$0xff]
    %v924 = vld [vmem:[#allocation2 + $0x1958] sm:$0xff]
    %v925 = vld [vmem:[#allocation2 + $0x1960] sm:$0xff]
    %v926 = vld [vmem:[#allocation2 + $0x1968] sm:$0xff]
    %v927 = vld [vmem:[#allocation2 + $0x1970] sm:$0xff]
    %v928 = vld [vmem:[#allocation2 + $0x1978] sm:$0xff]
    %v929 = vld [vmem:[#allocation2 + $0x1980] sm:$0xff]
    %v930 = vld [vmem:[#allocation2 + $0x1988] sm:$0xff]
    %v931 = vld [vmem:[#allocation2 + $0x1990] sm:$0xff]
    %v932 = vld [vmem:[#allocation2 + $0x1998] sm:$0xff]
    %v933 = vld [vmem:[#allocation2 + $0x19a0] sm:$0xff]
    %v934 = vld [vmem:[#allocation2 + $0x19a8] sm:$0xff]
    %v935 = vld [vmem:[#allocation2 + $0x19b0] sm:$0xff]
    %v936 = vld [vmem:[#allocation2 + $0x19b8] sm:$0xff]
    %v937 = vld [vmem:[#allocation2 + $0x19c0] sm:$0xff]
    %v938 = vld [vmem:[#allocation2 + $0x19c8] sm:$0xff]
    %v939 = vld [vmem:[#allocation2 + $0x19d0] sm:$0xff]
    %v940 = vld [vmem:[#allocation2 + $0x19d8] sm:$0xff]
    %v941 = vld [vmem:[#allocation2 + $0x19e0] sm:$0xff]
    %v942 = vld [vmem:[#allocation2 + $0x19e8] sm:$0xff]
    %v943 = vld [vmem:[#allocation2 + $0x19f0] sm:$0xff]
    %v944 = vld [vmem:[#allocation2 + $0x19f8] sm:$0xff]
    %v945 = vld [vmem:[#allocation2 + $0x1a00] sm:$0xff]
    %v946 = vld [vmem:[#allocation2 + $0x1a08] sm:$0xff]
    %v947 = vld [vmem:[#allocation2 + $0x1a10] sm:$0xff]
    %v948 = vld [vmem:[#allocation2 + $0x1a18] sm:$0xff]
    %v949 = vld [vmem:[#allocation2 + $0x1a20] sm:$0xff]
    %v950 = vld [vmem:[#allocation2 + $0x1a28] sm:$0xff]
    %v951 = vld [vmem:[#allocation2 + $0x1a30] sm:$0xff]
    %v952 = vld [vmem:[#allocation2 + $0x1a38] sm:$0xff]
    %v953 = vld [vmem:[#allocation2 + $0x1a40] sm:$0xff]
    %v954 = vld [vmem:[#allocation2 + $0x1a48] sm:$0xff]
    %v955 = vld [vmem:[#allocation2 + $0x1a50] sm:$0xff]
    %v956 = vld [vmem:[#allocation2 + $0x1a58] sm:$0xff]
    %v957 = vld [vmem:[#allocation2 + $0x1a60] sm:$0xff]
    %v958 = vld [vmem:[#allocation2 + $0x1a68] sm:$0xff]
    %v959 = vld [vmem:[#allocation2 + $0x1a70] sm:$0xff]
    %v960 = vld [vmem:[#allocation2 + $0x1a78] sm:$0xff]
    %v961 = vld [vmem:[#allocation2 + $0x1a80] sm:$0xff]
    %v962 = vld [vmem:[#allocation2 + $0x1a88] sm:$0xff]
    %v963 = vld [vmem:[#allocation2 + $0x1a90] sm:$0xff]
    %v964 = vld [vmem:[#allocation2 + $0x1a98] sm:$0xff]
    %v965 = vld [vmem:[#allocation2 + $0x1aa0] sm:$0xff]
    %v966 = vld [vmem:[#allocation2 + $0x1aa8] sm:$0xff]
    %v967 = vld [vmem:[#allocation2 + $0x1ab0] sm:$0xff]
    %v968 = vld [vmem:[#allocation2 + $0x1ab8] sm:$0xff]
    %v969 = vld [vmem:[#allocation2 + $0x1ac0] sm:$0xff]
    %v970 = vld [vmem:[#allocation2 + $0x1ac8] sm:$0xff]
    %v971 = vld [vmem:[#allocation2 + $0x1ad0] sm:$0xff]
    %v972 = vld [vmem:[#allocation2 + $0x1ad8] sm:$0xff]
    %v973 = vld [vmem:[#allocation2 + $0x1ae0] sm:$0xff]
    %v974 = vld [vmem:[#allocation2 + $0x1ae8] sm:$0xff]
    %v975 = vld [vmem:[#allocation2 + $0x1af0] sm:$0xff]
    %v976 = vld [vmem:[#allocation2 + $0x1af8] sm:$0xff]
    %v977 = vld [vmem:[#allocation2 + $0x1b00] sm:$0xff]
    %v978 = vld [vmem:[#allocation2 + $0x1b08] sm:$0xff]
    %v979 = vld [vmem:[#allocation2 + $0x1b10] sm:$0xff]
    %v980 = vld [vmem:[#allocation2 + $0x1b18] sm:$0xff]
    %v981 = vld [vmem:[#allocation2 + $0x1b20] sm:$0xff]
    %v982 = vld [vmem:[#allocation2 + $0x1b28] sm:$0xff]
    %v983 = vld [vmem:[#allocation2 + $0x1b30] sm:$0xff]
    %v984 = vld [vmem:[#allocation2 + $0x1b38] sm:$0xff]
    %v985 = vld [vmem:[#allocation2 + $0x1b40] sm:$0xff]
    %v986 = vld [vmem:[#allocation2 + $0x1b48] sm:$0xff]
    %v987 = vld [vmem:[#allocation2 + $0x1b50] sm:$0xff]
    %v988 = vld [vmem:[#allocation2 + $0x1b58] sm:$0xff]
    %v989 = vld [vmem:[#allocation2 + $0x1b60] sm:$0xff]
    %v990 = vld [vmem:[#allocation2 + $0x1b68] sm:$0xff]
    %v991 = vld [vmem:[#allocation2 + $0x1b70] sm:$0xff]
    %v992 = vld [vmem:[#allocation2 + $0x1b78] sm:$0xff]
    %v993 = vld [vmem:[#allocation2 + $0x1b80] sm:$0xff]
    %v994 = vld [vmem:[#allocation2 + $0x1b88] sm:$0xff]
    %v995 = vld [vmem:[#allocation2 + $0x1b90] sm:$0xff]
    %v996 = vld [vmem:[#allocation2 + $0x1b98] sm:$0xff]
    %v997 = vld [vmem:[#allocation2 + $0x1ba0] sm:$0xff]
    %v998 = vld [vmem:[#allocation2 + $0x1ba8] sm:$0xff]
    %v999 = vld [vmem:[#allocation2 + $0x1bb0] sm:$0xff]
    %v1000 = vld [vmem:[#allocation2 + $0x1bb8] sm:$0xff]
    %v1001 = vld [vmem:[#allocation2 + $0x1bc0] sm:$0xff]
    %v1002 = vld [vmem:[#allocation2 + $0x1bc8] sm:$0xff]
    %v1003 = vld [vmem:[#allocation2 + $0x1bd0] sm:$0xff]
    %v1004 = vld [vmem:[#allocation2 + $0x1bd8] sm:$0xff]
    %v1005 = vld [vmem:[#allocation2 + $0x1be0] sm:$0xff]
    %v1006 = vld [vmem:[#allocation2 + $0x1be8] sm:$0xff]
    %v1007 = vld [vmem:[#allocation2 + $0x1bf0] sm:$0xff]
    %v1008 = vld [vmem:[#allocation2 + $0x1bf8] sm:$0xff]
    %v1009 = vld [vmem:[#allocation2 + $0x1c00] sm:$0xff]
    %v1010 = vld [vmem:[#allocation2 + $0x1c08] sm:$0xff]
    %v1011 = vld [vmem:[#allocation2 + $0x1c10] sm:$0xff]
    %v1012 = vld [vmem:[#allocation2 + $0x1c18] sm:$0xff]
    %v1013 = vld [vmem:[#allocation2 + $0x1c20] sm:$0xff]
    %v1014 = vld [vmem:[#allocation2 + $0x1c28] sm:$0xff]
    %v1015 = vld [vmem:[#allocation2 + $0x1c30] sm:$0xff]
    %v1016 = vld [vmem:[#allocation2 + $0x1c38] sm:$0xff]
    %v1017 = vld [vmem:[#allocation2 + $0x1c40] sm:$0xff]
    %v1018 = vld [vmem:[#allocation2 + $0x1c48] sm:$0xff]
    %v1019 = vld [vmem:[#allocation2 + $0x1c50] sm:$0xff]
    %v1020 = vld [vmem:[#allocation2 + $0x1c58] sm:$0xff]
    %v1021 = vld [vmem:[#allocation2 + $0x1c60] sm:$0xff]
    %v1022 = vld [vmem:[#allocation2 + $0x1c68] sm:$0xff]
    %v1023 = vld [vmem:[#allocation2 + $0x1c70] sm:$0xff]
    %v1024 = vld [vmem:[#allocation2 + $0x1c78] sm:$0xff]
    %v1025 = vld [vmem:[#allocation2 + $0x1c80] sm:$0xff]
    %v1026 = vld [vmem:[#allocation2 + $0x1c88] sm:$0xff]
    %v1027 = vld [vmem:[#allocation2 + $0x1c90] sm:$0xff]
    %v1028 = vld [vmem:[#allocation2 + $0x1c98] sm:$0xff]
    %v1029 = vld [vmem:[#allocation2 + $0x1ca0] sm:$0xff]
    %v1030 = vld [vmem:[#allocation2 + $0x1ca8] sm:$0xff]
    %v1031 = vld [vmem:[#allocation2 + $0x1cb0] sm:$0xff]
    %v1032 = vld [vmem:[#allocation2 + $0x1cb8] sm:$0xff]
    %v1033 = vld [vmem:[#allocation2 + $0x1cc0] sm:$0xff]
    %v1034 = vld [vmem:[#allocation2 + $0x1cc8] sm:$0xff]
    %v1035 = vld [vmem:[#allocation2 + $0x1cd0] sm:$0xff]
    %v1036 = vld [vmem:[#allocation2 + $0x1cd8] sm:$0xff]
    %v1037 = vld [vmem:[#allocation2 + $0x1ce0] sm:$0xff]
    %v1038 = vld [vmem:[#allocation2 + $0x1ce8] sm:$0xff]
    %v1039 = vld [vmem:[#allocation2 + $0x1cf0] sm:$0xff]
    %v1040 = vld [vmem:[#allocation2 + $0x1cf8] sm:$0xff]
    %v1041 = vld [vmem:[#allocation2 + $0x1d00] sm:$0xff]
    %v1042 = vld [vmem:[#allocation2 + $0x1d08] sm:$0xff]
    %v1043 = vld [vmem:[#allocation2 + $0x1d10] sm:$0xff]
    %v1044 = vld [vmem:[#allocation2 + $0x1d18] sm:$0xff]
    %v1045 = vld [vmem:[#allocation2 + $0x1d20] sm:$0xff]
    %v1046 = vld [vmem:[#allocation2 + $0x1d28] sm:$0xff]
    %v1047 = vld [vmem:[#allocation2 + $0x1d30] sm:$0xff]
    %v1048 = vld [vmem:[#allocation2 + $0x1d38] sm:$0xff]
    %v1049 = vld [vmem:[#allocation2 + $0x1d40] sm:$0xff]
    %v1050 = vld [vmem:[#allocation2 + $0x1d48] sm:$0xff]
    %v1051 = vld [vmem:[#allocation2 + $0x1d50] sm:$0xff]
    %v1052 = vld [vmem:[#allocation2 + $0x1d58] sm:$0xff]
    %v1053 = vld [vmem:[#allocation2 + $0x1d60] sm:$0xff]
    %v1054 = vld [vmem:[#allocation2 + $0x1d68] sm:$0xff]
    %v1055 = vld [vmem:[#allocation2 + $0x1d70] sm:$0xff]
    %v1056 = vld [vmem:[#allocation2 + $0x1d78] sm:$0xff]
    %v1057 = vld [vmem:[#allocation2 + $0x1d80] sm:$0xff]
    %v1058 = vld [vmem:[#allocation2 + $0x1d88] sm:$0xff]
    %v1059 = vld [vmem:[#allocation2 + $0x1d90] sm:$0xff]
    %v1060 = vld [vmem:[#allocation2 + $0x1d98] sm:$0xff]
    %v1061 = vld [vmem:[#allocation2 + $0x1da0] sm:$0xff]
    %v1062 = vld [vmem:[#allocation2 + $0x1da8] sm:$0xff]
    %v1063 = vld [vmem:[#allocation2 + $0x1db0] sm:$0xff]
    %v1064 = vld [vmem:[#allocation2 + $0x1db8] sm:$0xff]
    %v1065 = vld [vmem:[#allocation2 + $0x1dc0] sm:$0xff]
    %v1066 = vld [vmem:[#allocation2 + $0x1dc8] sm:$0xff]
    %v1067 = vld [vmem:[#allocation2 + $0x1dd0] sm:$0xff]
    %v1068 = vld [vmem:[#allocation2 + $0x1dd8] sm:$0xff]
    %v1069 = vld [vmem:[#allocation2 + $0x1de0] sm:$0xff]
    %v1070 = vld [vmem:[#allocation2 + $0x1de8] sm:$0xff]
    %v1071 = vld [vmem:[#allocation2 + $0x1df0] sm:$0xff]
    %v1072 = vld [vmem:[#allocation2 + $0x1df8] sm:$0xff]
    %v1073 = vld [vmem:[#allocation2 + $0x1e00] sm:$0xff]
    %v1074 = vld [vmem:[#allocation2 + $0x1e08] sm:$0xff]
    %v1075 = vld [vmem:[#allocation2 + $0x1e10] sm:$0xff]
    %v1076 = vld [vmem:[#allocation2 + $0x1e18] sm:$0xff]
    %v1077 = vld [vmem:[#allocation2 + $0x1e20] sm:$0xff]
    %v1078 = vld [vmem:[#allocation2 + $0x1e28] sm:$0xff]
    %v1079 = vld [vmem:[#allocation2 + $0x1e30] sm:$0xff]
    %v1080 = vld [vmem:[#allocation2 + $0x1e38] sm:$0xff]
    %v1081 = vld [vmem:[#allocation2 + $0x1e40] sm:$0xff]
    %v1082 = vld [vmem:[#allocation2 + $0x1e48] sm:$0xff]
    %v1083 = vld [vmem:[#allocation2 + $0x1e50] sm:$0xff]
    %v1084 = vld [vmem:[#allocation2 + $0x1e58] sm:$0xff]
    %v1085 = vld [vmem:[#allocation2 + $0x1e60] sm:$0xff]
    %v1086 = vld [vmem:[#allocation2 + $0x1e68] sm:$0xff]
    %v1087 = vld [vmem:[#allocation2 + $0x1e70] sm:$0xff]
    %v1088 = vld [vmem:[#allocation2 + $0x1e78] sm:$0xff]
    %v1089 = vld [vmem:[#allocation2 + $0x1e80] sm:$0xff]
    %v1090 = vld [vmem:[#allocation2 + $0x1e88] sm:$0xff]
    %v1091 = vld [vmem:[#allocation2 + $0x1e90] sm:$0xff]
    %v1092 = vld [vmem:[#allocation2 + $0x1e98] sm:$0xff]
    %v1093 = vld [vmem:[#allocation2 + $0x1ea0] sm:$0xff]
    %v1094 = vld [vmem:[#allocation2 + $0x1ea8] sm:$0xff]
    %v1095 = vld [vmem:[#allocation2 + $0x1eb0] sm:$0xff]
    %v1096 = vld [vmem:[#allocation2 + $0x1eb8] sm:$0xff]
    %v1097 = vld [vmem:[#allocation2 + $0x1ec0] sm:$0xff]
    %v1098 = vld [vmem:[#allocation2 + $0x1ec8] sm:$0xff]
    %v1099 = vld [vmem:[#allocation2 + $0x1ed0] sm:$0xff]
    %v1100 = vld [vmem:[#allocation2 + $0x1ed8] sm:$0xff]
    %v1101 = vld [vmem:[#allocation2 + $0x1ee0] sm:$0xff]
    %v1102 = vld [vmem:[#allocation2 + $0x1ee8] sm:$0xff]
    %v1103 = vld [vmem:[#allocation2 + $0x1ef0] sm:$0xff]
    %v1104 = vld [vmem:[#allocation2 + $0x1ef8] sm:$0xff]
    %v1105 = vld [vmem:[#allocation2 + $0x1f00] sm:$0xff]
    %v1106 = vld [vmem:[#allocation2 + $0x1f08] sm:$0xff]
    %v1107 = vld [vmem:[#allocation2 + $0x1f10] sm:$0xff]
    %v1108 = vld [vmem:[#allocation2 + $0x1f18] sm:$0xff]
    %v1109 = vld [vmem:[#allocation2 + $0x1f20] sm:$0xff]
    %v1110 = vld [vmem:[#allocation2 + $0x1f28] sm:$0xff]
    %v1111 = vld [vmem:[#allocation2 + $0x1f30] sm:$0xff]
    %v1112 = vld [vmem:[#allocation2 + $0x1f38] sm:$0xff]
    %v1113 = vld [vmem:[#allocation2 + $0x1f40] sm:$0xff]
    %v1114 = vld [vmem:[#allocation2 + $0x1f48] sm:$0xff]
    %v1115 = vld [vmem:[#allocation2 + $0x1f50] sm:$0xff]
    %v1116 = vld [vmem:[#allocation2 + $0x1f58] sm:$0xff]
    %v1117 = vld [vmem:[#allocation2 + $0x1f60] sm:$0xff]
    %v1118 = vld [vmem:[#allocation2 + $0x1f68] sm:$0xff]
    %v1119 = vld [vmem:[#allocation2 + $0x1f70] sm:$0xff]
    %v1120 = vld [vmem:[#allocation2 + $0x1f78] sm:$0xff]
    %v1121 = vld [vmem:[#allocation2 + $0x1f80] sm:$0xff]
    %v1122 = vld [vmem:[#allocation2 + $0x1f88] sm:$0xff]
    %v1123 = vld [vmem:[#allocation2 + $0x1f90] sm:$0xff]
    %v1124 = vld [vmem:[#allocation2 + $0x1f98] sm:$0xff]
    %v1125 = vld [vmem:[#allocation2 + $0x1fa0] sm:$0xff]
    %v1126 = vld [vmem:[#allocation2 + $0x1fa8] sm:$0xff]
    %v1127 = vld [vmem:[#allocation2 + $0x1fb0] sm:$0xff]
    %v1128 = vld [vmem:[#allocation2 + $0x1fb8] sm:$0xff]
    %v1129 = vld [vmem:[#allocation2 + $0x1fc0] sm:$0xff]
    %v1130 = vld [vmem:[#allocation2 + $0x1fc8] sm:$0xff]
    %v1131 = vld [vmem:[#allocation2 + $0x1fd0] sm:$0xff]
    %v1132 = vld [vmem:[#allocation2 + $0x1fd8] sm:$0xff]
    %v1133 = vld [vmem:[#allocation2 + $0x1fe0] sm:$0xff]
    %v1134 = vld [vmem:[#allocation2 + $0x1fe8] sm:$0xff]
    %v1135 = vld [vmem:[#allocation2 + $0x1ff0] sm:$0xff]
    %v1136 = vld [vmem:[#allocation2 + $0x1ff8] sm:$0xff]
    %v1137 = vld [vmem:[#allocation2 + $0x2000] sm:$0xff]
    %v1138 = vld [vmem:[#allocation2 + $0x2008] sm:$0xff]
    %v1139 = vld [vmem:[#allocation2 + $0x2010] sm:$0xff]
    %v1140 = vld [vmem:[#allocation2 + $0x2018] sm:$0xff]
    %v1141 = vld [vmem:[#allocation2 + $0x2020] sm:$0xff]
    %v1142 = vld [vmem:[#allocation2 + $0x2028] sm:$0xff]
    %v1143 = vld [vmem:[#allocation2 + $0x2030] sm:$0xff]
    %v1144 = vld [vmem:[#allocation2 + $0x2038] sm:$0xff]
    %v1145 = vld [vmem:[#allocation2 + $0x2040] sm:$0xff]
    %v1146 = vld [vmem:[#allocation2 + $0x2048] sm:$0xff]
    %v1147 = vld [vmem:[#allocation2 + $0x2050] sm:$0xff]
    %v1148 = vld [vmem:[#allocation2 + $0x2058] sm:$0xff]
    %v1149 = vld [vmem:[#allocation2 + $0x2060] sm:$0xff]
    %v1150 = vld [vmem:[#allocation2 + $0x2068] sm:$0xff]
    %v1151 = vld [vmem:[#allocation2 + $0x2070] sm:$0xff]
    %v1152 = vld [vmem:[#allocation2 + $0x2078] sm:$0xff]
    %v1153 = vld [vmem:[#allocation2 + $0x2080] sm:$0xff]
    %v1154 = vld [vmem:[#allocation2 + $0x2088] sm:$0xff]
    %v1155 = vld [vmem:[#allocation2 + $0x2090] sm:$0xff]
    %v1156 = vld [vmem:[#allocation2 + $0x2098] sm:$0xff]
    %v1157 = vld [vmem:[#allocation2 + $0x20a0] sm:$0xff]
    %v1158 = vld [vmem:[#allocation2 + $0x20a8] sm:$0xff]
    %v1159 = vld [vmem:[#allocation2 + $0x20b0] sm:$0xff]
    %v1160 = vld [vmem:[#allocation2 + $0x20b8] sm:$0xff]
    %v1161 = vld [vmem:[#allocation2 + $0x20c0] sm:$0xff]
    %v1162 = vld [vmem:[#allocation2 + $0x20c8] sm:$0xff]
    %v1163 = vld [vmem:[#allocation2 + $0x20d0] sm:$0xff]
    %v1164 = vld [vmem:[#allocation2 + $0x20d8] sm:$0xff]
    %v1165 = vld [vmem:[#allocation2 + $0x20e0] sm:$0xff]
    %v1166 = vld [vmem:[#allocation2 + $0x20e8] sm:$0xff]
    %v1167 = vld [vmem:[#allocation2 + $0x20f0] sm:$0xff]
    %v1168 = vld [vmem:[#allocation2 + $0x20f8] sm:$0xff]
    %v1169 = vld [vmem:[#allocation2 + $0x2100] sm:$0xff]
    %v1170 = vld [vmem:[#allocation2 + $0x2108] sm:$0xff]
    %v1171 = vld [vmem:[#allocation2 + $0x2110] sm:$0xff]
    %v1172 = vld [vmem:[#allocation2 + $0x2118] sm:$0xff]
    %v1173 = vld [vmem:[#allocation2 + $0x2120] sm:$0xff]
    %v1174 = vld [vmem:[#allocation2 + $0x2128] sm:$0xff]
    %v1175 = vld [vmem:[#allocation2 + $0x2130] sm:$0xff]
    %v1176 = vld [vmem:[#allocation2 + $0x2138] sm:$0xff]
    %v1177 = vld [vmem:[#allocation2 + $0x2140] sm:$0xff]
    %v1178 = vld [vmem:[#allocation2 + $0x2148] sm:$0xff]
    %v1179 = vld [vmem:[#allocation2 + $0x2150] sm:$0xff]
    %v1180 = vld [vmem:[#allocation2 + $0x2158] sm:$0xff]
    %v1181 = vld [vmem:[#allocation2 + $0x2160] sm:$0xff]
    %v1182 = vld [vmem:[#allocation2 + $0x2168] sm:$0xff]
    %v1183 = vld [vmem:[#allocation2 + $0x2170] sm:$0xff]
    %v1184 = vld [vmem:[#allocation2 + $0x2178] sm:$0xff]
    %v1185 = vld [vmem:[#allocation2 + $0x2180] sm:$0xff]
    %v1186 = vld [vmem:[#allocation2 + $0x2188] sm:$0xff]
    %v1187 = vld [vmem:[#allocation2 + $0x2190] sm:$0xff]
    %v1188 = vld [vmem:[#allocation2 + $0x2198] sm:$0xff]
    %v1189 = vld [vmem:[#allocation2 + $0x21a0] sm:$0xff]
    %v1190 = vld [vmem:[#allocation2 + $0x21a8] sm:$0xff]
    %v1191 = vld [vmem:[#allocation2 + $0x21b0] sm:$0xff]
    %v1192 = vld [vmem:[#allocation2 + $0x21b8] sm:$0xff]
    %v1193 = vld [vmem:[#allocation2 + $0x21c0] sm:$0xff]
    %v1194 = vld [vmem:[#allocation2 + $0x21c8] sm:$0xff]
    %v1195 = vld [vmem:[#allocation2 + $0x21d0] sm:$0xff]
    %v1196 = vld [vmem:[#allocation2 + $0x21d8] sm:$0xff]
    %v1197 = vld [vmem:[#allocation2 + $0x21e0] sm:$0xff]
    %v1198 = vld [vmem:[#allocation2 + $0x21e8] sm:$0xff]
    %v1199 = vld [vmem:[#allocation2 + $0x21f0] sm:$0xff]
    %v1200 = vld [vmem:[#allocation2 + $0x21f8] sm:$0xff]
    %v1201 = vld [vmem:[#allocation2 + $0x2200] sm:$0xff]
    %v1202 = vld [vmem:[#allocation2 + $0x2208] sm:$0xff]
    %v1203 = vld [vmem:[#allocation2 + $0x2210] sm:$0xff]
    %v1204 = vld [vmem:[#allocation2 + $0x2218] sm:$0xff]
    %v1205 = vld [vmem:[#allocation2 + $0x2220] sm:$0xff]
    %v1206 = vld [vmem:[#allocation2 + $0x2228] sm:$0xff]
    %v1207 = vld [vmem:[#allocation2 + $0x2230] sm:$0xff]
    %v1208 = vld [vmem:[#allocation2 + $0x2238] sm:$0xff]
    %v1209 = vld [vmem:[#allocation2 + $0x2240] sm:$0xff]
    %v1210 = vld [vmem:[#allocation2 + $0x2248] sm:$0xff]
    %v1211 = vld [vmem:[#allocation2 + $0x2250] sm:$0xff]
    %v1212 = vld [vmem:[#allocation2 + $0x2258] sm:$0xff]
    %v1213 = vld [vmem:[#allocation2 + $0x2260] sm:$0xff]
    %v1214 = vld [vmem:[#allocation2 + $0x2268] sm:$0xff]
    %v1215 = vld [vmem:[#allocation2 + $0x2270] sm:$0xff]
    %v1216 = vld [vmem:[#allocation2 + $0x2278] sm:$0xff]
    %v1217 = vld [vmem:[#allocation2 + $0x2280] sm:$0xff]
    %v1218 = vld [vmem:[#allocation2 + $0x2288] sm:$0xff]
    %v1219 = vld [vmem:[#allocation2 + $0x2290] sm:$0xff]
    %v1220 = vld [vmem:[#allocation2 + $0x2298] sm:$0xff]
    %v1221 = vld [vmem:[#allocation2 + $0x22a0] sm:$0xff]
    %v1222 = vld [vmem:[#allocation2 + $0x22a8] sm:$0xff]
    %v1223 = vld [vmem:[#allocation2 + $0x22b0] sm:$0xff]
    %v1224 = vld [vmem:[#allocation2 + $0x22b8] sm:$0xff]
    %v1225 = vld [vmem:[#allocation2 + $0x22c0] sm:$0xff]
    %v1226 = vld [vmem:[#allocation2 + $0x22c8] sm:$0xff]
    %v1227 = vld [vmem:[#allocation2 + $0x22d0] sm:$0xff]
    %v1228 = vld [vmem:[#allocation2 + $0x22d8] sm:$0xff]
    %v1229 = vld [vmem:[#allocation2 + $0x22e0] sm:$0xff]
    %v1230 = vld [vmem:[#allocation2 + $0x22e8] sm:$0xff]
    %v1231 = vld [vmem:[#allocation2 + $0x22f0] sm:$0xff]
    %v1232 = vld [vmem:[#allocation2 + $0x22f8] sm:$0xff]
    %v1233 = vld [vmem:[#allocation2 + $0x2300] sm:$0xff]
    %v1234 = vld [vmem:[#allocation2 + $0x2308] sm:$0xff]
    %v1235 = vld [vmem:[#allocation2 + $0x2310] sm:$0xff]
    %v1236 = vld [vmem:[#allocation2 + $0x2318] sm:$0xff]
    %v1237 = vld [vmem:[#allocation2 + $0x2320] sm:$0xff]
    %v1238 = vld [vmem:[#allocation2 + $0x2328] sm:$0xff]
    %v1239 = vld [vmem:[#allocation2 + $0x2330] sm:$0xff]
    %v1240 = vld [vmem:[#allocation2 + $0x2338] sm:$0xff]
    %v1241 = vld [vmem:[#allocation2 + $0x2340] sm:$0xff]
    %v1242 = vld [vmem:[#allocation2 + $0x2348] sm:$0xff]
    %v1243 = vld [vmem:[#allocation2 + $0x2350] sm:$0xff]
    %v1244 = vld [vmem:[#allocation2 + $0x2358] sm:$0xff]
    %v1245 = vld [vmem:[#allocation2 + $0x2360] sm:$0xff]
    %v1246 = vld [vmem:[#allocation2 + $0x2368] sm:$0xff]
    %v1247 = vld [vmem:[#allocation2 + $0x2370] sm:$0xff]
    %v1248 = vld [vmem:[#allocation2 + $0x2378] sm:$0xff]
    %v1249 = vld [vmem:[#allocation2 + $0x2380] sm:$0xff]
    %v1250 = vld [vmem:[#allocation2 + $0x2388] sm:$0xff]
    %v1251 = vld [vmem:[#allocation2 + $0x2390] sm:$0xff]
    %v1252 = vld [vmem:[#allocation2 + $0x2398] sm:$0xff]
    %v1253 = vld [vmem:[#allocation2 + $0x23a0] sm:$0xff]
    %v1254 = vld [vmem:[#allocation2 + $0x23a8] sm:$0xff]
    %v1255 = vld [vmem:[#allocation2 + $0x23b0] sm:$0xff]
    %v1256 = vld [vmem:[#allocation2 + $0x23b8] sm:$0xff]
    %v1257 = vld [vmem:[#allocation2 + $0x23c0] sm:$0xff]
    %v1258 = vld [vmem:[#allocation2 + $0x23c8] sm:$0xff]
    %v1259 = vld [vmem:[#allocation2 + $0x23d0] sm:$0xff]
    %v1260 = vld [vmem:[#allocation2 + $0x23d8] sm:$0xff]
    %v1261 = vld [vmem:[#allocation2 + $0x23e0] sm:$0xff]
    %v1262 = vld [vmem:[#allocation2 + $0x23e8] sm:$0xff]
    %v1263 = vld [vmem:[#allocation2 + $0x23f0] sm:$0xff]
    %v1264 = vld [vmem:[#allocation2 + $0x23f8] sm:$0xff]
    %v1265 = vld [vmem:[#allocation2 + $0x2400] sm:$0xff]
    %v1266 = vld [vmem:[#allocation2 + $0x2408] sm:$0xff]
    %v1267 = vld [vmem:[#allocation2 + $0x2410] sm:$0xff]
    %v1268 = vld [vmem:[#allocation2 + $0x2418] sm:$0xff]
    %v1269 = vld [vmem:[#allocation2 + $0x2420] sm:$0xff]
    %v1270 = vld [vmem:[#allocation2 + $0x2428] sm:$0xff]
    %v1271 = vld [vmem:[#allocation2 + $0x2430] sm:$0xff]
    %v1272 = vld [vmem:[#allocation2 + $0x2438] sm:$0xff]
    %v1273 = vld [vmem:[#allocation2 + $0x2440] sm:$0xff]
    %v1274 = vld [vmem:[#allocation2 + $0x2448] sm:$0xff]
    %v1275 = vld [vmem:[#allocation2 + $0x2450] sm:$0xff]
    %v1276 = vld [vmem:[#allocation2 + $0x2458] sm:$0xff]
    %v1277 = vld [vmem:[#allocation2 + $0x2460] sm:$0xff]
    %v1278 = vld [vmem:[#allocation2 + $0x2468] sm:$0xff]
    %v1279 = vld [vmem:[#allocation2 + $0x2470] sm:$0xff]
    %v1280 = vld [vmem:[#allocation2 + $0x2478] sm:$0xff]
    %v1281 = vld [vmem:[#allocation2 + $0x2480] sm:$0xff]
    %v1282 = vld [vmem:[#allocation2 + $0x2488] sm:$0xff]
    %v1283 = vld [vmem:[#allocation2 + $0x2490] sm:$0xff]
    %v1284 = vld [vmem:[#allocation2 + $0x2498] sm:$0xff]
    %v1285 = vld [vmem:[#allocation2 + $0x24a0] sm:$0xff]
    %v1286 = vld [vmem:[#allocation2 + $0x24a8] sm:$0xff]
    %v1287 = vld [vmem:[#allocation2 + $0x24b0] sm:$0xff]
    %v1288 = vld [vmem:[#allocation2 + $0x24b8] sm:$0xff]
    %v1289 = vld [vmem:[#allocation2 + $0x24c0] sm:$0xff]
    %v1290 = vld [vmem:[#allocation2 + $0x24c8] sm:$0xff]
    %v1291 = vld [vmem:[#allocation2 + $0x24d0] sm:$0xff]
    %v1292 = vld [vmem:[#allocation2 + $0x24d8] sm:$0xff]
    %v1293 = vld [vmem:[#allocation2 + $0x24e0] sm:$0xff]
    %v1294 = vld [vmem:[#allocation2 + $0x24e8] sm:$0xff]
    %v1295 = vld [vmem:[#allocation2 + $0x24f0] sm:$0xff]
    %v1296 = vld [vmem:[#allocation2 + $0x24f8] sm:$0xff]
    %v1297 = vld [vmem:[#allocation2 + $0x2500] sm:$0xff]
    %v1298 = vld [vmem:[#allocation2 + $0x2508] sm:$0xff]
    %v1299 = vld [vmem:[#allocation2 + $0x2510] sm:$0xff]
    %v1300 = vld [vmem:[#allocation2 + $0x2518] sm:$0xff]
    %v1301 = vld [vmem:[#allocation2 + $0x2520] sm:$0xff]
    %v1302 = vld [vmem:[#allocation2 + $0x2528] sm:$0xff]
    %v1303 = vld [vmem:[#allocation2 + $0x2530] sm:$0xff]
    %v1304 = vld [vmem:[#allocation2 + $0x2538] sm:$0xff]
    %v1305 = vld [vmem:[#allocation2 + $0x2540] sm:$0xff]
    %v1306 = vld [vmem:[#allocation2 + $0x2548] sm:$0xff]
    %v1307 = vld [vmem:[#allocation2 + $0x2550] sm:$0xff]
    %v1308 = vld [vmem:[#allocation2 + $0x2558] sm:$0xff]
    %v1309 = vld [vmem:[#allocation2 + $0x2560] sm:$0xff]
    %v1310 = vld [vmem:[#allocation2 + $0x2568] sm:$0xff]
    %v1311 = vld [vmem:[#allocation2 + $0x2570] sm:$0xff]
    %v1312 = vld [vmem:[#allocation2 + $0x2578] sm:$0xff]
    %v1313 = vld [vmem:[#allocation2 + $0x2580] sm:$0xff]
    %v1314 = vld [vmem:[#allocation2 + $0x2588] sm:$0xff]
    %v1315 = vld [vmem:[#allocation2 + $0x2590] sm:$0xff]
    %v1316 = vld [vmem:[#allocation2 + $0x2598] sm:$0xff]
    %v1317 = vld [vmem:[#allocation2 + $0x25a0] sm:$0xff]
    %v1318 = vld [vmem:[#allocation2 + $0x25a8] sm:$0xff]
    %v1319 = vld [vmem:[#allocation2 + $0x25b0] sm:$0xff]
    %v1320 = vld [vmem:[#allocation2 + $0x25b8] sm:$0xff]
    %v1321 = vld [vmem:[#allocation2 + $0x25c0] sm:$0xff]
    %v1322 = vld [vmem:[#allocation2 + $0x25c8] sm:$0xff]
    %v1323 = vld [vmem:[#allocation2 + $0x25d0] sm:$0xff]
    %v1324 = vld [vmem:[#allocation2 + $0x25d8] sm:$0xff]
    %v1325 = vld [vmem:[#allocation2 + $0x25e0] sm:$0xff]
    %v1326 = vld [vmem:[#allocation2 + $0x25e8] sm:$0xff]
    %v1327 = vld [vmem:[#allocation2 + $0x25f0] sm:$0xff]
    %v1328 = vld [vmem:[#allocation2 + $0x25f8] sm:$0xff]
    %v1329 = vld [vmem:[#allocation4] sm:$0xff]
    %v1331 = vlaneseq
    %v1332 = vshrl.u32 %v1331, 7
    %v1333 = vsub.s32 0, %v1332
    %v1334 = vrot.slane %v1329, %v1333
    %v1335 = vlaneseq
    %v1336 = vshrl.u32 %v1335, 7
    %v1337 = vsub.s32 1, %v1336
    %v1338 = vrot.slane %v1329, %v1337
    %v1339 = vlaneseq
    %v1340 = vshrl.u32 %v1339, 7
    %v1341 = vsub.s32 2, %v1340
    %v1342 = vrot.slane %v1329, %v1341
    %v1343 = vlaneseq
    %v1344 = vshrl.u32 %v1343, 7
    %v1345 = vsub.s32 3, %v1344
    %v1346 = vrot.slane %v1329, %v1345
    %v1347 = vlaneseq
    %v1348 = vshrl.u32 %v1347, 7
    %v1349 = vsub.s32 4, %v1348
    %v1350 = vrot.slane %v1329, %v1349
    %v1351 = vlaneseq
    %v1352 = vshrl.u32 %v1351, 7
    %v1353 = vsub.s32 5, %v1352
    %v1354 = vrot.slane %v1329, %v1353
    %v1355 = vlaneseq
    %v1356 = vshrl.u32 %v1355, 7
    %v1357 = vsub.s32 6, %v1356
    %v1358 = vrot.slane %v1329, %v1357
    %v1359 = vlaneseq
    %v1360 = vshrl.u32 %v1359, 7
    %v1361 = vsub.s32 7, %v1360
    %v1362 = vrot.slane %v1329, %v1361
    %v1381 = vunpack.c.l.b16 %v103
    %v1382 = vunpack.c.h.b16 %v103
    %v1383 = vunpack.c.l.b16 %v104
    %v1384 = vunpack.c.h.b16 %v104
    %v1385 = vunpack.c.l.b16 %v105
    %v1386 = vunpack.c.h.b16 %v105
    %v1387 = vunpack.c.l.b16 %v106
    %v1388 = vunpack.c.h.b16 %v106
    %v1389 = vunpack.c.l.b16 %v107
    %v1390 = vunpack.c.h.b16 %v107
    %v1391 = vunpack.c.l.b16 %v108
    %v1392 = vunpack.c.h.b16 %v108
    %v1393 = vunpack.c.l.b16 %v109
    %v1394 = vunpack.c.h.b16 %v109
    %v1395 = vunpack.c.l.b16 %v110
    %v1396 = vunpack.c.h.b16 %v110
    %v1397 = vunpack.c.l.b16 %v111
    %v1398 = vunpack.c.h.b16 %v111
    %v1399 = vunpack.c.l.b16 %v112
    %v1400 = vpack.c.b16 %v1381, %v1381
    %v1401 = vpack.c.b16 %v1382, %v1382
    %v1402 = vpack.c.b16 %v1383, %v1383
    %v1403 = vpack.c.b16 %v1384, %v1384
    %v1404 = vpack.c.b16 %v1385, %v1385
    %v1405 = vpack.c.b16 %v1386, %v1386
    %v1406 = vpack.c.b16 %v1387, %v1387
    %v1407 = vpack.c.b16 %v1388, %v1388
    %v1408 = vpack.c.b16 %v1389, %v1389
    %v1409 = vpack.c.b16 %v1390, %v1390
    %v1410 = vpack.c.b16 %v1391, %v1391
    %v1411 = vpack.c.b16 %v1392, %v1392
    %v1412 = vpack.c.b16 %v1393, %v1393
    %v1413 = vpack.c.b16 %v1394, %v1394
    %v1414 = vpack.c.b16 %v1395, %v1395
    %v1415 = vpack.c.b16 %v1396, %v1396
    %v1416 = vpack.c.b16 %v1397, %v1397
    %v1417 = vpack.c.b16 %v1398, %v1398
    %v1418 = vpack.c.b16 %v1399, %v1399
    %v2654 = vunpack.c.l.b16 %v113
    %v2655 = vunpack.c.h.b16 %v113
    %v2656 = vunpack.c.l.b16 %v114
    %v2657 = vunpack.c.h.b16 %v114
    %v2658 = vunpack.c.l.b16 %v115
    %v2659 = vunpack.c.h.b16 %v115
    %v2660 = vunpack.c.l.b16 %v116
    %v2661 = vunpack.c.h.b16 %v116
    %v2662 = vunpack.c.l.b16 %v117
    %v2663 = vunpack.c.h.b16 %v117
    %v2664 = vunpack.c.l.b16 %v118
    %v2665 = vunpack.c.h.b16 %v118
    %v2666 = vunpack.c.l.b16 %v119
    %v2667 = vunpack.c.h.b16 %v119
    %v2668 = vunpack.c.l.b16 %v120
    %v2669 = vunpack.c.h.b16 %v120
    %v2670 = vunpack.c.l.b16 %v121
    %v2671 = vunpack.c.h.b16 %v121
    %v2672 = vunpack.c.l.b16 %v122
    %v2673 = vunpack.c.h.b16 %v122
    %v2674 = vunpack.c.l.b16 %v123
    %v2675 = vunpack.c.h.b16 %v123
    %v2676 = vunpack.c.l.b16 %v124
    %v2677 = vunpack.c.h.b16 %v124
    %v2678 = vunpack.c.l.b16 %v125
    %v2679 = vunpack.c.h.b16 %v125
    %v2680 = vunpack.c.l.b16 %v126
    %v2681 = vunpack.c.h.b16 %v126
    %v2682 = vunpack.c.l.b16 %v127
    %v2683 = vunpack.c.h.b16 %v127
    %v2684 = vunpack.c.l.b16 %v128
    %v2685 = vunpack.c.h.b16 %v128
    %v2686 = vunpack.c.l.b16 %v129
    %v2687 = vunpack.c.h.b16 %v129
    %v2688 = vunpack.c.l.b16 %v130
    %v2689 = vunpack.c.h.b16 %v130
    %v2690 = vunpack.c.l.b16 %v131
    %v2691 = vunpack.c.h.b16 %v131
    %v2692 = vunpack.c.l.b16 %v132
    %v2693 = vunpack.c.h.b16 %v132
    %v2694 = vunpack.c.l.b16 %v133
    %v2695 = vunpack.c.h.b16 %v133
    %v2696 = vunpack.c.l.b16 %v134
    %v2697 = vunpack.c.h.b16 %v134
    %v2698 = vunpack.c.l.b16 %v135
    %v2699 = vunpack.c.h.b16 %v135
    %v2700 = vunpack.c.l.b16 %v136
    %v2701 = vunpack.c.h.b16 %v136
    %v2702 = vunpack.c.l.b16 %v137
    %v2703 = vunpack.c.h.b16 %v137
    %v2704 = vunpack.c.l.b16 %v138
    %v2705 = vunpack.c.h.b16 %v138
    %v2706 = vunpack.c.l.b16 %v139
    %v2707 = vunpack.c.h.b16 %v139
    %v2708 = vunpack.c.l.b16 %v140
    %v2709 = vunpack.c.h.b16 %v140
    %v2710 = vunpack.c.l.b16 %v141
    %v2711 = vunpack.c.h.b16 %v141
    %v2712 = vunpack.c.l.b16 %v142
    %v2713 = vunpack.c.h.b16 %v142
    %v2714 = vunpack.c.l.b16 %v143
    %v2715 = vunpack.c.h.b16 %v143
    %v2716 = vunpack.c.l.b16 %v144
    %v2717 = vunpack.c.h.b16 %v144
    %v2718 = vunpack.c.l.b16 %v145
    %v2719 = vunpack.c.h.b16 %v145
    %v2720 = vunpack.c.l.b16 %v146
    %v2721 = vunpack.c.h.b16 %v146
    %v2722 = vunpack.c.l.b16 %v147
    %v2723 = vunpack.c.h.b16 %v147
    %v2724 = vunpack.c.l.b16 %v148
    %v2725 = vunpack.c.h.b16 %v148
    %v2726 = vunpack.c.l.b16 %v149
    %v2727 = vunpack.c.h.b16 %v149
    %v2728 = vunpack.c.l.b16 %v150
    %v2729 = vunpack.c.h.b16 %v150
    %v2730 = vunpack.c.l.b16 %v151
    %v2731 = vunpack.c.h.b16 %v151
    %v2732 = vunpack.c.l.b16 %v152
    %v2733 = vunpack.c.h.b16 %v152
    %v2734 = vunpack.c.l.b16 %v153
    %v2735 = vunpack.c.h.b16 %v153
    %v2736 = vunpack.c.l.b16 %v154
    %v2737 = vunpack.c.h.b16 %v154
    %v2738 = vunpack.c.l.b16 %v155
    %v2739 = vunpack.c.h.b16 %v155
    %v2740 = vunpack.c.l.b16 %v156
    %v2741 = vunpack.c.h.b16 %v156
    %v2742 = vunpack.c.l.b16 %v157
    %v2743 = vunpack.c.h.b16 %v157
    %v2744 = vunpack.c.l.b16 %v158
    %v2745 = vunpack.c.h.b16 %v158
    %v2746 = vunpack.c.l.b16 %v159
    %v2747 = vunpack.c.h.b16 %v159
    %v2748 = vunpack.c.l.b16 %v160
    %v2749 = vunpack.c.h.b16 %v160
    %v2750 = vunpack.c.l.b16 %v161
    %v2751 = vunpack.c.h.b16 %v161
    %v2752 = vunpack.c.l.b16 %v162
    %v2753 = vunpack.c.h.b16 %v162
    %v2754 = vunpack.c.l.b16 %v163
    %v2755 = vunpack.c.h.b16 %v163
    %v2756 = vunpack.c.l.b16 %v164
    %v2757 = vunpack.c.h.b16 %v164
    %v2758 = vunpack.c.l.b16 %v165
    %v2759 = vunpack.c.h.b16 %v165
    %v2760 = vunpack.c.l.b16 %v166
    %v2761 = vunpack.c.h.b16 %v166
    %v2762 = vunpack.c.l.b16 %v167
    %v2763 = vunpack.c.h.b16 %v167
    %v2764 = vunpack.c.l.b16 %v168
    %v2765 = vunpack.c.h.b16 %v168
    %v2766 = vunpack.c.l.b16 %v169
    %v2767 = vunpack.c.h.b16 %v169
    %v2768 = vunpack.c.l.b16 %v170
    %v2769 = vunpack.c.h.b16 %v170
    %v2770 = vunpack.c.l.b16 %v171
    %v2771 = vunpack.c.h.b16 %v171
    %v2772 = vunpack.c.l.b16 %v172
    %v2773 = vunpack.c.h.b16 %v172
    %v2774 = vunpack.c.l.b16 %v173
    %v2775 = vunpack.c.h.b16 %v173
    %v2776 = vunpack.c.l.b16 %v174
    %v2777 = vunpack.c.h.b16 %v174
    %v2778 = vunpack.c.l.b16 %v175
    %v2779 = vunpack.c.h.b16 %v175
    %v2780 = vunpack.c.l.b16 %v176
    %v2781 = vunpack.c.h.b16 %v176
    %v2782 = vunpack.c.l.b16 %v177
    %v2783 = vunpack.c.h.b16 %v177
    %v2784 = vunpack.c.l.b16 %v178
    %v2785 = vunpack.c.h.b16 %v178
    %v2786 = vunpack.c.l.b16 %v179
    %v2787 = vunpack.c.h.b16 %v179
    %v2788 = vunpack.c.l.b16 %v180
    %v2789 = vunpack.c.h.b16 %v180
    %v2790 = vunpack.c.l.b16 %v181
    %v2791 = vunpack.c.h.b16 %v181
    %v2792 = vunpack.c.l.b16 %v182
    %v2793 = vunpack.c.h.b16 %v182
    %v2794 = vunpack.c.l.b16 %v183
    %v2795 = vunpack.c.h.b16 %v183
    %v2796 = vunpack.c.l.b16 %v184
    %v2797 = vunpack.c.h.b16 %v184
    %v2798 = vunpack.c.l.b16 %v185
    %v2799 = vunpack.c.h.b16 %v185
    %v2800 = vunpack.c.l.b16 %v186
    %v2801 = vunpack.c.h.b16 %v186
    %v2802 = vunpack.c.l.b16 %v187
    %v2803 = vunpack.c.h.b16 %v187
    %v2804 = vunpack.c.l.b16 %v188
    %v2805 = vunpack.c.h.b16 %v188
    %v2806 = vunpack.c.l.b16 %v189
    %v2807 = vunpack.c.h.b16 %v189
    %v2808 = vunpack.c.l.b16 %v190
    %v2809 = vunpack.c.h.b16 %v190
    %v2810 = vunpack.c.l.b16 %v191
    %v2811 = vunpack.c.h.b16 %v191
    %v2812 = vunpack.c.l.b16 %v192
    %v2813 = vunpack.c.h.b16 %v192
    %v2814 = vunpack.c.l.b16 %v193
    %v2815 = vunpack.c.h.b16 %v193
    %v2816 = vunpack.c.l.b16 %v194
    %v2817 = vunpack.c.h.b16 %v194
    %v2818 = vunpack.c.l.b16 %v195
    %v2819 = vunpack.c.h.b16 %v195
    %v2820 = vunpack.c.l.b16 %v196
    %v2821 = vunpack.c.h.b16 %v196
    %v2822 = vunpack.c.l.b16 %v197
    %v2823 = vunpack.c.h.b16 %v197
    %v2824 = vunpack.c.l.b16 %v198
    %v2825 = vunpack.c.h.b16 %v198
    %v2826 = vunpack.c.l.b16 %v199
    %v2827 = vunpack.c.h.b16 %v199
    %v2828 = vunpack.c.l.b16 %v200
    %v2829 = vunpack.c.h.b16 %v200
    %v2830 = vunpack.c.l.b16 %v201
    %v2831 = vunpack.c.h.b16 %v201
    %v2832 = vunpack.c.l.b16 %v202
    %v2833 = vunpack.c.h.b16 %v202
    %v2834 = vunpack.c.l.b16 %v203
    %v2835 = vunpack.c.h.b16 %v203
    %v2836 = vunpack.c.l.b16 %v204
    %v2837 = vunpack.c.h.b16 %v204
    %v2838 = vunpack.c.l.b16 %v205
    %v2839 = vunpack.c.h.b16 %v205
    %v2840 = vunpack.c.l.b16 %v206
    %v2841 = vunpack.c.h.b16 %v206
    %v2842 = vunpack.c.l.b16 %v207
    %v2843 = vunpack.c.h.b16 %v207
    %v2844 = vunpack.c.l.b16 %v208
    %v2845 = vunpack.c.h.b16 %v208
    %v2846 = vunpack.c.l.b16 %v209
    %v2847 = vunpack.c.h.b16 %v209
    %v2848 = vunpack.c.l.b16 %v210
    %v2849 = vunpack.c.h.b16 %v210
    %v2850 = vunpack.c.l.b16 %v211
    %v2851 = vunpack.c.h.b16 %v211
    %v2852 = vunpack.c.l.b16 %v212
    %v2853 = vunpack.c.h.b16 %v212
    %v2854 = vunpack.c.l.b16 %v213
    %v2855 = vunpack.c.h.b16 %v213
    %v2856 = vunpack.c.l.b16 %v214
    %v2857 = vunpack.c.h.b16 %v214
    %v2858 = vunpack.c.l.b16 %v215
    %v2859 = vunpack.c.h.b16 %v215
    %v2860 = vunpack.c.l.b16 %v216
    %v2861 = vunpack.c.h.b16 %v216
    %v2862 = vunpack.c.l.b16 %v217
    %v2863 = vunpack.c.h.b16 %v217
    %v2864 = vunpack.c.l.b16 %v218
    %v2865 = vunpack.c.h.b16 %v218
    %v2866 = vunpack.c.l.b16 %v219
    %v2867 = vunpack.c.h.b16 %v219
    %v2868 = vunpack.c.l.b16 %v220
    %v2869 = vunpack.c.h.b16 %v220
    %v2870 = vunpack.c.l.b16 %v221
    %v2871 = vunpack.c.h.b16 %v221
    %v2872 = vunpack.c.l.b16 %v222
    %v2873 = vunpack.c.h.b16 %v222
    %v2874 = vunpack.c.l.b16 %v223
    %v2875 = vunpack.c.h.b16 %v223
    %v2876 = vunpack.c.l.b16 %v224
    %v2877 = vunpack.c.h.b16 %v224
    %v2878 = vunpack.c.l.b16 %v225
    %v2879 = vunpack.c.h.b16 %v225
    %v2880 = vunpack.c.l.b16 %v226
    %v2881 = vunpack.c.h.b16 %v226
    %v2882 = vunpack.c.l.b16 %v227
    %v2883 = vunpack.c.h.b16 %v227
    %v2884 = vunpack.c.l.b16 %v228
    %v2885 = vunpack.c.h.b16 %v228
    %v2886 = vunpack.c.l.b16 %v229
    %v2887 = vunpack.c.h.b16 %v229
    %v2888 = vunpack.c.l.b16 %v230
    %v2889 = vunpack.c.h.b16 %v230
    %v2890 = vunpack.c.l.b16 %v231
    %v2891 = vunpack.c.h.b16 %v231
    %v2892 = vunpack.c.l.b16 %v232
    %v2893 = vunpack.c.h.b16 %v232
    %v2894 = vunpack.c.l.b16 %v233
    %v2895 = vunpack.c.h.b16 %v233
    %v2896 = vunpack.c.l.b16 %v234
    %v2897 = vunpack.c.h.b16 %v234
    %v2898 = vunpack.c.l.b16 %v235
    %v2899 = vunpack.c.h.b16 %v235
    %v2900 = vunpack.c.l.b16 %v236
    %v2901 = vunpack.c.h.b16 %v236
    %v2902 = vunpack.c.l.b16 %v237
    %v2903 = vunpack.c.h.b16 %v237
    %v2904 = vunpack.c.l.b16 %v238
    %v2905 = vunpack.c.h.b16 %v238
    %v2906 = vunpack.c.l.b16 %v239
    %v2907 = vunpack.c.h.b16 %v239
    %v2908 = vunpack.c.l.b16 %v240
    %v2909 = vunpack.c.h.b16 %v240
    %v2910 = vunpack.c.l.b16 %v241
    %v2911 = vunpack.c.h.b16 %v241
    %v2912 = vunpack.c.l.b16 %v242
    %v2913 = vunpack.c.h.b16 %v242
    %v2914 = vunpack.c.l.b16 %v243
    %v2915 = vunpack.c.h.b16 %v243
    %v2916 = vunpack.c.l.b16 %v244
    %v2917 = vunpack.c.h.b16 %v244
    %v2918 = vunpack.c.l.b16 %v245
    %v2919 = vunpack.c.h.b16 %v245
    %v2920 = vunpack.c.l.b16 %v246
    %v2921 = vunpack.c.h.b16 %v246
    %v2922 = vunpack.c.l.b16 %v247
    %v2923 = vunpack.c.h.b16 %v247
    %v2924 = vunpack.c.l.b16 %v248
    %v2925 = vunpack.c.h.b16 %v248
    %v2926 = vunpack.c.l.b16 %v249
    %v2927 = vunpack.c.h.b16 %v249
    %v2928 = vunpack.c.l.b16 %v250
    %v2929 = vunpack.c.h.b16 %v250
    %v2930 = vunpack.c.l.b16 %v251
    %v2931 = vunpack.c.h.b16 %v251
    %v2932 = vunpack.c.l.b16 %v252
    %v2933 = vunpack.c.h.b16 %v252
    %v2934 = vunpack.c.l.b16 %v253
    %v2935 = vunpack.c.h.b16 %v253
    %v2936 = vunpack.c.l.b16 %v254
    %v2937 = vunpack.c.h.b16 %v254
    %v2938 = vunpack.c.l.b16 %v255
    %v2939 = vunpack.c.h.b16 %v255
    %v2940 = vunpack.c.l.b16 %v256
    %v2941 = vunpack.c.h.b16 %v256
    %v2942 = vunpack.c.l.b16 %v257
    %v2943 = vunpack.c.h.b16 %v257
    %v2944 = vunpack.c.l.b16 %v258
    %v2945 = vunpack.c.h.b16 %v258
    %v2946 = vunpack.c.l.b16 %v259
    %v2947 = vunpack.c.h.b16 %v259
    %v2948 = vunpack.c.l.b16 %v260
    %v2949 = vunpack.c.h.b16 %v260
    %v2950 = vunpack.c.l.b16 %v261
    %v2951 = vunpack.c.h.b16 %v261
    %v2952 = vunpack.c.l.b16 %v262
    %v2953 = vunpack.c.h.b16 %v262
    %v2954 = vunpack.c.l.b16 %v263
    %v2955 = vunpack.c.h.b16 %v263
    %v2956 = vunpack.c.l.b16 %v264
    %v2957 = vunpack.c.h.b16 %v264
    %v2958 = vunpack.c.l.b16 %v265
    %v2959 = vunpack.c.h.b16 %v265
    %v2960 = vunpack.c.l.b16 %v266
    %v2961 = vunpack.c.h.b16 %v266
    %v2962 = vunpack.c.l.b16 %v267
    %v2963 = vunpack.c.h.b16 %v267
    %v2964 = vunpack.c.l.b16 %v268
    %v2965 = vunpack.c.h.b16 %v268
    %v2966 = vunpack.c.l.b16 %v269
    %v2967 = vunpack.c.h.b16 %v269
    %v2968 = vunpack.c.l.b16 %v270
    %v2969 = vunpack.c.h.b16 %v270
    %v2970 = vunpack.c.l.b16 %v271
    %v2971 = vunpack.c.h.b16 %v271
    %v2972 = vunpack.c.l.b16 %v272
    %v2973 = vunpack.c.h.b16 %v272
    %v2974 = vunpack.c.l.b16 %v273
    %v2975 = vunpack.c.h.b16 %v273
    %v2976 = vunpack.c.l.b16 %v274
    %v2977 = vunpack.c.h.b16 %v274
    %v2978 = vunpack.c.l.b16 %v275
    %v2979 = vunpack.c.h.b16 %v275
    %v2980 = vunpack.c.l.b16 %v276
    %v2981 = vunpack.c.h.b16 %v276
    %v2982 = vunpack.c.l.b16 %v277
    %v2983 = vunpack.c.h.b16 %v277
    %v2984 = vunpack.c.l.b16 %v278
    %v2985 = vunpack.c.h.b16 %v278
    %v2986 = vunpack.c.l.b16 %v279
    %v2987 = vunpack.c.h.b16 %v279
    %v2988 = vunpack.c.l.b16 %v280
    %v2989 = vunpack.c.h.b16 %v280
    %v2990 = vunpack.c.l.b16 %v281
    %v2991 = vunpack.c.h.b16 %v281
    %v2992 = vunpack.c.l.b16 %v282
    %v2993 = vunpack.c.h.b16 %v282
    %v2994 = vunpack.c.l.b16 %v283
    %v2995 = vunpack.c.h.b16 %v283
    %v2996 = vunpack.c.l.b16 %v284
    %v2997 = vunpack.c.h.b16 %v284
    %v2998 = vunpack.c.l.b16 %v285
    %v2999 = vunpack.c.h.b16 %v285
    %v3000 = vunpack.c.l.b16 %v286
    %v3001 = vunpack.c.h.b16 %v286
    %v3002 = vunpack.c.l.b16 %v287
    %v3003 = vunpack.c.h.b16 %v287
    %v3004 = vunpack.c.l.b16 %v288
    %v3005 = vunpack.c.h.b16 %v288
    %v3006 = vunpack.c.l.b16 %v289
    %v3007 = vunpack.c.h.b16 %v289
    %v3008 = vunpack.c.l.b16 %v290
    %v3009 = vunpack.c.h.b16 %v290
    %v3010 = vunpack.c.l.b16 %v291
    %v3011 = vunpack.c.h.b16 %v291
    %v3012 = vunpack.c.l.b16 %v292
    %v3013 = vunpack.c.h.b16 %v292
    %v3014 = vunpack.c.l.b16 %v293
    %v3015 = vunpack.c.h.b16 %v293
    %v3016 = vunpack.c.l.b16 %v294
    %v3017 = vunpack.c.h.b16 %v294
    %v3018 = vunpack.c.l.b16 %v295
    %v3019 = vunpack.c.h.b16 %v295
    %v3020 = vunpack.c.l.b16 %v296
    %v3021 = vunpack.c.h.b16 %v296
    %v3022 = vunpack.c.l.b16 %v297
    %v3023 = vunpack.c.h.b16 %v297
    %v3024 = vunpack.c.l.b16 %v298
    %v3025 = vunpack.c.h.b16 %v298
    %v3026 = vunpack.c.l.b16 %v299
    %v3027 = vunpack.c.h.b16 %v299
    %v3028 = vunpack.c.l.b16 %v300
    %v3029 = vunpack.c.h.b16 %v300
    %v3030 = vunpack.c.l.b16 %v301
    %v3031 = vunpack.c.h.b16 %v301
    %v3032 = vunpack.c.l.b16 %v302
    %v3033 = vunpack.c.h.b16 %v302
    %v3034 = vunpack.c.l.b16 %v303
    %v3035 = vunpack.c.h.b16 %v303
    %v3036 = vunpack.c.l.b16 %v304
    %v3037 = vunpack.c.h.b16 %v304
    %v3038 = vunpack.c.l.b16 %v305
    %v3039 = vunpack.c.h.b16 %v305
    %v3040 = vunpack.c.l.b16 %v306
    %v3041 = vunpack.c.h.b16 %v306
    %v3042 = vunpack.c.l.b16 %v307
    %v3043 = vunpack.c.h.b16 %v307
    %v3044 = vunpack.c.l.b16 %v308
    %v3045 = vunpack.c.h.b16 %v308
    %v3046 = vunpack.c.l.b16 %v309
    %v3047 = vunpack.c.h.b16 %v309
    %v3048 = vunpack.c.l.b16 %v310
    %v3049 = vunpack.c.h.b16 %v310
    %v3050 = vunpack.c.l.b16 %v311
    %v3051 = vunpack.c.h.b16 %v311
    %v3052 = vunpack.c.l.b16 %v312
    %v3053 = vunpack.c.h.b16 %v312
    %v3054 = vunpack.c.l.b16 %v313
    %v3055 = vunpack.c.h.b16 %v313
    %v3056 = vunpack.c.l.b16 %v314
    %v3057 = vunpack.c.h.b16 %v314
    %v3058 = vunpack.c.l.b16 %v315
    %v3059 = vunpack.c.h.b16 %v315
    %v3060 = vunpack.c.l.b16 %v316
    %v3061 = vunpack.c.h.b16 %v316
    %v3062 = vunpack.c.l.b16 %v317
    %v3063 = vunpack.c.h.b16 %v317
    %v3064 = vunpack.c.l.b16 %v318
    %v3065 = vunpack.c.h.b16 %v318
    %v3066 = vunpack.c.l.b16 %v319
    %v3067 = vunpack.c.h.b16 %v319
    %v3068 = vunpack.c.l.b16 %v320
    %v3069 = vunpack.c.h.b16 %v320
    %v3070 = vunpack.c.l.b16 %v321
    %v3071 = vunpack.c.h.b16 %v321
    %v3072 = vunpack.c.l.b16 %v322
    %v3073 = vunpack.c.h.b16 %v322
    %v3074 = vunpack.c.l.b16 %v323
    %v3075 = vunpack.c.h.b16 %v323
    %v3076 = vunpack.c.l.b16 %v324
    %v3077 = vunpack.c.h.b16 %v324
    %v3078 = vunpack.c.l.b16 %v325
    %v3079 = vunpack.c.h.b16 %v325
    %v3080 = vunpack.c.l.b16 %v326
    %v3081 = vunpack.c.h.b16 %v326
    %v3082 = vunpack.c.l.b16 %v327
    %v3083 = vunpack.c.h.b16 %v327
    %v3084 = vunpack.c.l.b16 %v328
    %v3085 = vunpack.c.h.b16 %v328
    %v3086 = vunpack.c.l.b16 %v329
    %v3087 = vunpack.c.h.b16 %v329
    %v3088 = vunpack.c.l.b16 %v330
    %v3089 = vunpack.c.h.b16 %v330
    %v3090 = vunpack.c.l.b16 %v331
    %v3091 = vunpack.c.h.b16 %v331
    %v3092 = vunpack.c.l.b16 %v332
    %v3093 = vunpack.c.h.b16 %v332
    %v3094 = vunpack.c.l.b16 %v333
    %v3095 = vunpack.c.h.b16 %v333
    %v3096 = vunpack.c.l.b16 %v334
    %v3097 = vunpack.c.h.b16 %v334
    %v3098 = vunpack.c.l.b16 %v335
    %v3099 = vunpack.c.h.b16 %v335
    %v3100 = vunpack.c.l.b16 %v336
    %v3101 = vunpack.c.h.b16 %v336
    %v3102 = vunpack.c.l.b16 %v337
    %v3103 = vunpack.c.h.b16 %v337
    %v3104 = vunpack.c.l.b16 %v338
    %v3105 = vunpack.c.h.b16 %v338
    %v3106 = vunpack.c.l.b16 %v339
    %v3107 = vunpack.c.h.b16 %v339
    %v3108 = vunpack.c.l.b16 %v340
    %v3109 = vunpack.c.h.b16 %v340
    %v3110 = vunpack.c.l.b16 %v341
    %v3111 = vunpack.c.h.b16 %v341
    %v3112 = vunpack.c.l.b16 %v342
    %v3113 = vunpack.c.h.b16 %v342
    %v3114 = vunpack.c.l.b16 %v343
    %v3115 = vunpack.c.h.b16 %v343
    %v3116 = vunpack.c.l.b16 %v344
    %v3117 = vunpack.c.h.b16 %v344
    %v3118 = vunpack.c.l.b16 %v345
    %v3119 = vunpack.c.h.b16 %v345
    %v3120 = vunpack.c.l.b16 %v346
    %v3121 = vunpack.c.h.b16 %v346
    %v3122 = vunpack.c.l.b16 %v347
    %v3123 = vunpack.c.h.b16 %v347
    %v3124 = vunpack.c.l.b16 %v348
    %v3125 = vunpack.c.h.b16 %v348
    %v3126 = vunpack.c.l.b16 %v349
    %v3127 = vunpack.c.h.b16 %v349
    %v3128 = vunpack.c.l.b16 %v350
    %v3129 = vunpack.c.h.b16 %v350
    %v3130 = vunpack.c.l.b16 %v351
    %v3131 = vunpack.c.h.b16 %v351
    %v3132 = vunpack.c.l.b16 %v352
    %v3133 = vunpack.c.h.b16 %v352
    %v3134 = vunpack.c.l.b16 %v353
    %v3135 = vunpack.c.h.b16 %v353
    %v3136 = vunpack.c.l.b16 %v354
    %v3137 = vunpack.c.h.b16 %v354
    %v3138 = vunpack.c.l.b16 %v355
    %v3139 = vunpack.c.h.b16 %v355
    %v3140 = vunpack.c.l.b16 %v356
    %v3141 = vunpack.c.h.b16 %v356
    %v3142 = vunpack.c.l.b16 %v357
    %v3143 = vunpack.c.h.b16 %v357
    %v3144 = vunpack.c.l.b16 %v358
    %v3145 = vunpack.c.h.b16 %v358
    %v3146 = vunpack.c.l.b16 %v359
    %v3147 = vunpack.c.h.b16 %v359
    %v3148 = vunpack.c.l.b16 %v360
    %v3149 = vunpack.c.h.b16 %v360
    %v3150 = vunpack.c.l.b16 %v361
    %v3151 = vunpack.c.h.b16 %v361
    %v3152 = vunpack.c.l.b16 %v362
    %v3153 = vunpack.c.h.b16 %v362
    %v3154 = vunpack.c.l.b16 %v363
    %v3155 = vunpack.c.h.b16 %v363
    %v3156 = vunpack.c.l.b16 %v364
    %v3157 = vunpack.c.h.b16 %v364
    %v3158 = vunpack.c.l.b16 %v365
    %v3159 = vunpack.c.h.b16 %v365
    %v3160 = vunpack.c.l.b16 %v366
    %v3161 = vunpack.c.h.b16 %v366
    %v3162 = vunpack.c.l.b16 %v367
    %v3163 = vunpack.c.h.b16 %v367
    %v3164 = vunpack.c.l.b16 %v368
    %v3165 = vunpack.c.h.b16 %v368
    %v3166 = vunpack.c.l.b16 %v369
    %v3167 = vunpack.c.h.b16 %v369
    %v3168 = vunpack.c.l.b16 %v370
    %v3169 = vunpack.c.h.b16 %v370
    %v3170 = vunpack.c.l.b16 %v371
    %v3171 = vunpack.c.h.b16 %v371
    %v3172 = vunpack.c.l.b16 %v372
    %v3173 = vunpack.c.h.b16 %v372
    %v3174 = vunpack.c.l.b16 %v373
    %v3175 = vunpack.c.h.b16 %v373
    %v3176 = vunpack.c.l.b16 %v374
    %v3177 = vunpack.c.h.b16 %v374
    %v3178 = vunpack.c.l.b16 %v375
    %v3179 = vunpack.c.h.b16 %v375
    %v3180 = vunpack.c.l.b16 %v376
    %v3181 = vunpack.c.h.b16 %v376
    %v3182 = vunpack.c.l.b16 %v377
    %v3183 = vunpack.c.h.b16 %v377
    %v3184 = vunpack.c.l.b16 %v378
    %v3185 = vunpack.c.h.b16 %v378
    %v3186 = vunpack.c.l.b16 %v379
    %v3187 = vunpack.c.h.b16 %v379
    %v3188 = vunpack.c.l.b16 %v380
    %v3189 = vunpack.c.h.b16 %v380
    %v3190 = vunpack.c.l.b16 %v381
    %v3191 = vunpack.c.h.b16 %v381
    %v3192 = vunpack.c.l.b16 %v382
    %v3193 = vunpack.c.h.b16 %v382
    %v3194 = vunpack.c.l.b16 %v383
    %v3195 = vunpack.c.h.b16 %v383
    %v3196 = vunpack.c.l.b16 %v384
    %v3197 = vunpack.c.h.b16 %v384
    %v3198 = vunpack.c.l.b16 %v385
    %v3199 = vunpack.c.h.b16 %v385
    %v3200 = vunpack.c.l.b16 %v386
    %v3201 = vunpack.c.h.b16 %v386
    %v3202 = vunpack.c.l.b16 %v387
    %v3203 = vunpack.c.h.b16 %v387
    %v3204 = vunpack.c.l.b16 %v388
    %v3205 = vunpack.c.h.b16 %v388
    %v3206 = vunpack.c.l.b16 %v389
    %v3207 = vunpack.c.h.b16 %v389
    %v3208 = vunpack.c.l.b16 %v390
    %v3209 = vunpack.c.h.b16 %v390
    %v3210 = vunpack.c.l.b16 %v391
    %v3211 = vunpack.c.h.b16 %v391
    %v3212 = vunpack.c.l.b16 %v392
    %v3213 = vunpack.c.h.b16 %v392
    %v3214 = vunpack.c.l.b16 %v393
    %v3215 = vunpack.c.h.b16 %v393
    %v3216 = vunpack.c.l.b16 %v394
    %v3217 = vunpack.c.h.b16 %v394
    %v3218 = vunpack.c.l.b16 %v395
    %v3219 = vunpack.c.h.b16 %v395
    %v3220 = vunpack.c.l.b16 %v396
    %v3221 = vunpack.c.h.b16 %v396
    %v3222 = vunpack.c.l.b16 %v397
    %v3223 = vunpack.c.h.b16 %v397
    %v3224 = vunpack.c.l.b16 %v398
    %v3225 = vunpack.c.h.b16 %v398
    %v3226 = vunpack.c.l.b16 %v399
    %v3227 = vunpack.c.h.b16 %v399
    %v3228 = vunpack.c.l.b16 %v400
    %v3229 = vunpack.c.h.b16 %v400
    %v3230 = vunpack.c.l.b16 %v401
    %v3231 = vunpack.c.h.b16 %v401
    %v3232 = vunpack.c.l.b16 %v402
    %v3233 = vunpack.c.h.b16 %v402
    %v3234 = vunpack.c.l.b16 %v403
    %v3235 = vunpack.c.h.b16 %v403
    %v3236 = vunpack.c.l.b16 %v404
    %v3237 = vunpack.c.h.b16 %v404
    %v3238 = vunpack.c.l.b16 %v405
    %v3239 = vunpack.c.h.b16 %v405
    %v3240 = vunpack.c.l.b16 %v406
    %v3241 = vunpack.c.h.b16 %v406
    %v3242 = vunpack.c.l.b16 %v407
    %v3243 = vunpack.c.h.b16 %v407
    %v3244 = vunpack.c.l.b16 %v408
    %v3245 = vunpack.c.h.b16 %v408
    %v3246 = vunpack.c.l.b16 %v409
    %v3247 = vunpack.c.h.b16 %v409
    %v3248 = vunpack.c.l.b16 %v410
    %v3249 = vunpack.c.h.b16 %v410
    %v3250 = vunpack.c.l.b16 %v411
    %v3251 = vunpack.c.h.b16 %v411
    %v3252 = vunpack.c.l.b16 %v412
    %v3253 = vunpack.c.h.b16 %v412
    %v3254 = vunpack.c.l.b16 %v413
    %v3255 = vunpack.c.h.b16 %v413
    %v3256 = vunpack.c.l.b16 %v414
    %v3257 = vunpack.c.h.b16 %v414
    %v3258 = vunpack.c.l.b16 %v415
    %v3259 = vunpack.c.h.b16 %v415
    %v3260 = vunpack.c.l.b16 %v416
    %v3261 = vunpack.c.h.b16 %v416
    %v3262 = vunpack.c.l.b16 %v417
    %v3263 = vunpack.c.h.b16 %v417
    %v3264 = vunpack.c.l.b16 %v418
    %v3265 = vunpack.c.h.b16 %v418
    %v3266 = vunpack.c.l.b16 %v419
    %v3267 = vunpack.c.h.b16 %v419
    %v3268 = vunpack.c.l.b16 %v420
    %v3269 = vunpack.c.h.b16 %v420
    %v3270 = vunpack.c.l.b16 %v421
    %v3271 = vunpack.c.h.b16 %v421
    %v3272 = vunpack.c.l.b16 %v422
    %v3273 = vunpack.c.h.b16 %v422
    %v3274 = vunpack.c.l.b16 %v423
    %v3275 = vunpack.c.h.b16 %v423
    %v3276 = vunpack.c.l.b16 %v424
    %v3277 = vunpack.c.h.b16 %v424
    %v3278 = vunpack.c.l.b16 %v425
    %v3279 = vunpack.c.h.b16 %v425
    %v3280 = vunpack.c.l.b16 %v426
    %v3281 = vunpack.c.h.b16 %v426
    %v3282 = vunpack.c.l.b16 %v427
    %v3283 = vunpack.c.h.b16 %v427
    %v3284 = vunpack.c.l.b16 %v428
    %v3285 = vunpack.c.h.b16 %v428
    %v3286 = vunpack.c.l.b16 %v429
    %v3287 = vunpack.c.h.b16 %v429
    %v3288 = vunpack.c.l.b16 %v430
    %v3289 = vunpack.c.h.b16 %v430
    %v3290 = vunpack.c.l.b16 %v431
    %v3291 = vunpack.c.h.b16 %v431
    %v3292 = vunpack.c.l.b16 %v432
    %v3293 = vunpack.c.h.b16 %v432
    %v3294 = vunpack.c.l.b16 %v433
    %v3295 = vunpack.c.h.b16 %v433
    %v3296 = vunpack.c.l.b16 %v434
    %v3297 = vunpack.c.h.b16 %v434
    %v3298 = vunpack.c.l.b16 %v435
    %v3299 = vunpack.c.h.b16 %v435
    %v3300 = vunpack.c.l.b16 %v436
    %v3301 = vunpack.c.h.b16 %v436
    %v3302 = vunpack.c.l.b16 %v437
    %v3303 = vunpack.c.h.b16 %v437
    %v3304 = vunpack.c.l.b16 %v438
    %v3305 = vunpack.c.h.b16 %v438
    %v3306 = vunpack.c.l.b16 %v439
    %v3307 = vunpack.c.h.b16 %v439
    %v3308 = vunpack.c.l.b16 %v440
    %v3309 = vunpack.c.h.b16 %v440
    %v3310 = vunpack.c.l.b16 %v441
    %v3311 = vunpack.c.h.b16 %v441
    %v3312 = vunpack.c.l.b16 %v442
    %v3313 = vunpack.c.h.b16 %v442
    %v3314 = vunpack.c.l.b16 %v443
    %v3315 = vunpack.c.h.b16 %v443
    %v3316 = vunpack.c.l.b16 %v444
    %v3317 = vunpack.c.h.b16 %v444
    %v3318 = vunpack.c.l.b16 %v445
    %v3319 = vunpack.c.h.b16 %v445
    %v3320 = vunpack.c.l.b16 %v446
    %v3321 = vunpack.c.h.b16 %v446
    %v3322 = vunpack.c.l.b16 %v447
    %v3323 = vunpack.c.h.b16 %v447
    %v3324 = vunpack.c.l.b16 %v448
    %v3325 = vunpack.c.h.b16 %v448
    %v3326 = vunpack.c.l.b16 %v449
    %v3327 = vunpack.c.h.b16 %v449
    %v3328 = vunpack.c.l.b16 %v450
    %v3329 = vunpack.c.h.b16 %v450
    %v3330 = vunpack.c.l.b16 %v451
    %v3331 = vunpack.c.h.b16 %v451
    %v3332 = vunpack.c.l.b16 %v452
    %v3333 = vunpack.c.h.b16 %v452
    %v3334 = vunpack.c.l.b16 %v453
    %v3335 = vunpack.c.h.b16 %v453
    %v3336 = vunpack.c.l.b16 %v454
    %v3337 = vunpack.c.h.b16 %v454
    %v3338 = vunpack.c.l.b16 %v455
    %v3339 = vunpack.c.h.b16 %v455
    %v3340 = vunpack.c.l.b16 %v456
    %v3341 = vunpack.c.h.b16 %v456
    %v3342 = vunpack.c.l.b16 %v457
    %v3343 = vunpack.c.h.b16 %v457
    %v3344 = vunpack.c.l.b16 %v458
    %v3345 = vunpack.c.h.b16 %v458
    %v3346 = vunpack.c.l.b16 %v459
    %v3347 = vunpack.c.h.b16 %v459
    %v3348 = vunpack.c.l.b16 %v460
    %v3349 = vunpack.c.h.b16 %v460
    %v3350 = vunpack.c.l.b16 %v461
    %v3351 = vunpack.c.h.b16 %v461
    %v3352 = vunpack.c.l.b16 %v462
    %v3353 = vunpack.c.h.b16 %v462
    %v3354 = vunpack.c.l.b16 %v463
    %v3355 = vunpack.c.h.b16 %v463
    %v3356 = vunpack.c.l.b16 %v464
    %v3357 = vunpack.c.h.b16 %v464
    %v3358 = vunpack.c.l.b16 %v465
    %v3359 = vunpack.c.h.b16 %v465
    %v3360 = vunpack.c.l.b16 %v466
    %v3361 = vunpack.c.h.b16 %v466
    %v3362 = vunpack.c.l.b16 %v467
    %v3363 = vunpack.c.h.b16 %v467
    %v3364 = vunpack.c.l.b16 %v468
    %v3365 = vunpack.c.h.b16 %v468
    %v3366 = vunpack.c.l.b16 %v469
    %v3367 = vunpack.c.h.b16 %v469
    %v3368 = vunpack.c.l.b16 %v470
    %v3369 = vunpack.c.h.b16 %v470
    %v3370 = vunpack.c.l.b16 %v471
    %v3371 = vunpack.c.h.b16 %v471
    %v3372 = vunpack.c.l.b16 %v472
    %v3373 = vunpack.c.h.b16 %v472
    %v3374 = vunpack.c.l.b16 %v473
    %v3375 = vunpack.c.h.b16 %v473
    %v3376 = vunpack.c.l.b16 %v474
    %v3377 = vunpack.c.h.b16 %v474
    %v3378 = vunpack.c.l.b16 %v475
    %v3379 = vunpack.c.h.b16 %v475
    %v3380 = vunpack.c.l.b16 %v476
    %v3381 = vunpack.c.h.b16 %v476
    %v3382 = vunpack.c.l.b16 %v477
    %v3383 = vunpack.c.h.b16 %v477
    %v3384 = vunpack.c.l.b16 %v478
    %v3385 = vunpack.c.h.b16 %v478
    %v3386 = vunpack.c.l.b16 %v479
    %v3387 = vunpack.c.h.b16 %v479
    %v3388 = vunpack.c.l.b16 %v480
    %v3389 = vunpack.c.h.b16 %v480
    %v3390 = vunpack.c.l.b16 %v481
    %v3391 = vunpack.c.h.b16 %v481
    %v3392 = vunpack.c.l.b16 %v482
    %v3393 = vunpack.c.h.b16 %v482
    %v3394 = vunpack.c.l.b16 %v483
    %v3395 = vunpack.c.h.b16 %v483
    %v3396 = vunpack.c.l.b16 %v484
    %v3397 = vunpack.c.h.b16 %v484
    %v3398 = vunpack.c.l.b16 %v485
    %v3399 = vunpack.c.h.b16 %v485
    %v3400 = vunpack.c.l.b16 %v486
    %v3401 = vunpack.c.h.b16 %v486
    %v3402 = vunpack.c.l.b16 %v487
    %v3403 = vunpack.c.h.b16 %v487
    %v3404 = vunpack.c.l.b16 %v488
    %v3405 = vunpack.c.h.b16 %v488
    %v3406 = vunpack.c.l.b16 %v489
    %v3407 = vunpack.c.h.b16 %v489
    %v3408 = vunpack.c.l.b16 %v490
    %v3409 = vunpack.c.h.b16 %v490
    %v3410 = vunpack.c.l.b16 %v491
    %v3411 = vunpack.c.h.b16 %v491
    %v3412 = vunpack.c.l.b16 %v492
    %v3413 = vunpack.c.h.b16 %v492
    %v3414 = vunpack.c.l.b16 %v493
    %v3415 = vunpack.c.h.b16 %v493
    %v3416 = vunpack.c.l.b16 %v494
    %v3417 = vunpack.c.h.b16 %v494
    %v3418 = vunpack.c.l.b16 %v495
    %v3419 = vunpack.c.h.b16 %v495
    %v3420 = vunpack.c.l.b16 %v496
    %v3421 = vunpack.c.h.b16 %v496
    %v3422 = vunpack.c.l.b16 %v497
    %v3423 = vunpack.c.h.b16 %v497
    %v3424 = vunpack.c.l.b16 %v498
    %v3425 = vunpack.c.h.b16 %v498
    %v3426 = vunpack.c.l.b16 %v499
    %v3427 = vunpack.c.h.b16 %v499
    %v3428 = vunpack.c.l.b16 %v500
    %v3429 = vunpack.c.h.b16 %v500
    %v3430 = vunpack.c.l.b16 %v501
    %v3431 = vunpack.c.h.b16 %v501
    %v3432 = vunpack.c.l.b16 %v502
    %v3433 = vunpack.c.h.b16 %v502
    %v3434 = vunpack.c.l.b16 %v503
    %v3435 = vunpack.c.h.b16 %v503
    %v3436 = vunpack.c.l.b16 %v504
    %v3437 = vunpack.c.h.b16 %v504
    %v3438 = vunpack.c.l.b16 %v505
    %v3439 = vunpack.c.h.b16 %v505
    %v3440 = vunpack.c.l.b16 %v506
    %v3441 = vunpack.c.h.b16 %v506
    %v3442 = vunpack.c.l.b16 %v507
    %v3443 = vunpack.c.h.b16 %v507
    %v3444 = vunpack.c.l.b16 %v508
    %v3445 = vunpack.c.h.b16 %v508
    %v3446 = vunpack.c.l.b16 %v509
    %v3447 = vunpack.c.h.b16 %v509
    %v3448 = vunpack.c.l.b16 %v510
    %v3449 = vunpack.c.h.b16 %v510
    %v3450 = vunpack.c.l.b16 %v511
    %v3451 = vunpack.c.h.b16 %v511
    %v3452 = vunpack.c.l.b16 %v512
    %v3453 = vunpack.c.h.b16 %v512
    %v3454 = vunpack.c.l.b16 %v513
    %v3455 = vunpack.c.h.b16 %v513
    %v3456 = vunpack.c.l.b16 %v514
    %v3457 = vunpack.c.h.b16 %v514
    %v3458 = vunpack.c.l.b16 %v515
    %v3459 = vunpack.c.h.b16 %v515
    %v3460 = vunpack.c.l.b16 %v516
    %v3461 = vunpack.c.h.b16 %v516
    %v3462 = vunpack.c.l.b16 %v517
    %v3463 = vunpack.c.h.b16 %v517
    %v3464 = vunpack.c.l.b16 %v518
    %v3465 = vunpack.c.h.b16 %v518
    %v3466 = vunpack.c.l.b16 %v519
    %v3467 = vunpack.c.h.b16 %v519
    %v3468 = vunpack.c.l.b16 %v520
    %v3469 = vunpack.c.h.b16 %v520
    %v3470 = vunpack.c.l.b16 %v521
    %v3471 = vunpack.c.h.b16 %v521
    %v3472 = vunpack.c.l.b16 %v522
    %v3473 = vunpack.c.h.b16 %v522
    %v3474 = vunpack.c.l.b16 %v523
    %v3475 = vunpack.c.h.b16 %v523
    %v3476 = vunpack.c.l.b16 %v524
    %v3477 = vunpack.c.h.b16 %v524
    %v3478 = vunpack.c.l.b16 %v525
    %v3479 = vunpack.c.h.b16 %v525
    %v3480 = vunpack.c.l.b16 %v526
    %v3481 = vunpack.c.h.b16 %v526
    %v3482 = vunpack.c.l.b16 %v527
    %v3483 = vunpack.c.h.b16 %v527
    %v3484 = vunpack.c.l.b16 %v528
    %v3485 = vunpack.c.h.b16 %v528
    %v3486 = vunpack.c.l.b16 %v529
    %v3487 = vunpack.c.h.b16 %v529
    %v3488 = vunpack.c.l.b16 %v530
    %v3489 = vunpack.c.h.b16 %v530
    %v3490 = vunpack.c.l.b16 %v531
    %v3491 = vunpack.c.h.b16 %v531
    %v3492 = vunpack.c.l.b16 %v532
    %v3493 = vunpack.c.h.b16 %v532
    %v3494 = vunpack.c.l.b16 %v533
    %v3495 = vunpack.c.h.b16 %v533
    %v3496 = vunpack.c.l.b16 %v534
    %v3497 = vunpack.c.h.b16 %v534
    %v3498 = vunpack.c.l.b16 %v535
    %v3499 = vunpack.c.h.b16 %v535
    %v3500 = vunpack.c.l.b16 %v536
    %v3501 = vunpack.c.h.b16 %v536
    %v3502 = vunpack.c.l.b16 %v537
    %v3503 = vunpack.c.h.b16 %v537
    %v3504 = vunpack.c.l.b16 %v538
    %v3505 = vunpack.c.h.b16 %v538
    %v3506 = vunpack.c.l.b16 %v539
    %v3507 = vunpack.c.h.b16 %v539
    %v3508 = vunpack.c.l.b16 %v540
    %v3509 = vunpack.c.h.b16 %v540
    %v3510 = vunpack.c.l.b16 %v541
    %v3511 = vunpack.c.h.b16 %v541
    %v3512 = vunpack.c.l.b16 %v542
    %v3513 = vunpack.c.h.b16 %v542
    %v3514 = vunpack.c.l.b16 %v543
    %v3515 = vunpack.c.h.b16 %v543
    %v3516 = vunpack.c.l.b16 %v544
    %v3517 = vunpack.c.h.b16 %v544
    %v3518 = vunpack.c.l.b16 %v545
    %v3519 = vunpack.c.h.b16 %v545
    %v3520 = vunpack.c.l.b16 %v546
    %v3521 = vunpack.c.h.b16 %v546
    %v3522 = vunpack.c.l.b16 %v547
    %v3523 = vunpack.c.h.b16 %v547
    %v3524 = vunpack.c.l.b16 %v548
    %v3525 = vunpack.c.h.b16 %v548
    %v3526 = vunpack.c.l.b16 %v549
    %v3527 = vunpack.c.h.b16 %v549
    %v3528 = vunpack.c.l.b16 %v550
    %v3529 = vunpack.c.h.b16 %v550
    %v3530 = vunpack.c.l.b16 %v551
    %v3531 = vunpack.c.h.b16 %v551
    %v3532 = vunpack.c.l.b16 %v552
    %v3533 = vunpack.c.h.b16 %v552
    %v3534 = vunpack.c.l.b16 %v553
    %v3535 = vunpack.c.h.b16 %v553
    %v3536 = vunpack.c.l.b16 %v554
    %v3537 = vunpack.c.h.b16 %v554
    %v3538 = vunpack.c.l.b16 %v555
    %v3539 = vunpack.c.h.b16 %v555
    %v3540 = vunpack.c.l.b16 %v556
    %v3541 = vunpack.c.h.b16 %v556
    %v3542 = vunpack.c.l.b16 %v557
    %v3543 = vunpack.c.h.b16 %v557
    %v3544 = vunpack.c.l.b16 %v558
    %v3545 = vunpack.c.h.b16 %v558
    %v3546 = vunpack.c.l.b16 %v559
    %v3547 = vunpack.c.h.b16 %v559
    %v3548 = vunpack.c.l.b16 %v560
    %v3549 = vunpack.c.h.b16 %v560
    %v3550 = vunpack.c.l.b16 %v561
    %v3551 = vunpack.c.h.b16 %v561
    %v3552 = vunpack.c.l.b16 %v562
    %v3553 = vunpack.c.h.b16 %v562
    %v3554 = vunpack.c.l.b16 %v563
    %v3555 = vunpack.c.h.b16 %v563
    %v3556 = vunpack.c.l.b16 %v564
    %v3557 = vunpack.c.h.b16 %v564
    %v3558 = vunpack.c.l.b16 %v565
    %v3559 = vunpack.c.h.b16 %v565
    %v3560 = vunpack.c.l.b16 %v566
    %v3561 = vunpack.c.h.b16 %v566
    %v3562 = vunpack.c.l.b16 %v567
    %v3563 = vunpack.c.h.b16 %v567
    %v3564 = vunpack.c.l.b16 %v568
    %v3565 = vunpack.c.h.b16 %v568
    %v3566 = vunpack.c.l.b16 %v569
    %v3567 = vunpack.c.h.b16 %v569
    %v3568 = vunpack.c.l.b16 %v570
    %v3569 = vunpack.c.h.b16 %v570
    %v3570 = vunpack.c.l.b16 %v571
    %v3571 = vunpack.c.h.b16 %v571
    %v3572 = vunpack.c.l.b16 %v572
    %v3573 = vunpack.c.h.b16 %v572
    %v3574 = vunpack.c.l.b16 %v573
    %v3575 = vunpack.c.h.b16 %v573
    %v3576 = vunpack.c.l.b16 %v574
    %v3577 = vunpack.c.h.b16 %v574
    %v3578 = vunpack.c.l.b16 %v575
    %v3579 = vunpack.c.h.b16 %v575
    %v3580 = vunpack.c.l.b16 %v576
    %v3581 = vunpack.c.h.b16 %v576
    %v3582 = vunpack.c.l.b16 %v577
    %v3583 = vunpack.c.h.b16 %v577
    %v3584 = vunpack.c.l.b16 %v578
    %v3585 = vunpack.c.h.b16 %v578
    %v3586 = vunpack.c.l.b16 %v579
    %v3587 = vunpack.c.h.b16 %v579
    %v3588 = vunpack.c.l.b16 %v580
    %v3589 = vunpack.c.h.b16 %v580
    %v3590 = vunpack.c.l.b16 %v581
    %v3591 = vunpack.c.h.b16 %v581
    %v3592 = vunpack.c.l.b16 %v582
    %v3593 = vunpack.c.h.b16 %v582
    %v3594 = vunpack.c.l.b16 %v583
    %v3595 = vunpack.c.h.b16 %v583
    %v3596 = vunpack.c.l.b16 %v584
    %v3597 = vunpack.c.h.b16 %v584
    %v3598 = vunpack.c.l.b16 %v585
    %v3599 = vunpack.c.h.b16 %v585
    %v3600 = vunpack.c.l.b16 %v586
    %v3601 = vunpack.c.h.b16 %v586
    %v3602 = vunpack.c.l.b16 %v587
    %v3603 = vunpack.c.h.b16 %v587
    %v3604 = vunpack.c.l.b16 %v588
    %v3605 = vunpack.c.h.b16 %v588
    %v3606 = vunpack.c.l.b16 %v589
    %v3607 = vunpack.c.h.b16 %v589
    %v3608 = vunpack.c.l.b16 %v590
    %v3609 = vunpack.c.h.b16 %v590
    %v3610 = vunpack.c.l.b16 %v591
    %v3611 = vunpack.c.h.b16 %v591
    %v3612 = vunpack.c.l.b16 %v592
    %v3613 = vunpack.c.h.b16 %v592
    %v3614 = vunpack.c.l.b16 %v593
    %v3615 = vunpack.c.h.b16 %v593
    %v3616 = vunpack.c.l.b16 %v594
    %v3617 = vunpack.c.h.b16 %v594
    %v3618 = vunpack.c.l.b16 %v595
    %v3619 = vunpack.c.h.b16 %v595
    %v3620 = vunpack.c.l.b16 %v596
    %v3621 = vunpack.c.h.b16 %v596
    %v3622 = vunpack.c.l.b16 %v597
    %v3623 = vunpack.c.h.b16 %v597
    %v3624 = vunpack.c.l.b16 %v598
    %v3625 = vunpack.c.h.b16 %v598
    %v3626 = vunpack.c.l.b16 %v599
    %v3627 = vunpack.c.h.b16 %v599
    %v3628 = vunpack.c.l.b16 %v600
    %v3629 = vunpack.c.h.b16 %v600
    %v3630 = vunpack.c.l.b16 %v601
    %v3631 = vunpack.c.h.b16 %v601
    %v3632 = vunpack.c.l.b16 %v602
    %v3633 = vunpack.c.h.b16 %v602
    %v3634 = vunpack.c.l.b16 %v603
    %v3635 = vunpack.c.h.b16 %v603
    %v3636 = vunpack.c.l.b16 %v604
    %v3637 = vunpack.c.h.b16 %v604
    %v3638 = vunpack.c.l.b16 %v605
    %v3639 = vunpack.c.h.b16 %v605
    %v3640 = vunpack.c.l.b16 %v606
    %v3641 = vunpack.c.h.b16 %v606
    %v3642 = vunpack.c.l.b16 %v607
    %v3643 = vunpack.c.h.b16 %v607
    %v3644 = vunpack.c.l.b16 %v608
    %v3645 = vunpack.c.h.b16 %v608
    %v3646 = vunpack.c.l.b16 %v609
    %v3647 = vunpack.c.h.b16 %v609
    %v3648 = vunpack.c.l.b16 %v610
    %v3649 = vunpack.c.h.b16 %v610
    %v3650 = vunpack.c.l.b16 %v611
    %v3651 = vunpack.c.h.b16 %v611
    %v3652 = vunpack.c.l.b16 %v612
    %v3653 = vunpack.c.h.b16 %v612
    %v3654 = vunpack.c.l.b16 %v613
    %v3655 = vunpack.c.h.b16 %v613
    %v3656 = vunpack.c.l.b16 %v614
    %v3657 = vunpack.c.h.b16 %v614
    %v3658 = vunpack.c.l.b16 %v615
    %v3659 = vunpack.c.h.b16 %v615
    %v3660 = vunpack.c.l.b16 %v616
    %v3661 = vunpack.c.h.b16 %v616
    %v3662 = vunpack.c.l.b16 %v617
    %v3663 = vunpack.c.h.b16 %v617
    %v3664 = vunpack.c.l.b16 %v618
    %v3665 = vunpack.c.h.b16 %v618
    %v3666 = vunpack.c.l.b16 %v619
    %v3667 = vunpack.c.h.b16 %v619
    %v3668 = vunpack.c.l.b16 %v620
    %v3669 = vunpack.c.h.b16 %v620
    %v3670 = vunpack.c.l.b16 %v621
    %v3671 = vunpack.c.h.b16 %v621
    %v3672 = vunpack.c.l.b16 %v622
    %v3673 = vunpack.c.h.b16 %v622
    %v3674 = vunpack.c.l.b16 %v623
    %v3675 = vunpack.c.h.b16 %v623
    %v3676 = vunpack.c.l.b16 %v624
    %v3677 = vunpack.c.h.b16 %v624
    %v3678 = vunpack.c.l.b16 %v625
    %v3679 = vunpack.c.h.b16 %v625
    %v3680 = vunpack.c.l.b16 %v626
    %v3681 = vunpack.c.h.b16 %v626
    %v3682 = vunpack.c.l.b16 %v627
    %v3683 = vunpack.c.h.b16 %v627
    %v3684 = vunpack.c.l.b16 %v628
    %v3685 = vunpack.c.h.b16 %v628
    %v3686 = vunpack.c.l.b16 %v629
    %v3687 = vunpack.c.h.b16 %v629
    %v3688 = vunpack.c.l.b16 %v630
    %v3689 = vunpack.c.h.b16 %v630
    %v3690 = vunpack.c.l.b16 %v631
    %v3691 = vunpack.c.h.b16 %v631
    %v3692 = vunpack.c.l.b16 %v632
    %v3693 = vunpack.c.h.b16 %v632
    %v3694 = vunpack.c.l.b16 %v633
    %v3695 = vunpack.c.h.b16 %v633
    %v3696 = vunpack.c.l.b16 %v634
    %v3697 = vunpack.c.h.b16 %v634
    %v3698 = vunpack.c.l.b16 %v635
    %v3699 = vunpack.c.h.b16 %v635
    %v3700 = vunpack.c.l.b16 %v636
    %v3701 = vunpack.c.h.b16 %v636
    %v3702 = vunpack.c.l.b16 %v637
    %v3703 = vunpack.c.h.b16 %v637
    %v3704 = vunpack.c.l.b16 %v638
    %v3705 = vunpack.c.h.b16 %v638
    %v3706 = vunpack.c.l.b16 %v639
    %v3707 = vunpack.c.h.b16 %v639
    %v3708 = vunpack.c.l.b16 %v640
    %v3709 = vunpack.c.h.b16 %v640
    %v3710 = vunpack.c.l.b16 %v641
    %v3711 = vunpack.c.h.b16 %v641
    %v3712 = vunpack.c.l.b16 %v642
    %v3713 = vunpack.c.h.b16 %v642
    %v3714 = vunpack.c.l.b16 %v643
    %v3715 = vunpack.c.h.b16 %v643
    %v3716 = vunpack.c.l.b16 %v644
    %v3717 = vunpack.c.h.b16 %v644
    %v3718 = vunpack.c.l.b16 %v645
    %v3719 = vunpack.c.h.b16 %v645
    %v3720 = vunpack.c.l.b16 %v646
    %v3721 = vunpack.c.h.b16 %v646
    %v3722 = vunpack.c.l.b16 %v647
    %v3723 = vunpack.c.h.b16 %v647
    %v3724 = vunpack.c.l.b16 %v648
    %v3725 = vunpack.c.h.b16 %v648
    %v3726 = vunpack.c.l.b16 %v649
    %v3727 = vunpack.c.h.b16 %v649
    %v3728 = vunpack.c.l.b16 %v650
    %v3729 = vunpack.c.h.b16 %v650
    %v3730 = vunpack.c.l.b16 %v651
    %v3731 = vunpack.c.h.b16 %v651
    %v3732 = vunpack.c.l.b16 %v652
    %v3733 = vunpack.c.h.b16 %v652
    %v3734 = vunpack.c.l.b16 %v653
    %v3735 = vunpack.c.h.b16 %v653
    %v3736 = vunpack.c.l.b16 %v654
    %v3737 = vunpack.c.h.b16 %v654
    %v3738 = vunpack.c.l.b16 %v655
    %v3739 = vunpack.c.h.b16 %v655
    %v3740 = vunpack.c.l.b16 %v656
    %v3741 = vunpack.c.h.b16 %v656
    %v3742 = vunpack.c.l.b16 %v657
    %v3743 = vunpack.c.h.b16 %v657
    %v3744 = vunpack.c.l.b16 %v658
    %v3745 = vunpack.c.h.b16 %v658
    %v3746 = vunpack.c.l.b16 %v659
    %v3747 = vunpack.c.h.b16 %v659
    %v3748 = vunpack.c.l.b16 %v660
    %v3749 = vunpack.c.h.b16 %v660
    %v3750 = vunpack.c.l.b16 %v661
    %v3751 = vunpack.c.h.b16 %v661
    %v3752 = vunpack.c.l.b16 %v662
    %v3753 = vunpack.c.h.b16 %v662
    %v3754 = vunpack.c.l.b16 %v663
    %v3755 = vunpack.c.h.b16 %v663
    %v3756 = vunpack.c.l.b16 %v664
    %v3757 = vunpack.c.h.b16 %v664
    %v3758 = vunpack.c.l.b16 %v665
    %v3759 = vunpack.c.h.b16 %v665
    %v3760 = vunpack.c.l.b16 %v666
    %v3761 = vunpack.c.h.b16 %v666
    %v3762 = vunpack.c.l.b16 %v667
    %v3763 = vunpack.c.h.b16 %v667
    %v3764 = vunpack.c.l.b16 %v668
    %v3765 = vunpack.c.h.b16 %v668
    %v3766 = vunpack.c.l.b16 %v669
    %v3767 = vunpack.c.h.b16 %v669
    %v3768 = vunpack.c.l.b16 %v670
    %v3769 = vunpack.c.h.b16 %v670
    %v3770 = vunpack.c.l.b16 %v671
    %v3771 = vunpack.c.h.b16 %v671
    %v3772 = vunpack.c.l.b16 %v672
    %v3773 = vunpack.c.h.b16 %v672
    %v3774 = vunpack.c.l.b16 %v673
    %v3775 = vunpack.c.h.b16 %v673
    %v3776 = vunpack.c.l.b16 %v674
    %v3777 = vunpack.c.h.b16 %v674
    %v3778 = vunpack.c.l.b16 %v675
    %v3779 = vunpack.c.h.b16 %v675
    %v3780 = vunpack.c.l.b16 %v676
    %v3781 = vunpack.c.h.b16 %v676
    %v3782 = vunpack.c.l.b16 %v677
    %v3783 = vunpack.c.h.b16 %v677
    %v3784 = vunpack.c.l.b16 %v678
    %v3785 = vunpack.c.h.b16 %v678
    %v3786 = vunpack.c.l.b16 %v679
    %v3787 = vunpack.c.h.b16 %v679
    %v3788 = vunpack.c.l.b16 %v680
    %v3789 = vunpack.c.h.b16 %v680
    %v3790 = vunpack.c.l.b16 %v681
    %v3791 = vunpack.c.h.b16 %v681
    %v3792 = vunpack.c.l.b16 %v682
    %v3793 = vunpack.c.h.b16 %v682
    %v3794 = vunpack.c.l.b16 %v683
    %v3795 = vunpack.c.h.b16 %v683
    %v3796 = vunpack.c.l.b16 %v684
    %v3797 = vunpack.c.h.b16 %v684
    %v3798 = vunpack.c.l.b16 %v685
    %v3799 = vunpack.c.h.b16 %v685
    %v3800 = vunpack.c.l.b16 %v686
    %v3801 = vunpack.c.h.b16 %v686
    %v3802 = vunpack.c.l.b16 %v687
    %v3803 = vunpack.c.h.b16 %v687
    %v3804 = vunpack.c.l.b16 %v688
    %v3805 = vunpack.c.h.b16 %v688
    %v3806 = vunpack.c.l.b16 %v689
    %v3807 = vunpack.c.h.b16 %v689
    %v3808 = vunpack.c.l.b16 %v690
    %v3809 = vunpack.c.h.b16 %v690
    %v3810 = vunpack.c.l.b16 %v691
    %v3811 = vunpack.c.h.b16 %v691
    %v3812 = vunpack.c.l.b16 %v692
    %v3813 = vunpack.c.h.b16 %v692
    %v3814 = vunpack.c.l.b16 %v693
    %v3815 = vunpack.c.h.b16 %v693
    %v3816 = vunpack.c.l.b16 %v694
    %v3817 = vunpack.c.h.b16 %v694
    %v3818 = vunpack.c.l.b16 %v695
    %v3819 = vunpack.c.h.b16 %v695
    %v3820 = vunpack.c.l.b16 %v696
    %v3821 = vunpack.c.h.b16 %v696
    %v3822 = vunpack.c.l.b16 %v697
    %v3823 = vunpack.c.h.b16 %v697
    %v3824 = vunpack.c.l.b16 %v698
    %v3825 = vunpack.c.h.b16 %v698
    %v3826 = vunpack.c.l.b16 %v699
    %v3827 = vunpack.c.h.b16 %v699
    %v3828 = vunpack.c.l.b16 %v700
    %v3829 = vunpack.c.h.b16 %v700
    %v3830 = vunpack.c.l.b16 %v701
    %v3831 = vunpack.c.h.b16 %v701
    %v3832 = vunpack.c.l.b16 %v702
    %v3833 = vunpack.c.h.b16 %v702
    %v3834 = vunpack.c.l.b16 %v703
    %v3835 = vunpack.c.h.b16 %v703
    %v3836 = vunpack.c.l.b16 %v704
    %v3837 = vunpack.c.h.b16 %v704
    %v3838 = vunpack.c.l.b16 %v705
    %v3839 = vunpack.c.h.b16 %v705
    %v3840 = vunpack.c.l.b16 %v706
    %v3841 = vunpack.c.h.b16 %v706
    %v3842 = vunpack.c.l.b16 %v707
    %v3843 = vunpack.c.h.b16 %v707
    %v3844 = vunpack.c.l.b16 %v708
    %v3845 = vunpack.c.h.b16 %v708
    %v3846 = vunpack.c.l.b16 %v709
    %v3847 = vunpack.c.h.b16 %v709
    %v3848 = vunpack.c.l.b16 %v710
    %v3849 = vunpack.c.h.b16 %v710
    %v3850 = vunpack.c.l.b16 %v711
    %v3851 = vunpack.c.h.b16 %v711
    %v3852 = vunpack.c.l.b16 %v712
    %v3853 = vunpack.c.h.b16 %v712
    %v3854 = vunpack.c.l.b16 %v713
    %v3855 = vunpack.c.h.b16 %v713
    %v3856 = vunpack.c.l.b16 %v714
    %v3857 = vunpack.c.h.b16 %v714
    %v3858 = vunpack.c.l.b16 %v715
    %v3859 = vunpack.c.h.b16 %v715
    %v3860 = vunpack.c.l.b16 %v716
    %v3861 = vunpack.c.h.b16 %v716
    %v3862 = vunpack.c.l.b16 %v717
    %v3863 = vunpack.c.h.b16 %v717
    %v3864 = vunpack.c.l.b16 %v718
    %v3865 = vunpack.c.h.b16 %v718
    %v3866 = vunpack.c.l.b16 %v719
    %v3867 = vunpack.c.h.b16 %v719
    %v3868 = vunpack.c.l.b16 %v720
    %v3869 = vunpack.c.h.b16 %v720
    %v3870 = vunpack.c.l.b16 %v721
    %v3871 = vunpack.c.h.b16 %v721
    %v3872 = vunpack.c.l.b16 %v722
    %v3873 = vunpack.c.h.b16 %v722
    %v3874 = vunpack.c.l.b16 %v723
    %v3875 = vunpack.c.h.b16 %v723
    %v3876 = vunpack.c.l.b16 %v724
    %v3877 = vunpack.c.h.b16 %v724
    %v3878 = vunpack.c.l.b16 %v725
    %v3879 = vunpack.c.h.b16 %v725
    %v3880 = vunpack.c.l.b16 %v726
    %v3881 = vunpack.c.h.b16 %v726
    %v3882 = vunpack.c.l.b16 %v727
    %v3883 = vunpack.c.h.b16 %v727
    %v3884 = vunpack.c.l.b16 %v728
    %v3885 = vunpack.c.h.b16 %v728
    %v3886 = vunpack.c.l.b16 %v729
    %v3887 = vunpack.c.h.b16 %v729
    %v3888 = vunpack.c.l.b16 %v730
    %v3889 = vunpack.c.h.b16 %v730
    %v3890 = vunpack.c.l.b16 %v731
    %v3891 = vunpack.c.h.b16 %v731
    %v3892 = vunpack.c.l.b16 %v732
    %v3893 = vunpack.c.h.b16 %v732
    %v3894 = vunpack.c.l.b16 %v733
    %v3895 = vunpack.c.h.b16 %v733
    %v3896 = vunpack.c.l.b16 %v734
    %v3897 = vunpack.c.h.b16 %v734
    %v3898 = vunpack.c.l.b16 %v735
    %v3899 = vunpack.c.h.b16 %v735
    %v3900 = vunpack.c.l.b16 %v736
    %v3901 = vunpack.c.h.b16 %v736
    %v3902 = vunpack.c.l.b16 %v737
    %v3903 = vunpack.c.h.b16 %v737
    %v3904 = vunpack.c.l.b16 %v738
    %v3905 = vunpack.c.h.b16 %v738
    %v3906 = vunpack.c.l.b16 %v739
    %v3907 = vunpack.c.h.b16 %v739
    %v3908 = vunpack.c.l.b16 %v740
    %v3909 = vunpack.c.h.b16 %v740
    %v3910 = vunpack.c.l.b16 %v741
    %v3911 = vunpack.c.h.b16 %v741
    %v3912 = vunpack.c.l.b16 %v742
    %v3913 = vunpack.c.h.b16 %v742
    %v3914 = vunpack.c.l.b16 %v743
    %v3915 = vunpack.c.h.b16 %v743
    %v3916 = vunpack.c.l.b16 %v744
    %v3917 = vunpack.c.h.b16 %v744
    %v3918 = vunpack.c.l.b16 %v745
    %v3919 = vunpack.c.h.b16 %v745
    %v3920 = vunpack.c.l.b16 %v746
    %v3921 = vunpack.c.h.b16 %v746
    %v3922 = vunpack.c.l.b16 %v747
    %v3923 = vunpack.c.h.b16 %v747
    %v3924 = vunpack.c.l.b16 %v748
    %v3925 = vunpack.c.h.b16 %v748
    %v3926 = vunpack.c.l.b16 %v749
    %v3927 = vunpack.c.h.b16 %v749
    %v3928 = vunpack.c.l.b16 %v750
    %v3929 = vunpack.c.h.b16 %v750
    %v3930 = vunpack.c.l.b16 %v751
    %v3931 = vunpack.c.h.b16 %v751
    %v3932 = vunpack.c.l.b16 %v752
    %v3933 = vunpack.c.h.b16 %v752
    %v3934 = vunpack.c.l.b16 %v753
    %v3935 = vunpack.c.h.b16 %v753
    %v3936 = vunpack.c.l.b16 %v754
    %v3937 = vunpack.c.h.b16 %v754
    %v3938 = vunpack.c.l.b16 %v755
    %v3939 = vunpack.c.h.b16 %v755
    %v3940 = vunpack.c.l.b16 %v756
    %v3941 = vunpack.c.h.b16 %v756
    %v3942 = vunpack.c.l.b16 %v757
    %v3943 = vunpack.c.h.b16 %v757
    %v3944 = vunpack.c.l.b16 %v758
    %v3945 = vunpack.c.h.b16 %v758
    %v3946 = vunpack.c.l.b16 %v759
    %v3947 = vunpack.c.h.b16 %v759
    %v3948 = vunpack.c.l.b16 %v760
    %v3949 = vunpack.c.h.b16 %v760
    %v3950 = vunpack.c.l.b16 %v761
    %v3951 = vunpack.c.h.b16 %v761
    %v3952 = vunpack.c.l.b16 %v762
    %v3953 = vunpack.c.h.b16 %v762
    %v3954 = vunpack.c.l.b16 %v763
    %v3955 = vunpack.c.h.b16 %v763
    %v3956 = vunpack.c.l.b16 %v764
    %v3957 = vunpack.c.h.b16 %v764
    %v3958 = vunpack.c.l.b16 %v765
    %v3959 = vunpack.c.h.b16 %v765
    %v3960 = vunpack.c.l.b16 %v766
    %v3961 = vunpack.c.h.b16 %v766
    %v3962 = vunpack.c.l.b16 %v767
    %v3963 = vunpack.c.h.b16 %v767
    %v3964 = vunpack.c.l.b16 %v768
    %v3965 = vunpack.c.h.b16 %v768
    %v3966 = vunpack.c.l.b16 %v769
    %v3967 = vunpack.c.h.b16 %v769
    %v3968 = vunpack.c.l.b16 %v770
    %v3969 = vunpack.c.h.b16 %v770
    %v3970 = vunpack.c.l.b16 %v771
    %v3971 = vunpack.c.h.b16 %v771
    %v3972 = vunpack.c.l.b16 %v772
    %v3973 = vunpack.c.h.b16 %v772
    %v3974 = vunpack.c.l.b16 %v773
    %v3975 = vunpack.c.h.b16 %v773
    %v3976 = vunpack.c.l.b16 %v774
    %v3977 = vunpack.c.h.b16 %v774
    %v3978 = vunpack.c.l.b16 %v775
    %v3979 = vunpack.c.h.b16 %v775
    %v3980 = vunpack.c.l.b16 %v776
    %v3981 = vunpack.c.h.b16 %v776
    %v3982 = vunpack.c.l.b16 %v777
    %v3983 = vunpack.c.h.b16 %v777
    %v3984 = vunpack.c.l.b16 %v778
    %v3985 = vunpack.c.h.b16 %v778
    %v3986 = vunpack.c.l.b16 %v779
    %v3987 = vunpack.c.h.b16 %v779
    %v3988 = vunpack.c.l.b16 %v780
    %v3989 = vunpack.c.h.b16 %v780
    %v3990 = vunpack.c.l.b16 %v781
    %v3991 = vunpack.c.h.b16 %v781
    %v3992 = vunpack.c.l.b16 %v782
    %v3993 = vunpack.c.h.b16 %v782
    %v3994 = vunpack.c.l.b16 %v783
    %v3995 = vunpack.c.h.b16 %v783
    %v3996 = vunpack.c.l.b16 %v784
    %v3997 = vunpack.c.h.b16 %v784
    %v3998 = vunpack.c.l.b16 %v785
    %v3999 = vunpack.c.h.b16 %v785
    %v4000 = vunpack.c.l.b16 %v786
    %v4001 = vunpack.c.h.b16 %v786
    %v4002 = vunpack.c.l.b16 %v787
    %v4003 = vunpack.c.h.b16 %v787
    %v4004 = vunpack.c.l.b16 %v788
    %v4005 = vunpack.c.h.b16 %v788
    %v4006 = vunpack.c.l.b16 %v789
    %v4007 = vunpack.c.h.b16 %v789
    %v4008 = vunpack.c.l.b16 %v790
    %v4009 = vunpack.c.h.b16 %v790
    %v4010 = vunpack.c.l.b16 %v791
    %v4011 = vunpack.c.h.b16 %v791
    %v4012 = vunpack.c.l.b16 %v792
    %v4013 = vunpack.c.h.b16 %v792
    %v4014 = vunpack.c.l.b16 %v793
    %v4015 = vunpack.c.h.b16 %v793
    %v4016 = vunpack.c.l.b16 %v794
    %v4017 = vunpack.c.h.b16 %v794
    %v4018 = vunpack.c.l.b16 %v795
    %v4019 = vunpack.c.h.b16 %v795
    %v4020 = vunpack.c.l.b16 %v796
    %v4021 = vunpack.c.h.b16 %v796
    %v4022 = vunpack.c.l.b16 %v797
    %v4023 = vunpack.c.h.b16 %v797
    %v4024 = vunpack.c.l.b16 %v798
    %v4025 = vunpack.c.h.b16 %v798
    %v4026 = vunpack.c.l.b16 %v799
    %v4027 = vunpack.c.h.b16 %v799
    %v4028 = vunpack.c.l.b16 %v800
    %v4029 = vunpack.c.h.b16 %v800
    %v4030 = vunpack.c.l.b16 %v801
    %v4031 = vunpack.c.h.b16 %v801
    %v4032 = vunpack.c.l.b16 %v802
    %v4033 = vunpack.c.h.b16 %v802
    %v4034 = vunpack.c.l.b16 %v803
    %v4035 = vunpack.c.h.b16 %v803
    %v4036 = vunpack.c.l.b16 %v804
    %v4037 = vunpack.c.h.b16 %v804
    %v4038 = vunpack.c.l.b16 %v805
    %v4039 = vunpack.c.h.b16 %v805
    %v4040 = vunpack.c.l.b16 %v806
    %v4041 = vunpack.c.h.b16 %v806
    %v4042 = vunpack.c.l.b16 %v807
    %v4043 = vunpack.c.h.b16 %v807
    %v4044 = vunpack.c.l.b16 %v808
    %v4045 = vunpack.c.h.b16 %v808
    %v4046 = vunpack.c.l.b16 %v809
    %v4047 = vunpack.c.h.b16 %v809
    %v4048 = vunpack.c.l.b16 %v810
    %v4049 = vunpack.c.h.b16 %v810
    %v4050 = vunpack.c.l.b16 %v811
    %v4051 = vunpack.c.h.b16 %v811
    %v4052 = vunpack.c.l.b16 %v812
    %v4053 = vunpack.c.h.b16 %v812
    %v4054 = vunpack.c.l.b16 %v813
    %v4055 = vunpack.c.h.b16 %v813
    %v4056 = vunpack.c.l.b16 %v814
    %v4057 = vunpack.c.h.b16 %v814
    %v4058 = vunpack.c.l.b16 %v815
    %v4059 = vunpack.c.h.b16 %v815
    %v4060 = vunpack.c.l.b16 %v816
    %v4061 = vunpack.c.h.b16 %v816
    %v4062 = vunpack.c.l.b16 %v817
    %v4063 = vunpack.c.h.b16 %v817
    %v4064 = vunpack.c.l.b16 %v818
    %v4065 = vunpack.c.h.b16 %v818
    %v4066 = vunpack.c.l.b16 %v819
    %v4067 = vunpack.c.h.b16 %v819
    %v4068 = vunpack.c.l.b16 %v820
    %v4069 = vunpack.c.h.b16 %v820
    %v4070 = vunpack.c.l.b16 %v821
    %v4071 = vunpack.c.h.b16 %v821
    %v4072 = vunpack.c.l.b16 %v822
    %v4073 = vunpack.c.h.b16 %v822
    %v4074 = vunpack.c.l.b16 %v823
    %v4075 = vunpack.c.h.b16 %v823
    %v4076 = vunpack.c.l.b16 %v824
    %v4077 = vunpack.c.h.b16 %v824
    %v4078 = vunpack.c.l.b16 %v825
    %v4079 = vunpack.c.h.b16 %v825
    %v4080 = vunpack.c.l.b16 %v826
    %v4081 = vunpack.c.h.b16 %v826
    %v4082 = vunpack.c.l.b16 %v827
    %v4083 = vunpack.c.h.b16 %v827
    %v4084 = vunpack.c.l.b16 %v828
    %v4085 = vunpack.c.h.b16 %v828
    %v4086 = vunpack.c.l.b16 %v829
    %v4087 = vunpack.c.h.b16 %v829
    %v4088 = vunpack.c.l.b16 %v830
    %v4089 = vunpack.c.h.b16 %v830
    %v4090 = vunpack.c.l.b16 %v831
    %v4091 = vunpack.c.h.b16 %v831
    %v4092 = vunpack.c.l.b16 %v832
    %v4093 = vunpack.c.h.b16 %v832
    %v4094 = vunpack.c.l.b16 %v833
    %v4095 = vunpack.c.h.b16 %v833
    %v4096 = vunpack.c.l.b16 %v834
    %v4097 = vunpack.c.h.b16 %v834
    %v4098 = vunpack.c.l.b16 %v835
    %v4099 = vunpack.c.h.b16 %v835
    %v4100 = vunpack.c.l.b16 %v836
    %v4101 = vunpack.c.h.b16 %v836
    %v4102 = vunpack.c.l.b16 %v837
    %v4103 = vunpack.c.h.b16 %v837
    %v4104 = vunpack.c.l.b16 %v838
    %v4105 = vunpack.c.h.b16 %v838
    %v4106 = vunpack.c.l.b16 %v839
    %v4107 = vunpack.c.h.b16 %v839
    %v4108 = vunpack.c.l.b16 %v840
    %v4109 = vunpack.c.h.b16 %v840
    %v4110 = vunpack.c.l.b16 %v841
    %v4111 = vunpack.c.h.b16 %v841
    %v4112 = vunpack.c.l.b16 %v842
    %v4113 = vunpack.c.h.b16 %v842
    %v4114 = vunpack.c.l.b16 %v843
    %v4115 = vunpack.c.h.b16 %v843
    %v4116 = vunpack.c.l.b16 %v844
    %v4117 = vunpack.c.h.b16 %v844
    %v4118 = vunpack.c.l.b16 %v845
    %v4119 = vunpack.c.h.b16 %v845
    %v4120 = vunpack.c.l.b16 %v846
    %v4121 = vunpack.c.h.b16 %v846
    %v4122 = vunpack.c.l.b16 %v847
    %v4123 = vunpack.c.h.b16 %v847
    %v4124 = vunpack.c.l.b16 %v848
    %v4125 = vunpack.c.h.b16 %v848
    %v4126 = vunpack.c.l.b16 %v849
    %v4127 = vunpack.c.h.b16 %v849
    %v4128 = vunpack.c.l.b16 %v850
    %v4129 = vunpack.c.h.b16 %v850
    %v4130 = vunpack.c.l.b16 %v851
    %v4131 = vunpack.c.h.b16 %v851
    %v4132 = vunpack.c.l.b16 %v852
    %v4133 = vunpack.c.h.b16 %v852
    %v4134 = vunpack.c.l.b16 %v853
    %v4135 = vunpack.c.h.b16 %v853
    %v4136 = vunpack.c.l.b16 %v854
    %v4137 = vunpack.c.h.b16 %v854
    %v4138 = vunpack.c.l.b16 %v855
    %v4139 = vunpack.c.h.b16 %v855
    %v4140 = vunpack.c.l.b16 %v856
    %v4141 = vunpack.c.h.b16 %v856
    %v4142 = vunpack.c.l.b16 %v857
    %v4143 = vunpack.c.h.b16 %v857
    %v4144 = vunpack.c.l.b16 %v858
    %v4145 = vunpack.c.h.b16 %v858
    %v4146 = vunpack.c.l.b16 %v859
    %v4147 = vunpack.c.h.b16 %v859
    %v4148 = vunpack.c.l.b16 %v860
    %v4149 = vunpack.c.h.b16 %v860
    %v4150 = vunpack.c.l.b16 %v861
    %v4151 = vunpack.c.h.b16 %v861
    %v4152 = vunpack.c.l.b16 %v862
    %v4153 = vunpack.c.h.b16 %v862
    %v4154 = vunpack.c.l.b16 %v863
    %v4155 = vunpack.c.h.b16 %v863
    %v4156 = vunpack.c.l.b16 %v864
    %v4157 = vunpack.c.h.b16 %v864
    %v4158 = vunpack.c.l.b16 %v865
    %v4159 = vunpack.c.h.b16 %v865
    %v4160 = vunpack.c.l.b16 %v866
    %v4161 = vunpack.c.h.b16 %v866
    %v4162 = vunpack.c.l.b16 %v867
    %v4163 = vunpack.c.h.b16 %v867
    %v4164 = vunpack.c.l.b16 %v868
    %v4165 = vunpack.c.h.b16 %v868
    %v4166 = vunpack.c.l.b16 %v869
    %v4167 = vunpack.c.h.b16 %v869
    %v4168 = vunpack.c.l.b16 %v870
    %v4169 = vunpack.c.h.b16 %v870
    %v4170 = vunpack.c.l.b16 %v871
    %v4171 = vunpack.c.h.b16 %v871
    %v4172 = vunpack.c.l.b16 %v872
    %v4173 = vunpack.c.h.b16 %v872
    %v4174 = vunpack.c.l.b16 %v873
    %v4175 = vunpack.c.h.b16 %v873
    %v4176 = vunpack.c.l.b16 %v874
    %v4177 = vunpack.c.h.b16 %v874
    %v4178 = vunpack.c.l.b16 %v875
    %v4179 = vunpack.c.h.b16 %v875
    %v4180 = vunpack.c.l.b16 %v876
    %v4181 = vunpack.c.h.b16 %v876
    %v4182 = vunpack.c.l.b16 %v877
    %v4183 = vunpack.c.h.b16 %v877
    %v4184 = vunpack.c.l.b16 %v878
    %v4185 = vunpack.c.h.b16 %v878
    %v4186 = vunpack.c.l.b16 %v879
    %v4187 = vunpack.c.h.b16 %v879
    %v4188 = vunpack.c.l.b16 %v880
    %v4189 = vunpack.c.h.b16 %v880
    %v4190 = vunpack.c.l.b16 %v881
    %v4191 = vunpack.c.h.b16 %v881
    %v4192 = vunpack.c.l.b16 %v882
    %v4193 = vunpack.c.h.b16 %v882
    %v4194 = vunpack.c.l.b16 %v883
    %v4195 = vunpack.c.h.b16 %v883
    %v4196 = vunpack.c.l.b16 %v884
    %v4197 = vunpack.c.h.b16 %v884
    %v4198 = vunpack.c.l.b16 %v885
    %v4199 = vunpack.c.h.b16 %v885
    %v4200 = vunpack.c.l.b16 %v886
    %v4201 = vunpack.c.h.b16 %v886
    %v4202 = vunpack.c.l.b16 %v887
    %v4203 = vunpack.c.h.b16 %v887
    %v4204 = vunpack.c.l.b16 %v888
    %v4205 = vunpack.c.h.b16 %v888
    %v4206 = vunpack.c.l.b16 %v889
    %v4207 = vunpack.c.h.b16 %v889
    %v4208 = vunpack.c.l.b16 %v890
    %v4209 = vunpack.c.h.b16 %v890
    %v4210 = vunpack.c.l.b16 %v891
    %v4211 = vunpack.c.h.b16 %v891
    %v4212 = vunpack.c.l.b16 %v892
    %v4213 = vunpack.c.h.b16 %v892
    %v4214 = vunpack.c.l.b16 %v893
    %v4215 = vunpack.c.h.b16 %v893
    %v4216 = vunpack.c.l.b16 %v894
    %v4217 = vunpack.c.h.b16 %v894
    %v4218 = vunpack.c.l.b16 %v895
    %v4219 = vunpack.c.h.b16 %v895
    %v4220 = vunpack.c.l.b16 %v896
    %v4221 = vunpack.c.h.b16 %v896
    %v4222 = vunpack.c.l.b16 %v897
    %v4223 = vunpack.c.h.b16 %v897
    %v4224 = vunpack.c.l.b16 %v898
    %v4225 = vunpack.c.h.b16 %v898
    %v4226 = vunpack.c.l.b16 %v899
    %v4227 = vunpack.c.h.b16 %v899
    %v4228 = vunpack.c.l.b16 %v900
    %v4229 = vunpack.c.h.b16 %v900
    %v4230 = vunpack.c.l.b16 %v901
    %v4231 = vunpack.c.h.b16 %v901
    %v4232 = vunpack.c.l.b16 %v902
    %v4233 = vunpack.c.h.b16 %v902
    %v4234 = vunpack.c.l.b16 %v903
    %v4235 = vunpack.c.h.b16 %v903
    %v4236 = vunpack.c.l.b16 %v904
    %v4237 = vunpack.c.h.b16 %v904
    %v4238 = vunpack.c.l.b16 %v905
    %v4239 = vunpack.c.h.b16 %v905
    %v4240 = vunpack.c.l.b16 %v906
    %v4241 = vunpack.c.h.b16 %v906
    %v4242 = vunpack.c.l.b16 %v907
    %v4243 = vunpack.c.h.b16 %v907
    %v4244 = vunpack.c.l.b16 %v908
    %v4245 = vunpack.c.h.b16 %v908
    %v4246 = vunpack.c.l.b16 %v909
    %v4247 = vunpack.c.h.b16 %v909
    %v4248 = vunpack.c.l.b16 %v910
    %v4249 = vunpack.c.h.b16 %v910
    %v4250 = vunpack.c.l.b16 %v911
    %v4251 = vunpack.c.h.b16 %v911
    %v4252 = vunpack.c.l.b16 %v912
    %v4253 = vunpack.c.h.b16 %v912
    %v4254 = vunpack.c.l.b16 %v913
    %v4255 = vunpack.c.h.b16 %v913
    %v4256 = vunpack.c.l.b16 %v914
    %v4257 = vunpack.c.h.b16 %v914
    %v4258 = vunpack.c.l.b16 %v915
    %v4259 = vunpack.c.h.b16 %v915
    %v4260 = vunpack.c.l.b16 %v916
    %v4261 = vunpack.c.h.b16 %v916
    %v4262 = vunpack.c.l.b16 %v917
    %v4263 = vunpack.c.h.b16 %v917
    %v4264 = vunpack.c.l.b16 %v918
    %v4265 = vunpack.c.h.b16 %v918
    %v4266 = vunpack.c.l.b16 %v919
    %v4267 = vunpack.c.h.b16 %v919
    %v4268 = vunpack.c.l.b16 %v920
    %v4269 = vunpack.c.h.b16 %v920
    %v4270 = vunpack.c.l.b16 %v921
    %v4271 = vunpack.c.h.b16 %v921
    %v4272 = vunpack.c.l.b16 %v922
    %v4273 = vunpack.c.h.b16 %v922
    %v4274 = vunpack.c.l.b16 %v923
    %v4275 = vunpack.c.h.b16 %v923
    %v4276 = vunpack.c.l.b16 %v924
    %v4277 = vunpack.c.h.b16 %v924
    %v4278 = vunpack.c.l.b16 %v925
    %v4279 = vunpack.c.h.b16 %v925
    %v4280 = vunpack.c.l.b16 %v926
    %v4281 = vunpack.c.h.b16 %v926
    %v4282 = vunpack.c.l.b16 %v927
    %v4283 = vunpack.c.h.b16 %v927
    %v4284 = vunpack.c.l.b16 %v928
    %v4285 = vunpack.c.h.b16 %v928
    %v4286 = vunpack.c.l.b16 %v929
    %v4287 = vunpack.c.h.b16 %v929
    %v4288 = vunpack.c.l.b16 %v930
    %v4289 = vunpack.c.h.b16 %v930
    %v4290 = vunpack.c.l.b16 %v931
    %v4291 = vunpack.c.h.b16 %v931
    %v4292 = vunpack.c.l.b16 %v932
    %v4293 = vunpack.c.h.b16 %v932
    %v4294 = vunpack.c.l.b16 %v933
    %v4295 = vunpack.c.h.b16 %v933
    %v4296 = vunpack.c.l.b16 %v934
    %v4297 = vunpack.c.h.b16 %v934
    %v4298 = vunpack.c.l.b16 %v935
    %v4299 = vunpack.c.h.b16 %v935
    %v4300 = vunpack.c.l.b16 %v936
    %v4301 = vunpack.c.h.b16 %v936
    %v4302 = vunpack.c.l.b16 %v937
    %v4303 = vunpack.c.h.b16 %v937
    %v4304 = vunpack.c.l.b16 %v938
    %v4305 = vunpack.c.h.b16 %v938
    %v4306 = vunpack.c.l.b16 %v939
    %v4307 = vunpack.c.h.b16 %v939
    %v4308 = vunpack.c.l.b16 %v940
    %v4309 = vunpack.c.h.b16 %v940
    %v4310 = vunpack.c.l.b16 %v941
    %v4311 = vunpack.c.h.b16 %v941
    %v4312 = vunpack.c.l.b16 %v942
    %v4313 = vunpack.c.h.b16 %v942
    %v4314 = vunpack.c.l.b16 %v943
    %v4315 = vunpack.c.h.b16 %v943
    %v4316 = vunpack.c.l.b16 %v944
    %v4317 = vunpack.c.h.b16 %v944
    %v4318 = vunpack.c.l.b16 %v945
    %v4319 = vunpack.c.h.b16 %v945
    %v4320 = vunpack.c.l.b16 %v946
    %v4321 = vunpack.c.h.b16 %v946
    %v4322 = vunpack.c.l.b16 %v947
    %v4323 = vunpack.c.h.b16 %v947
    %v4324 = vunpack.c.l.b16 %v948
    %v4325 = vunpack.c.h.b16 %v948
    %v4326 = vunpack.c.l.b16 %v949
    %v4327 = vunpack.c.h.b16 %v949
    %v4328 = vunpack.c.l.b16 %v950
    %v4329 = vunpack.c.h.b16 %v950
    %v4330 = vunpack.c.l.b16 %v951
    %v4331 = vunpack.c.h.b16 %v951
    %v4332 = vunpack.c.l.b16 %v952
    %v4333 = vunpack.c.h.b16 %v952
    %v4334 = vunpack.c.l.b16 %v953
    %v4335 = vunpack.c.h.b16 %v953
    %v4336 = vunpack.c.l.b16 %v954
    %v4337 = vunpack.c.h.b16 %v954
    %v4338 = vunpack.c.l.b16 %v955
    %v4339 = vunpack.c.h.b16 %v955
    %v4340 = vunpack.c.l.b16 %v956
    %v4341 = vunpack.c.h.b16 %v956
    %v4342 = vunpack.c.l.b16 %v957
    %v4343 = vunpack.c.h.b16 %v957
    %v4344 = vunpack.c.l.b16 %v958
    %v4345 = vunpack.c.h.b16 %v958
    %v4346 = vunpack.c.l.b16 %v959
    %v4347 = vunpack.c.h.b16 %v959
    %v4348 = vunpack.c.l.b16 %v960
    %v4349 = vunpack.c.h.b16 %v960
    %v4350 = vunpack.c.l.b16 %v961
    %v4351 = vunpack.c.h.b16 %v961
    %v4352 = vunpack.c.l.b16 %v962
    %v4353 = vunpack.c.h.b16 %v962
    %v4354 = vunpack.c.l.b16 %v963
    %v4355 = vunpack.c.h.b16 %v963
    %v4356 = vunpack.c.l.b16 %v964
    %v4357 = vunpack.c.h.b16 %v964
    %v4358 = vunpack.c.l.b16 %v965
    %v4359 = vunpack.c.h.b16 %v965
    %v4360 = vunpack.c.l.b16 %v966
    %v4361 = vunpack.c.h.b16 %v966
    %v4362 = vunpack.c.l.b16 %v967
    %v4363 = vunpack.c.h.b16 %v967
    %v4364 = vunpack.c.l.b16 %v968
    %v4365 = vunpack.c.h.b16 %v968
    %v4366 = vunpack.c.l.b16 %v969
    %v4367 = vunpack.c.h.b16 %v969
    %v4368 = vunpack.c.l.b16 %v970
    %v4369 = vunpack.c.h.b16 %v970
    %v4370 = vunpack.c.l.b16 %v971
    %v4371 = vunpack.c.h.b16 %v971
    %v4372 = vunpack.c.l.b16 %v972
    %v4373 = vunpack.c.h.b16 %v972
    %v4374 = vunpack.c.l.b16 %v973
    %v4375 = vunpack.c.h.b16 %v973
    %v4376 = vunpack.c.l.b16 %v974
    %v4377 = vunpack.c.h.b16 %v974
    %v4378 = vunpack.c.l.b16 %v975
    %v4379 = vunpack.c.h.b16 %v975
    %v4380 = vunpack.c.l.b16 %v976
    %v4381 = vunpack.c.h.b16 %v976
    %v4382 = vunpack.c.l.b16 %v977
    %v4383 = vunpack.c.h.b16 %v977
    %v4384 = vunpack.c.l.b16 %v978
    %v4385 = vunpack.c.h.b16 %v978
    %v4386 = vunpack.c.l.b16 %v979
    %v4387 = vunpack.c.h.b16 %v979
    %v4388 = vunpack.c.l.b16 %v980
    %v4389 = vunpack.c.h.b16 %v980
    %v4390 = vunpack.c.l.b16 %v981
    %v4391 = vunpack.c.h.b16 %v981
    %v4392 = vunpack.c.l.b16 %v982
    %v4393 = vunpack.c.h.b16 %v982
    %v4394 = vunpack.c.l.b16 %v983
    %v4395 = vunpack.c.h.b16 %v983
    %v4396 = vunpack.c.l.b16 %v984
    %v4397 = vunpack.c.h.b16 %v984
    %v4398 = vunpack.c.l.b16 %v985
    %v4399 = vunpack.c.h.b16 %v985
    %v4400 = vunpack.c.l.b16 %v986
    %v4401 = vunpack.c.h.b16 %v986
    %v4402 = vunpack.c.l.b16 %v987
    %v4403 = vunpack.c.h.b16 %v987
    %v4404 = vunpack.c.l.b16 %v988
    %v4405 = vunpack.c.h.b16 %v988
    %v4406 = vunpack.c.l.b16 %v989
    %v4407 = vunpack.c.h.b16 %v989
    %v4408 = vunpack.c.l.b16 %v990
    %v4409 = vunpack.c.h.b16 %v990
    %v4410 = vunpack.c.l.b16 %v991
    %v4411 = vunpack.c.h.b16 %v991
    %v4412 = vunpack.c.l.b16 %v992
    %v4413 = vunpack.c.h.b16 %v992
    %v4414 = vunpack.c.l.b16 %v993
    %v4415 = vunpack.c.h.b16 %v993
    %v4416 = vunpack.c.l.b16 %v994
    %v4417 = vunpack.c.h.b16 %v994
    %v4418 = vunpack.c.l.b16 %v995
    %v4419 = vunpack.c.h.b16 %v995
    %v4420 = vunpack.c.l.b16 %v996
    %v4421 = vunpack.c.h.b16 %v996
    %v4422 = vunpack.c.l.b16 %v997
    %v4423 = vunpack.c.h.b16 %v997
    %v4424 = vunpack.c.l.b16 %v998
    %v4425 = vunpack.c.h.b16 %v998
    %v4426 = vunpack.c.l.b16 %v999
    %v4427 = vunpack.c.h.b16 %v999
    %v4428 = vunpack.c.l.b16 %v1000
    %v4429 = vunpack.c.h.b16 %v1000
    %v4430 = vunpack.c.l.b16 %v1001
    %v4431 = vunpack.c.h.b16 %v1001
    %v4432 = vunpack.c.l.b16 %v1002
    %v4433 = vunpack.c.h.b16 %v1002
    %v4434 = vunpack.c.l.b16 %v1003
    %v4435 = vunpack.c.h.b16 %v1003
    %v4436 = vunpack.c.l.b16 %v1004
    %v4437 = vunpack.c.h.b16 %v1004
    %v4438 = vunpack.c.l.b16 %v1005
    %v4439 = vunpack.c.h.b16 %v1005
    %v4440 = vunpack.c.l.b16 %v1006
    %v4441 = vunpack.c.h.b16 %v1006
    %v4442 = vunpack.c.l.b16 %v1007
    %v4443 = vunpack.c.h.b16 %v1007
    %v4444 = vunpack.c.l.b16 %v1008
    %v4445 = vunpack.c.h.b16 %v1008
    %v4446 = vunpack.c.l.b16 %v1009
    %v4447 = vunpack.c.h.b16 %v1009
    %v4448 = vunpack.c.l.b16 %v1010
    %v4449 = vunpack.c.h.b16 %v1010
    %v4450 = vunpack.c.l.b16 %v1011
    %v4451 = vunpack.c.h.b16 %v1011
    %v4452 = vunpack.c.l.b16 %v1012
    %v4453 = vunpack.c.h.b16 %v1012
    %v4454 = vunpack.c.l.b16 %v1013
    %v4455 = vunpack.c.h.b16 %v1013
    %v4456 = vunpack.c.l.b16 %v1014
    %v4457 = vunpack.c.h.b16 %v1014
    %v4458 = vunpack.c.l.b16 %v1015
    %v4459 = vunpack.c.h.b16 %v1015
    %v4460 = vunpack.c.l.b16 %v1016
    %v4461 = vunpack.c.h.b16 %v1016
    %v4462 = vunpack.c.l.b16 %v1017
    %v4463 = vunpack.c.h.b16 %v1017
    %v4464 = vunpack.c.l.b16 %v1018
    %v4465 = vunpack.c.h.b16 %v1018
    %v4466 = vunpack.c.l.b16 %v1019
    %v4467 = vunpack.c.h.b16 %v1019
    %v4468 = vunpack.c.l.b16 %v1020
    %v4469 = vunpack.c.h.b16 %v1020
    %v4470 = vunpack.c.l.b16 %v1021
    %v4471 = vunpack.c.h.b16 %v1021
    %v4472 = vunpack.c.l.b16 %v1022
    %v4473 = vunpack.c.h.b16 %v1022
    %v4474 = vunpack.c.l.b16 %v1023
    %v4475 = vunpack.c.h.b16 %v1023
    %v4476 = vunpack.c.l.b16 %v1024
    %v4477 = vunpack.c.h.b16 %v1024
    %v4478 = vunpack.c.l.b16 %v1025
    %v4479 = vunpack.c.h.b16 %v1025
    %v4480 = vunpack.c.l.b16 %v1026
    %v4481 = vunpack.c.h.b16 %v1026
    %v4482 = vunpack.c.l.b16 %v1027
    %v4483 = vunpack.c.h.b16 %v1027
    %v4484 = vunpack.c.l.b16 %v1028
    %v4485 = vunpack.c.h.b16 %v1028
    %v4486 = vunpack.c.l.b16 %v1029
    %v4487 = vunpack.c.h.b16 %v1029
    %v4488 = vunpack.c.l.b16 %v1030
    %v4489 = vunpack.c.h.b16 %v1030
    %v4490 = vunpack.c.l.b16 %v1031
    %v4491 = vunpack.c.h.b16 %v1031
    %v4492 = vunpack.c.l.b16 %v1032
    %v4493 = vunpack.c.h.b16 %v1032
    %v4494 = vunpack.c.l.b16 %v1033
    %v4495 = vunpack.c.h.b16 %v1033
    %v4496 = vunpack.c.l.b16 %v1034
    %v4497 = vunpack.c.h.b16 %v1034
    %v4498 = vunpack.c.l.b16 %v1035
    %v4499 = vunpack.c.h.b16 %v1035
    %v4500 = vunpack.c.l.b16 %v1036
    %v4501 = vunpack.c.h.b16 %v1036
    %v4502 = vunpack.c.l.b16 %v1037
    %v4503 = vunpack.c.h.b16 %v1037
    %v4504 = vunpack.c.l.b16 %v1038
    %v4505 = vunpack.c.h.b16 %v1038
    %v4506 = vunpack.c.l.b16 %v1039
    %v4507 = vunpack.c.h.b16 %v1039
    %v4508 = vunpack.c.l.b16 %v1040
    %v4509 = vunpack.c.h.b16 %v1040
    %v4510 = vunpack.c.l.b16 %v1041
    %v4511 = vunpack.c.h.b16 %v1041
    %v4512 = vunpack.c.l.b16 %v1042
    %v4513 = vunpack.c.h.b16 %v1042
    %v4514 = vunpack.c.l.b16 %v1043
    %v4515 = vunpack.c.h.b16 %v1043
    %v4516 = vunpack.c.l.b16 %v1044
    %v4517 = vunpack.c.h.b16 %v1044
    %v4518 = vunpack.c.l.b16 %v1045
    %v4519 = vunpack.c.h.b16 %v1045
    %v4520 = vunpack.c.l.b16 %v1046
    %v4521 = vunpack.c.h.b16 %v1046
    %v4522 = vunpack.c.l.b16 %v1047
    %v4523 = vunpack.c.h.b16 %v1047
    %v4524 = vunpack.c.l.b16 %v1048
    %v4525 = vunpack.c.h.b16 %v1048
    %v4526 = vunpack.c.l.b16 %v1049
    %v4527 = vunpack.c.h.b16 %v1049
    %v4528 = vunpack.c.l.b16 %v1050
    %v4529 = vunpack.c.h.b16 %v1050
    %v4530 = vunpack.c.l.b16 %v1051
    %v4531 = vunpack.c.h.b16 %v1051
    %v4532 = vunpack.c.l.b16 %v1052
    %v4533 = vunpack.c.h.b16 %v1052
    %v4534 = vunpack.c.l.b16 %v1053
    %v4535 = vunpack.c.h.b16 %v1053
    %v4536 = vunpack.c.l.b16 %v1054
    %v4537 = vunpack.c.h.b16 %v1054
    %v4538 = vunpack.c.l.b16 %v1055
    %v4539 = vunpack.c.h.b16 %v1055
    %v4540 = vunpack.c.l.b16 %v1056
    %v4541 = vunpack.c.h.b16 %v1056
    %v4542 = vunpack.c.l.b16 %v1057
    %v4543 = vunpack.c.h.b16 %v1057
    %v4544 = vunpack.c.l.b16 %v1058
    %v4545 = vunpack.c.h.b16 %v1058
    %v4546 = vunpack.c.l.b16 %v1059
    %v4547 = vunpack.c.h.b16 %v1059
    %v4548 = vunpack.c.l.b16 %v1060
    %v4549 = vunpack.c.h.b16 %v1060
    %v4550 = vunpack.c.l.b16 %v1061
    %v4551 = vunpack.c.h.b16 %v1061
    %v4552 = vunpack.c.l.b16 %v1062
    %v4553 = vunpack.c.h.b16 %v1062
    %v4554 = vunpack.c.l.b16 %v1063
    %v4555 = vunpack.c.h.b16 %v1063
    %v4556 = vunpack.c.l.b16 %v1064
    %v4557 = vunpack.c.h.b16 %v1064
    %v4558 = vunpack.c.l.b16 %v1065
    %v4559 = vunpack.c.h.b16 %v1065
    %v4560 = vunpack.c.l.b16 %v1066
    %v4561 = vunpack.c.h.b16 %v1066
    %v4562 = vunpack.c.l.b16 %v1067
    %v4563 = vunpack.c.h.b16 %v1067
    %v4564 = vunpack.c.l.b16 %v1068
    %v4565 = vunpack.c.h.b16 %v1068
    %v4566 = vunpack.c.l.b16 %v1069
    %v4567 = vunpack.c.h.b16 %v1069
    %v4568 = vunpack.c.l.b16 %v1070
    %v4569 = vunpack.c.h.b16 %v1070
    %v4570 = vunpack.c.l.b16 %v1071
    %v4571 = vunpack.c.h.b16 %v1071
    %v4572 = vunpack.c.l.b16 %v1072
    %v4573 = vunpack.c.h.b16 %v1072
    %v4574 = vunpack.c.l.b16 %v1073
    %v4575 = vunpack.c.h.b16 %v1073
    %v4576 = vunpack.c.l.b16 %v1074
    %v4577 = vunpack.c.h.b16 %v1074
    %v4578 = vunpack.c.l.b16 %v1075
    %v4579 = vunpack.c.h.b16 %v1075
    %v4580 = vunpack.c.l.b16 %v1076
    %v4581 = vunpack.c.h.b16 %v1076
    %v4582 = vunpack.c.l.b16 %v1077
    %v4583 = vunpack.c.h.b16 %v1077
    %v4584 = vunpack.c.l.b16 %v1078
    %v4585 = vunpack.c.h.b16 %v1078
    %v4586 = vunpack.c.l.b16 %v1079
    %v4587 = vunpack.c.h.b16 %v1079
    %v4588 = vunpack.c.l.b16 %v1080
    %v4589 = vunpack.c.h.b16 %v1080
    %v4590 = vunpack.c.l.b16 %v1081
    %v4591 = vunpack.c.h.b16 %v1081
    %v4592 = vunpack.c.l.b16 %v1082
    %v4593 = vunpack.c.h.b16 %v1082
    %v4594 = vunpack.c.l.b16 %v1083
    %v4595 = vunpack.c.h.b16 %v1083
    %v4596 = vunpack.c.l.b16 %v1084
    %v4597 = vunpack.c.h.b16 %v1084
    %v4598 = vunpack.c.l.b16 %v1085
    %v4599 = vunpack.c.h.b16 %v1085
    %v4600 = vunpack.c.l.b16 %v1086
    %v4601 = vunpack.c.h.b16 %v1086
    %v4602 = vunpack.c.l.b16 %v1087
    %v4603 = vunpack.c.h.b16 %v1087
    %v4604 = vunpack.c.l.b16 %v1088
    %v4605 = vunpack.c.h.b16 %v1088
    %v4606 = vunpack.c.l.b16 %v1089
    %v4607 = vunpack.c.h.b16 %v1089
    %v4608 = vunpack.c.l.b16 %v1090
    %v4609 = vunpack.c.h.b16 %v1090
    %v4610 = vunpack.c.l.b16 %v1091
    %v4611 = vunpack.c.h.b16 %v1091
    %v4612 = vunpack.c.l.b16 %v1092
    %v4613 = vunpack.c.h.b16 %v1092
    %v4614 = vunpack.c.l.b16 %v1093
    %v4615 = vunpack.c.h.b16 %v1093
    %v4616 = vunpack.c.l.b16 %v1094
    %v4617 = vunpack.c.h.b16 %v1094
    %v4618 = vunpack.c.l.b16 %v1095
    %v4619 = vunpack.c.h.b16 %v1095
    %v4620 = vunpack.c.l.b16 %v1096
    %v4621 = vunpack.c.h.b16 %v1096
    %v4622 = vunpack.c.l.b16 %v1097
    %v4623 = vunpack.c.h.b16 %v1097
    %v4624 = vunpack.c.l.b16 %v1098
    %v4625 = vunpack.c.h.b16 %v1098
    %v4626 = vunpack.c.l.b16 %v1099
    %v4627 = vunpack.c.h.b16 %v1099
    %v4628 = vunpack.c.l.b16 %v1100
    %v4629 = vunpack.c.h.b16 %v1100
    %v4630 = vunpack.c.l.b16 %v1101
    %v4631 = vunpack.c.h.b16 %v1101
    %v4632 = vunpack.c.l.b16 %v1102
    %v4633 = vunpack.c.h.b16 %v1102
    %v4634 = vunpack.c.l.b16 %v1103
    %v4635 = vunpack.c.h.b16 %v1103
    %v4636 = vunpack.c.l.b16 %v1104
    %v4637 = vunpack.c.h.b16 %v1104
    %v4638 = vunpack.c.l.b16 %v1105
    %v4639 = vunpack.c.h.b16 %v1105
    %v4640 = vunpack.c.l.b16 %v1106
    %v4641 = vunpack.c.h.b16 %v1106
    %v4642 = vunpack.c.l.b16 %v1107
    %v4643 = vunpack.c.h.b16 %v1107
    %v4644 = vunpack.c.l.b16 %v1108
    %v4645 = vunpack.c.h.b16 %v1108
    %v4646 = vunpack.c.l.b16 %v1109
    %v4647 = vunpack.c.h.b16 %v1109
    %v4648 = vunpack.c.l.b16 %v1110
    %v4649 = vunpack.c.h.b16 %v1110
    %v4650 = vunpack.c.l.b16 %v1111
    %v4651 = vunpack.c.h.b16 %v1111
    %v4652 = vunpack.c.l.b16 %v1112
    %v4653 = vunpack.c.h.b16 %v1112
    %v4654 = vunpack.c.l.b16 %v1113
    %v4655 = vunpack.c.h.b16 %v1113
    %v4656 = vunpack.c.l.b16 %v1114
    %v4657 = vunpack.c.h.b16 %v1114
    %v4658 = vunpack.c.l.b16 %v1115
    %v4659 = vunpack.c.h.b16 %v1115
    %v4660 = vunpack.c.l.b16 %v1116
    %v4661 = vunpack.c.h.b16 %v1116
    %v4662 = vunpack.c.l.b16 %v1117
    %v4663 = vunpack.c.h.b16 %v1117
    %v4664 = vunpack.c.l.b16 %v1118
    %v4665 = vunpack.c.h.b16 %v1118
    %v4666 = vunpack.c.l.b16 %v1119
    %v4667 = vunpack.c.h.b16 %v1119
    %v4668 = vunpack.c.l.b16 %v1120
    %v4669 = vunpack.c.h.b16 %v1120
    %v4670 = vunpack.c.l.b16 %v1121
    %v4671 = vunpack.c.h.b16 %v1121
    %v4672 = vunpack.c.l.b16 %v1122
    %v4673 = vunpack.c.h.b16 %v1122
    %v4674 = vunpack.c.l.b16 %v1123
    %v4675 = vunpack.c.h.b16 %v1123
    %v4676 = vunpack.c.l.b16 %v1124
    %v4677 = vunpack.c.h.b16 %v1124
    %v4678 = vunpack.c.l.b16 %v1125
    %v4679 = vunpack.c.h.b16 %v1125
    %v4680 = vunpack.c.l.b16 %v1126
    %v4681 = vunpack.c.h.b16 %v1126
    %v4682 = vunpack.c.l.b16 %v1127
    %v4683 = vunpack.c.h.b16 %v1127
    %v4684 = vunpack.c.l.b16 %v1128
    %v4685 = vunpack.c.h.b16 %v1128
    %v4686 = vunpack.c.l.b16 %v1129
    %v4687 = vunpack.c.h.b16 %v1129
    %v4688 = vunpack.c.l.b16 %v1130
    %v4689 = vunpack.c.h.b16 %v1130
    %v4690 = vunpack.c.l.b16 %v1131
    %v4691 = vunpack.c.h.b16 %v1131
    %v4692 = vunpack.c.l.b16 %v1132
    %v4693 = vunpack.c.h.b16 %v1132
    %v4694 = vunpack.c.l.b16 %v1133
    %v4695 = vunpack.c.h.b16 %v1133
    %v4696 = vunpack.c.l.b16 %v1134
    %v4697 = vunpack.c.h.b16 %v1134
    %v4698 = vunpack.c.l.b16 %v1135
    %v4699 = vunpack.c.h.b16 %v1135
    %v4700 = vunpack.c.l.b16 %v1136
    %v4701 = vunpack.c.h.b16 %v1136
    %v4702 = vunpack.c.l.b16 %v1137
    %v4703 = vunpack.c.h.b16 %v1137
    %v4704 = vunpack.c.l.b16 %v1138
    %v4705 = vunpack.c.h.b16 %v1138
    %v4706 = vunpack.c.l.b16 %v1139
    %v4707 = vunpack.c.h.b16 %v1139
    %v4708 = vunpack.c.l.b16 %v1140
    %v4709 = vunpack.c.h.b16 %v1140
    %v4710 = vunpack.c.l.b16 %v1141
    %v4711 = vunpack.c.h.b16 %v1141
    %v4712 = vunpack.c.l.b16 %v1142
    %v4713 = vunpack.c.h.b16 %v1142
    %v4714 = vunpack.c.l.b16 %v1143
    %v4715 = vunpack.c.h.b16 %v1143
    %v4716 = vunpack.c.l.b16 %v1144
    %v4717 = vunpack.c.h.b16 %v1144
    %v4718 = vunpack.c.l.b16 %v1145
    %v4719 = vunpack.c.h.b16 %v1145
    %v4720 = vunpack.c.l.b16 %v1146
    %v4721 = vunpack.c.h.b16 %v1146
    %v4722 = vunpack.c.l.b16 %v1147
    %v4723 = vunpack.c.h.b16 %v1147
    %v4724 = vunpack.c.l.b16 %v1148
    %v4725 = vunpack.c.h.b16 %v1148
    %v4726 = vunpack.c.l.b16 %v1149
    %v4727 = vunpack.c.h.b16 %v1149
    %v4728 = vunpack.c.l.b16 %v1150
    %v4729 = vunpack.c.h.b16 %v1150
    %v4730 = vunpack.c.l.b16 %v1151
    %v4731 = vunpack.c.h.b16 %v1151
    %v4732 = vunpack.c.l.b16 %v1152
    %v4733 = vunpack.c.h.b16 %v1152
    %v4734 = vunpack.c.l.b16 %v1153
    %v4735 = vunpack.c.h.b16 %v1153
    %v4736 = vunpack.c.l.b16 %v1154
    %v4737 = vunpack.c.h.b16 %v1154
    %v4738 = vunpack.c.l.b16 %v1155
    %v4739 = vunpack.c.h.b16 %v1155
    %v4740 = vunpack.c.l.b16 %v1156
    %v4741 = vunpack.c.h.b16 %v1156
    %v4742 = vunpack.c.l.b16 %v1157
    %v4743 = vunpack.c.h.b16 %v1157
    %v4744 = vunpack.c.l.b16 %v1158
    %v4745 = vunpack.c.h.b16 %v1158
    %v4746 = vunpack.c.l.b16 %v1159
    %v4747 = vunpack.c.h.b16 %v1159
    %v4748 = vunpack.c.l.b16 %v1160
    %v4749 = vunpack.c.h.b16 %v1160
    %v4750 = vunpack.c.l.b16 %v1161
    %v4751 = vunpack.c.h.b16 %v1161
    %v4752 = vunpack.c.l.b16 %v1162
    %v4753 = vunpack.c.h.b16 %v1162
    %v4754 = vunpack.c.l.b16 %v1163
    %v4755 = vunpack.c.h.b16 %v1163
    %v4756 = vunpack.c.l.b16 %v1164
    %v4757 = vunpack.c.h.b16 %v1164
    %v4758 = vunpack.c.l.b16 %v1165
    %v4759 = vunpack.c.h.b16 %v1165
    %v4760 = vunpack.c.l.b16 %v1166
    %v4761 = vunpack.c.h.b16 %v1166
    %v4762 = vunpack.c.l.b16 %v1167
    %v4763 = vunpack.c.h.b16 %v1167
    %v4764 = vunpack.c.l.b16 %v1168
    %v4765 = vunpack.c.h.b16 %v1168
    %v4766 = vunpack.c.l.b16 %v1169
    %v4767 = vunpack.c.h.b16 %v1169
    %v4768 = vunpack.c.l.b16 %v1170
    %v4769 = vunpack.c.h.b16 %v1170
    %v4770 = vunpack.c.l.b16 %v1171
    %v4771 = vunpack.c.h.b16 %v1171
    %v4772 = vunpack.c.l.b16 %v1172
    %v4773 = vunpack.c.h.b16 %v1172
    %v4774 = vunpack.c.l.b16 %v1173
    %v4775 = vunpack.c.h.b16 %v1173
    %v4776 = vunpack.c.l.b16 %v1174
    %v4777 = vunpack.c.h.b16 %v1174
    %v4778 = vunpack.c.l.b16 %v1175
    %v4779 = vunpack.c.h.b16 %v1175
    %v4780 = vunpack.c.l.b16 %v1176
    %v4781 = vunpack.c.h.b16 %v1176
    %v4782 = vunpack.c.l.b16 %v1177
    %v4783 = vunpack.c.h.b16 %v1177
    %v4784 = vunpack.c.l.b16 %v1178
    %v4785 = vunpack.c.h.b16 %v1178
    %v4786 = vunpack.c.l.b16 %v1179
    %v4787 = vunpack.c.h.b16 %v1179
    %v4788 = vunpack.c.l.b16 %v1180
    %v4789 = vunpack.c.h.b16 %v1180
    %v4790 = vunpack.c.l.b16 %v1181
    %v4791 = vunpack.c.h.b16 %v1181
    %v4792 = vunpack.c.l.b16 %v1182
    %v4793 = vunpack.c.h.b16 %v1182
    %v4794 = vunpack.c.l.b16 %v1183
    %v4795 = vunpack.c.h.b16 %v1183
    %v4796 = vunpack.c.l.b16 %v1184
    %v4797 = vunpack.c.h.b16 %v1184
    %v4798 = vunpack.c.l.b16 %v1185
    %v4799 = vunpack.c.h.b16 %v1185
    %v4800 = vunpack.c.l.b16 %v1186
    %v4801 = vunpack.c.h.b16 %v1186
    %v4802 = vunpack.c.l.b16 %v1187
    %v4803 = vunpack.c.h.b16 %v1187
    %v4804 = vunpack.c.l.b16 %v1188
    %v4805 = vunpack.c.h.b16 %v1188
    %v4806 = vunpack.c.l.b16 %v1189
    %v4807 = vunpack.c.h.b16 %v1189
    %v4808 = vunpack.c.l.b16 %v1190
    %v4809 = vunpack.c.h.b16 %v1190
    %v4810 = vunpack.c.l.b16 %v1191
    %v4811 = vunpack.c.h.b16 %v1191
    %v4812 = vunpack.c.l.b16 %v1192
    %v4813 = vunpack.c.h.b16 %v1192
    %v4814 = vunpack.c.l.b16 %v1193
    %v4815 = vunpack.c.h.b16 %v1193
    %v4816 = vunpack.c.l.b16 %v1194
    %v4817 = vunpack.c.h.b16 %v1194
    %v4818 = vunpack.c.l.b16 %v1195
    %v4819 = vunpack.c.h.b16 %v1195
    %v4820 = vunpack.c.l.b16 %v1196
    %v4821 = vunpack.c.h.b16 %v1196
    %v4822 = vunpack.c.l.b16 %v1197
    %v4823 = vunpack.c.h.b16 %v1197
    %v4824 = vunpack.c.l.b16 %v1198
    %v4825 = vunpack.c.h.b16 %v1198
    %v4826 = vunpack.c.l.b16 %v1199
    %v4827 = vunpack.c.h.b16 %v1199
    %v4828 = vunpack.c.l.b16 %v1200
    %v4829 = vunpack.c.h.b16 %v1200
    %v4830 = vunpack.c.l.b16 %v1201
    %v4831 = vunpack.c.h.b16 %v1201
    %v4832 = vunpack.c.l.b16 %v1202
    %v4833 = vunpack.c.h.b16 %v1202
    %v4834 = vunpack.c.l.b16 %v1203
    %v4835 = vunpack.c.h.b16 %v1203
    %v4836 = vunpack.c.l.b16 %v1204
    %v4837 = vunpack.c.h.b16 %v1204
    %v4838 = vunpack.c.l.b16 %v1205
    %v4839 = vunpack.c.h.b16 %v1205
    %v4840 = vunpack.c.l.b16 %v1206
    %v4841 = vunpack.c.h.b16 %v1206
    %v4842 = vunpack.c.l.b16 %v1207
    %v4843 = vunpack.c.h.b16 %v1207
    %v4844 = vunpack.c.l.b16 %v1208
    %v4845 = vunpack.c.h.b16 %v1208
    %v4846 = vunpack.c.l.b16 %v1209
    %v4847 = vunpack.c.h.b16 %v1209
    %v4848 = vunpack.c.l.b16 %v1210
    %v4849 = vunpack.c.h.b16 %v1210
    %v4850 = vunpack.c.l.b16 %v1211
    %v4851 = vunpack.c.h.b16 %v1211
    %v4852 = vunpack.c.l.b16 %v1212
    %v4853 = vunpack.c.h.b16 %v1212
    %v4854 = vunpack.c.l.b16 %v1213
    %v4855 = vunpack.c.h.b16 %v1213
    %v4856 = vunpack.c.l.b16 %v1214
    %v4857 = vunpack.c.h.b16 %v1214
    %v4858 = vunpack.c.l.b16 %v1215
    %v4859 = vunpack.c.h.b16 %v1215
    %v4860 = vunpack.c.l.b16 %v1216
    %v4861 = vunpack.c.h.b16 %v1216
    %v4862 = vunpack.c.l.b16 %v1217
    %v4863 = vunpack.c.h.b16 %v1217
    %v4864 = vunpack.c.l.b16 %v1218
    %v4865 = vunpack.c.h.b16 %v1218
    %v4866 = vunpack.c.l.b16 %v1219
    %v4867 = vunpack.c.h.b16 %v1219
    %v4868 = vunpack.c.l.b16 %v1220
    %v4869 = vunpack.c.h.b16 %v1220
    %v4870 = vunpack.c.l.b16 %v1221
    %v4871 = vunpack.c.h.b16 %v1221
    %v4872 = vunpack.c.l.b16 %v1222
    %v4873 = vunpack.c.h.b16 %v1222
    %v4874 = vunpack.c.l.b16 %v1223
    %v4875 = vunpack.c.h.b16 %v1223
    %v4876 = vunpack.c.l.b16 %v1224
    %v4877 = vunpack.c.h.b16 %v1224
    %v4878 = vunpack.c.l.b16 %v1225
    %v4879 = vunpack.c.h.b16 %v1225
    %v4880 = vunpack.c.l.b16 %v1226
    %v4881 = vunpack.c.h.b16 %v1226
    %v4882 = vunpack.c.l.b16 %v1227
    %v4883 = vunpack.c.h.b16 %v1227
    %v4884 = vunpack.c.l.b16 %v1228
    %v4885 = vunpack.c.h.b16 %v1228
    %v4886 = vunpack.c.l.b16 %v1229
    %v4887 = vunpack.c.h.b16 %v1229
    %v4888 = vunpack.c.l.b16 %v1230
    %v4889 = vunpack.c.h.b16 %v1230
    %v4890 = vunpack.c.l.b16 %v1231
    %v4891 = vunpack.c.h.b16 %v1231
    %v4892 = vunpack.c.l.b16 %v1232
    %v4893 = vunpack.c.h.b16 %v1232
    %v4894 = vunpack.c.l.b16 %v1233
    %v4895 = vunpack.c.h.b16 %v1233
    %v4896 = vunpack.c.l.b16 %v1234
    %v4897 = vunpack.c.h.b16 %v1234
    %v4898 = vunpack.c.l.b16 %v1235
    %v4899 = vunpack.c.h.b16 %v1235
    %v4900 = vunpack.c.l.b16 %v1236
    %v4901 = vunpack.c.h.b16 %v1236
    %v4902 = vunpack.c.l.b16 %v1237
    %v4903 = vunpack.c.h.b16 %v1237
    %v4904 = vunpack.c.l.b16 %v1238
    %v4905 = vunpack.c.h.b16 %v1238
    %v4906 = vunpack.c.l.b16 %v1239
    %v4907 = vunpack.c.h.b16 %v1239
    %v4908 = vunpack.c.l.b16 %v1240
    %v4909 = vunpack.c.h.b16 %v1240
    %v4910 = vunpack.c.l.b16 %v1241
    %v4911 = vunpack.c.h.b16 %v1241
    %v4912 = vunpack.c.l.b16 %v1242
    %v4913 = vunpack.c.h.b16 %v1242
    %v4914 = vunpack.c.l.b16 %v1243
    %v4915 = vunpack.c.h.b16 %v1243
    %v4916 = vunpack.c.l.b16 %v1244
    %v4917 = vunpack.c.h.b16 %v1244
    %v4918 = vunpack.c.l.b16 %v1245
    %v4919 = vunpack.c.h.b16 %v1245
    %v4920 = vunpack.c.l.b16 %v1246
    %v4921 = vunpack.c.h.b16 %v1246
    %v4922 = vunpack.c.l.b16 %v1247
    %v4923 = vunpack.c.h.b16 %v1247
    %v4924 = vunpack.c.l.b16 %v1248
    %v4925 = vunpack.c.h.b16 %v1248
    %v4926 = vunpack.c.l.b16 %v1249
    %v4927 = vunpack.c.h.b16 %v1249
    %v4928 = vunpack.c.l.b16 %v1250
    %v4929 = vunpack.c.h.b16 %v1250
    %v4930 = vunpack.c.l.b16 %v1251
    %v4931 = vunpack.c.h.b16 %v1251
    %v4932 = vunpack.c.l.b16 %v1252
    %v4933 = vunpack.c.h.b16 %v1252
    %v4934 = vunpack.c.l.b16 %v1253
    %v4935 = vunpack.c.h.b16 %v1253
    %v4936 = vunpack.c.l.b16 %v1254
    %v4937 = vunpack.c.h.b16 %v1254
    %v4938 = vunpack.c.l.b16 %v1255
    %v4939 = vunpack.c.h.b16 %v1255
    %v4940 = vunpack.c.l.b16 %v1256
    %v4941 = vunpack.c.h.b16 %v1256
    %v4942 = vunpack.c.l.b16 %v1257
    %v4943 = vunpack.c.h.b16 %v1257
    %v4944 = vunpack.c.l.b16 %v1258
    %v4945 = vunpack.c.h.b16 %v1258
    %v4946 = vunpack.c.l.b16 %v1259
    %v4947 = vunpack.c.h.b16 %v1259
    %v4948 = vunpack.c.l.b16 %v1260
    %v4949 = vunpack.c.h.b16 %v1260
    %v4950 = vunpack.c.l.b16 %v1261
    %v4951 = vunpack.c.h.b16 %v1261
    %v4952 = vunpack.c.l.b16 %v1262
    %v4953 = vunpack.c.h.b16 %v1262
    %v4954 = vunpack.c.l.b16 %v1263
    %v4955 = vunpack.c.h.b16 %v1263
    %v4956 = vunpack.c.l.b16 %v1264
    %v4957 = vunpack.c.h.b16 %v1264
    %v4958 = vunpack.c.l.b16 %v1265
    %v4959 = vunpack.c.h.b16 %v1265
    %v4960 = vunpack.c.l.b16 %v1266
    %v4961 = vunpack.c.h.b16 %v1266
    %v4962 = vunpack.c.l.b16 %v1267
    %v4963 = vunpack.c.h.b16 %v1267
    %v4964 = vunpack.c.l.b16 %v1268
    %v4965 = vunpack.c.h.b16 %v1268
    %v4966 = vunpack.c.l.b16 %v1269
    %v4967 = vunpack.c.h.b16 %v1269
    %v4968 = vunpack.c.l.b16 %v1270
    %v4969 = vunpack.c.h.b16 %v1270
    %v4970 = vunpack.c.l.b16 %v1271
    %v4971 = vunpack.c.h.b16 %v1271
    %v4972 = vunpack.c.l.b16 %v1272
    %v4973 = vunpack.c.h.b16 %v1272
    %v4974 = vunpack.c.l.b16 %v1273
    %v4975 = vunpack.c.h.b16 %v1273
    %v4976 = vunpack.c.l.b16 %v1274
    %v4977 = vunpack.c.h.b16 %v1274
    %v4978 = vunpack.c.l.b16 %v1275
    %v4979 = vunpack.c.h.b16 %v1275
    %v4980 = vunpack.c.l.b16 %v1276
    %v4981 = vunpack.c.h.b16 %v1276
    %v4982 = vunpack.c.l.b16 %v1277
    %v4983 = vunpack.c.h.b16 %v1277
    %v4984 = vunpack.c.l.b16 %v1278
    %v4985 = vunpack.c.h.b16 %v1278
    %v4986 = vunpack.c.l.b16 %v1279
    %v4987 = vunpack.c.h.b16 %v1279
    %v4988 = vunpack.c.l.b16 %v1280
    %v4989 = vunpack.c.h.b16 %v1280
    %v4990 = vunpack.c.l.b16 %v1281
    %v4991 = vunpack.c.h.b16 %v1281
    %v4992 = vunpack.c.l.b16 %v1282
    %v4993 = vunpack.c.h.b16 %v1282
    %v4994 = vunpack.c.l.b16 %v1283
    %v4995 = vunpack.c.h.b16 %v1283
    %v4996 = vunpack.c.l.b16 %v1284
    %v4997 = vunpack.c.h.b16 %v1284
    %v4998 = vunpack.c.l.b16 %v1285
    %v4999 = vunpack.c.h.b16 %v1285
    %v5000 = vunpack.c.l.b16 %v1286
    %v5001 = vunpack.c.h.b16 %v1286
    %v5002 = vunpack.c.l.b16 %v1287
    %v5003 = vunpack.c.h.b16 %v1287
    %v5004 = vunpack.c.l.b16 %v1288
    %v5005 = vunpack.c.h.b16 %v1288
    %v5006 = vunpack.c.l.b16 %v1289
    %v5007 = vunpack.c.h.b16 %v1289
    %v5008 = vunpack.c.l.b16 %v1290
    %v5009 = vunpack.c.h.b16 %v1290
    %v5010 = vunpack.c.l.b16 %v1291
    %v5011 = vunpack.c.h.b16 %v1291
    %v5012 = vunpack.c.l.b16 %v1292
    %v5013 = vunpack.c.h.b16 %v1292
    %v5014 = vunpack.c.l.b16 %v1293
    %v5015 = vunpack.c.h.b16 %v1293
    %v5016 = vunpack.c.l.b16 %v1294
    %v5017 = vunpack.c.h.b16 %v1294
    %v5018 = vunpack.c.l.b16 %v1295
    %v5019 = vunpack.c.h.b16 %v1295
    %v5020 = vunpack.c.l.b16 %v1296
    %v5021 = vunpack.c.h.b16 %v1296
    %v5022 = vunpack.c.l.b16 %v1297
    %v5023 = vunpack.c.h.b16 %v1297
    %v5024 = vunpack.c.l.b16 %v1298
    %v5025 = vunpack.c.h.b16 %v1298
    %v5026 = vunpack.c.l.b16 %v1299
    %v5027 = vunpack.c.h.b16 %v1299
    %v5028 = vunpack.c.l.b16 %v1300
    %v5029 = vunpack.c.h.b16 %v1300
    %v5030 = vunpack.c.l.b16 %v1301
    %v5031 = vunpack.c.h.b16 %v1301
    %v5032 = vunpack.c.l.b16 %v1302
    %v5033 = vunpack.c.h.b16 %v1302
    %v5034 = vunpack.c.l.b16 %v1303
    %v5035 = vunpack.c.h.b16 %v1303
    %v5036 = vunpack.c.l.b16 %v1304
    %v5037 = vunpack.c.h.b16 %v1304
    %v5038 = vunpack.c.l.b16 %v1305
    %v5039 = vunpack.c.h.b16 %v1305
    %v5040 = vunpack.c.l.b16 %v1306
    %v5041 = vunpack.c.h.b16 %v1306
    %v5042 = vunpack.c.l.b16 %v1307
    %v5043 = vunpack.c.h.b16 %v1307
    %v5044 = vunpack.c.l.b16 %v1308
    %v5045 = vunpack.c.h.b16 %v1308
    %v5046 = vunpack.c.l.b16 %v1309
    %v5047 = vunpack.c.h.b16 %v1309
    %v5048 = vunpack.c.l.b16 %v1310
    %v5049 = vunpack.c.h.b16 %v1310
    %v5050 = vunpack.c.l.b16 %v1311
    %v5051 = vunpack.c.h.b16 %v1311
    %v5052 = vunpack.c.l.b16 %v1312
    %v5053 = vunpack.c.h.b16 %v1312
    %v5054 = vunpack.c.l.b16 %v1313
    %v5055 = vunpack.c.h.b16 %v1313
    %v5056 = vunpack.c.l.b16 %v1314
    %v5057 = vunpack.c.h.b16 %v1314
    %v5058 = vunpack.c.l.b16 %v1315
    %v5059 = vunpack.c.h.b16 %v1315
    %v5060 = vunpack.c.l.b16 %v1316
    %v5061 = vunpack.c.h.b16 %v1316
    %v5062 = vunpack.c.l.b16 %v1317
    %v5063 = vunpack.c.h.b16 %v1317
    %v5064 = vunpack.c.l.b16 %v1318
    %v5065 = vunpack.c.h.b16 %v1318
    %v5066 = vunpack.c.l.b16 %v1319
    %v5067 = vunpack.c.h.b16 %v1319
    %v5068 = vunpack.c.l.b16 %v1320
    %v5069 = vunpack.c.h.b16 %v1320
    %v5070 = vunpack.c.l.b16 %v1321
    %v5071 = vunpack.c.h.b16 %v1321
    %v5072 = vunpack.c.l.b16 %v1322
    %v5073 = vunpack.c.h.b16 %v1322
    %v5074 = vunpack.c.l.b16 %v1323
    %v5075 = vunpack.c.h.b16 %v1323
    %v5076 = vunpack.c.l.b16 %v1324
    %v5077 = vunpack.c.h.b16 %v1324
    %v5078 = vunpack.c.l.b16 %v1325
    %v5079 = vunpack.c.h.b16 %v1325
    %v5080 = vunpack.c.l.b16 %v1326
    %v5081 = vunpack.c.h.b16 %v1326
    %v5082 = vunpack.c.l.b16 %v1327
    %v5083 = vunpack.c.h.b16 %v1327
    %v5084 = vunpack.c.l.b16 %v1328
    %v5085 = vunpack.c.h.b16 %v1328
    %v5086 = vpack.c.b16 %v2662, %v2654
    %v5087 = vpack.c.b16 %v2663, %v2655
    %v5088 = vpack.c.b16 %v2664, %v2656
    %v5089 = vpack.c.b16 %v2665, %v2657
    %v5090 = vpack.c.b16 %v2666, %v2658
    %v5091 = vpack.c.b16 %v2667, %v2659
    %v5092 = vpack.c.b16 %v2668, %v2660
    %v5093 = vpack.c.b16 %v2669, %v2661
    %v5094 = vpack.c.b16 %v2678, %v2670
    %v5095 = vpack.c.b16 %v2679, %v2671
    %v5096 = vpack.c.b16 %v2680, %v2672
    %v5097 = vpack.c.b16 %v2681, %v2673
    %v5098 = vpack.c.b16 %v2682, %v2674
    %v5099 = vpack.c.b16 %v2683, %v2675
    %v5100 = vpack.c.b16 %v2684, %v2676
    %v5101 = vpack.c.b16 %v2685, %v2677
    %v5102 = vpack.c.b16 %v2694, %v2686
    %v5103 = vpack.c.b16 %v2695, %v2687
    %v5104 = vpack.c.b16 %v2696, %v2688
    %v5105 = vpack.c.b16 %v2697, %v2689
    %v5106 = vpack.c.b16 %v2698, %v2690
    %v5107 = vpack.c.b16 %v2699, %v2691
    %v5108 = vpack.c.b16 %v2700, %v2692
    %v5109 = vpack.c.b16 %v2701, %v2693
    %v5110 = vpack.c.b16 %v2710, %v2702
    %v5111 = vpack.c.b16 %v2711, %v2703
    %v5112 = vpack.c.b16 %v2712, %v2704
    %v5113 = vpack.c.b16 %v2713, %v2705
    %v5114 = vpack.c.b16 %v2714, %v2706
    %v5115 = vpack.c.b16 %v2715, %v2707
    %v5116 = vpack.c.b16 %v2716, %v2708
    %v5117 = vpack.c.b16 %v2717, %v2709
    %v5118 = vpack.c.b16 %v2726, %v2718
    %v5119 = vpack.c.b16 %v2727, %v2719
    %v5120 = vpack.c.b16 %v2728, %v2720
    %v5121 = vpack.c.b16 %v2729, %v2721
    %v5122 = vpack.c.b16 %v2730, %v2722
    %v5123 = vpack.c.b16 %v2731, %v2723
    %v5124 = vpack.c.b16 %v2732, %v2724
    %v5125 = vpack.c.b16 %v2733, %v2725
    %v5126 = vpack.c.b16 %v2742, %v2734
    %v5127 = vpack.c.b16 %v2743, %v2735
    %v5128 = vpack.c.b16 %v2744, %v2736
    %v5129 = vpack.c.b16 %v2745, %v2737
    %v5130 = vpack.c.b16 %v2746, %v2738
    %v5131 = vpack.c.b16 %v2747, %v2739
    %v5132 = vpack.c.b16 %v2748, %v2740
    %v5133 = vpack.c.b16 %v2749, %v2741
    %v5134 = vpack.c.b16 %v2758, %v2750
    %v5135 = vpack.c.b16 %v2759, %v2751
    %v5136 = vpack.c.b16 %v2760, %v2752
    %v5137 = vpack.c.b16 %v2761, %v2753
    %v5138 = vpack.c.b16 %v2762, %v2754
    %v5139 = vpack.c.b16 %v2763, %v2755
    %v5140 = vpack.c.b16 %v2764, %v2756
    %v5141 = vpack.c.b16 %v2765, %v2757
    %v5142 = vpack.c.b16 %v2774, %v2766
    %v5143 = vpack.c.b16 %v2775, %v2767
    %v5144 = vpack.c.b16 %v2776, %v2768
    %v5145 = vpack.c.b16 %v2777, %v2769
    %v5146 = vpack.c.b16 %v2778, %v2770
    %v5147 = vpack.c.b16 %v2779, %v2771
    %v5148 = vpack.c.b16 %v2780, %v2772
    %v5149 = vpack.c.b16 %v2781, %v2773
    %v5150 = vpack.c.b16 %v2790, %v2782
    %v5151 = vpack.c.b16 %v2791, %v2783
    %v5152 = vpack.c.b16 %v2792, %v2784
    %v5153 = vpack.c.b16 %v2793, %v2785
    %v5154 = vpack.c.b16 %v2794, %v2786
    %v5155 = vpack.c.b16 %v2795, %v2787
    %v5156 = vpack.c.b16 %v2796, %v2788
    %v5157 = vpack.c.b16 %v2797, %v2789
    %v5158 = vpack.c.b16 %v2806, %v2798
    %v5159 = vpack.c.b16 %v2807, %v2799
    %v5160 = vpack.c.b16 %v2808, %v2800
    %v5161 = vpack.c.b16 %v2809, %v2801
    %v5162 = vpack.c.b16 %v2810, %v2802
    %v5163 = vpack.c.b16 %v2811, %v2803
    %v5164 = vpack.c.b16 %v2812, %v2804
    %v5165 = vpack.c.b16 %v2813, %v2805
    %v5166 = vpack.c.b16 %v2822, %v2814
    %v5167 = vpack.c.b16 %v2823, %v2815
    %v5168 = vpack.c.b16 %v2824, %v2816
    %v5169 = vpack.c.b16 %v2825, %v2817
    %v5170 = vpack.c.b16 %v2826, %v2818
    %v5171 = vpack.c.b16 %v2827, %v2819
    %v5172 = vpack.c.b16 %v2828, %v2820
    %v5173 = vpack.c.b16 %v2829, %v2821
    %v5174 = vpack.c.b16 %v2838, %v2830
    %v5175 = vpack.c.b16 %v2839, %v2831
    %v5176 = vpack.c.b16 %v2840, %v2832
    %v5177 = vpack.c.b16 %v2841, %v2833
    %v5178 = vpack.c.b16 %v2842, %v2834
    %v5179 = vpack.c.b16 %v2843, %v2835
    %v5180 = vpack.c.b16 %v2844, %v2836
    %v5181 = vpack.c.b16 %v2845, %v2837
    %v5182 = vpack.c.b16 %v2854, %v2846
    %v5183 = vpack.c.b16 %v2855, %v2847
    %v5184 = vpack.c.b16 %v2856, %v2848
    %v5185 = vpack.c.b16 %v2857, %v2849
    %v5186 = vpack.c.b16 %v2858, %v2850
    %v5187 = vpack.c.b16 %v2859, %v2851
    %v5188 = vpack.c.b16 %v2860, %v2852
    %v5189 = vpack.c.b16 %v2861, %v2853
    %v5190 = vpack.c.b16 %v2870, %v2862
    %v5191 = vpack.c.b16 %v2871, %v2863
    %v5192 = vpack.c.b16 %v2872, %v2864
    %v5193 = vpack.c.b16 %v2873, %v2865
    %v5194 = vpack.c.b16 %v2874, %v2866
    %v5195 = vpack.c.b16 %v2875, %v2867
    %v5196 = vpack.c.b16 %v2876, %v2868
    %v5197 = vpack.c.b16 %v2877, %v2869
    %v5198 = vpack.c.b16 %v2886, %v2878
    %v5199 = vpack.c.b16 %v2887, %v2879
    %v5200 = vpack.c.b16 %v2888, %v2880
    %v5201 = vpack.c.b16 %v2889, %v2881
    %v5202 = vpack.c.b16 %v2890, %v2882
    %v5203 = vpack.c.b16 %v2891, %v2883
    %v5204 = vpack.c.b16 %v2892, %v2884
    %v5205 = vpack.c.b16 %v2893, %v2885
    %v5206 = vpack.c.b16 %v2902, %v2894
    %v5207 = vpack.c.b16 %v2903, %v2895
    %v5208 = vpack.c.b16 %v2904, %v2896
    %v5209 = vpack.c.b16 %v2905, %v2897
    %v5210 = vpack.c.b16 %v2906, %v2898
    %v5211 = vpack.c.b16 %v2907, %v2899
    %v5212 = vpack.c.b16 %v2908, %v2900
    %v5213 = vpack.c.b16 %v2909, %v2901
    %v5214 = vpack.c.b16 %v2918, %v2910
    %v5215 = vpack.c.b16 %v2919, %v2911
    %v5216 = vpack.c.b16 %v2920, %v2912
    %v5217 = vpack.c.b16 %v2921, %v2913
    %v5218 = vpack.c.b16 %v2922, %v2914
    %v5219 = vpack.c.b16 %v2923, %v2915
    %v5220 = vpack.c.b16 %v2924, %v2916
    %v5221 = vpack.c.b16 %v2925, %v2917
    %v5222 = vpack.c.b16 %v2934, %v2926
    %v5223 = vpack.c.b16 %v2935, %v2927
    %v5224 = vpack.c.b16 %v2936, %v2928
    %v5225 = vpack.c.b16 %v2937, %v2929
    %v5226 = vpack.c.b16 %v2938, %v2930
    %v5227 = vpack.c.b16 %v2939, %v2931
    %v5228 = vpack.c.b16 %v2940, %v2932
    %v5229 = vpack.c.b16 %v2941, %v2933
    %v5230 = vpack.c.b16 %v2950, %v2942
    %v5231 = vpack.c.b16 %v2951, %v2943
    %v5232 = vpack.c.b16 %v2952, %v2944
    %v5233 = vpack.c.b16 %v2953, %v2945
    %v5234 = vpack.c.b16 %v2954, %v2946
    %v5235 = vpack.c.b16 %v2955, %v2947
    %v5236 = vpack.c.b16 %v2956, %v2948
    %v5237 = vpack.c.b16 %v2957, %v2949
    %v5238 = vpack.c.b16 %v2966, %v2958
    %v5239 = vpack.c.b16 %v2967, %v2959
    %v5240 = vpack.c.b16 %v2968, %v2960
    %v5241 = vpack.c.b16 %v2969, %v2961
    %v5242 = vpack.c.b16 %v2970, %v2962
    %v5243 = vpack.c.b16 %v2971, %v2963
    %v5244 = vpack.c.b16 %v2972, %v2964
    %v5245 = vpack.c.b16 %v2973, %v2965
    %v5246 = vpack.c.b16 %v2982, %v2974
    %v5247 = vpack.c.b16 %v2983, %v2975
    %v5248 = vpack.c.b16 %v2984, %v2976
    %v5249 = vpack.c.b16 %v2985, %v2977
    %v5250 = vpack.c.b16 %v2986, %v2978
    %v5251 = vpack.c.b16 %v2987, %v2979
    %v5252 = vpack.c.b16 %v2988, %v2980
    %v5253 = vpack.c.b16 %v2989, %v2981
    %v5254 = vpack.c.b16 %v2998, %v2990
    %v5255 = vpack.c.b16 %v2999, %v2991
    %v5256 = vpack.c.b16 %v3000, %v2992
    %v5257 = vpack.c.b16 %v3001, %v2993
    %v5258 = vpack.c.b16 %v3002, %v2994
    %v5259 = vpack.c.b16 %v3003, %v2995
    %v5260 = vpack.c.b16 %v3004, %v2996
    %v5261 = vpack.c.b16 %v3005, %v2997
    %v5262 = vpack.c.b16 %v3014, %v3006
    %v5263 = vpack.c.b16 %v3015, %v3007
    %v5264 = vpack.c.b16 %v3016, %v3008
    %v5265 = vpack.c.b16 %v3017, %v3009
    %v5266 = vpack.c.b16 %v3018, %v3010
    %v5267 = vpack.c.b16 %v3019, %v3011
    %v5268 = vpack.c.b16 %v3020, %v3012
    %v5269 = vpack.c.b16 %v3021, %v3013
    %v5270 = vpack.c.b16 %v3030, %v3022
    %v5271 = vpack.c.b16 %v3031, %v3023
    %v5272 = vpack.c.b16 %v3032, %v3024
    %v5273 = vpack.c.b16 %v3033, %v3025
    %v5274 = vpack.c.b16 %v3034, %v3026
    %v5275 = vpack.c.b16 %v3035, %v3027
    %v5276 = vpack.c.b16 %v3036, %v3028
    %v5277 = vpack.c.b16 %v3037, %v3029
    %v5278 = vpack.c.b16 %v3046, %v3038
    %v5279 = vpack.c.b16 %v3047, %v3039
    %v5280 = vpack.c.b16 %v3048, %v3040
    %v5281 = vpack.c.b16 %v3049, %v3041
    %v5282 = vpack.c.b16 %v3050, %v3042
    %v5283 = vpack.c.b16 %v3051, %v3043
    %v5284 = vpack.c.b16 %v3052, %v3044
    %v5285 = vpack.c.b16 %v3053, %v3045
    %v5286 = vpack.c.b16 %v3062, %v3054
    %v5287 = vpack.c.b16 %v3063, %v3055
    %v5288 = vpack.c.b16 %v3064, %v3056
    %v5289 = vpack.c.b16 %v3065, %v3057
    %v5290 = vpack.c.b16 %v3066, %v3058
    %v5291 = vpack.c.b16 %v3067, %v3059
    %v5292 = vpack.c.b16 %v3068, %v3060
    %v5293 = vpack.c.b16 %v3069, %v3061
    %v5294 = vpack.c.b16 %v3078, %v3070
    %v5295 = vpack.c.b16 %v3079, %v3071
    %v5296 = vpack.c.b16 %v3080, %v3072
    %v5297 = vpack.c.b16 %v3081, %v3073
    %v5298 = vpack.c.b16 %v3082, %v3074
    %v5299 = vpack.c.b16 %v3083, %v3075
    %v5300 = vpack.c.b16 %v3084, %v3076
    %v5301 = vpack.c.b16 %v3085, %v3077
    %v5302 = vpack.c.b16 %v3094, %v3086
    %v5303 = vpack.c.b16 %v3095, %v3087
    %v5304 = vpack.c.b16 %v3096, %v3088
    %v5305 = vpack.c.b16 %v3097, %v3089
    %v5306 = vpack.c.b16 %v3098, %v3090
    %v5307 = vpack.c.b16 %v3099, %v3091
    %v5308 = vpack.c.b16 %v3100, %v3092
    %v5309 = vpack.c.b16 %v3101, %v3093
    %v5310 = vpack.c.b16 %v3110, %v3102
    %v5311 = vpack.c.b16 %v3111, %v3103
    %v5312 = vpack.c.b16 %v3112, %v3104
    %v5313 = vpack.c.b16 %v3113, %v3105
    %v5314 = vpack.c.b16 %v3114, %v3106
    %v5315 = vpack.c.b16 %v3115, %v3107
    %v5316 = vpack.c.b16 %v3116, %v3108
    %v5317 = vpack.c.b16 %v3117, %v3109
    %v5318 = vpack.c.b16 %v3126, %v3118
    %v5319 = vpack.c.b16 %v3127, %v3119
    %v5320 = vpack.c.b16 %v3128, %v3120
    %v5321 = vpack.c.b16 %v3129, %v3121
    %v5322 = vpack.c.b16 %v3130, %v3122
    %v5323 = vpack.c.b16 %v3131, %v3123
    %v5324 = vpack.c.b16 %v3132, %v3124
    %v5325 = vpack.c.b16 %v3133, %v3125
    %v5326 = vpack.c.b16 %v3142, %v3134
    %v5327 = vpack.c.b16 %v3143, %v3135
    %v5328 = vpack.c.b16 %v3144, %v3136
    %v5329 = vpack.c.b16 %v3145, %v3137
    %v5330 = vpack.c.b16 %v3146, %v3138
    %v5331 = vpack.c.b16 %v3147, %v3139
    %v5332 = vpack.c.b16 %v3148, %v3140
    %v5333 = vpack.c.b16 %v3149, %v3141
    %v5334 = vpack.c.b16 %v3158, %v3150
    %v5335 = vpack.c.b16 %v3159, %v3151
    %v5336 = vpack.c.b16 %v3160, %v3152
    %v5337 = vpack.c.b16 %v3161, %v3153
    %v5338 = vpack.c.b16 %v3162, %v3154
    %v5339 = vpack.c.b16 %v3163, %v3155
    %v5340 = vpack.c.b16 %v3164, %v3156
    %v5341 = vpack.c.b16 %v3165, %v3157
    %v5342 = vpack.c.b16 %v3174, %v3166
    %v5343 = vpack.c.b16 %v3175, %v3167
    %v5344 = vpack.c.b16 %v3176, %v3168
    %v5345 = vpack.c.b16 %v3177, %v3169
    %v5346 = vpack.c.b16 %v3178, %v3170
    %v5347 = vpack.c.b16 %v3179, %v3171
    %v5348 = vpack.c.b16 %v3180, %v3172
    %v5349 = vpack.c.b16 %v3181, %v3173
    %v5350 = vpack.c.b16 %v3190, %v3182
    %v5351 = vpack.c.b16 %v3191, %v3183
    %v5352 = vpack.c.b16 %v3192, %v3184
    %v5353 = vpack.c.b16 %v3193, %v3185
    %v5354 = vpack.c.b16 %v3194, %v3186
    %v5355 = vpack.c.b16 %v3195, %v3187
    %v5356 = vpack.c.b16 %v3196, %v3188
    %v5357 = vpack.c.b16 %v3197, %v3189
    %v5358 = vpack.c.b16 %v3206, %v3198
    %v5359 = vpack.c.b16 %v3207, %v3199
    %v5360 = vpack.c.b16 %v3208, %v3200
    %v5361 = vpack.c.b16 %v3209, %v3201
    %v5362 = vpack.c.b16 %v3210, %v3202
    %v5363 = vpack.c.b16 %v3211, %v3203
    %v5364 = vpack.c.b16 %v3212, %v3204
    %v5365 = vpack.c.b16 %v3213, %v3205
    %v5366 = vpack.c.b16 %v3222, %v3214
    %v5367 = vpack.c.b16 %v3223, %v3215
    %v5368 = vpack.c.b16 %v3224, %v3216
    %v5369 = vpack.c.b16 %v3225, %v3217
    %v5370 = vpack.c.b16 %v3226, %v3218
    %v5371 = vpack.c.b16 %v3227, %v3219
    %v5372 = vpack.c.b16 %v3228, %v3220
    %v5373 = vpack.c.b16 %v3229, %v3221
    %v5374 = vpack.c.b16 %v3238, %v3230
    %v5375 = vpack.c.b16 %v3239, %v3231
    %v5376 = vpack.c.b16 %v3240, %v3232
    %v5377 = vpack.c.b16 %v3241, %v3233
    %v5378 = vpack.c.b16 %v3242, %v3234
    %v5379 = vpack.c.b16 %v3243, %v3235
    %v5380 = vpack.c.b16 %v3244, %v3236
    %v5381 = vpack.c.b16 %v3245, %v3237
    %v5382 = vpack.c.b16 %v3254, %v3246
    %v5383 = vpack.c.b16 %v3255, %v3247
    %v5384 = vpack.c.b16 %v3256, %v3248
    %v5385 = vpack.c.b16 %v3257, %v3249
    %v5386 = vpack.c.b16 %v3258, %v3250
    %v5387 = vpack.c.b16 %v3259, %v3251
    %v5388 = vpack.c.b16 %v3260, %v3252
    %v5389 = vpack.c.b16 %v3261, %v3253
    %v5390 = vpack.c.b16 %v3270, %v3262
    %v5391 = vpack.c.b16 %v3271, %v3263
    %v5392 = vpack.c.b16 %v3272, %v3264
    %v5393 = vpack.c.b16 %v3273, %v3265
    %v5394 = vpack.c.b16 %v3274, %v3266
    %v5395 = vpack.c.b16 %v3275, %v3267
    %v5396 = vpack.c.b16 %v3276, %v3268
    %v5397 = vpack.c.b16 %v3277, %v3269
    %v5398 = vpack.c.b16 %v3286, %v3278
    %v5399 = vpack.c.b16 %v3287, %v3279
    %v5400 = vpack.c.b16 %v3288, %v3280
    %v5401 = vpack.c.b16 %v3289, %v3281
    %v5402 = vpack.c.b16 %v3290, %v3282
    %v5403 = vpack.c.b16 %v3291, %v3283
    %v5404 = vpack.c.b16 %v3292, %v3284
    %v5405 = vpack.c.b16 %v3293, %v3285
    %v5406 = vpack.c.b16 %v3302, %v3294
    %v5407 = vpack.c.b16 %v3303, %v3295
    %v5408 = vpack.c.b16 %v3304, %v3296
    %v5409 = vpack.c.b16 %v3305, %v3297
    %v5410 = vpack.c.b16 %v3306, %v3298
    %v5411 = vpack.c.b16 %v3307, %v3299
    %v5412 = vpack.c.b16 %v3308, %v3300
    %v5413 = vpack.c.b16 %v3309, %v3301
    %v5414 = vpack.c.b16 %v3318, %v3310
    %v5415 = vpack.c.b16 %v3319, %v3311
    %v5416 = vpack.c.b16 %v3320, %v3312
    %v5417 = vpack.c.b16 %v3321, %v3313
    %v5418 = vpack.c.b16 %v3322, %v3314
    %v5419 = vpack.c.b16 %v3323, %v3315
    %v5420 = vpack.c.b16 %v3324, %v3316
    %v5421 = vpack.c.b16 %v3325, %v3317
    %v5422 = vpack.c.b16 %v3334, %v3326
    %v5423 = vpack.c.b16 %v3335, %v3327
    %v5424 = vpack.c.b16 %v3336, %v3328
    %v5425 = vpack.c.b16 %v3337, %v3329
    %v5426 = vpack.c.b16 %v3338, %v3330
    %v5427 = vpack.c.b16 %v3339, %v3331
    %v5428 = vpack.c.b16 %v3340, %v3332
    %v5429 = vpack.c.b16 %v3341, %v3333
    %v5430 = vpack.c.b16 %v3350, %v3342
    %v5431 = vpack.c.b16 %v3351, %v3343
    %v5432 = vpack.c.b16 %v3352, %v3344
    %v5433 = vpack.c.b16 %v3353, %v3345
    %v5434 = vpack.c.b16 %v3354, %v3346
    %v5435 = vpack.c.b16 %v3355, %v3347
    %v5436 = vpack.c.b16 %v3356, %v3348
    %v5437 = vpack.c.b16 %v3357, %v3349
    %v5438 = vpack.c.b16 %v3366, %v3358
    %v5439 = vpack.c.b16 %v3367, %v3359
    %v5440 = vpack.c.b16 %v3368, %v3360
    %v5441 = vpack.c.b16 %v3369, %v3361
    %v5442 = vpack.c.b16 %v3370, %v3362
    %v5443 = vpack.c.b16 %v3371, %v3363
    %v5444 = vpack.c.b16 %v3372, %v3364
    %v5445 = vpack.c.b16 %v3373, %v3365
    %v5446 = vpack.c.b16 %v3382, %v3374
    %v5447 = vpack.c.b16 %v3383, %v3375
    %v5448 = vpack.c.b16 %v3384, %v3376
    %v5449 = vpack.c.b16 %v3385, %v3377
    %v5450 = vpack.c.b16 %v3386, %v3378
    %v5451 = vpack.c.b16 %v3387, %v3379
    %v5452 = vpack.c.b16 %v3388, %v3380
    %v5453 = vpack.c.b16 %v3389, %v3381
    %v5454 = vpack.c.b16 %v3398, %v3390
    %v5455 = vpack.c.b16 %v3399, %v3391
    %v5456 = vpack.c.b16 %v3400, %v3392
    %v5457 = vpack.c.b16 %v3401, %v3393
    %v5458 = vpack.c.b16 %v3402, %v3394
    %v5459 = vpack.c.b16 %v3403, %v3395
    %v5460 = vpack.c.b16 %v3404, %v3396
    %v5461 = vpack.c.b16 %v3405, %v3397
    %v5462 = vpack.c.b16 %v3414, %v3406
    %v5463 = vpack.c.b16 %v3415, %v3407
    %v5464 = vpack.c.b16 %v3416, %v3408
    %v5465 = vpack.c.b16 %v3417, %v3409
    %v5466 = vpack.c.b16 %v3418, %v3410
    %v5467 = vpack.c.b16 %v3419, %v3411
    %v5468 = vpack.c.b16 %v3420, %v3412
    %v5469 = vpack.c.b16 %v3421, %v3413
    %v5470 = vpack.c.b16 %v3430, %v3422
    %v5471 = vpack.c.b16 %v3431, %v3423
    %v5472 = vpack.c.b16 %v3432, %v3424
    %v5473 = vpack.c.b16 %v3433, %v3425
    %v5474 = vpack.c.b16 %v3434, %v3426
    %v5475 = vpack.c.b16 %v3435, %v3427
    %v5476 = vpack.c.b16 %v3436, %v3428
    %v5477 = vpack.c.b16 %v3437, %v3429
    %v5478 = vpack.c.b16 %v3446, %v3438
    %v5479 = vpack.c.b16 %v3447, %v3439
    %v5480 = vpack.c.b16 %v3448, %v3440
    %v5481 = vpack.c.b16 %v3449, %v3441
    %v5482 = vpack.c.b16 %v3450, %v3442
    %v5483 = vpack.c.b16 %v3451, %v3443
    %v5484 = vpack.c.b16 %v3452, %v3444
    %v5485 = vpack.c.b16 %v3453, %v3445
    %v5486 = vpack.c.b16 %v3462, %v3454
    %v5487 = vpack.c.b16 %v3463, %v3455
    %v5488 = vpack.c.b16 %v3464, %v3456
    %v5489 = vpack.c.b16 %v3465, %v3457
    %v5490 = vpack.c.b16 %v3466, %v3458
    %v5491 = vpack.c.b16 %v3467, %v3459
    %v5492 = vpack.c.b16 %v3468, %v3460
    %v5493 = vpack.c.b16 %v3469, %v3461
    %v5494 = vpack.c.b16 %v3478, %v3470
    %v5495 = vpack.c.b16 %v3479, %v3471
    %v5496 = vpack.c.b16 %v3480, %v3472
    %v5497 = vpack.c.b16 %v3481, %v3473
    %v5498 = vpack.c.b16 %v3482, %v3474
    %v5499 = vpack.c.b16 %v3483, %v3475
    %v5500 = vpack.c.b16 %v3484, %v3476
    %v5501 = vpack.c.b16 %v3485, %v3477
    %v5502 = vpack.c.b16 %v3494, %v3486
    %v5503 = vpack.c.b16 %v3495, %v3487
    %v5504 = vpack.c.b16 %v3496, %v3488
    %v5505 = vpack.c.b16 %v3497, %v3489
    %v5506 = vpack.c.b16 %v3498, %v3490
    %v5507 = vpack.c.b16 %v3499, %v3491
    %v5508 = vpack.c.b16 %v3500, %v3492
    %v5509 = vpack.c.b16 %v3501, %v3493
    %v5510 = vpack.c.b16 %v3510, %v3502
    %v5511 = vpack.c.b16 %v3511, %v3503
    %v5512 = vpack.c.b16 %v3512, %v3504
    %v5513 = vpack.c.b16 %v3513, %v3505
    %v5514 = vpack.c.b16 %v3514, %v3506
    %v5515 = vpack.c.b16 %v3515, %v3507
    %v5516 = vpack.c.b16 %v3516, %v3508
    %v5517 = vpack.c.b16 %v3517, %v3509
    %v5518 = vpack.c.b16 %v3526, %v3518
    %v5519 = vpack.c.b16 %v3527, %v3519
    %v5520 = vpack.c.b16 %v3528, %v3520
    %v5521 = vpack.c.b16 %v3529, %v3521
    %v5522 = vpack.c.b16 %v3530, %v3522
    %v5523 = vpack.c.b16 %v3531, %v3523
    %v5524 = vpack.c.b16 %v3532, %v3524
    %v5525 = vpack.c.b16 %v3533, %v3525
    %v5526 = vpack.c.b16 %v3542, %v3534
    %v5527 = vpack.c.b16 %v3543, %v3535
    %v5528 = vpack.c.b16 %v3544, %v3536
    %v5529 = vpack.c.b16 %v3545, %v3537
    %v5530 = vpack.c.b16 %v3546, %v3538
    %v5531 = vpack.c.b16 %v3547, %v3539
    %v5532 = vpack.c.b16 %v3548, %v3540
    %v5533 = vpack.c.b16 %v3549, %v3541
    %v5534 = vpack.c.b16 %v3558, %v3550
    %v5535 = vpack.c.b16 %v3559, %v3551
    %v5536 = vpack.c.b16 %v3560, %v3552
    %v5537 = vpack.c.b16 %v3561, %v3553
    %v5538 = vpack.c.b16 %v3562, %v3554
    %v5539 = vpack.c.b16 %v3563, %v3555
    %v5540 = vpack.c.b16 %v3564, %v3556
    %v5541 = vpack.c.b16 %v3565, %v3557
    %v5542 = vpack.c.b16 %v3574, %v3566
    %v5543 = vpack.c.b16 %v3575, %v3567
    %v5544 = vpack.c.b16 %v3576, %v3568
    %v5545 = vpack.c.b16 %v3577, %v3569
    %v5546 = vpack.c.b16 %v3578, %v3570
    %v5547 = vpack.c.b16 %v3579, %v3571
    %v5548 = vpack.c.b16 %v3580, %v3572
    %v5549 = vpack.c.b16 %v3581, %v3573
    %v5550 = vpack.c.b16 %v3590, %v3582
    %v5551 = vpack.c.b16 %v3591, %v3583
    %v5552 = vpack.c.b16 %v3592, %v3584
    %v5553 = vpack.c.b16 %v3593, %v3585
    %v5554 = vpack.c.b16 %v3594, %v3586
    %v5555 = vpack.c.b16 %v3595, %v3587
    %v5556 = vpack.c.b16 %v3596, %v3588
    %v5557 = vpack.c.b16 %v3597, %v3589
    %v5558 = vpack.c.b16 %v3606, %v3598
    %v5559 = vpack.c.b16 %v3607, %v3599
    %v5560 = vpack.c.b16 %v3608, %v3600
    %v5561 = vpack.c.b16 %v3609, %v3601
    %v5562 = vpack.c.b16 %v3610, %v3602
    %v5563 = vpack.c.b16 %v3611, %v3603
    %v5564 = vpack.c.b16 %v3612, %v3604
    %v5565 = vpack.c.b16 %v3613, %v3605
    %v5566 = vpack.c.b16 %v3622, %v3614
    %v5567 = vpack.c.b16 %v3623, %v3615
    %v5568 = vpack.c.b16 %v3624, %v3616
    %v5569 = vpack.c.b16 %v3625, %v3617
    %v5570 = vpack.c.b16 %v3626, %v3618
    %v5571 = vpack.c.b16 %v3627, %v3619
    %v5572 = vpack.c.b16 %v3628, %v3620
    %v5573 = vpack.c.b16 %v3629, %v3621
    %v5574 = vpack.c.b16 %v3638, %v3630
    %v5575 = vpack.c.b16 %v3639, %v3631
    %v5576 = vpack.c.b16 %v3640, %v3632
    %v5577 = vpack.c.b16 %v3641, %v3633
    %v5578 = vpack.c.b16 %v3642, %v3634
    %v5579 = vpack.c.b16 %v3643, %v3635
    %v5580 = vpack.c.b16 %v3644, %v3636
    %v5581 = vpack.c.b16 %v3645, %v3637
    %v5582 = vpack.c.b16 %v3654, %v3646
    %v5583 = vpack.c.b16 %v3655, %v3647
    %v5584 = vpack.c.b16 %v3656, %v3648
    %v5585 = vpack.c.b16 %v3657, %v3649
    %v5586 = vpack.c.b16 %v3658, %v3650
    %v5587 = vpack.c.b16 %v3659, %v3651
    %v5588 = vpack.c.b16 %v3660, %v3652
    %v5589 = vpack.c.b16 %v3661, %v3653
    %v5590 = vpack.c.b16 %v3670, %v3662
    %v5591 = vpack.c.b16 %v3671, %v3663
    %v5592 = vpack.c.b16 %v3672, %v3664
    %v5593 = vpack.c.b16 %v3673, %v3665
    %v5594 = vpack.c.b16 %v3674, %v3666
    %v5595 = vpack.c.b16 %v3675, %v3667
    %v5596 = vpack.c.b16 %v3676, %v3668
    %v5597 = vpack.c.b16 %v3677, %v3669
    %v5598 = vpack.c.b16 %v3686, %v3678
    %v5599 = vpack.c.b16 %v3687, %v3679
    %v5600 = vpack.c.b16 %v3688, %v3680
    %v5601 = vpack.c.b16 %v3689, %v3681
    %v5602 = vpack.c.b16 %v3690, %v3682
    %v5603 = vpack.c.b16 %v3691, %v3683
    %v5604 = vpack.c.b16 %v3692, %v3684
    %v5605 = vpack.c.b16 %v3693, %v3685
    %v5606 = vpack.c.b16 %v3702, %v3694
    %v5607 = vpack.c.b16 %v3703, %v3695
    %v5608 = vpack.c.b16 %v3704, %v3696
    %v5609 = vpack.c.b16 %v3705, %v3697
    %v5610 = vpack.c.b16 %v3706, %v3698
    %v5611 = vpack.c.b16 %v3707, %v3699
    %v5612 = vpack.c.b16 %v3708, %v3700
    %v5613 = vpack.c.b16 %v3709, %v3701
    %v5614 = vpack.c.b16 %v3718, %v3710
    %v5615 = vpack.c.b16 %v3719, %v3711
    %v5616 = vpack.c.b16 %v3720, %v3712
    %v5617 = vpack.c.b16 %v3721, %v3713
    %v5618 = vpack.c.b16 %v3722, %v3714
    %v5619 = vpack.c.b16 %v3723, %v3715
    %v5620 = vpack.c.b16 %v3724, %v3716
    %v5621 = vpack.c.b16 %v3725, %v3717
    %v5622 = vpack.c.b16 %v3734, %v3726
    %v5623 = vpack.c.b16 %v3735, %v3727
    %v5624 = vpack.c.b16 %v3736, %v3728
    %v5625 = vpack.c.b16 %v3737, %v3729
    %v5626 = vpack.c.b16 %v3738, %v3730
    %v5627 = vpack.c.b16 %v3739, %v3731
    %v5628 = vpack.c.b16 %v3740, %v3732
    %v5629 = vpack.c.b16 %v3741, %v3733
    %v5630 = vpack.c.b16 %v3750, %v3742
    %v5631 = vpack.c.b16 %v3751, %v3743
    %v5632 = vpack.c.b16 %v3752, %v3744
    %v5633 = vpack.c.b16 %v3753, %v3745
    %v5634 = vpack.c.b16 %v3754, %v3746
    %v5635 = vpack.c.b16 %v3755, %v3747
    %v5636 = vpack.c.b16 %v3756, %v3748
    %v5637 = vpack.c.b16 %v3757, %v3749
    %v5638 = vpack.c.b16 %v3766, %v3758
    %v5639 = vpack.c.b16 %v3767, %v3759
    %v5640 = vpack.c.b16 %v3768, %v3760
    %v5641 = vpack.c.b16 %v3769, %v3761
    %v5642 = vpack.c.b16 %v3770, %v3762
    %v5643 = vpack.c.b16 %v3771, %v3763
    %v5644 = vpack.c.b16 %v3772, %v3764
    %v5645 = vpack.c.b16 %v3773, %v3765
    %v5646 = vpack.c.b16 %v3782, %v3774
    %v5647 = vpack.c.b16 %v3783, %v3775
    %v5648 = vpack.c.b16 %v3784, %v3776
    %v5649 = vpack.c.b16 %v3785, %v3777
    %v5650 = vpack.c.b16 %v3786, %v3778
    %v5651 = vpack.c.b16 %v3787, %v3779
    %v5652 = vpack.c.b16 %v3788, %v3780
    %v5653 = vpack.c.b16 %v3789, %v3781
    %v5654 = vpack.c.b16 %v3798, %v3790
    %v5655 = vpack.c.b16 %v3799, %v3791
    %v5656 = vpack.c.b16 %v3800, %v3792
    %v5657 = vpack.c.b16 %v3801, %v3793
    %v5658 = vpack.c.b16 %v3802, %v3794
    %v5659 = vpack.c.b16 %v3803, %v3795
    %v5660 = vpack.c.b16 %v3804, %v3796
    %v5661 = vpack.c.b16 %v3805, %v3797
    %v5662 = vpack.c.b16 %v3814, %v3806
    %v5663 = vpack.c.b16 %v3815, %v3807
    %v5664 = vpack.c.b16 %v3816, %v3808
    %v5665 = vpack.c.b16 %v3817, %v3809
    %v5666 = vpack.c.b16 %v3818, %v3810
    %v5667 = vpack.c.b16 %v3819, %v3811
    %v5668 = vpack.c.b16 %v3820, %v3812
    %v5669 = vpack.c.b16 %v3821, %v3813
    %v5670 = vpack.c.b16 %v3830, %v3822
    %v5671 = vpack.c.b16 %v3831, %v3823
    %v5672 = vpack.c.b16 %v3832, %v3824
    %v5673 = vpack.c.b16 %v3833, %v3825
    %v5674 = vpack.c.b16 %v3834, %v3826
    %v5675 = vpack.c.b16 %v3835, %v3827
    %v5676 = vpack.c.b16 %v3836, %v3828
    %v5677 = vpack.c.b16 %v3837, %v3829
    %v5678 = vpack.c.b16 %v3846, %v3838
    %v5679 = vpack.c.b16 %v3847, %v3839
    %v5680 = vpack.c.b16 %v3848, %v3840
    %v5681 = vpack.c.b16 %v3849, %v3841
    %v5682 = vpack.c.b16 %v3850, %v3842
    %v5683 = vpack.c.b16 %v3851, %v3843
    %v5684 = vpack.c.b16 %v3852, %v3844
    %v5685 = vpack.c.b16 %v3853, %v3845
    %v5686 = vpack.c.b16 %v3862, %v3854
    %v5687 = vpack.c.b16 %v3863, %v3855
    %v5688 = vpack.c.b16 %v3864, %v3856
    %v5689 = vpack.c.b16 %v3865, %v3857
    %v5690 = vpack.c.b16 %v3866, %v3858
    %v5691 = vpack.c.b16 %v3867, %v3859
    %v5692 = vpack.c.b16 %v3868, %v3860
    %v5693 = vpack.c.b16 %v3869, %v3861
    %v5694 = vpack.c.b16 %v3878, %v3870
    %v5695 = vpack.c.b16 %v3879, %v3871
    %v5696 = vpack.c.b16 %v3880, %v3872
    %v5697 = vpack.c.b16 %v3881, %v3873
    %v5698 = vpack.c.b16 %v3882, %v3874
    %v5699 = vpack.c.b16 %v3883, %v3875
    %v5700 = vpack.c.b16 %v3884, %v3876
    %v5701 = vpack.c.b16 %v3885, %v3877
    %v5702 = vpack.c.b16 %v3894, %v3886
    %v5703 = vpack.c.b16 %v3895, %v3887
    %v5704 = vpack.c.b16 %v3896, %v3888
    %v5705 = vpack.c.b16 %v3897, %v3889
    %v5706 = vpack.c.b16 %v3898, %v3890
    %v5707 = vpack.c.b16 %v3899, %v3891
    %v5708 = vpack.c.b16 %v3900, %v3892
    %v5709 = vpack.c.b16 %v3901, %v3893
    %v5710 = vpack.c.b16 %v3910, %v3902
    %v5711 = vpack.c.b16 %v3911, %v3903
    %v5712 = vpack.c.b16 %v3912, %v3904
    %v5713 = vpack.c.b16 %v3913, %v3905
    %v5714 = vpack.c.b16 %v3914, %v3906
    %v5715 = vpack.c.b16 %v3915, %v3907
    %v5716 = vpack.c.b16 %v3916, %v3908
    %v5717 = vpack.c.b16 %v3917, %v3909
    %v5718 = vpack.c.b16 %v3926, %v3918
    %v5719 = vpack.c.b16 %v3927, %v3919
    %v5720 = vpack.c.b16 %v3928, %v3920
    %v5721 = vpack.c.b16 %v3929, %v3921
    %v5722 = vpack.c.b16 %v3930, %v3922
    %v5723 = vpack.c.b16 %v3931, %v3923
    %v5724 = vpack.c.b16 %v3932, %v3924
    %v5725 = vpack.c.b16 %v3933, %v3925
    %v5726 = vpack.c.b16 %v3942, %v3934
    %v5727 = vpack.c.b16 %v3943, %v3935
    %v5728 = vpack.c.b16 %v3944, %v3936
    %v5729 = vpack.c.b16 %v3945, %v3937
    %v5730 = vpack.c.b16 %v3946, %v3938
    %v5731 = vpack.c.b16 %v3947, %v3939
    %v5732 = vpack.c.b16 %v3948, %v3940
    %v5733 = vpack.c.b16 %v3949, %v3941
    %v5734 = vpack.c.b16 %v3958, %v3950
    %v5735 = vpack.c.b16 %v3959, %v3951
    %v5736 = vpack.c.b16 %v3960, %v3952
    %v5737 = vpack.c.b16 %v3961, %v3953
    %v5738 = vpack.c.b16 %v3962, %v3954
    %v5739 = vpack.c.b16 %v3963, %v3955
    %v5740 = vpack.c.b16 %v3964, %v3956
    %v5741 = vpack.c.b16 %v3965, %v3957
    %v5742 = vpack.c.b16 %v3974, %v3966
    %v5743 = vpack.c.b16 %v3975, %v3967
    %v5744 = vpack.c.b16 %v3976, %v3968
    %v5745 = vpack.c.b16 %v3977, %v3969
    %v5746 = vpack.c.b16 %v3978, %v3970
    %v5747 = vpack.c.b16 %v3979, %v3971
    %v5748 = vpack.c.b16 %v3980, %v3972
    %v5749 = vpack.c.b16 %v3981, %v3973
    %v5750 = vpack.c.b16 %v3990, %v3982
    %v5751 = vpack.c.b16 %v3991, %v3983
    %v5752 = vpack.c.b16 %v3992, %v3984
    %v5753 = vpack.c.b16 %v3993, %v3985
    %v5754 = vpack.c.b16 %v3994, %v3986
    %v5755 = vpack.c.b16 %v3995, %v3987
    %v5756 = vpack.c.b16 %v3996, %v3988
    %v5757 = vpack.c.b16 %v3997, %v3989
    %v5758 = vpack.c.b16 %v4006, %v3998
    %v5759 = vpack.c.b16 %v4007, %v3999
    %v5760 = vpack.c.b16 %v4008, %v4000
    %v5761 = vpack.c.b16 %v4009, %v4001
    %v5762 = vpack.c.b16 %v4010, %v4002
    %v5763 = vpack.c.b16 %v4011, %v4003
    %v5764 = vpack.c.b16 %v4012, %v4004
    %v5765 = vpack.c.b16 %v4013, %v4005
    %v5766 = vpack.c.b16 %v4022, %v4014
    %v5767 = vpack.c.b16 %v4023, %v4015
    %v5768 = vpack.c.b16 %v4024, %v4016
    %v5769 = vpack.c.b16 %v4025, %v4017
    %v5770 = vpack.c.b16 %v4026, %v4018
    %v5771 = vpack.c.b16 %v4027, %v4019
    %v5772 = vpack.c.b16 %v4028, %v4020
    %v5773 = vpack.c.b16 %v4029, %v4021
    %v5774 = vpack.c.b16 %v4038, %v4030
    %v5775 = vpack.c.b16 %v4039, %v4031
    %v5776 = vpack.c.b16 %v4040, %v4032
    %v5777 = vpack.c.b16 %v4041, %v4033
    %v5778 = vpack.c.b16 %v4042, %v4034
    %v5779 = vpack.c.b16 %v4043, %v4035
    %v5780 = vpack.c.b16 %v4044, %v4036
    %v5781 = vpack.c.b16 %v4045, %v4037
    %v5782 = vpack.c.b16 %v4054, %v4046
    %v5783 = vpack.c.b16 %v4055, %v4047
    %v5784 = vpack.c.b16 %v4056, %v4048
    %v5785 = vpack.c.b16 %v4057, %v4049
    %v5786 = vpack.c.b16 %v4058, %v4050
    %v5787 = vpack.c.b16 %v4059, %v4051
    %v5788 = vpack.c.b16 %v4060, %v4052
    %v5789 = vpack.c.b16 %v4061, %v4053
    %v5790 = vpack.c.b16 %v4070, %v4062
    %v5791 = vpack.c.b16 %v4071, %v4063
    %v5792 = vpack.c.b16 %v4072, %v4064
    %v5793 = vpack.c.b16 %v4073, %v4065
    %v5794 = vpack.c.b16 %v4074, %v4066
    %v5795 = vpack.c.b16 %v4075, %v4067
    %v5796 = vpack.c.b16 %v4076, %v4068
    %v5797 = vpack.c.b16 %v4077, %v4069
    %v5798 = vpack.c.b16 %v4086, %v4078
    %v5799 = vpack.c.b16 %v4087, %v4079
    %v5800 = vpack.c.b16 %v4088, %v4080
    %v5801 = vpack.c.b16 %v4089, %v4081
    %v5802 = vpack.c.b16 %v4090, %v4082
    %v5803 = vpack.c.b16 %v4091, %v4083
    %v5804 = vpack.c.b16 %v4092, %v4084
    %v5805 = vpack.c.b16 %v4093, %v4085
    %v5806 = vpack.c.b16 %v4102, %v4094
    %v5807 = vpack.c.b16 %v4103, %v4095
    %v5808 = vpack.c.b16 %v4104, %v4096
    %v5809 = vpack.c.b16 %v4105, %v4097
    %v5810 = vpack.c.b16 %v4106, %v4098
    %v5811 = vpack.c.b16 %v4107, %v4099
    %v5812 = vpack.c.b16 %v4108, %v4100
    %v5813 = vpack.c.b16 %v4109, %v4101
    %v5814 = vpack.c.b16 %v4118, %v4110
    %v5815 = vpack.c.b16 %v4119, %v4111
    %v5816 = vpack.c.b16 %v4120, %v4112
    %v5817 = vpack.c.b16 %v4121, %v4113
    %v5818 = vpack.c.b16 %v4122, %v4114
    %v5819 = vpack.c.b16 %v4123, %v4115
    %v5820 = vpack.c.b16 %v4124, %v4116
    %v5821 = vpack.c.b16 %v4125, %v4117
    %v5822 = vpack.c.b16 %v4134, %v4126
    %v5823 = vpack.c.b16 %v4135, %v4127
    %v5824 = vpack.c.b16 %v4136, %v4128
    %v5825 = vpack.c.b16 %v4137, %v4129
    %v5826 = vpack.c.b16 %v4138, %v4130
    %v5827 = vpack.c.b16 %v4139, %v4131
    %v5828 = vpack.c.b16 %v4140, %v4132
    %v5829 = vpack.c.b16 %v4141, %v4133
    %v5830 = vpack.c.b16 %v4150, %v4142
    %v5831 = vpack.c.b16 %v4151, %v4143
    %v5832 = vpack.c.b16 %v4152, %v4144
    %v5833 = vpack.c.b16 %v4153, %v4145
    %v5834 = vpack.c.b16 %v4154, %v4146
    %v5835 = vpack.c.b16 %v4155, %v4147
    %v5836 = vpack.c.b16 %v4156, %v4148
    %v5837 = vpack.c.b16 %v4157, %v4149
    %v5838 = vpack.c.b16 %v4166, %v4158
    %v5839 = vpack.c.b16 %v4167, %v4159
    %v5840 = vpack.c.b16 %v4168, %v4160
    %v5841 = vpack.c.b16 %v4169, %v4161
    %v5842 = vpack.c.b16 %v4170, %v4162
    %v5843 = vpack.c.b16 %v4171, %v4163
    %v5844 = vpack.c.b16 %v4172, %v4164
    %v5845 = vpack.c.b16 %v4173, %v4165
    %v5846 = vpack.c.b16 %v4182, %v4174
    %v5847 = vpack.c.b16 %v4183, %v4175
    %v5848 = vpack.c.b16 %v4184, %v4176
    %v5849 = vpack.c.b16 %v4185, %v4177
    %v5850 = vpack.c.b16 %v4186, %v4178
    %v5851 = vpack.c.b16 %v4187, %v4179
    %v5852 = vpack.c.b16 %v4188, %v4180
    %v5853 = vpack.c.b16 %v4189, %v4181
    %v5854 = vpack.c.b16 %v4198, %v4190
    %v5855 = vpack.c.b16 %v4199, %v4191
    %v5856 = vpack.c.b16 %v4200, %v4192
    %v5857 = vpack.c.b16 %v4201, %v4193
    %v5858 = vpack.c.b16 %v4202, %v4194
    %v5859 = vpack.c.b16 %v4203, %v4195
    %v5860 = vpack.c.b16 %v4204, %v4196
    %v5861 = vpack.c.b16 %v4205, %v4197
    %v5862 = vpack.c.b16 %v4214, %v4206
    %v5863 = vpack.c.b16 %v4215, %v4207
    %v5864 = vpack.c.b16 %v4216, %v4208
    %v5865 = vpack.c.b16 %v4217, %v4209
    %v5866 = vpack.c.b16 %v4218, %v4210
    %v5867 = vpack.c.b16 %v4219, %v4211
    %v5868 = vpack.c.b16 %v4220, %v4212
    %v5869 = vpack.c.b16 %v4221, %v4213
    %v5870 = vpack.c.b16 %v4230, %v4222
    %v5871 = vpack.c.b16 %v4231, %v4223
    %v5872 = vpack.c.b16 %v4232, %v4224
    %v5873 = vpack.c.b16 %v4233, %v4225
    %v5874 = vpack.c.b16 %v4234, %v4226
    %v5875 = vpack.c.b16 %v4235, %v4227
    %v5876 = vpack.c.b16 %v4236, %v4228
    %v5877 = vpack.c.b16 %v4237, %v4229
    %v5878 = vpack.c.b16 %v4246, %v4238
    %v5879 = vpack.c.b16 %v4247, %v4239
    %v5880 = vpack.c.b16 %v4248, %v4240
    %v5881 = vpack.c.b16 %v4249, %v4241
    %v5882 = vpack.c.b16 %v4250, %v4242
    %v5883 = vpack.c.b16 %v4251, %v4243
    %v5884 = vpack.c.b16 %v4252, %v4244
    %v5885 = vpack.c.b16 %v4253, %v4245
    %v5886 = vpack.c.b16 %v4262, %v4254
    %v5887 = vpack.c.b16 %v4263, %v4255
    %v5888 = vpack.c.b16 %v4264, %v4256
    %v5889 = vpack.c.b16 %v4265, %v4257
    %v5890 = vpack.c.b16 %v4266, %v4258
    %v5891 = vpack.c.b16 %v4267, %v4259
    %v5892 = vpack.c.b16 %v4268, %v4260
    %v5893 = vpack.c.b16 %v4269, %v4261
    %v5894 = vpack.c.b16 %v4278, %v4270
    %v5895 = vpack.c.b16 %v4279, %v4271
    %v5896 = vpack.c.b16 %v4280, %v4272
    %v5897 = vpack.c.b16 %v4281, %v4273
    %v5898 = vpack.c.b16 %v4282, %v4274
    %v5899 = vpack.c.b16 %v4283, %v4275
    %v5900 = vpack.c.b16 %v4284, %v4276
    %v5901 = vpack.c.b16 %v4285, %v4277
    %v5902 = vpack.c.b16 %v4294, %v4286
    %v5903 = vpack.c.b16 %v4295, %v4287
    %v5904 = vpack.c.b16 %v4296, %v4288
    %v5905 = vpack.c.b16 %v4297, %v4289
    %v5906 = vpack.c.b16 %v4298, %v4290
    %v5907 = vpack.c.b16 %v4299, %v4291
    %v5908 = vpack.c.b16 %v4300, %v4292
    %v5909 = vpack.c.b16 %v4301, %v4293
    %v5910 = vpack.c.b16 %v4310, %v4302
    %v5911 = vpack.c.b16 %v4311, %v4303
    %v5912 = vpack.c.b16 %v4312, %v4304
    %v5913 = vpack.c.b16 %v4313, %v4305
    %v5914 = vpack.c.b16 %v4314, %v4306
    %v5915 = vpack.c.b16 %v4315, %v4307
    %v5916 = vpack.c.b16 %v4316, %v4308
    %v5917 = vpack.c.b16 %v4317, %v4309
    %v5918 = vpack.c.b16 %v4326, %v4318
    %v5919 = vpack.c.b16 %v4327, %v4319
    %v5920 = vpack.c.b16 %v4328, %v4320
    %v5921 = vpack.c.b16 %v4329, %v4321
    %v5922 = vpack.c.b16 %v4330, %v4322
    %v5923 = vpack.c.b16 %v4331, %v4323
    %v5924 = vpack.c.b16 %v4332, %v4324
    %v5925 = vpack.c.b16 %v4333, %v4325
    %v5926 = vpack.c.b16 %v4342, %v4334
    %v5927 = vpack.c.b16 %v4343, %v4335
    %v5928 = vpack.c.b16 %v4344, %v4336
    %v5929 = vpack.c.b16 %v4345, %v4337
    %v5930 = vpack.c.b16 %v4346, %v4338
    %v5931 = vpack.c.b16 %v4347, %v4339
    %v5932 = vpack.c.b16 %v4348, %v4340
    %v5933 = vpack.c.b16 %v4349, %v4341
    %v5934 = vpack.c.b16 %v4358, %v4350
    %v5935 = vpack.c.b16 %v4359, %v4351
    %v5936 = vpack.c.b16 %v4360, %v4352
    %v5937 = vpack.c.b16 %v4361, %v4353
    %v5938 = vpack.c.b16 %v4362, %v4354
    %v5939 = vpack.c.b16 %v4363, %v4355
    %v5940 = vpack.c.b16 %v4364, %v4356
    %v5941 = vpack.c.b16 %v4365, %v4357
    %v5942 = vpack.c.b16 %v4374, %v4366
    %v5943 = vpack.c.b16 %v4375, %v4367
    %v5944 = vpack.c.b16 %v4376, %v4368
    %v5945 = vpack.c.b16 %v4377, %v4369
    %v5946 = vpack.c.b16 %v4378, %v4370
    %v5947 = vpack.c.b16 %v4379, %v4371
    %v5948 = vpack.c.b16 %v4380, %v4372
    %v5949 = vpack.c.b16 %v4381, %v4373
    %v5950 = vpack.c.b16 %v4390, %v4382
    %v5951 = vpack.c.b16 %v4391, %v4383
    %v5952 = vpack.c.b16 %v4392, %v4384
    %v5953 = vpack.c.b16 %v4393, %v4385
    %v5954 = vpack.c.b16 %v4394, %v4386
    %v5955 = vpack.c.b16 %v4395, %v4387
    %v5956 = vpack.c.b16 %v4396, %v4388
    %v5957 = vpack.c.b16 %v4397, %v4389
    %v5958 = vpack.c.b16 %v4406, %v4398
    %v5959 = vpack.c.b16 %v4407, %v4399
    %v5960 = vpack.c.b16 %v4408, %v4400
    %v5961 = vpack.c.b16 %v4409, %v4401
    %v5962 = vpack.c.b16 %v4410, %v4402
    %v5963 = vpack.c.b16 %v4411, %v4403
    %v5964 = vpack.c.b16 %v4412, %v4404
    %v5965 = vpack.c.b16 %v4413, %v4405
    %v5966 = vpack.c.b16 %v4422, %v4414
    %v5967 = vpack.c.b16 %v4423, %v4415
    %v5968 = vpack.c.b16 %v4424, %v4416
    %v5969 = vpack.c.b16 %v4425, %v4417
    %v5970 = vpack.c.b16 %v4426, %v4418
    %v5971 = vpack.c.b16 %v4427, %v4419
    %v5972 = vpack.c.b16 %v4428, %v4420
    %v5973 = vpack.c.b16 %v4429, %v4421
    %v5974 = vpack.c.b16 %v4438, %v4430
    %v5975 = vpack.c.b16 %v4439, %v4431
    %v5976 = vpack.c.b16 %v4440, %v4432
    %v5977 = vpack.c.b16 %v4441, %v4433
    %v5978 = vpack.c.b16 %v4442, %v4434
    %v5979 = vpack.c.b16 %v4443, %v4435
    %v5980 = vpack.c.b16 %v4444, %v4436
    %v5981 = vpack.c.b16 %v4445, %v4437
    %v5982 = vpack.c.b16 %v4454, %v4446
    %v5983 = vpack.c.b16 %v4455, %v4447
    %v5984 = vpack.c.b16 %v4456, %v4448
    %v5985 = vpack.c.b16 %v4457, %v4449
    %v5986 = vpack.c.b16 %v4458, %v4450
    %v5987 = vpack.c.b16 %v4459, %v4451
    %v5988 = vpack.c.b16 %v4460, %v4452
    %v5989 = vpack.c.b16 %v4461, %v4453
    %v5990 = vpack.c.b16 %v4470, %v4462
    %v5991 = vpack.c.b16 %v4471, %v4463
    %v5992 = vpack.c.b16 %v4472, %v4464
    %v5993 = vpack.c.b16 %v4473, %v4465
    %v5994 = vpack.c.b16 %v4474, %v4466
    %v5995 = vpack.c.b16 %v4475, %v4467
    %v5996 = vpack.c.b16 %v4476, %v4468
    %v5997 = vpack.c.b16 %v4477, %v4469
    %v5998 = vpack.c.b16 %v4486, %v4478
    %v5999 = vpack.c.b16 %v4487, %v4479
    %v6000 = vpack.c.b16 %v4488, %v4480
    %v6001 = vpack.c.b16 %v4489, %v4481
    %v6002 = vpack.c.b16 %v4490, %v4482
    %v6003 = vpack.c.b16 %v4491, %v4483
    %v6004 = vpack.c.b16 %v4492, %v4484
    %v6005 = vpack.c.b16 %v4493, %v4485
    %v6006 = vpack.c.b16 %v4502, %v4494
    %v6007 = vpack.c.b16 %v4503, %v4495
    %v6008 = vpack.c.b16 %v4504, %v4496
    %v6009 = vpack.c.b16 %v4505, %v4497
    %v6010 = vpack.c.b16 %v4506, %v4498
    %v6011 = vpack.c.b16 %v4507, %v4499
    %v6012 = vpack.c.b16 %v4508, %v4500
    %v6013 = vpack.c.b16 %v4509, %v4501
    %v6014 = vpack.c.b16 %v4518, %v4510
    %v6015 = vpack.c.b16 %v4519, %v4511
    %v6016 = vpack.c.b16 %v4520, %v4512
    %v6017 = vpack.c.b16 %v4521, %v4513
    %v6018 = vpack.c.b16 %v4522, %v4514
    %v6019 = vpack.c.b16 %v4523, %v4515
    %v6020 = vpack.c.b16 %v4524, %v4516
    %v6021 = vpack.c.b16 %v4525, %v4517
    %v6022 = vpack.c.b16 %v4534, %v4526
    %v6023 = vpack.c.b16 %v4535, %v4527
    %v6024 = vpack.c.b16 %v4536, %v4528
    %v6025 = vpack.c.b16 %v4537, %v4529
    %v6026 = vpack.c.b16 %v4538, %v4530
    %v6027 = vpack.c.b16 %v4539, %v4531
    %v6028 = vpack.c.b16 %v4540, %v4532
    %v6029 = vpack.c.b16 %v4541, %v4533
    %v6030 = vpack.c.b16 %v4550, %v4542
    %v6031 = vpack.c.b16 %v4551, %v4543
    %v6032 = vpack.c.b16 %v4552, %v4544
    %v6033 = vpack.c.b16 %v4553, %v4545
    %v6034 = vpack.c.b16 %v4554, %v4546
    %v6035 = vpack.c.b16 %v4555, %v4547
    %v6036 = vpack.c.b16 %v4556, %v4548
    %v6037 = vpack.c.b16 %v4557, %v4549
    %v6038 = vpack.c.b16 %v4566, %v4558
    %v6039 = vpack.c.b16 %v4567, %v4559
    %v6040 = vpack.c.b16 %v4568, %v4560
    %v6041 = vpack.c.b16 %v4569, %v4561
    %v6042 = vpack.c.b16 %v4570, %v4562
    %v6043 = vpack.c.b16 %v4571, %v4563
    %v6044 = vpack.c.b16 %v4572, %v4564
    %v6045 = vpack.c.b16 %v4573, %v4565
    %v6046 = vpack.c.b16 %v4582, %v4574
    %v6047 = vpack.c.b16 %v4583, %v4575
    %v6048 = vpack.c.b16 %v4584, %v4576
    %v6049 = vpack.c.b16 %v4585, %v4577
    %v6050 = vpack.c.b16 %v4586, %v4578
    %v6051 = vpack.c.b16 %v4587, %v4579
    %v6052 = vpack.c.b16 %v4588, %v4580
    %v6053 = vpack.c.b16 %v4589, %v4581
    %v6054 = vpack.c.b16 %v4598, %v4590
    %v6055 = vpack.c.b16 %v4599, %v4591
    %v6056 = vpack.c.b16 %v4600, %v4592
    %v6057 = vpack.c.b16 %v4601, %v4593
    %v6058 = vpack.c.b16 %v4602, %v4594
    %v6059 = vpack.c.b16 %v4603, %v4595
    %v6060 = vpack.c.b16 %v4604, %v4596
    %v6061 = vpack.c.b16 %v4605, %v4597
    %v6062 = vpack.c.b16 %v4614, %v4606
    %v6063 = vpack.c.b16 %v4615, %v4607
    %v6064 = vpack.c.b16 %v4616, %v4608
    %v6065 = vpack.c.b16 %v4617, %v4609
    %v6066 = vpack.c.b16 %v4618, %v4610
    %v6067 = vpack.c.b16 %v4619, %v4611
    %v6068 = vpack.c.b16 %v4620, %v4612
    %v6069 = vpack.c.b16 %v4621, %v4613
    %v6070 = vpack.c.b16 %v4630, %v4622
    %v6071 = vpack.c.b16 %v4631, %v4623
    %v6072 = vpack.c.b16 %v4632, %v4624
    %v6073 = vpack.c.b16 %v4633, %v4625
    %v6074 = vpack.c.b16 %v4634, %v4626
    %v6075 = vpack.c.b16 %v4635, %v4627
    %v6076 = vpack.c.b16 %v4636, %v4628
    %v6077 = vpack.c.b16 %v4637, %v4629
    %v6078 = vpack.c.b16 %v4646, %v4638
    %v6079 = vpack.c.b16 %v4647, %v4639
    %v6080 = vpack.c.b16 %v4648, %v4640
    %v6081 = vpack.c.b16 %v4649, %v4641
    %v6082 = vpack.c.b16 %v4650, %v4642
    %v6083 = vpack.c.b16 %v4651, %v4643
    %v6084 = vpack.c.b16 %v4652, %v4644
    %v6085 = vpack.c.b16 %v4653, %v4645
    %v6086 = vpack.c.b16 %v4662, %v4654
    %v6087 = vpack.c.b16 %v4663, %v4655
    %v6088 = vpack.c.b16 %v4664, %v4656
    %v6089 = vpack.c.b16 %v4665, %v4657
    %v6090 = vpack.c.b16 %v4666, %v4658
    %v6091 = vpack.c.b16 %v4667, %v4659
    %v6092 = vpack.c.b16 %v4668, %v4660
    %v6093 = vpack.c.b16 %v4669, %v4661
    %v6094 = vpack.c.b16 %v4678, %v4670
    %v6095 = vpack.c.b16 %v4679, %v4671
    %v6096 = vpack.c.b16 %v4680, %v4672
    %v6097 = vpack.c.b16 %v4681, %v4673
    %v6098 = vpack.c.b16 %v4682, %v4674
    %v6099 = vpack.c.b16 %v4683, %v4675
    %v6100 = vpack.c.b16 %v4684, %v4676
    %v6101 = vpack.c.b16 %v4685, %v4677
    %v6102 = vpack.c.b16 %v4694, %v4686
    %v6103 = vpack.c.b16 %v4695, %v4687
    %v6104 = vpack.c.b16 %v4696, %v4688
    %v6105 = vpack.c.b16 %v4697, %v4689
    %v6106 = vpack.c.b16 %v4698, %v4690
    %v6107 = vpack.c.b16 %v4699, %v4691
    %v6108 = vpack.c.b16 %v4700, %v4692
    %v6109 = vpack.c.b16 %v4701, %v4693
    %v6110 = vpack.c.b16 %v4710, %v4702
    %v6111 = vpack.c.b16 %v4711, %v4703
    %v6112 = vpack.c.b16 %v4712, %v4704
    %v6113 = vpack.c.b16 %v4713, %v4705
    %v6114 = vpack.c.b16 %v4714, %v4706
    %v6115 = vpack.c.b16 %v4715, %v4707
    %v6116 = vpack.c.b16 %v4716, %v4708
    %v6117 = vpack.c.b16 %v4717, %v4709
    %v6118 = vpack.c.b16 %v4726, %v4718
    %v6119 = vpack.c.b16 %v4727, %v4719
    %v6120 = vpack.c.b16 %v4728, %v4720
    %v6121 = vpack.c.b16 %v4729, %v4721
    %v6122 = vpack.c.b16 %v4730, %v4722
    %v6123 = vpack.c.b16 %v4731, %v4723
    %v6124 = vpack.c.b16 %v4732, %v4724
    %v6125 = vpack.c.b16 %v4733, %v4725
    %v6126 = vpack.c.b16 %v4742, %v4734
    %v6127 = vpack.c.b16 %v4743, %v4735
    %v6128 = vpack.c.b16 %v4744, %v4736
    %v6129 = vpack.c.b16 %v4745, %v4737
    %v6130 = vpack.c.b16 %v4746, %v4738
    %v6131 = vpack.c.b16 %v4747, %v4739
    %v6132 = vpack.c.b16 %v4748, %v4740
    %v6133 = vpack.c.b16 %v4749, %v4741
    %v6134 = vpack.c.b16 %v4758, %v4750
    %v6135 = vpack.c.b16 %v4759, %v4751
    %v6136 = vpack.c.b16 %v4760, %v4752
    %v6137 = vpack.c.b16 %v4761, %v4753
    %v6138 = vpack.c.b16 %v4762, %v4754
    %v6139 = vpack.c.b16 %v4763, %v4755
    %v6140 = vpack.c.b16 %v4764, %v4756
    %v6141 = vpack.c.b16 %v4765, %v4757
    %v6142 = vpack.c.b16 %v4774, %v4766
    %v6143 = vpack.c.b16 %v4775, %v4767
    %v6144 = vpack.c.b16 %v4776, %v4768
    %v6145 = vpack.c.b16 %v4777, %v4769
    %v6146 = vpack.c.b16 %v4778, %v4770
    %v6147 = vpack.c.b16 %v4779, %v4771
    %v6148 = vpack.c.b16 %v4780, %v4772
    %v6149 = vpack.c.b16 %v4781, %v4773
    %v6150 = vpack.c.b16 %v4790, %v4782
    %v6151 = vpack.c.b16 %v4791, %v4783
    %v6152 = vpack.c.b16 %v4792, %v4784
    %v6153 = vpack.c.b16 %v4793, %v4785
    %v6154 = vpack.c.b16 %v4794, %v4786
    %v6155 = vpack.c.b16 %v4795, %v4787
    %v6156 = vpack.c.b16 %v4796, %v4788
    %v6157 = vpack.c.b16 %v4797, %v4789
    %v6158 = vpack.c.b16 %v4806, %v4798
    %v6159 = vpack.c.b16 %v4807, %v4799
    %v6160 = vpack.c.b16 %v4808, %v4800
    %v6161 = vpack.c.b16 %v4809, %v4801
    %v6162 = vpack.c.b16 %v4810, %v4802
    %v6163 = vpack.c.b16 %v4811, %v4803
    %v6164 = vpack.c.b16 %v4812, %v4804
    %v6165 = vpack.c.b16 %v4813, %v4805
    %v6166 = vpack.c.b16 %v4822, %v4814
    %v6167 = vpack.c.b16 %v4823, %v4815
    %v6168 = vpack.c.b16 %v4824, %v4816
    %v6169 = vpack.c.b16 %v4825, %v4817
    %v6170 = vpack.c.b16 %v4826, %v4818
    %v6171 = vpack.c.b16 %v4827, %v4819
    %v6172 = vpack.c.b16 %v4828, %v4820
    %v6173 = vpack.c.b16 %v4829, %v4821
    %v6174 = vpack.c.b16 %v4838, %v4830
    %v6175 = vpack.c.b16 %v4839, %v4831
    %v6176 = vpack.c.b16 %v4840, %v4832
    %v6177 = vpack.c.b16 %v4841, %v4833
    %v6178 = vpack.c.b16 %v4842, %v4834
    %v6179 = vpack.c.b16 %v4843, %v4835
    %v6180 = vpack.c.b16 %v4844, %v4836
    %v6181 = vpack.c.b16 %v4845, %v4837
    %v6182 = vpack.c.b16 %v4854, %v4846
    %v6183 = vpack.c.b16 %v4855, %v4847
    %v6184 = vpack.c.b16 %v4856, %v4848
    %v6185 = vpack.c.b16 %v4857, %v4849
    %v6186 = vpack.c.b16 %v4858, %v4850
    %v6187 = vpack.c.b16 %v4859, %v4851
    %v6188 = vpack.c.b16 %v4860, %v4852
    %v6189 = vpack.c.b16 %v4861, %v4853
    %v6190 = vpack.c.b16 %v4870, %v4862
    %v6191 = vpack.c.b16 %v4871, %v4863
    %v6192 = vpack.c.b16 %v4872, %v4864
    %v6193 = vpack.c.b16 %v4873, %v4865
    %v6194 = vpack.c.b16 %v4874, %v4866
    %v6195 = vpack.c.b16 %v4875, %v4867
    %v6196 = vpack.c.b16 %v4876, %v4868
    %v6197 = vpack.c.b16 %v4877, %v4869
    %v6198 = vpack.c.b16 %v4886, %v4878
    %v6199 = vpack.c.b16 %v4887, %v4879
    %v6200 = vpack.c.b16 %v4888, %v4880
    %v6201 = vpack.c.b16 %v4889, %v4881
    %v6202 = vpack.c.b16 %v4890, %v4882
    %v6203 = vpack.c.b16 %v4891, %v4883
    %v6204 = vpack.c.b16 %v4892, %v4884
    %v6205 = vpack.c.b16 %v4893, %v4885
    %v6206 = vpack.c.b16 %v4902, %v4894
    %v6207 = vpack.c.b16 %v4903, %v4895
    %v6208 = vpack.c.b16 %v4904, %v4896
    %v6209 = vpack.c.b16 %v4905, %v4897
    %v6210 = vpack.c.b16 %v4906, %v4898
    %v6211 = vpack.c.b16 %v4907, %v4899
    %v6212 = vpack.c.b16 %v4908, %v4900
    %v6213 = vpack.c.b16 %v4909, %v4901
    %v6214 = vpack.c.b16 %v4918, %v4910
    %v6215 = vpack.c.b16 %v4919, %v4911
    %v6216 = vpack.c.b16 %v4920, %v4912
    %v6217 = vpack.c.b16 %v4921, %v4913
    %v6218 = vpack.c.b16 %v4922, %v4914
    %v6219 = vpack.c.b16 %v4923, %v4915
    %v6220 = vpack.c.b16 %v4924, %v4916
    %v6221 = vpack.c.b16 %v4925, %v4917
    %v6222 = vpack.c.b16 %v4934, %v4926
    %v6223 = vpack.c.b16 %v4935, %v4927
    %v6224 = vpack.c.b16 %v4936, %v4928
    %v6225 = vpack.c.b16 %v4937, %v4929
    %v6226 = vpack.c.b16 %v4938, %v4930
    %v6227 = vpack.c.b16 %v4939, %v4931
    %v6228 = vpack.c.b16 %v4940, %v4932
    %v6229 = vpack.c.b16 %v4941, %v4933
    %v6230 = vpack.c.b16 %v4950, %v4942
    %v6231 = vpack.c.b16 %v4951, %v4943
    %v6232 = vpack.c.b16 %v4952, %v4944
    %v6233 = vpack.c.b16 %v4953, %v4945
    %v6234 = vpack.c.b16 %v4954, %v4946
    %v6235 = vpack.c.b16 %v4955, %v4947
    %v6236 = vpack.c.b16 %v4956, %v4948
    %v6237 = vpack.c.b16 %v4957, %v4949
    %v6238 = vpack.c.b16 %v4966, %v4958
    %v6239 = vpack.c.b16 %v4967, %v4959
    %v6240 = vpack.c.b16 %v4968, %v4960
    %v6241 = vpack.c.b16 %v4969, %v4961
    %v6242 = vpack.c.b16 %v4970, %v4962
    %v6243 = vpack.c.b16 %v4971, %v4963
    %v6244 = vpack.c.b16 %v4972, %v4964
    %v6245 = vpack.c.b16 %v4973, %v4965
    %v6246 = vpack.c.b16 %v4982, %v4974
    %v6247 = vpack.c.b16 %v4983, %v4975
    %v6248 = vpack.c.b16 %v4984, %v4976
    %v6249 = vpack.c.b16 %v4985, %v4977
    %v6250 = vpack.c.b16 %v4986, %v4978
    %v6251 = vpack.c.b16 %v4987, %v4979
    %v6252 = vpack.c.b16 %v4988, %v4980
    %v6253 = vpack.c.b16 %v4989, %v4981
    %v6254 = vpack.c.b16 %v4998, %v4990
    %v6255 = vpack.c.b16 %v4999, %v4991
    %v6256 = vpack.c.b16 %v5000, %v4992
    %v6257 = vpack.c.b16 %v5001, %v4993
    %v6258 = vpack.c.b16 %v5002, %v4994
    %v6259 = vpack.c.b16 %v5003, %v4995
    %v6260 = vpack.c.b16 %v5004, %v4996
    %v6261 = vpack.c.b16 %v5005, %v4997
    %v6262 = vpack.c.b16 %v5014, %v5006
    %v6263 = vpack.c.b16 %v5015, %v5007
    %v6264 = vpack.c.b16 %v5016, %v5008
    %v6265 = vpack.c.b16 %v5017, %v5009
    %v6266 = vpack.c.b16 %v5018, %v5010
    %v6267 = vpack.c.b16 %v5019, %v5011
    %v6268 = vpack.c.b16 %v5020, %v5012
    %v6269 = vpack.c.b16 %v5021, %v5013
    %v6270 = vpack.c.b16 %v5030, %v5022
    %v6271 = vpack.c.b16 %v5031, %v5023
    %v6272 = vpack.c.b16 %v5032, %v5024
    %v6273 = vpack.c.b16 %v5033, %v5025
    %v6274 = vpack.c.b16 %v5034, %v5026
    %v6275 = vpack.c.b16 %v5035, %v5027
    %v6276 = vpack.c.b16 %v5036, %v5028
    %v6277 = vpack.c.b16 %v5037, %v5029
    %v6278 = vpack.c.b16 %v5046, %v5038
    %v6279 = vpack.c.b16 %v5047, %v5039
    %v6280 = vpack.c.b16 %v5048, %v5040
    %v6281 = vpack.c.b16 %v5049, %v5041
    %v6282 = vpack.c.b16 %v5050, %v5042
    %v6283 = vpack.c.b16 %v5051, %v5043
    %v6284 = vpack.c.b16 %v5052, %v5044
    %v6285 = vpack.c.b16 %v5053, %v5045
    %v6286 = vpack.c.b16 %v5062, %v5054
    %v6287 = vpack.c.b16 %v5063, %v5055
    %v6288 = vpack.c.b16 %v5064, %v5056
    %v6289 = vpack.c.b16 %v5065, %v5057
    %v6290 = vpack.c.b16 %v5066, %v5058
    %v6291 = vpack.c.b16 %v5067, %v5059
    %v6292 = vpack.c.b16 %v5068, %v5060
    %v6293 = vpack.c.b16 %v5069, %v5061
    %v6294 = vpack.c.b16 %v5078, %v5070
    %v6295 = vpack.c.b16 %v5079, %v5071
    %v6296 = vpack.c.b16 %v5080, %v5072
    %v6297 = vpack.c.b16 %v5081, %v5073
    %v6298 = vpack.c.b16 %v5082, %v5074
    %v6299 = vpack.c.b16 %v5083, %v5075
    %v6300 = vpack.c.b16 %v5084, %v5076
    %v6301 = vpack.c.b16 %v5085, %v5077
    %7518 = vmatprep.subr.bf16.mxu0 %v5143
    %7519 = vmatpush1.bf16.msra.mxu0 %v5142
    %7520 = vmatprep.subr.bf16.mxu0 %v5135
    %7521 = vmatpush1.bf16.msra.mxu0 %v5134
    %7522 = vmatprep.subr.bf16.mxu0 %v5127
    %7523 = vmatpush1.bf16.msra.mxu0 %v5126
    %7524 = vmatprep.subr.bf16.mxu0 %v5119
    %7525 = vmatpush1.bf16.msra.mxu0 %v5118
    %7526 = vmatprep.subr.bf16.mxu0 %v5111
    %7527 = vmatpush1.bf16.msra.mxu0 %v5110
    %7528 = vmatprep.subr.bf16.mxu0 %v5103
    %7529 = vmatpush1.bf16.msra.mxu0 %v5102
    %7530 = vmatprep.subr.bf16.mxu0 %v5095
    %7531 = vmatpush1.bf16.msra.mxu0 %v5094
    %7532 = vmatprep.subr.bf16.mxu0 %v5087
    %7533 = vmatpush1.bf16.msra.mxu0 %v5086
    %7534 = vmatprep.subr.bf16.mxu0 %v5207
    %7535 = vmatpush2.bf16.msra.mxu0 %v5206
    %7536 = vmatprep.subr.bf16.mxu0 %v5199
    %7537 = vmatpush2.bf16.msra.mxu0 %v5198
    %7538 = vmatprep.subr.bf16.mxu0 %v5191
    %7539 = vmatpush2.bf16.msra.mxu0 %v5190
    %7540 = vmatprep.subr.bf16.mxu0 %v5183
    %7541 = vmatpush2.bf16.msra.mxu0 %v5182
    %7542 = vmatprep.subr.bf16.mxu0 %v5175
    %7543 = vmatpush2.bf16.msra.mxu0 %v5174
    %7544 = vmatprep.subr.bf16.mxu0 %v5167
    %7545 = vmatpush2.bf16.msra.mxu0 %v5166
    %7546 = vmatprep.subr.bf16.mxu0 %v5159
    %7547 = vmatpush2.bf16.msra.mxu0 %v5158
    %7548 = vmatprep.subr.bf16.mxu0 %v5151
    %7549 = vmatpush2.bf16.msra.mxu0 %v5150
    %7550 = vmatprep.mubr.bf16.mxu0 %v1401
    %7551 = vmatmul.mubr.bf16.gmra.mxu0 %v1400
    %v7552 = vpop.f32.mrf.mxu0
    %v7553 = vadd.f32 %v1334, %v7552
    %v7554 = vpop.f32.mrf.mxu0
    %v7555 = vadd.f32 %v1338, %v7554
    %v7556 = vpop.f32.mrf.mxu0
    %v7557 = vpop.f32.mrf.mxu0
    %7558 = vdwg.mxu0
    %7559 = vmatprep.subr.bf16.mxu0 %v5271
    %7560 = vmatpush1.bf16.msra.mxu0 %v5270
    %7561 = vmatprep.subr.bf16.mxu0 %v5263
    %7562 = vmatpush1.bf16.msra.mxu0 %v5262
    %7563 = vmatprep.subr.bf16.mxu0 %v5255
    %7564 = vmatpush1.bf16.msra.mxu0 %v5254
    %7565 = vmatprep.subr.bf16.mxu0 %v5247
    %7566 = vmatpush1.bf16.msra.mxu0 %v5246
    %7567 = vmatprep.subr.bf16.mxu0 %v5239
    %7568 = vmatpush1.bf16.msra.mxu0 %v5238
    %7569 = vmatprep.subr.bf16.mxu0 %v5231
    %7570 = vmatpush1.bf16.msra.mxu0 %v5230
    %7571 = vmatprep.subr.bf16.mxu0 %v5223
    %7572 = vmatpush1.bf16.msra.mxu0 %v5222
    %7573 = vmatprep.subr.bf16.mxu0 %v5215
    %7574 = vmatpush1.bf16.msra.mxu0 %v5214
    %7575 = vmatprep.subr.bf16.mxu0 %v5335
    %7576 = vmatpush2.bf16.msra.mxu0 %v5334
    %7577 = vmatprep.subr.bf16.mxu0 %v5327
    %7578 = vmatpush2.bf16.msra.mxu0 %v5326
    %7579 = vmatprep.subr.bf16.mxu0 %v5319
    %7580 = vmatpush2.bf16.msra.mxu0 %v5318
    %7581 = vmatprep.subr.bf16.mxu0 %v5311
    %7582 = vmatpush2.bf16.msra.mxu0 %v5310
    %7583 = vmatprep.subr.bf16.mxu0 %v5303
    %7584 = vmatpush2.bf16.msra.mxu0 %v5302
    %7585 = vmatprep.subr.bf16.mxu0 %v5295
    %7586 = vmatpush2.bf16.msra.mxu0 %v5294
    %7587 = vmatprep.subr.bf16.mxu0 %v5287
    %7588 = vmatpush2.bf16.msra.mxu0 %v5286
    %7589 = vmatprep.subr.bf16.mxu0 %v5279
    %7590 = vmatpush2.bf16.msra.mxu0 %v5278
    %7591 = vmatprep.mubr.bf16.mxu0 %v1403
    %7592 = vmatmul.mubr.bf16.gmra.mxu0 %v1402
    %v7593 = vpop.f32.mrf.mxu0
    %v7594 = vadd.f32 %v7553, %v7593
    %v7595 = vpop.f32.mrf.mxu0
    %v7596 = vadd.f32 %v7555, %v7595
    %v7597 = vpop.f32.mrf.mxu0
    %v7598 = vpop.f32.mrf.mxu0
    %7599 = vdwg.mxu0
    %7600 = vmatprep.subr.bf16.mxu0 %v5399
    %7601 = vmatpush1.bf16.msra.mxu0 %v5398
    %7602 = vmatprep.subr.bf16.mxu0 %v5391
    %7603 = vmatpush1.bf16.msra.mxu0 %v5390
    %7604 = vmatprep.subr.bf16.mxu0 %v5383
    %7605 = vmatpush1.bf16.msra.mxu0 %v5382
    %7606 = vmatprep.subr.bf16.mxu0 %v5375
    %7607 = vmatpush1.bf16.msra.mxu0 %v5374
    %7608 = vmatprep.subr.bf16.mxu0 %v5367
    %7609 = vmatpush1.bf16.msra.mxu0 %v5366
    %7610 = vmatprep.subr.bf16.mxu0 %v5359
    %7611 = vmatpush1.bf16.msra.mxu0 %v5358
    %7612 = vmatprep.subr.bf16.mxu0 %v5351
    %7613 = vmatpush1.bf16.msra.mxu0 %v5350
    %7614 = vmatprep.subr.bf16.mxu0 %v5343
    %7615 = vmatpush1.bf16.msra.mxu0 %v5342
    %7616 = vmatprep.subr.bf16.mxu0 %v5463
    %7617 = vmatpush2.bf16.msra.mxu0 %v5462
    %7618 = vmatprep.subr.bf16.mxu0 %v5455
    %7619 = vmatpush2.bf16.msra.mxu0 %v5454
    %7620 = vmatprep.subr.bf16.mxu0 %v5447
    %7621 = vmatpush2.bf16.msra.mxu0 %v5446
    %7622 = vmatprep.subr.bf16.mxu0 %v5439
    %7623 = vmatpush2.bf16.msra.mxu0 %v5438
    %7624 = vmatprep.subr.bf16.mxu0 %v5431
    %7625 = vmatpush2.bf16.msra.mxu0 %v5430
    %7626 = vmatprep.subr.bf16.mxu0 %v5423
    %7627 = vmatpush2.bf16.msra.mxu0 %v5422
    %7628 = vmatprep.subr.bf16.mxu0 %v5415
    %7629 = vmatpush2.bf16.msra.mxu0 %v5414
    %7630 = vmatprep.subr.bf16.mxu0 %v5407
    %7631 = vmatpush2.bf16.msra.mxu0 %v5406
    %7632 = vmatprep.mubr.bf16.mxu0 %v1405
    %7633 = vmatmul.mubr.bf16.gmra.mxu0 %v1404
    %v7634 = vpop.f32.mrf.mxu0
    %v7635 = vadd.f32 %v7594, %v7634
    %v7636 = vpop.f32.mrf.mxu0
    %v7637 = vadd.f32 %v7596, %v7636
    %v7638 = vpop.f32.mrf.mxu0
    %v7639 = vpop.f32.mrf.mxu0
    %7640 = vdwg.mxu0
    %7641 = vmatprep.subr.bf16.mxu0 %v5527
    %7642 = vmatpush1.bf16.msra.mxu0 %v5526
    %7643 = vmatprep.subr.bf16.mxu0 %v5519
    %7644 = vmatpush1.bf16.msra.mxu0 %v5518
    %7645 = vmatprep.subr.bf16.mxu0 %v5511
    %7646 = vmatpush1.bf16.msra.mxu0 %v5510
    %7647 = vmatprep.subr.bf16.mxu0 %v5503
    %7648 = vmatpush1.bf16.msra.mxu0 %v5502
    %7649 = vmatprep.subr.bf16.mxu0 %v5495
    %7650 = vmatpush1.bf16.msra.mxu0 %v5494
    %7651 = vmatprep.subr.bf16.mxu0 %v5487
    %7652 = vmatpush1.bf16.msra.mxu0 %v5486
    %7653 = vmatprep.subr.bf16.mxu0 %v5479
    %7654 = vmatpush1.bf16.msra.mxu0 %v5478
    %7655 = vmatprep.subr.bf16.mxu0 %v5471
    %7656 = vmatpush1.bf16.msra.mxu0 %v5470
    %7657 = vmatprep.subr.bf16.mxu0 %v5591
    %7658 = vmatpush2.bf16.msra.mxu0 %v5590
    %7659 = vmatprep.subr.bf16.mxu0 %v5583
    %7660 = vmatpush2.bf16.msra.mxu0 %v5582
    %7661 = vmatprep.subr.bf16.mxu0 %v5575
    %7662 = vmatpush2.bf16.msra.mxu0 %v5574
    %7663 = vmatprep.subr.bf16.mxu0 %v5567
    %7664 = vmatpush2.bf16.msra.mxu0 %v5566
    %7665 = vmatprep.subr.bf16.mxu0 %v5559
    %7666 = vmatpush2.bf16.msra.mxu0 %v5558
    %7667 = vmatprep.subr.bf16.mxu0 %v5551
    %7668 = vmatpush2.bf16.msra.mxu0 %v5550
    %7669 = vmatprep.subr.bf16.mxu0 %v5543
    %7670 = vmatpush2.bf16.msra.mxu0 %v5542
    %7671 = vmatprep.subr.bf16.mxu0 %v5535
    %7672 = vmatpush2.bf16.msra.mxu0 %v5534
    %7673 = vmatprep.mubr.bf16.mxu0 %v1407
    %7674 = vmatmul.mubr.bf16.gmra.mxu0 %v1406
    %v7675 = vpop.f32.mrf.mxu0
    %v7676 = vadd.f32 %v7635, %v7675
    %v7677 = vpop.f32.mrf.mxu0
    %v7678 = vadd.f32 %v7637, %v7677
    %v7679 = vpop.f32.mrf.mxu0
    %v7680 = vpop.f32.mrf.mxu0
    %7681 = vdwg.mxu0
    %7682 = vmatprep.subr.bf16.mxu0 %v5655
    %7683 = vmatpush1.bf16.msra.mxu0 %v5654
    %7684 = vmatprep.subr.bf16.mxu0 %v5647
    %7685 = vmatpush1.bf16.msra.mxu0 %v5646
    %7686 = vmatprep.subr.bf16.mxu0 %v5639
    %7687 = vmatpush1.bf16.msra.mxu0 %v5638
    %7688 = vmatprep.subr.bf16.mxu0 %v5631
    %7689 = vmatpush1.bf16.msra.mxu0 %v5630
    %7690 = vmatprep.subr.bf16.mxu0 %v5623
    %7691 = vmatpush1.bf16.msra.mxu0 %v5622
    %7692 = vmatprep.subr.bf16.mxu0 %v5615
    %7693 = vmatpush1.bf16.msra.mxu0 %v5614
    %7694 = vmatprep.subr.bf16.mxu0 %v5607
    %7695 = vmatpush1.bf16.msra.mxu0 %v5606
    %7696 = vmatprep.subr.bf16.mxu0 %v5599
    %7697 = vmatpush1.bf16.msra.mxu0 %v5598
    %7698 = vmatprep.subr.bf16.mxu0 %v5719
    %7699 = vmatpush2.bf16.msra.mxu0 %v5718
    %7700 = vmatprep.subr.bf16.mxu0 %v5711
    %7701 = vmatpush2.bf16.msra.mxu0 %v5710
    %7702 = vmatprep.subr.bf16.mxu0 %v5703
    %7703 = vmatpush2.bf16.msra.mxu0 %v5702
    %7704 = vmatprep.subr.bf16.mxu0 %v5695
    %7705 = vmatpush2.bf16.msra.mxu0 %v5694
    %7706 = vmatprep.subr.bf16.mxu0 %v5687
    %7707 = vmatpush2.bf16.msra.mxu0 %v5686
    %7708 = vmatprep.subr.bf16.mxu0 %v5679
    %7709 = vmatpush2.bf16.msra.mxu0 %v5678
    %7710 = vmatprep.subr.bf16.mxu0 %v5671
    %7711 = vmatpush2.bf16.msra.mxu0 %v5670
    %7712 = vmatprep.subr.bf16.mxu0 %v5663
    %7713 = vmatpush2.bf16.msra.mxu0 %v5662
    %7714 = vmatprep.mubr.bf16.mxu0 %v1409
    %7715 = vmatmul.mubr.bf16.gmra.mxu0 %v1408
    %v7716 = vpop.f32.mrf.mxu0
    %v7717 = vadd.f32 %v7676, %v7716
    %v7718 = vpop.f32.mrf.mxu0
    %v7719 = vadd.f32 %v7678, %v7718
    %v7720 = vpop.f32.mrf.mxu0
    %v7721 = vpop.f32.mrf.mxu0
    %7722 = vdwg.mxu0
    %7723 = vmatprep.subr.bf16.mxu0 %v5783
    %7724 = vmatpush1.bf16.msra.mxu0 %v5782
    %7725 = vmatprep.subr.bf16.mxu0 %v5775
    %7726 = vmatpush1.bf16.msra.mxu0 %v5774
    %7727 = vmatprep.subr.bf16.mxu0 %v5767
    %7728 = vmatpush1.bf16.msra.mxu0 %v5766
    %7729 = vmatprep.subr.bf16.mxu0 %v5759
    %7730 = vmatpush1.bf16.msra.mxu0 %v5758
    %7731 = vmatprep.subr.bf16.mxu0 %v5751
    %7732 = vmatpush1.bf16.msra.mxu0 %v5750
    %7733 = vmatprep.subr.bf16.mxu0 %v5743
    %7734 = vmatpush1.bf16.msra.mxu0 %v5742
    %7735 = vmatprep.subr.bf16.mxu0 %v5735
    %7736 = vmatpush1.bf16.msra.mxu0 %v5734
    %7737 = vmatprep.subr.bf16.mxu0 %v5727
    %7738 = vmatpush1.bf16.msra.mxu0 %v5726
    %7739 = vmatprep.subr.bf16.mxu0 %v5847
    %7740 = vmatpush2.bf16.msra.mxu0 %v5846
    %7741 = vmatprep.subr.bf16.mxu0 %v5839
    %7742 = vmatpush2.bf16.msra.mxu0 %v5838
    %7743 = vmatprep.subr.bf16.mxu0 %v5831
    %7744 = vmatpush2.bf16.msra.mxu0 %v5830
    %7745 = vmatprep.subr.bf16.mxu0 %v5823
    %7746 = vmatpush2.bf16.msra.mxu0 %v5822
    %7747 = vmatprep.subr.bf16.mxu0 %v5815
    %7748 = vmatpush2.bf16.msra.mxu0 %v5814
    %7749 = vmatprep.subr.bf16.mxu0 %v5807
    %7750 = vmatpush2.bf16.msra.mxu0 %v5806
    %7751 = vmatprep.subr.bf16.mxu0 %v5799
    %7752 = vmatpush2.bf16.msra.mxu0 %v5798
    %7753 = vmatprep.subr.bf16.mxu0 %v5791
    %7754 = vmatpush2.bf16.msra.mxu0 %v5790
    %7755 = vmatprep.mubr.bf16.mxu0 %v1411
    %7756 = vmatmul.mubr.bf16.gmra.mxu0 %v1410
    %v7757 = vpop.f32.mrf.mxu0
    %v7758 = vadd.f32 %v7717, %v7757
    %v7759 = vpop.f32.mrf.mxu0
    %v7760 = vadd.f32 %v7719, %v7759
    %v7761 = vpop.f32.mrf.mxu0
    %v7762 = vpop.f32.mrf.mxu0
    %7763 = vdwg.mxu0
    %7764 = vmatprep.subr.bf16.mxu0 %v5911
    %7765 = vmatpush1.bf16.msra.mxu0 %v5910
    %7766 = vmatprep.subr.bf16.mxu0 %v5903
    %7767 = vmatpush1.bf16.msra.mxu0 %v5902
    %7768 = vmatprep.subr.bf16.mxu0 %v5895
    %7769 = vmatpush1.bf16.msra.mxu0 %v5894
    %7770 = vmatprep.subr.bf16.mxu0 %v5887
    %7771 = vmatpush1.bf16.msra.mxu0 %v5886
    %7772 = vmatprep.subr.bf16.mxu0 %v5879
    %7773 = vmatpush1.bf16.msra.mxu0 %v5878
    %7774 = vmatprep.subr.bf16.mxu0 %v5871
    %7775 = vmatpush1.bf16.msra.mxu0 %v5870
    %7776 = vmatprep.subr.bf16.mxu0 %v5863
    %7777 = vmatpush1.bf16.msra.mxu0 %v5862
    %7778 = vmatprep.subr.bf16.mxu0 %v5855
    %7779 = vmatpush1.bf16.msra.mxu0 %v5854
    %7780 = vmatprep.subr.bf16.mxu0 %v5975
    %7781 = vmatpush2.bf16.msra.mxu0 %v5974
    %7782 = vmatprep.subr.bf16.mxu0 %v5967
    %7783 = vmatpush2.bf16.msra.mxu0 %v5966
    %7784 = vmatprep.subr.bf16.mxu0 %v5959
    %7785 = vmatpush2.bf16.msra.mxu0 %v5958
    %7786 = vmatprep.subr.bf16.mxu0 %v5951
    %7787 = vmatpush2.bf16.msra.mxu0 %v5950
    %7788 = vmatprep.subr.bf16.mxu0 %v5943
    %7789 = vmatpush2.bf16.msra.mxu0 %v5942
    %7790 = vmatprep.subr.bf16.mxu0 %v5935
    %7791 = vmatpush2.bf16.msra.mxu0 %v5934
    %7792 = vmatprep.subr.bf16.mxu0 %v5927
    %7793 = vmatpush2.bf16.msra.mxu0 %v5926
    %7794 = vmatprep.subr.bf16.mxu0 %v5919
    %7795 = vmatpush2.bf16.msra.mxu0 %v5918
    %7796 = vmatprep.mubr.bf16.mxu0 %v1413
    %7797 = vmatmul.mubr.bf16.gmra.mxu0 %v1412
    %v7798 = vpop.f32.mrf.mxu0
    %v7799 = vadd.f32 %v7758, %v7798
    %v7800 = vpop.f32.mrf.mxu0
    %v7801 = vadd.f32 %v7760, %v7800
    %v7802 = vpop.f32.mrf.mxu0
    %v7803 = vpop.f32.mrf.mxu0
    %7804 = vdwg.mxu0
    %7805 = vmatprep.subr.bf16.mxu0 %v6039
    %7806 = vmatpush1.bf16.msra.mxu0 %v6038
    %7807 = vmatprep.subr.bf16.mxu0 %v6031
    %7808 = vmatpush1.bf16.msra.mxu0 %v6030
    %7809 = vmatprep.subr.bf16.mxu0 %v6023
    %7810 = vmatpush1.bf16.msra.mxu0 %v6022
    %7811 = vmatprep.subr.bf16.mxu0 %v6015
    %7812 = vmatpush1.bf16.msra.mxu0 %v6014
    %7813 = vmatprep.subr.bf16.mxu0 %v6007
    %7814 = vmatpush1.bf16.msra.mxu0 %v6006
    %7815 = vmatprep.subr.bf16.mxu0 %v5999
    %7816 = vmatpush1.bf16.msra.mxu0 %v5998
    %7817 = vmatprep.subr.bf16.mxu0 %v5991
    %7818 = vmatpush1.bf16.msra.mxu0 %v5990
    %7819 = vmatprep.subr.bf16.mxu0 %v5983
    %7820 = vmatpush1.bf16.msra.mxu0 %v5982
    %7821 = vmatprep.subr.bf16.mxu0 %v6103
    %7822 = vmatpush2.bf16.msra.mxu0 %v6102
    %7823 = vmatprep.subr.bf16.mxu0 %v6095
    %7824 = vmatpush2.bf16.msra.mxu0 %v6094
    %7825 = vmatprep.subr.bf16.mxu0 %v6087
    %7826 = vmatpush2.bf16.msra.mxu0 %v6086
    %7827 = vmatprep.subr.bf16.mxu0 %v6079
    %7828 = vmatpush2.bf16.msra.mxu0 %v6078
    %7829 = vmatprep.subr.bf16.mxu0 %v6071
    %7830 = vmatpush2.bf16.msra.mxu0 %v6070
    %7831 = vmatprep.subr.bf16.mxu0 %v6063
    %7832 = vmatpush2.bf16.msra.mxu0 %v6062
    %7833 = vmatprep.subr.bf16.mxu0 %v6055
    %7834 = vmatpush2.bf16.msra.mxu0 %v6054
    %7835 = vmatprep.subr.bf16.mxu0 %v6047
    %7836 = vmatpush2.bf16.msra.mxu0 %v6046
    %7837 = vmatprep.mubr.bf16.mxu0 %v1415
    %7838 = vmatmul.mubr.bf16.gmra.mxu0 %v1414
    %v7839 = vpop.f32.mrf.mxu0
    %v7840 = vadd.f32 %v7799, %v7839
    %v7841 = vpop.f32.mrf.mxu0
    %v7842 = vadd.f32 %v7801, %v7841
    %v7843 = vpop.f32.mrf.mxu0
    %v7844 = vpop.f32.mrf.mxu0
    %7845 = vdwg.mxu0
    %7846 = vmatprep.subr.bf16.mxu0 %v6167
    %7847 = vmatpush1.bf16.msra.mxu0 %v6166
    %7848 = vmatprep.subr.bf16.mxu0 %v6159
    %7849 = vmatpush1.bf16.msra.mxu0 %v6158
    %7850 = vmatprep.subr.bf16.mxu0 %v6151
    %7851 = vmatpush1.bf16.msra.mxu0 %v6150
    %7852 = vmatprep.subr.bf16.mxu0 %v6143
    %7853 = vmatpush1.bf16.msra.mxu0 %v6142
    %7854 = vmatprep.subr.bf16.mxu0 %v6135
    %7855 = vmatpush1.bf16.msra.mxu0 %v6134
    %7856 = vmatprep.subr.bf16.mxu0 %v6127
    %7857 = vmatpush1.bf16.msra.mxu0 %v6126
    %7858 = vmatprep.subr.bf16.mxu0 %v6119
    %7859 = vmatpush1.bf16.msra.mxu0 %v6118
    %7860 = vmatprep.subr.bf16.mxu0 %v6111
    %7861 = vmatpush1.bf16.msra.mxu0 %v6110
    %7862 = vmatprep.subr.bf16.mxu0 %v6231
    %7863 = vmatpush2.bf16.msra.mxu0 %v6230
    %7864 = vmatprep.subr.bf16.mxu0 %v6223
    %7865 = vmatpush2.bf16.msra.mxu0 %v6222
    %7866 = vmatprep.subr.bf16.mxu0 %v6215
    %7867 = vmatpush2.bf16.msra.mxu0 %v6214
    %7868 = vmatprep.subr.bf16.mxu0 %v6207
    %7869 = vmatpush2.bf16.msra.mxu0 %v6206
    %7870 = vmatprep.subr.bf16.mxu0 %v6199
    %7871 = vmatpush2.bf16.msra.mxu0 %v6198
    %7872 = vmatprep.subr.bf16.mxu0 %v6191
    %7873 = vmatpush2.bf16.msra.mxu0 %v6190
    %7874 = vmatprep.subr.bf16.mxu0 %v6183
    %7875 = vmatpush2.bf16.msra.mxu0 %v6182
    %7876 = vmatprep.subr.bf16.mxu0 %v6175
    %7877 = vmatpush2.bf16.msra.mxu0 %v6174
    %7878 = vmatprep.mubr.bf16.mxu0 %v1417
    %7879 = vmatmul.mubr.bf16.gmra.mxu0 %v1416
    %v7880 = vpop.f32.mrf.mxu0
    %v7881 = vadd.f32 %v7840, %v7880
    %v7882 = vpop.f32.mrf.mxu0
    %v7883 = vadd.f32 %v7842, %v7882
    %v7884 = vpop.f32.mrf.mxu0
    %v7885 = vpop.f32.mrf.mxu0
    %7886 = vdwg.mxu0
    %7887 = vmatprep.subr.bf16.mxu0 %v6295
    %7888 = vmatpush1.bf16.msra.mxu0 %v6294
    %7889 = vmatprep.subr.bf16.mxu0 %v6287
    %7890 = vmatpush1.bf16.msra.mxu0 %v6286
    %7891 = vmatprep.subr.bf16.mxu0 %v6279
    %7892 = vmatpush1.bf16.msra.mxu0 %v6278
    %7893 = vmatprep.subr.bf16.mxu0 %v6271
    %7894 = vmatpush1.bf16.msra.mxu0 %v6270
    %7895 = vmatprep.subr.bf16.mxu0 %v6263
    %7896 = vmatpush1.bf16.msra.mxu0 %v6262
    %7897 = vmatprep.subr.bf16.mxu0 %v6255
    %7898 = vmatpush1.bf16.msra.mxu0 %v6254
    %7899 = vmatprep.subr.bf16.mxu0 %v6247
    %7900 = vmatpush1.bf16.msra.mxu0 %v6246
    %7901 = vmatprep.subr.bf16.mxu0 %v6239
    %7902 = vmatpush1.bf16.msra.mxu0 %v6238
    %7903 = vmatprep.subr.bf16.mxu0 0
    %7904 = vmatpush2.bf16.msra.mxu0 0
    %7905 = vmatprep.subr.bf16.mxu0 0
    %7906 = vmatpush2.bf16.msra.mxu0 0
    %7907 = vmatprep.subr.bf16.mxu0 0
    %7908 = vmatpush2.bf16.msra.mxu0 0
    %7909 = vmatprep.subr.bf16.mxu0 0
    %7910 = vmatpush2.bf16.msra.mxu0 0
    %7911 = vmatprep.subr.bf16.mxu0 0
    %7912 = vmatpush2.bf16.msra.mxu0 0
    %7913 = vmatprep.subr.bf16.mxu0 0
    %7914 = vmatpush2.bf16.msra.mxu0 0
    %7915 = vmatprep.subr.bf16.mxu0 0
    %7916 = vmatpush2.bf16.msra.mxu0 0
    %7917 = vmatprep.subr.bf16.mxu0 0
    %7918 = vmatpush2.bf16.msra.mxu0 0
    %7919 = vmatprep.mubr.bf16.mxu0 0
    %7920 = vmatmul.mubr.bf16.gmra.mxu0 %v1418
    %v7921 = vpop.f32.mrf.mxu0
    %v7922 = vadd.f32 %v7881, %v7921
    %v7923 = vpop.f32.mrf.mxu0
    %v7924 = vadd.f32 %v7883, %v7923
    %v7925 = vpop.f32.mrf.mxu0
    %v7926 = vpop.f32.mrf.mxu0
    %7927 = vdwg.mxu0
    %7928 = vmatprep.subr.bf16.mxu0 %v5145
    %7929 = vmatpush1.bf16.msra.mxu0 %v5144
    %7930 = vmatprep.subr.bf16.mxu0 %v5137
    %7931 = vmatpush1.bf16.msra.mxu0 %v5136
    %7932 = vmatprep.subr.bf16.mxu0 %v5129
    %7933 = vmatpush1.bf16.msra.mxu0 %v5128
    %7934 = vmatprep.subr.bf16.mxu0 %v5121
    %7935 = vmatpush1.bf16.msra.mxu0 %v5120
    %7936 = vmatprep.subr.bf16.mxu0 %v5113
    %7937 = vmatpush1.bf16.msra.mxu0 %v5112
    %7938 = vmatprep.subr.bf16.mxu0 %v5105
    %7939 = vmatpush1.bf16.msra.mxu0 %v5104
    %7940 = vmatprep.subr.bf16.mxu0 %v5097
    %7941 = vmatpush1.bf16.msra.mxu0 %v5096
    %7942 = vmatprep.subr.bf16.mxu0 %v5089
    %7943 = vmatpush1.bf16.msra.mxu0 %v5088
    %7944 = vmatprep.subr.bf16.mxu0 %v5209
    %7945 = vmatpush2.bf16.msra.mxu0 %v5208
    %7946 = vmatprep.subr.bf16.mxu0 %v5201
    %7947 = vmatpush2.bf16.msra.mxu0 %v5200
    %7948 = vmatprep.subr.bf16.mxu0 %v5193
    %7949 = vmatpush2.bf16.msra.mxu0 %v5192
    %7950 = vmatprep.subr.bf16.mxu0 %v5185
    %7951 = vmatpush2.bf16.msra.mxu0 %v5184
    %7952 = vmatprep.subr.bf16.mxu0 %v5177
    %7953 = vmatpush2.bf16.msra.mxu0 %v5176
    %7954 = vmatprep.subr.bf16.mxu0 %v5169
    %7955 = vmatpush2.bf16.msra.mxu0 %v5168
    %7956 = vmatprep.subr.bf16.mxu0 %v5161
    %7957 = vmatpush2.bf16.msra.mxu0 %v5160
    %7958 = vmatprep.subr.bf16.mxu0 %v5153
    %7959 = vmatpush2.bf16.msra.mxu0 %v5152
    %7960 = vmatprep.mubr.bf16.mxu0 %v1401
    %7961 = vmatmul.mubr.bf16.gmra.mxu0 %v1400
    %v7962 = vpop.f32.mrf.mxu0
    %v7963 = vadd.f32 %v1342, %v7962
    %v7964 = vpop.f32.mrf.mxu0
    %v7965 = vadd.f32 %v1346, %v7964
    %v7966 = vpop.f32.mrf.mxu0
    %v7967 = vpop.f32.mrf.mxu0
    %7968 = vdwg.mxu0
    %7969 = vmatprep.subr.bf16.mxu0 %v5273
    %7970 = vmatpush1.bf16.msra.mxu0 %v5272
    %7971 = vmatprep.subr.bf16.mxu0 %v5265
    %7972 = vmatpush1.bf16.msra.mxu0 %v5264
    %7973 = vmatprep.subr.bf16.mxu0 %v5257
    %7974 = vmatpush1.bf16.msra.mxu0 %v5256
    %7975 = vmatprep.subr.bf16.mxu0 %v5249
    %7976 = vmatpush1.bf16.msra.mxu0 %v5248
    %7977 = vmatprep.subr.bf16.mxu0 %v5241
    %7978 = vmatpush1.bf16.msra.mxu0 %v5240
    %7979 = vmatprep.subr.bf16.mxu0 %v5233
    %7980 = vmatpush1.bf16.msra.mxu0 %v5232
    %7981 = vmatprep.subr.bf16.mxu0 %v5225
    %7982 = vmatpush1.bf16.msra.mxu0 %v5224
    %7983 = vmatprep.subr.bf16.mxu0 %v5217
    %7984 = vmatpush1.bf16.msra.mxu0 %v5216
    %7985 = vmatprep.subr.bf16.mxu0 %v5337
    %7986 = vmatpush2.bf16.msra.mxu0 %v5336
    %7987 = vmatprep.subr.bf16.mxu0 %v5329
    %7988 = vmatpush2.bf16.msra.mxu0 %v5328
    %7989 = vmatprep.subr.bf16.mxu0 %v5321
    %7990 = vmatpush2.bf16.msra.mxu0 %v5320
    %7991 = vmatprep.subr.bf16.mxu0 %v5313
    %7992 = vmatpush2.bf16.msra.mxu0 %v5312
    %7993 = vmatprep.subr.bf16.mxu0 %v5305
    %7994 = vmatpush2.bf16.msra.mxu0 %v5304
    %7995 = vmatprep.subr.bf16.mxu0 %v5297
    %7996 = vmatpush2.bf16.msra.mxu0 %v5296
    %7997 = vmatprep.subr.bf16.mxu0 %v5289
    %7998 = vmatpush2.bf16.msra.mxu0 %v5288
    %7999 = vmatprep.subr.bf16.mxu0 %v5281
    %8000 = vmatpush2.bf16.msra.mxu0 %v5280
    %8001 = vmatprep.mubr.bf16.mxu0 %v1403
    %8002 = vmatmul.mubr.bf16.gmra.mxu0 %v1402
    %v8003 = vpop.f32.mrf.mxu0
    %v8004 = vadd.f32 %v7963, %v8003
    %v8005 = vpop.f32.mrf.mxu0
    %v8006 = vadd.f32 %v7965, %v8005
    %v8007 = vpop.f32.mrf.mxu0
    %v8008 = vpop.f32.mrf.mxu0
    %8009 = vdwg.mxu0
    %8010 = vmatprep.subr.bf16.mxu0 %v5401
    %8011 = vmatpush1.bf16.msra.mxu0 %v5400
    %8012 = vmatprep.subr.bf16.mxu0 %v5393
    %8013 = vmatpush1.bf16.msra.mxu0 %v5392
    %8014 = vmatprep.subr.bf16.mxu0 %v5385
    %8015 = vmatpush1.bf16.msra.mxu0 %v5384
    %8016 = vmatprep.subr.bf16.mxu0 %v5377
    %8017 = vmatpush1.bf16.msra.mxu0 %v5376
    %8018 = vmatprep.subr.bf16.mxu0 %v5369
    %8019 = vmatpush1.bf16.msra.mxu0 %v5368
    %8020 = vmatprep.subr.bf16.mxu0 %v5361
    %8021 = vmatpush1.bf16.msra.mxu0 %v5360
    %8022 = vmatprep.subr.bf16.mxu0 %v5353
    %8023 = vmatpush1.bf16.msra.mxu0 %v5352
    %8024 = vmatprep.subr.bf16.mxu0 %v5345
    %8025 = vmatpush1.bf16.msra.mxu0 %v5344
    %8026 = vmatprep.subr.bf16.mxu0 %v5465
    %8027 = vmatpush2.bf16.msra.mxu0 %v5464
    %8028 = vmatprep.subr.bf16.mxu0 %v5457
    %8029 = vmatpush2.bf16.msra.mxu0 %v5456
    %8030 = vmatprep.subr.bf16.mxu0 %v5449
    %8031 = vmatpush2.bf16.msra.mxu0 %v5448
    %8032 = vmatprep.subr.bf16.mxu0 %v5441
    %8033 = vmatpush2.bf16.msra.mxu0 %v5440
    %8034 = vmatprep.subr.bf16.mxu0 %v5433
    %8035 = vmatpush2.bf16.msra.mxu0 %v5432
    %8036 = vmatprep.subr.bf16.mxu0 %v5425
    %8037 = vmatpush2.bf16.msra.mxu0 %v5424
    %8038 = vmatprep.subr.bf16.mxu0 %v5417
    %8039 = vmatpush2.bf16.msra.mxu0 %v5416
    %8040 = vmatprep.subr.bf16.mxu0 %v5409
    %8041 = vmatpush2.bf16.msra.mxu0 %v5408
    %8042 = vmatprep.mubr.bf16.mxu0 %v1405
    %8043 = vmatmul.mubr.bf16.gmra.mxu0 %v1404
    %v8044 = vpop.f32.mrf.mxu0
    %v8045 = vadd.f32 %v8004, %v8044
    %v8046 = vpop.f32.mrf.mxu0
    %v8047 = vadd.f32 %v8006, %v8046
    %v8048 = vpop.f32.mrf.mxu0
    %v8049 = vpop.f32.mrf.mxu0
    %8050 = vdwg.mxu0
    %8051 = vmatprep.subr.bf16.mxu0 %v5529
    %8052 = vmatpush1.bf16.msra.mxu0 %v5528
    %8053 = vmatprep.subr.bf16.mxu0 %v5521
    %8054 = vmatpush1.bf16.msra.mxu0 %v5520
    %8055 = vmatprep.subr.bf16.mxu0 %v5513
    %8056 = vmatpush1.bf16.msra.mxu0 %v5512
    %8057 = vmatprep.subr.bf16.mxu0 %v5505
    %8058 = vmatpush1.bf16.msra.mxu0 %v5504
    %8059 = vmatprep.subr.bf16.mxu0 %v5497
    %8060 = vmatpush1.bf16.msra.mxu0 %v5496
    %8061 = vmatprep.subr.bf16.mxu0 %v5489
    %8062 = vmatpush1.bf16.msra.mxu0 %v5488
    %8063 = vmatprep.subr.bf16.mxu0 %v5481
    %8064 = vmatpush1.bf16.msra.mxu0 %v5480
    %8065 = vmatprep.subr.bf16.mxu0 %v5473
    %8066 = vmatpush1.bf16.msra.mxu0 %v5472
    %8067 = vmatprep.subr.bf16.mxu0 %v5593
    %8068 = vmatpush2.bf16.msra.mxu0 %v5592
    %8069 = vmatprep.subr.bf16.mxu0 %v5585
    %8070 = vmatpush2.bf16.msra.mxu0 %v5584
    %8071 = vmatprep.subr.bf16.mxu0 %v5577
    %8072 = vmatpush2.bf16.msra.mxu0 %v5576
    %8073 = vmatprep.subr.bf16.mxu0 %v5569
    %8074 = vmatpush2.bf16.msra.mxu0 %v5568
    %8075 = vmatprep.subr.bf16.mxu0 %v5561
    %8076 = vmatpush2.bf16.msra.mxu0 %v5560
    %8077 = vmatprep.subr.bf16.mxu0 %v5553
    %8078 = vmatpush2.bf16.msra.mxu0 %v5552
    %8079 = vmatprep.subr.bf16.mxu0 %v5545
    %8080 = vmatpush2.bf16.msra.mxu0 %v5544
    %8081 = vmatprep.subr.bf16.mxu0 %v5537
    %8082 = vmatpush2.bf16.msra.mxu0 %v5536
    %8083 = vmatprep.mubr.bf16.mxu0 %v1407
    %8084 = vmatmul.mubr.bf16.gmra.mxu0 %v1406
    %v8085 = vpop.f32.mrf.mxu0
    %v8086 = vadd.f32 %v8045, %v8085
    %v8087 = vpop.f32.mrf.mxu0
    %v8088 = vadd.f32 %v8047, %v8087
    %v8089 = vpop.f32.mrf.mxu0
    %v8090 = vpop.f32.mrf.mxu0
    %8091 = vdwg.mxu0
    %8092 = vmatprep.subr.bf16.mxu0 %v5657
    %8093 = vmatpush1.bf16.msra.mxu0 %v5656
    %8094 = vmatprep.subr.bf16.mxu0 %v5649
    %8095 = vmatpush1.bf16.msra.mxu0 %v5648
    %8096 = vmatprep.subr.bf16.mxu0 %v5641
    %8097 = vmatpush1.bf16.msra.mxu0 %v5640
    %8098 = vmatprep.subr.bf16.mxu0 %v5633
    %8099 = vmatpush1.bf16.msra.mxu0 %v5632
    %8100 = vmatprep.subr.bf16.mxu0 %v5625
    %8101 = vmatpush1.bf16.msra.mxu0 %v5624
    %8102 = vmatprep.subr.bf16.mxu0 %v5617
    %8103 = vmatpush1.bf16.msra.mxu0 %v5616
    %8104 = vmatprep.subr.bf16.mxu0 %v5609
    %8105 = vmatpush1.bf16.msra.mxu0 %v5608
    %8106 = vmatprep.subr.bf16.mxu0 %v5601
    %8107 = vmatpush1.bf16.msra.mxu0 %v5600
    %8108 = vmatprep.subr.bf16.mxu0 %v5721
    %8109 = vmatpush2.bf16.msra.mxu0 %v5720
    %8110 = vmatprep.subr.bf16.mxu0 %v5713
    %8111 = vmatpush2.bf16.msra.mxu0 %v5712
    %8112 = vmatprep.subr.bf16.mxu0 %v5705
    %8113 = vmatpush2.bf16.msra.mxu0 %v5704
    %8114 = vmatprep.subr.bf16.mxu0 %v5697
    %8115 = vmatpush2.bf16.msra.mxu0 %v5696
    %8116 = vmatprep.subr.bf16.mxu0 %v5689
    %8117 = vmatpush2.bf16.msra.mxu0 %v5688
    %8118 = vmatprep.subr.bf16.mxu0 %v5681
    %8119 = vmatpush2.bf16.msra.mxu0 %v5680
    %8120 = vmatprep.subr.bf16.mxu0 %v5673
    %8121 = vmatpush2.bf16.msra.mxu0 %v5672
    %8122 = vmatprep.subr.bf16.mxu0 %v5665
    %8123 = vmatpush2.bf16.msra.mxu0 %v5664
    %8124 = vmatprep.mubr.bf16.mxu0 %v1409
    %8125 = vmatmul.mubr.bf16.gmra.mxu0 %v1408
    %v8126 = vpop.f32.mrf.mxu0
    %v8127 = vadd.f32 %v8086, %v8126
    %v8128 = vpop.f32.mrf.mxu0
    %v8129 = vadd.f32 %v8088, %v8128
    %v8130 = vpop.f32.mrf.mxu0
    %v8131 = vpop.f32.mrf.mxu0
    %8132 = vdwg.mxu0
    %8133 = vmatprep.subr.bf16.mxu0 %v5785
    %8134 = vmatpush1.bf16.msra.mxu0 %v5784
    %8135 = vmatprep.subr.bf16.mxu0 %v5777
    %8136 = vmatpush1.bf16.msra.mxu0 %v5776
    %8137 = vmatprep.subr.bf16.mxu0 %v5769
    %8138 = vmatpush1.bf16.msra.mxu0 %v5768
    %8139 = vmatprep.subr.bf16.mxu0 %v5761
    %8140 = vmatpush1.bf16.msra.mxu0 %v5760
    %8141 = vmatprep.subr.bf16.mxu0 %v5753
    %8142 = vmatpush1.bf16.msra.mxu0 %v5752
    %8143 = vmatprep.subr.bf16.mxu0 %v5745
    %8144 = vmatpush1.bf16.msra.mxu0 %v5744
    %8145 = vmatprep.subr.bf16.mxu0 %v5737
    %8146 = vmatpush1.bf16.msra.mxu0 %v5736
    %8147 = vmatprep.subr.bf16.mxu0 %v5729
    %8148 = vmatpush1.bf16.msra.mxu0 %v5728
    %8149 = vmatprep.subr.bf16.mxu0 %v5849
    %8150 = vmatpush2.bf16.msra.mxu0 %v5848
    %8151 = vmatprep.subr.bf16.mxu0 %v5841
    %8152 = vmatpush2.bf16.msra.mxu0 %v5840
    %8153 = vmatprep.subr.bf16.mxu0 %v5833
    %8154 = vmatpush2.bf16.msra.mxu0 %v5832
    %8155 = vmatprep.subr.bf16.mxu0 %v5825
    %8156 = vmatpush2.bf16.msra.mxu0 %v5824
    %8157 = vmatprep.subr.bf16.mxu0 %v5817
    %8158 = vmatpush2.bf16.msra.mxu0 %v5816
    %8159 = vmatprep.subr.bf16.mxu0 %v5809
    %8160 = vmatpush2.bf16.msra.mxu0 %v5808
    %8161 = vmatprep.subr.bf16.mxu0 %v5801
    %8162 = vmatpush2.bf16.msra.mxu0 %v5800
    %8163 = vmatprep.subr.bf16.mxu0 %v5793
    %8164 = vmatpush2.bf16.msra.mxu0 %v5792
    %8165 = vmatprep.mubr.bf16.mxu0 %v1411
    %8166 = vmatmul.mubr.bf16.gmra.mxu0 %v1410
    %v8167 = vpop.f32.mrf.mxu0
    %v8168 = vadd.f32 %v8127, %v8167
    %v8169 = vpop.f32.mrf.mxu0
    %v8170 = vadd.f32 %v8129, %v8169
    %v8171 = vpop.f32.mrf.mxu0
    %v8172 = vpop.f32.mrf.mxu0
    %8173 = vdwg.mxu0
    %8174 = vmatprep.subr.bf16.mxu0 %v5913
    %8175 = vmatpush1.bf16.msra.mxu0 %v5912
    %8176 = vmatprep.subr.bf16.mxu0 %v5905
    %8177 = vmatpush1.bf16.msra.mxu0 %v5904
    %8178 = vmatprep.subr.bf16.mxu0 %v5897
    %8179 = vmatpush1.bf16.msra.mxu0 %v5896
    %8180 = vmatprep.subr.bf16.mxu0 %v5889
    %8181 = vmatpush1.bf16.msra.mxu0 %v5888
    %8182 = vmatprep.subr.bf16.mxu0 %v5881
    %8183 = vmatpush1.bf16.msra.mxu0 %v5880
    %8184 = vmatprep.subr.bf16.mxu0 %v5873
    %8185 = vmatpush1.bf16.msra.mxu0 %v5872
    %8186 = vmatprep.subr.bf16.mxu0 %v5865
    %8187 = vmatpush1.bf16.msra.mxu0 %v5864
    %8188 = vmatprep.subr.bf16.mxu0 %v5857
    %8189 = vmatpush1.bf16.msra.mxu0 %v5856
    %8190 = vmatprep.subr.bf16.mxu0 %v5977
    %8191 = vmatpush2.bf16.msra.mxu0 %v5976
    %8192 = vmatprep.subr.bf16.mxu0 %v5969
    %8193 = vmatpush2.bf16.msra.mxu0 %v5968
    %8194 = vmatprep.subr.bf16.mxu0 %v5961
    %8195 = vmatpush2.bf16.msra.mxu0 %v5960
    %8196 = vmatprep.subr.bf16.mxu0 %v5953
    %8197 = vmatpush2.bf16.msra.mxu0 %v5952
    %8198 = vmatprep.subr.bf16.mxu0 %v5945
    %8199 = vmatpush2.bf16.msra.mxu0 %v5944
    %8200 = vmatprep.subr.bf16.mxu0 %v5937
    %8201 = vmatpush2.bf16.msra.mxu0 %v5936
    %8202 = vmatprep.subr.bf16.mxu0 %v5929
    %8203 = vmatpush2.bf16.msra.mxu0 %v5928
    %8204 = vmatprep.subr.bf16.mxu0 %v5921
    %8205 = vmatpush2.bf16.msra.mxu0 %v5920
    %8206 = vmatprep.mubr.bf16.mxu0 %v1413
    %8207 = vmatmul.mubr.bf16.gmra.mxu0 %v1412
    %v8208 = vpop.f32.mrf.mxu0
    %v8209 = vadd.f32 %v8168, %v8208
    %v8210 = vpop.f32.mrf.mxu0
    %v8211 = vadd.f32 %v8170, %v8210
    %v8212 = vpop.f32.mrf.mxu0
    %v8213 = vpop.f32.mrf.mxu0
    %8214 = vdwg.mxu0
    %8215 = vmatprep.subr.bf16.mxu0 %v6041
    %8216 = vmatpush1.bf16.msra.mxu0 %v6040
    %8217 = vmatprep.subr.bf16.mxu0 %v6033
    %8218 = vmatpush1.bf16.msra.mxu0 %v6032
    %8219 = vmatprep.subr.bf16.mxu0 %v6025
    %8220 = vmatpush1.bf16.msra.mxu0 %v6024
    %8221 = vmatprep.subr.bf16.mxu0 %v6017
    %8222 = vmatpush1.bf16.msra.mxu0 %v6016
    %8223 = vmatprep.subr.bf16.mxu0 %v6009
    %8224 = vmatpush1.bf16.msra.mxu0 %v6008
    %8225 = vmatprep.subr.bf16.mxu0 %v6001
    %8226 = vmatpush1.bf16.msra.mxu0 %v6000
    %8227 = vmatprep.subr.bf16.mxu0 %v5993
    %8228 = vmatpush1.bf16.msra.mxu0 %v5992
    %8229 = vmatprep.subr.bf16.mxu0 %v5985
    %8230 = vmatpush1.bf16.msra.mxu0 %v5984
    %8231 = vmatprep.subr.bf16.mxu0 %v6105
    %8232 = vmatpush2.bf16.msra.mxu0 %v6104
    %8233 = vmatprep.subr.bf16.mxu0 %v6097
    %8234 = vmatpush2.bf16.msra.mxu0 %v6096
    %8235 = vmatprep.subr.bf16.mxu0 %v6089
    %8236 = vmatpush2.bf16.msra.mxu0 %v6088
    %8237 = vmatprep.subr.bf16.mxu0 %v6081
    %8238 = vmatpush2.bf16.msra.mxu0 %v6080
    %8239 = vmatprep.subr.bf16.mxu0 %v6073
    %8240 = vmatpush2.bf16.msra.mxu0 %v6072
    %8241 = vmatprep.subr.bf16.mxu0 %v6065
    %8242 = vmatpush2.bf16.msra.mxu0 %v6064
    %8243 = vmatprep.subr.bf16.mxu0 %v6057
    %8244 = vmatpush2.bf16.msra.mxu0 %v6056
    %8245 = vmatprep.subr.bf16.mxu0 %v6049
    %8246 = vmatpush2.bf16.msra.mxu0 %v6048
    %8247 = vmatprep.mubr.bf16.mxu0 %v1415
    %8248 = vmatmul.mubr.bf16.gmra.mxu0 %v1414
    %v8249 = vpop.f32.mrf.mxu0
    %v8250 = vadd.f32 %v8209, %v8249
    %v8251 = vpop.f32.mrf.mxu0
    %v8252 = vadd.f32 %v8211, %v8251
    %v8253 = vpop.f32.mrf.mxu0
    %v8254 = vpop.f32.mrf.mxu0
    %8255 = vdwg.mxu0
    %8256 = vmatprep.subr.bf16.mxu0 %v6169
    %8257 = vmatpush1.bf16.msra.mxu0 %v6168
    %8258 = vmatprep.subr.bf16.mxu0 %v6161
    %8259 = vmatpush1.bf16.msra.mxu0 %v6160
    %8260 = vmatprep.subr.bf16.mxu0 %v6153
    %8261 = vmatpush1.bf16.msra.mxu0 %v6152
    %8262 = vmatprep.subr.bf16.mxu0 %v6145
    %8263 = vmatpush1.bf16.msra.mxu0 %v6144
    %8264 = vmatprep.subr.bf16.mxu0 %v6137
    %8265 = vmatpush1.bf16.msra.mxu0 %v6136
    %8266 = vmatprep.subr.bf16.mxu0 %v6129
    %8267 = vmatpush1.bf16.msra.mxu0 %v6128
    %8268 = vmatprep.subr.bf16.mxu0 %v6121
    %8269 = vmatpush1.bf16.msra.mxu0 %v6120
    %8270 = vmatprep.subr.bf16.mxu0 %v6113
    %8271 = vmatpush1.bf16.msra.mxu0 %v6112
    %8272 = vmatprep.subr.bf16.mxu0 %v6233
    %8273 = vmatpush2.bf16.msra.mxu0 %v6232
    %8274 = vmatprep.subr.bf16.mxu0 %v6225
    %8275 = vmatpush2.bf16.msra.mxu0 %v6224
    %8276 = vmatprep.subr.bf16.mxu0 %v6217
    %8277 = vmatpush2.bf16.msra.mxu0 %v6216
    %8278 = vmatprep.subr.bf16.mxu0 %v6209
    %8279 = vmatpush2.bf16.msra.mxu0 %v6208
    %8280 = vmatprep.subr.bf16.mxu0 %v6201
    %8281 = vmatpush2.bf16.msra.mxu0 %v6200
    %8282 = vmatprep.subr.bf16.mxu0 %v6193
    %8283 = vmatpush2.bf16.msra.mxu0 %v6192
    %8284 = vmatprep.subr.bf16.mxu0 %v6185
    %8285 = vmatpush2.bf16.msra.mxu0 %v6184
    %8286 = vmatprep.subr.bf16.mxu0 %v6177
    %8287 = vmatpush2.bf16.msra.mxu0 %v6176
    %8288 = vmatprep.mubr.bf16.mxu0 %v1417
    %8289 = vmatmul.mubr.bf16.gmra.mxu0 %v1416
    %v8290 = vpop.f32.mrf.mxu0
    %v8291 = vadd.f32 %v8250, %v8290
    %v8292 = vpop.f32.mrf.mxu0
    %v8293 = vadd.f32 %v8252, %v8292
    %v8294 = vpop.f32.mrf.mxu0
    %v8295 = vpop.f32.mrf.mxu0
    %8296 = vdwg.mxu0
    %8297 = vmatprep.subr.bf16.mxu0 %v6297
    %8298 = vmatpush1.bf16.msra.mxu0 %v6296
    %8299 = vmatprep.subr.bf16.mxu0 %v6289
    %8300 = vmatpush1.bf16.msra.mxu0 %v6288
    %8301 = vmatprep.subr.bf16.mxu0 %v6281
    %8302 = vmatpush1.bf16.msra.mxu0 %v6280
    %8303 = vmatprep.subr.bf16.mxu0 %v6273
    %8304 = vmatpush1.bf16.msra.mxu0 %v6272
    %8305 = vmatprep.subr.bf16.mxu0 %v6265
    %8306 = vmatpush1.bf16.msra.mxu0 %v6264
    %8307 = vmatprep.subr.bf16.mxu0 %v6257
    %8308 = vmatpush1.bf16.msra.mxu0 %v6256
    %8309 = vmatprep.subr.bf16.mxu0 %v6249
    %8310 = vmatpush1.bf16.msra.mxu0 %v6248
    %8311 = vmatprep.subr.bf16.mxu0 %v6241
    %8312 = vmatpush1.bf16.msra.mxu0 %v6240
    %8313 = vmatprep.subr.bf16.mxu0 0
    %8314 = vmatpush2.bf16.msra.mxu0 0
    %8315 = vmatprep.subr.bf16.mxu0 0
    %8316 = vmatpush2.bf16.msra.mxu0 0
    %8317 = vmatprep.subr.bf16.mxu0 0
    %8318 = vmatpush2.bf16.msra.mxu0 0
    %8319 = vmatprep.subr.bf16.mxu0 0
    %8320 = vmatpush2.bf16.msra.mxu0 0
    %8321 = vmatprep.subr.bf16.mxu0 0
    %8322 = vmatpush2.bf16.msra.mxu0 0
    %8323 = vmatprep.subr.bf16.mxu0 0
    %8324 = vmatpush2.bf16.msra.mxu0 0
    %8325 = vmatprep.subr.bf16.mxu0 0
    %8326 = vmatpush2.bf16.msra.mxu0 0
    %8327 = vmatprep.subr.bf16.mxu0 0
    %8328 = vmatpush2.bf16.msra.mxu0 0
    %8329 = vmatprep.mubr.bf16.mxu0 0
    %8330 = vmatmul.mubr.bf16.gmra.mxu0 %v1418
    %v8331 = vpop.f32.mrf.mxu0
    %v8332 = vadd.f32 %v8291, %v8331
    %v8333 = vpop.f32.mrf.mxu0
    %v8334 = vadd.f32 %v8293, %v8333
    %v8335 = vpop.f32.mrf.mxu0
    %v8336 = vpop.f32.mrf.mxu0
    %8337 = vdwg.mxu0
    %8338 = vmatprep.subr.bf16.mxu0 %v5147
    %8339 = vmatpush1.bf16.msra.mxu0 %v5146
    %8340 = vmatprep.subr.bf16.mxu0 %v5139
    %8341 = vmatpush1.bf16.msra.mxu0 %v5138
    %8342 = vmatprep.subr.bf16.mxu0 %v5131
    %8343 = vmatpush1.bf16.msra.mxu0 %v5130
    %8344 = vmatprep.subr.bf16.mxu0 %v5123
    %8345 = vmatpush1.bf16.msra.mxu0 %v5122
    %8346 = vmatprep.subr.bf16.mxu0 %v5115
    %8347 = vmatpush1.bf16.msra.mxu0 %v5114
    %8348 = vmatprep.subr.bf16.mxu0 %v5107
    %8349 = vmatpush1.bf16.msra.mxu0 %v5106
    %8350 = vmatprep.subr.bf16.mxu0 %v5099
    %8351 = vmatpush1.bf16.msra.mxu0 %v5098
    %8352 = vmatprep.subr.bf16.mxu0 %v5091
    %8353 = vmatpush1.bf16.msra.mxu0 %v5090
    %8354 = vmatprep.subr.bf16.mxu0 %v5211
    %8355 = vmatpush2.bf16.msra.mxu0 %v5210
    %8356 = vmatprep.subr.bf16.mxu0 %v5203
    %8357 = vmatpush2.bf16.msra.mxu0 %v5202
    %8358 = vmatprep.subr.bf16.mxu0 %v5195
    %8359 = vmatpush2.bf16.msra.mxu0 %v5194
    %8360 = vmatprep.subr.bf16.mxu0 %v5187
    %8361 = vmatpush2.bf16.msra.mxu0 %v5186
    %8362 = vmatprep.subr.bf16.mxu0 %v5179
    %8363 = vmatpush2.bf16.msra.mxu0 %v5178
    %8364 = vmatprep.subr.bf16.mxu0 %v5171
    %8365 = vmatpush2.bf16.msra.mxu0 %v5170
    %8366 = vmatprep.subr.bf16.mxu0 %v5163
    %8367 = vmatpush2.bf16.msra.mxu0 %v5162
    %8368 = vmatprep.subr.bf16.mxu0 %v5155
    %8369 = vmatpush2.bf16.msra.mxu0 %v5154
    %8370 = vmatprep.mubr.bf16.mxu0 %v1401
    %8371 = vmatmul.mubr.bf16.gmra.mxu0 %v1400
    %v8372 = vpop.f32.mrf.mxu0
    %v8373 = vadd.f32 %v1350, %v8372
    %v8374 = vpop.f32.mrf.mxu0
    %v8375 = vadd.f32 %v1354, %v8374
    %v8376 = vpop.f32.mrf.mxu0
    %v8377 = vpop.f32.mrf.mxu0
    %8378 = vdwg.mxu0
    %8379 = vmatprep.subr.bf16.mxu0 %v5275
    %8380 = vmatpush1.bf16.msra.mxu0 %v5274
    %8381 = vmatprep.subr.bf16.mxu0 %v5267
    %8382 = vmatpush1.bf16.msra.mxu0 %v5266
    %8383 = vmatprep.subr.bf16.mxu0 %v5259
    %8384 = vmatpush1.bf16.msra.mxu0 %v5258
    %8385 = vmatprep.subr.bf16.mxu0 %v5251
    %8386 = vmatpush1.bf16.msra.mxu0 %v5250
    %8387 = vmatprep.subr.bf16.mxu0 %v5243
    %8388 = vmatpush1.bf16.msra.mxu0 %v5242
    %8389 = vmatprep.subr.bf16.mxu0 %v5235
    %8390 = vmatpush1.bf16.msra.mxu0 %v5234
    %8391 = vmatprep.subr.bf16.mxu0 %v5227
    %8392 = vmatpush1.bf16.msra.mxu0 %v5226
    %8393 = vmatprep.subr.bf16.mxu0 %v5219
    %8394 = vmatpush1.bf16.msra.mxu0 %v5218
    %8395 = vmatprep.subr.bf16.mxu0 %v5339
    %8396 = vmatpush2.bf16.msra.mxu0 %v5338
    %8397 = vmatprep.subr.bf16.mxu0 %v5331
    %8398 = vmatpush2.bf16.msra.mxu0 %v5330
    %8399 = vmatprep.subr.bf16.mxu0 %v5323
    %8400 = vmatpush2.bf16.msra.mxu0 %v5322
    %8401 = vmatprep.subr.bf16.mxu0 %v5315
    %8402 = vmatpush2.bf16.msra.mxu0 %v5314
    %8403 = vmatprep.subr.bf16.mxu0 %v5307
    %8404 = vmatpush2.bf16.msra.mxu0 %v5306
    %8405 = vmatprep.subr.bf16.mxu0 %v5299
    %8406 = vmatpush2.bf16.msra.mxu0 %v5298
    %8407 = vmatprep.subr.bf16.mxu0 %v5291
    %8408 = vmatpush2.bf16.msra.mxu0 %v5290
    %8409 = vmatprep.subr.bf16.mxu0 %v5283
    %8410 = vmatpush2.bf16.msra.mxu0 %v5282
    %8411 = vmatprep.mubr.bf16.mxu0 %v1403
    %8412 = vmatmul.mubr.bf16.gmra.mxu0 %v1402
    %v8413 = vpop.f32.mrf.mxu0
    %v8414 = vadd.f32 %v8373, %v8413
    %v8415 = vpop.f32.mrf.mxu0
    %v8416 = vadd.f32 %v8375, %v8415
    %v8417 = vpop.f32.mrf.mxu0
    %v8418 = vpop.f32.mrf.mxu0
    %8419 = vdwg.mxu0
    %8420 = vmatprep.subr.bf16.mxu0 %v5403
    %8421 = vmatpush1.bf16.msra.mxu0 %v5402
    %8422 = vmatprep.subr.bf16.mxu0 %v5395
    %8423 = vmatpush1.bf16.msra.mxu0 %v5394
    %8424 = vmatprep.subr.bf16.mxu0 %v5387
    %8425 = vmatpush1.bf16.msra.mxu0 %v5386
    %8426 = vmatprep.subr.bf16.mxu0 %v5379
    %8427 = vmatpush1.bf16.msra.mxu0 %v5378
    %8428 = vmatprep.subr.bf16.mxu0 %v5371
    %8429 = vmatpush1.bf16.msra.mxu0 %v5370
    %8430 = vmatprep.subr.bf16.mxu0 %v5363
    %8431 = vmatpush1.bf16.msra.mxu0 %v5362
    %8432 = vmatprep.subr.bf16.mxu0 %v5355
    %8433 = vmatpush1.bf16.msra.mxu0 %v5354
    %8434 = vmatprep.subr.bf16.mxu0 %v5347
    %8435 = vmatpush1.bf16.msra.mxu0 %v5346
    %8436 = vmatprep.subr.bf16.mxu0 %v5467
    %8437 = vmatpush2.bf16.msra.mxu0 %v5466
    %8438 = vmatprep.subr.bf16.mxu0 %v5459
    %8439 = vmatpush2.bf16.msra.mxu0 %v5458
    %8440 = vmatprep.subr.bf16.mxu0 %v5451
    %8441 = vmatpush2.bf16.msra.mxu0 %v5450
    %8442 = vmatprep.subr.bf16.mxu0 %v5443
    %8443 = vmatpush2.bf16.msra.mxu0 %v5442
    %8444 = vmatprep.subr.bf16.mxu0 %v5435
    %8445 = vmatpush2.bf16.msra.mxu0 %v5434
    %8446 = vmatprep.subr.bf16.mxu0 %v5427
    %8447 = vmatpush2.bf16.msra.mxu0 %v5426
    %8448 = vmatprep.subr.bf16.mxu0 %v5419
    %8449 = vmatpush2.bf16.msra.mxu0 %v5418
    %8450 = vmatprep.subr.bf16.mxu0 %v5411
    %8451 = vmatpush2.bf16.msra.mxu0 %v5410
    %8452 = vmatprep.mubr.bf16.mxu0 %v1405
    %8453 = vmatmul.mubr.bf16.gmra.mxu0 %v1404
    %v8454 = vpop.f32.mrf.mxu0
    %v8455 = vadd.f32 %v8414, %v8454
    %v8456 = vpop.f32.mrf.mxu0
    %v8457 = vadd.f32 %v8416, %v8456
    %v8458 = vpop.f32.mrf.mxu0
    %v8459 = vpop.f32.mrf.mxu0
    %8460 = vdwg.mxu0
    %8461 = vmatprep.subr.bf16.mxu0 %v5531
    %8462 = vmatpush1.bf16.msra.mxu0 %v5530
    %8463 = vmatprep.subr.bf16.mxu0 %v5523
    %8464 = vmatpush1.bf16.msra.mxu0 %v5522
    %8465 = vmatprep.subr.bf16.mxu0 %v5515
    %8466 = vmatpush1.bf16.msra.mxu0 %v5514
    %8467 = vmatprep.subr.bf16.mxu0 %v5507
    %8468 = vmatpush1.bf16.msra.mxu0 %v5506
    %8469 = vmatprep.subr.bf16.mxu0 %v5499
    %8470 = vmatpush1.bf16.msra.mxu0 %v5498
    %8471 = vmatprep.subr.bf16.mxu0 %v5491
    %8472 = vmatpush1.bf16.msra.mxu0 %v5490
    %8473 = vmatprep.subr.bf16.mxu0 %v5483
    %8474 = vmatpush1.bf16.msra.mxu0 %v5482
    %8475 = vmatprep.subr.bf16.mxu0 %v5475
    %8476 = vmatpush1.bf16.msra.mxu0 %v5474
    %8477 = vmatprep.subr.bf16.mxu0 %v5595
    %8478 = vmatpush2.bf16.msra.mxu0 %v5594
    %8479 = vmatprep.subr.bf16.mxu0 %v5587
    %8480 = vmatpush2.bf16.msra.mxu0 %v5586
    %8481 = vmatprep.subr.bf16.mxu0 %v5579
    %8482 = vmatpush2.bf16.msra.mxu0 %v5578
    %8483 = vmatprep.subr.bf16.mxu0 %v5571
    %8484 = vmatpush2.bf16.msra.mxu0 %v5570
    %8485 = vmatprep.subr.bf16.mxu0 %v5563
    %8486 = vmatpush2.bf16.msra.mxu0 %v5562
    %8487 = vmatprep.subr.bf16.mxu0 %v5555
    %8488 = vmatpush2.bf16.msra.mxu0 %v5554
    %8489 = vmatprep.subr.bf16.mxu0 %v5547
    %8490 = vmatpush2.bf16.msra.mxu0 %v5546
    %8491 = vmatprep.subr.bf16.mxu0 %v5539
    %8492 = vmatpush2.bf16.msra.mxu0 %v5538
    %8493 = vmatprep.mubr.bf16.mxu0 %v1407
    %8494 = vmatmul.mubr.bf16.gmra.mxu0 %v1406
    %v8495 = vpop.f32.mrf.mxu0
    %v8496 = vadd.f32 %v8455, %v8495
    %v8497 = vpop.f32.mrf.mxu0
    %v8498 = vadd.f32 %v8457, %v8497
    %v8499 = vpop.f32.mrf.mxu0
    %v8500 = vpop.f32.mrf.mxu0
    %8501 = vdwg.mxu0
    %8502 = vmatprep.subr.bf16.mxu0 %v5659
    %8503 = vmatpush1.bf16.msra.mxu0 %v5658
    %8504 = vmatprep.subr.bf16.mxu0 %v5651
    %8505 = vmatpush1.bf16.msra.mxu0 %v5650
    %8506 = vmatprep.subr.bf16.mxu0 %v5643
    %8507 = vmatpush1.bf16.msra.mxu0 %v5642
    %8508 = vmatprep.subr.bf16.mxu0 %v5635
    %8509 = vmatpush1.bf16.msra.mxu0 %v5634
    %8510 = vmatprep.subr.bf16.mxu0 %v5627
    %8511 = vmatpush1.bf16.msra.mxu0 %v5626
    %8512 = vmatprep.subr.bf16.mxu0 %v5619
    %8513 = vmatpush1.bf16.msra.mxu0 %v5618
    %8514 = vmatprep.subr.bf16.mxu0 %v5611
    %8515 = vmatpush1.bf16.msra.mxu0 %v5610
    %8516 = vmatprep.subr.bf16.mxu0 %v5603
    %8517 = vmatpush1.bf16.msra.mxu0 %v5602
    %8518 = vmatprep.subr.bf16.mxu0 %v5723
    %8519 = vmatpush2.bf16.msra.mxu0 %v5722
    %8520 = vmatprep.subr.bf16.mxu0 %v5715
    %8521 = vmatpush2.bf16.msra.mxu0 %v5714
    %8522 = vmatprep.subr.bf16.mxu0 %v5707
    %8523 = vmatpush2.bf16.msra.mxu0 %v5706
    %8524 = vmatprep.subr.bf16.mxu0 %v5699
    %8525 = vmatpush2.bf16.msra.mxu0 %v5698
    %8526 = vmatprep.subr.bf16.mxu0 %v5691
    %8527 = vmatpush2.bf16.msra.mxu0 %v5690
    %8528 = vmatprep.subr.bf16.mxu0 %v5683
    %8529 = vmatpush2.bf16.msra.mxu0 %v5682
    %8530 = vmatprep.subr.bf16.mxu0 %v5675
    %8531 = vmatpush2.bf16.msra.mxu0 %v5674
    %8532 = vmatprep.subr.bf16.mxu0 %v5667
    %8533 = vmatpush2.bf16.msra.mxu0 %v5666
    %8534 = vmatprep.mubr.bf16.mxu0 %v1409
    %8535 = vmatmul.mubr.bf16.gmra.mxu0 %v1408
    %v8536 = vpop.f32.mrf.mxu0
    %v8537 = vadd.f32 %v8496, %v8536
    %v8538 = vpop.f32.mrf.mxu0
    %v8539 = vadd.f32 %v8498, %v8538
    %v8540 = vpop.f32.mrf.mxu0
    %v8541 = vpop.f32.mrf.mxu0
    %8542 = vdwg.mxu0
    %8543 = vmatprep.subr.bf16.mxu0 %v5787
    %8544 = vmatpush1.bf16.msra.mxu0 %v5786
    %8545 = vmatprep.subr.bf16.mxu0 %v5779
    %8546 = vmatpush1.bf16.msra.mxu0 %v5778
    %8547 = vmatprep.subr.bf16.mxu0 %v5771
    %8548 = vmatpush1.bf16.msra.mxu0 %v5770
    %8549 = vmatprep.subr.bf16.mxu0 %v5763
    %8550 = vmatpush1.bf16.msra.mxu0 %v5762
    %8551 = vmatprep.subr.bf16.mxu0 %v5755
    %8552 = vmatpush1.bf16.msra.mxu0 %v5754
    %8553 = vmatprep.subr.bf16.mxu0 %v5747
    %8554 = vmatpush1.bf16.msra.mxu0 %v5746
    %8555 = vmatprep.subr.bf16.mxu0 %v5739
    %8556 = vmatpush1.bf16.msra.mxu0 %v5738
    %8557 = vmatprep.subr.bf16.mxu0 %v5731
    %8558 = vmatpush1.bf16.msra.mxu0 %v5730
    %8559 = vmatprep.subr.bf16.mxu0 %v5851
    %8560 = vmatpush2.bf16.msra.mxu0 %v5850
    %8561 = vmatprep.subr.bf16.mxu0 %v5843
    %8562 = vmatpush2.bf16.msra.mxu0 %v5842
    %8563 = vmatprep.subr.bf16.mxu0 %v5835
    %8564 = vmatpush2.bf16.msra.mxu0 %v5834
    %8565 = vmatprep.subr.bf16.mxu0 %v5827
    %8566 = vmatpush2.bf16.msra.mxu0 %v5826
    %8567 = vmatprep.subr.bf16.mxu0 %v5819
    %8568 = vmatpush2.bf16.msra.mxu0 %v5818
    %8569 = vmatprep.subr.bf16.mxu0 %v5811
    %8570 = vmatpush2.bf16.msra.mxu0 %v5810
    %8571 = vmatprep.subr.bf16.mxu0 %v5803
    %8572 = vmatpush2.bf16.msra.mxu0 %v5802
    %8573 = vmatprep.subr.bf16.mxu0 %v5795
    %8574 = vmatpush2.bf16.msra.mxu0 %v5794
    %8575 = vmatprep.mubr.bf16.mxu0 %v1411
    %8576 = vmatmul.mubr.bf16.gmra.mxu0 %v1410
    %v8577 = vpop.f32.mrf.mxu0
    %v8578 = vadd.f32 %v8537, %v8577
    %v8579 = vpop.f32.mrf.mxu0
    %v8580 = vadd.f32 %v8539, %v8579
    %v8581 = vpop.f32.mrf.mxu0
    %v8582 = vpop.f32.mrf.mxu0
    %8583 = vdwg.mxu0
    %8584 = vmatprep.subr.bf16.mxu0 %v5915
    %8585 = vmatpush1.bf16.msra.mxu0 %v5914
    %8586 = vmatprep.subr.bf16.mxu0 %v5907
    %8587 = vmatpush1.bf16.msra.mxu0 %v5906
    %8588 = vmatprep.subr.bf16.mxu0 %v5899
    %8589 = vmatpush1.bf16.msra.mxu0 %v5898
    %8590 = vmatprep.subr.bf16.mxu0 %v5891
    %8591 = vmatpush1.bf16.msra.mxu0 %v5890
    %8592 = vmatprep.subr.bf16.mxu0 %v5883
    %8593 = vmatpush1.bf16.msra.mxu0 %v5882
    %8594 = vmatprep.subr.bf16.mxu0 %v5875
    %8595 = vmatpush1.bf16.msra.mxu0 %v5874
    %8596 = vmatprep.subr.bf16.mxu0 %v5867
    %8597 = vmatpush1.bf16.msra.mxu0 %v5866
    %8598 = vmatprep.subr.bf16.mxu0 %v5859
    %8599 = vmatpush1.bf16.msra.mxu0 %v5858
    %8600 = vmatprep.subr.bf16.mxu0 %v5979
    %8601 = vmatpush2.bf16.msra.mxu0 %v5978
    %8602 = vmatprep.subr.bf16.mxu0 %v5971
    %8603 = vmatpush2.bf16.msra.mxu0 %v5970
    %8604 = vmatprep.subr.bf16.mxu0 %v5963
    %8605 = vmatpush2.bf16.msra.mxu0 %v5962
    %8606 = vmatprep.subr.bf16.mxu0 %v5955
    %8607 = vmatpush2.bf16.msra.mxu0 %v5954
    %8608 = vmatprep.subr.bf16.mxu0 %v5947
    %8609 = vmatpush2.bf16.msra.mxu0 %v5946
    %8610 = vmatprep.subr.bf16.mxu0 %v5939
    %8611 = vmatpush2.bf16.msra.mxu0 %v5938
    %8612 = vmatprep.subr.bf16.mxu0 %v5931
    %8613 = vmatpush2.bf16.msra.mxu0 %v5930
    %8614 = vmatprep.subr.bf16.mxu0 %v5923
    %8615 = vmatpush2.bf16.msra.mxu0 %v5922
    %8616 = vmatprep.mubr.bf16.mxu0 %v1413
    %8617 = vmatmul.mubr.bf16.gmra.mxu0 %v1412
    %v8618 = vpop.f32.mrf.mxu0
    %v8619 = vadd.f32 %v8578, %v8618
    %v8620 = vpop.f32.mrf.mxu0
    %v8621 = vadd.f32 %v8580, %v8620
    %v8622 = vpop.f32.mrf.mxu0
    %v8623 = vpop.f32.mrf.mxu0
    %8624 = vdwg.mxu0
    %8625 = vmatprep.subr.bf16.mxu0 %v6043
    %8626 = vmatpush1.bf16.msra.mxu0 %v6042
    %8627 = vmatprep.subr.bf16.mxu0 %v6035
    %8628 = vmatpush1.bf16.msra.mxu0 %v6034
    %8629 = vmatprep.subr.bf16.mxu0 %v6027
    %8630 = vmatpush1.bf16.msra.mxu0 %v6026
    %8631 = vmatprep.subr.bf16.mxu0 %v6019
    %8632 = vmatpush1.bf16.msra.mxu0 %v6018
    %8633 = vmatprep.subr.bf16.mxu0 %v6011
    %8634 = vmatpush1.bf16.msra.mxu0 %v6010
    %8635 = vmatprep.subr.bf16.mxu0 %v6003
    %8636 = vmatpush1.bf16.msra.mxu0 %v6002
    %8637 = vmatprep.subr.bf16.mxu0 %v5995
    %8638 = vmatpush1.bf16.msra.mxu0 %v5994
    %8639 = vmatprep.subr.bf16.mxu0 %v5987
    %8640 = vmatpush1.bf16.msra.mxu0 %v5986
    %8641 = vmatprep.subr.bf16.mxu0 %v6107
    %8642 = vmatpush2.bf16.msra.mxu0 %v6106
    %8643 = vmatprep.subr.bf16.mxu0 %v6099
    %8644 = vmatpush2.bf16.msra.mxu0 %v6098
    %8645 = vmatprep.subr.bf16.mxu0 %v6091
    %8646 = vmatpush2.bf16.msra.mxu0 %v6090
    %8647 = vmatprep.subr.bf16.mxu0 %v6083
    %8648 = vmatpush2.bf16.msra.mxu0 %v6082
    %8649 = vmatprep.subr.bf16.mxu0 %v6075
    %8650 = vmatpush2.bf16.msra.mxu0 %v6074
    %8651 = vmatprep.subr.bf16.mxu0 %v6067
    %8652 = vmatpush2.bf16.msra.mxu0 %v6066
    %8653 = vmatprep.subr.bf16.mxu0 %v6059
    %8654 = vmatpush2.bf16.msra.mxu0 %v6058
    %8655 = vmatprep.subr.bf16.mxu0 %v6051
    %8656 = vmatpush2.bf16.msra.mxu0 %v6050
    %8657 = vmatprep.mubr.bf16.mxu0 %v1415
    %8658 = vmatmul.mubr.bf16.gmra.mxu0 %v1414
    %v8659 = vpop.f32.mrf.mxu0
    %v8660 = vadd.f32 %v8619, %v8659
    %v8661 = vpop.f32.mrf.mxu0
    %v8662 = vadd.f32 %v8621, %v8661
    %v8663 = vpop.f32.mrf.mxu0
    %v8664 = vpop.f32.mrf.mxu0
    %8665 = vdwg.mxu0
    %8666 = vmatprep.subr.bf16.mxu0 %v6171
    %8667 = vmatpush1.bf16.msra.mxu0 %v6170
    %8668 = vmatprep.subr.bf16.mxu0 %v6163
    %8669 = vmatpush1.bf16.msra.mxu0 %v6162
    %8670 = vmatprep.subr.bf16.mxu0 %v6155
    %8671 = vmatpush1.bf16.msra.mxu0 %v6154
    %8672 = vmatprep.subr.bf16.mxu0 %v6147
    %8673 = vmatpush1.bf16.msra.mxu0 %v6146
    %8674 = vmatprep.subr.bf16.mxu0 %v6139
    %8675 = vmatpush1.bf16.msra.mxu0 %v6138
    %8676 = vmatprep.subr.bf16.mxu0 %v6131
    %8677 = vmatpush1.bf16.msra.mxu0 %v6130
    %8678 = vmatprep.subr.bf16.mxu0 %v6123
    %8679 = vmatpush1.bf16.msra.mxu0 %v6122
    %8680 = vmatprep.subr.bf16.mxu0 %v6115
    %8681 = vmatpush1.bf16.msra.mxu0 %v6114
    %8682 = vmatprep.subr.bf16.mxu0 %v6235
    %8683 = vmatpush2.bf16.msra.mxu0 %v6234
    %8684 = vmatprep.subr.bf16.mxu0 %v6227
    %8685 = vmatpush2.bf16.msra.mxu0 %v6226
    %8686 = vmatprep.subr.bf16.mxu0 %v6219
    %8687 = vmatpush2.bf16.msra.mxu0 %v6218
    %8688 = vmatprep.subr.bf16.mxu0 %v6211
    %8689 = vmatpush2.bf16.msra.mxu0 %v6210
    %8690 = vmatprep.subr.bf16.mxu0 %v6203
    %8691 = vmatpush2.bf16.msra.mxu0 %v6202
    %8692 = vmatprep.subr.bf16.mxu0 %v6195
    %8693 = vmatpush2.bf16.msra.mxu0 %v6194
    %8694 = vmatprep.subr.bf16.mxu0 %v6187
    %8695 = vmatpush2.bf16.msra.mxu0 %v6186
    %8696 = vmatprep.subr.bf16.mxu0 %v6179
    %8697 = vmatpush2.bf16.msra.mxu0 %v6178
    %8698 = vmatprep.mubr.bf16.mxu0 %v1417
    %8699 = vmatmul.mubr.bf16.gmra.mxu0 %v1416
    %v8700 = vpop.f32.mrf.mxu0
    %v8701 = vadd.f32 %v8660, %v8700
    %v8702 = vpop.f32.mrf.mxu0
    %v8703 = vadd.f32 %v8662, %v8702
    %v8704 = vpop.f32.mrf.mxu0
    %v8705 = vpop.f32.mrf.mxu0
    %8706 = vdwg.mxu0
    %8707 = vmatprep.subr.bf16.mxu0 %v6299
    %8708 = vmatpush1.bf16.msra.mxu0 %v6298
    %8709 = vmatprep.subr.bf16.mxu0 %v6291
    %8710 = vmatpush1.bf16.msra.mxu0 %v6290
    %8711 = vmatprep.subr.bf16.mxu0 %v6283
    %8712 = vmatpush1.bf16.msra.mxu0 %v6282
    %8713 = vmatprep.subr.bf16.mxu0 %v6275
    %8714 = vmatpush1.bf16.msra.mxu0 %v6274
    %8715 = vmatprep.subr.bf16.mxu0 %v6267
    %8716 = vmatpush1.bf16.msra.mxu0 %v6266
    %8717 = vmatprep.subr.bf16.mxu0 %v6259
    %8718 = vmatpush1.bf16.msra.mxu0 %v6258
    %8719 = vmatprep.subr.bf16.mxu0 %v6251
    %8720 = vmatpush1.bf16.msra.mxu0 %v6250
    %8721 = vmatprep.subr.bf16.mxu0 %v6243
    %8722 = vmatpush1.bf16.msra.mxu0 %v6242
    %8723 = vmatprep.subr.bf16.mxu0 0
    %8724 = vmatpush2.bf16.msra.mxu0 0
    %8725 = vmatprep.subr.bf16.mxu0 0
    %8726 = vmatpush2.bf16.msra.mxu0 0
    %8727 = vmatprep.subr.bf16.mxu0 0
    %8728 = vmatpush2.bf16.msra.mxu0 0
    %8729 = vmatprep.subr.bf16.mxu0 0
    %8730 = vmatpush2.bf16.msra.mxu0 0
    %8731 = vmatprep.subr.bf16.mxu0 0
    %8732 = vmatpush2.bf16.msra.mxu0 0
    %8733 = vmatprep.subr.bf16.mxu0 0
    %8734 = vmatpush2.bf16.msra.mxu0 0
    %8735 = vmatprep.subr.bf16.mxu0 0
    %8736 = vmatpush2.bf16.msra.mxu0 0
    %8737 = vmatprep.subr.bf16.mxu0 0
    %8738 = vmatpush2.bf16.msra.mxu0 0
    %8739 = vmatprep.mubr.bf16.mxu0 0
    %8740 = vmatmul.mubr.bf16.gmra.mxu0 %v1418
    %v8741 = vpop.f32.mrf.mxu0
    %v8742 = vadd.f32 %v8701, %v8741
    %v8743 = vpop.f32.mrf.mxu0
    %v8744 = vadd.f32 %v8703, %v8743
    %v8745 = vpop.f32.mrf.mxu0
    %v8746 = vpop.f32.mrf.mxu0
    %8747 = vdwg.mxu0
    %8748 = vmatprep.subr.bf16.mxu0 %v5149
    %8749 = vmatpush1.bf16.msra.mxu0 %v5148
    %8750 = vmatprep.subr.bf16.mxu0 %v5141
    %8751 = vmatpush1.bf16.msra.mxu0 %v5140
    %8752 = vmatprep.subr.bf16.mxu0 %v5133
    %8753 = vmatpush1.bf16.msra.mxu0 %v5132
    %8754 = vmatprep.subr.bf16.mxu0 %v5125
    %8755 = vmatpush1.bf16.msra.mxu0 %v5124
    %8756 = vmatprep.subr.bf16.mxu0 %v5117
    %8757 = vmatpush1.bf16.msra.mxu0 %v5116
    %8758 = vmatprep.subr.bf16.mxu0 %v5109
    %8759 = vmatpush1.bf16.msra.mxu0 %v5108
    %8760 = vmatprep.subr.bf16.mxu0 %v5101
    %8761 = vmatpush1.bf16.msra.mxu0 %v5100
    %8762 = vmatprep.subr.bf16.mxu0 %v5093
    %8763 = vmatpush1.bf16.msra.mxu0 %v5092
    %8764 = vmatprep.subr.bf16.mxu0 %v5213
    %8765 = vmatpush2.bf16.msra.mxu0 %v5212
    %8766 = vmatprep.subr.bf16.mxu0 %v5205
    %8767 = vmatpush2.bf16.msra.mxu0 %v5204
    %8768 = vmatprep.subr.bf16.mxu0 %v5197
    %8769 = vmatpush2.bf16.msra.mxu0 %v5196
    %8770 = vmatprep.subr.bf16.mxu0 %v5189
    %8771 = vmatpush2.bf16.msra.mxu0 %v5188
    %8772 = vmatprep.subr.bf16.mxu0 %v5181
    %8773 = vmatpush2.bf16.msra.mxu0 %v5180
    %8774 = vmatprep.subr.bf16.mxu0 %v5173
    %8775 = vmatpush2.bf16.msra.mxu0 %v5172
    %8776 = vmatprep.subr.bf16.mxu0 %v5165
    %8777 = vmatpush2.bf16.msra.mxu0 %v5164
    %8778 = vmatprep.subr.bf16.mxu0 %v5157
    %8779 = vmatpush2.bf16.msra.mxu0 %v5156
    %8780 = vmatprep.mubr.bf16.mxu0 %v1401
    %8781 = vmatmul.mubr.bf16.gmra.mxu0 %v1400
    %v8782 = vpop.f32.mrf.mxu0
    %v8783 = vadd.f32 %v1358, %v8782
    %v8784 = vpop.f32.mrf.mxu0
    %v8785 = vadd.f32 %v1362, %v8784
    %v8786 = vpop.f32.mrf.mxu0
    %v8787 = vpop.f32.mrf.mxu0
    %8788 = vdwg.mxu0
    %8789 = vmatprep.subr.bf16.mxu0 %v5277
    %8790 = vmatpush1.bf16.msra.mxu0 %v5276
    %8791 = vmatprep.subr.bf16.mxu0 %v5269
    %8792 = vmatpush1.bf16.msra.mxu0 %v5268
    %8793 = vmatprep.subr.bf16.mxu0 %v5261
    %8794 = vmatpush1.bf16.msra.mxu0 %v5260
    %8795 = vmatprep.subr.bf16.mxu0 %v5253
    %8796 = vmatpush1.bf16.msra.mxu0 %v5252
    %8797 = vmatprep.subr.bf16.mxu0 %v5245
    %8798 = vmatpush1.bf16.msra.mxu0 %v5244
    %8799 = vmatprep.subr.bf16.mxu0 %v5237
    %8800 = vmatpush1.bf16.msra.mxu0 %v5236
    %8801 = vmatprep.subr.bf16.mxu0 %v5229
    %8802 = vmatpush1.bf16.msra.mxu0 %v5228
    %8803 = vmatprep.subr.bf16.mxu0 %v5221
    %8804 = vmatpush1.bf16.msra.mxu0 %v5220
    %8805 = vmatprep.subr.bf16.mxu0 %v5341
    %8806 = vmatpush2.bf16.msra.mxu0 %v5340
    %8807 = vmatprep.subr.bf16.mxu0 %v5333
    %8808 = vmatpush2.bf16.msra.mxu0 %v5332
    %8809 = vmatprep.subr.bf16.mxu0 %v5325
    %8810 = vmatpush2.bf16.msra.mxu0 %v5324
    %8811 = vmatprep.subr.bf16.mxu0 %v5317
    %8812 = vmatpush2.bf16.msra.mxu0 %v5316
    %8813 = vmatprep.subr.bf16.mxu0 %v5309
    %8814 = vmatpush2.bf16.msra.mxu0 %v5308
    %8815 = vmatprep.subr.bf16.mxu0 %v5301
    %8816 = vmatpush2.bf16.msra.mxu0 %v5300
    %8817 = vmatprep.subr.bf16.mxu0 %v5293
    %8818 = vmatpush2.bf16.msra.mxu0 %v5292
    %8819 = vmatprep.subr.bf16.mxu0 %v5285
    %8820 = vmatpush2.bf16.msra.mxu0 %v5284
    %8821 = vmatprep.mubr.bf16.mxu0 %v1403
    %8822 = vmatmul.mubr.bf16.gmra.mxu0 %v1402
    %v8823 = vpop.f32.mrf.mxu0
    %v8824 = vadd.f32 %v8783, %v8823
    %v8825 = vpop.f32.mrf.mxu0
    %v8826 = vadd.f32 %v8785, %v8825
    %v8827 = vpop.f32.mrf.mxu0
    %v8828 = vpop.f32.mrf.mxu0
    %8829 = vdwg.mxu0
    %8830 = vmatprep.subr.bf16.mxu0 %v5405
    %8831 = vmatpush1.bf16.msra.mxu0 %v5404
    %8832 = vmatprep.subr.bf16.mxu0 %v5397
    %8833 = vmatpush1.bf16.msra.mxu0 %v5396
    %8834 = vmatprep.subr.bf16.mxu0 %v5389
    %8835 = vmatpush1.bf16.msra.mxu0 %v5388
    %8836 = vmatprep.subr.bf16.mxu0 %v5381
    %8837 = vmatpush1.bf16.msra.mxu0 %v5380
    %8838 = vmatprep.subr.bf16.mxu0 %v5373
    %8839 = vmatpush1.bf16.msra.mxu0 %v5372
    %8840 = vmatprep.subr.bf16.mxu0 %v5365
    %8841 = vmatpush1.bf16.msra.mxu0 %v5364
    %8842 = vmatprep.subr.bf16.mxu0 %v5357
    %8843 = vmatpush1.bf16.msra.mxu0 %v5356
    %8844 = vmatprep.subr.bf16.mxu0 %v5349
    %8845 = vmatpush1.bf16.msra.mxu0 %v5348
    %8846 = vmatprep.subr.bf16.mxu0 %v5469
    %8847 = vmatpush2.bf16.msra.mxu0 %v5468
    %8848 = vmatprep.subr.bf16.mxu0 %v5461
    %8849 = vmatpush2.bf16.msra.mxu0 %v5460
    %8850 = vmatprep.subr.bf16.mxu0 %v5453
    %8851 = vmatpush2.bf16.msra.mxu0 %v5452
    %8852 = vmatprep.subr.bf16.mxu0 %v5445
    %8853 = vmatpush2.bf16.msra.mxu0 %v5444
    %8854 = vmatprep.subr.bf16.mxu0 %v5437
    %8855 = vmatpush2.bf16.msra.mxu0 %v5436
    %8856 = vmatprep.subr.bf16.mxu0 %v5429
    %8857 = vmatpush2.bf16.msra.mxu0 %v5428
    %8858 = vmatprep.subr.bf16.mxu0 %v5421
    %8859 = vmatpush2.bf16.msra.mxu0 %v5420
    %8860 = vmatprep.subr.bf16.mxu0 %v5413
    %8861 = vmatpush2.bf16.msra.mxu0 %v5412
    %8862 = vmatprep.mubr.bf16.mxu0 %v1405
    %8863 = vmatmul.mubr.bf16.gmra.mxu0 %v1404
    %v8864 = vpop.f32.mrf.mxu0
    %v8865 = vadd.f32 %v8824, %v8864
    %v8866 = vpop.f32.mrf.mxu0
    %v8867 = vadd.f32 %v8826, %v8866
    %v8868 = vpop.f32.mrf.mxu0
    %v8869 = vpop.f32.mrf.mxu0
    %8870 = vdwg.mxu0
    %8871 = vmatprep.subr.bf16.mxu0 %v5533
    %8872 = vmatpush1.bf16.msra.mxu0 %v5532
    %8873 = vmatprep.subr.bf16.mxu0 %v5525
    %8874 = vmatpush1.bf16.msra.mxu0 %v5524
    %8875 = vmatprep.subr.bf16.mxu0 %v5517
    %8876 = vmatpush1.bf16.msra.mxu0 %v5516
    %8877 = vmatprep.subr.bf16.mxu0 %v5509
    %8878 = vmatpush1.bf16.msra.mxu0 %v5508
    %8879 = vmatprep.subr.bf16.mxu0 %v5501
    %8880 = vmatpush1.bf16.msra.mxu0 %v5500
    %8881 = vmatprep.subr.bf16.mxu0 %v5493
    %8882 = vmatpush1.bf16.msra.mxu0 %v5492
    %8883 = vmatprep.subr.bf16.mxu0 %v5485
    %8884 = vmatpush1.bf16.msra.mxu0 %v5484
    %8885 = vmatprep.subr.bf16.mxu0 %v5477
    %8886 = vmatpush1.bf16.msra.mxu0 %v5476
    %8887 = vmatprep.subr.bf16.mxu0 %v5597
    %8888 = vmatpush2.bf16.msra.mxu0 %v5596
    %8889 = vmatprep.subr.bf16.mxu0 %v5589
    %8890 = vmatpush2.bf16.msra.mxu0 %v5588
    %8891 = vmatprep.subr.bf16.mxu0 %v5581
    %8892 = vmatpush2.bf16.msra.mxu0 %v5580
    %8893 = vmatprep.subr.bf16.mxu0 %v5573
    %8894 = vmatpush2.bf16.msra.mxu0 %v5572
    %8895 = vmatprep.subr.bf16.mxu0 %v5565
    %8896 = vmatpush2.bf16.msra.mxu0 %v5564
    %8897 = vmatprep.subr.bf16.mxu0 %v5557
    %8898 = vmatpush2.bf16.msra.mxu0 %v5556
    %8899 = vmatprep.subr.bf16.mxu0 %v5549
    %8900 = vmatpush2.bf16.msra.mxu0 %v5548
    %8901 = vmatprep.subr.bf16.mxu0 %v5541
    %8902 = vmatpush2.bf16.msra.mxu0 %v5540
    %8903 = vmatprep.mubr.bf16.mxu0 %v1407
    %8904 = vmatmul.mubr.bf16.gmra.mxu0 %v1406
    %v8905 = vpop.f32.mrf.mxu0
    %v8906 = vadd.f32 %v8865, %v8905
    %v8907 = vpop.f32.mrf.mxu0
    %v8908 = vadd.f32 %v8867, %v8907
    %v8909 = vpop.f32.mrf.mxu0
    %v8910 = vpop.f32.mrf.mxu0
    %8911 = vdwg.mxu0
    %8912 = vmatprep.subr.bf16.mxu0 %v5661
    %8913 = vmatpush1.bf16.msra.mxu0 %v5660
    %8914 = vmatprep.subr.bf16.mxu0 %v5653
    %8915 = vmatpush1.bf16.msra.mxu0 %v5652
    %8916 = vmatprep.subr.bf16.mxu0 %v5645
    %8917 = vmatpush1.bf16.msra.mxu0 %v5644
    %8918 = vmatprep.subr.bf16.mxu0 %v5637
    %8919 = vmatpush1.bf16.msra.mxu0 %v5636
    %8920 = vmatprep.subr.bf16.mxu0 %v5629
    %8921 = vmatpush1.bf16.msra.mxu0 %v5628
    %8922 = vmatprep.subr.bf16.mxu0 %v5621
    %8923 = vmatpush1.bf16.msra.mxu0 %v5620
    %8924 = vmatprep.subr.bf16.mxu0 %v5613
    %8925 = vmatpush1.bf16.msra.mxu0 %v5612
    %8926 = vmatprep.subr.bf16.mxu0 %v5605
    %8927 = vmatpush1.bf16.msra.mxu0 %v5604
    %8928 = vmatprep.subr.bf16.mxu0 %v5725
    %8929 = vmatpush2.bf16.msra.mxu0 %v5724
    %8930 = vmatprep.subr.bf16.mxu0 %v5717
    %8931 = vmatpush2.bf16.msra.mxu0 %v5716
    %8932 = vmatprep.subr.bf16.mxu0 %v5709
    %8933 = vmatpush2.bf16.msra.mxu0 %v5708
    %8934 = vmatprep.subr.bf16.mxu0 %v5701
    %8935 = vmatpush2.bf16.msra.mxu0 %v5700
    %8936 = vmatprep.subr.bf16.mxu0 %v5693
    %8937 = vmatpush2.bf16.msra.mxu0 %v5692
    %8938 = vmatprep.subr.bf16.mxu0 %v5685
    %8939 = vmatpush2.bf16.msra.mxu0 %v5684
    %8940 = vmatprep.subr.bf16.mxu0 %v5677
    %8941 = vmatpush2.bf16.msra.mxu0 %v5676
    %8942 = vmatprep.subr.bf16.mxu0 %v5669
    %8943 = vmatpush2.bf16.msra.mxu0 %v5668
    %8944 = vmatprep.mubr.bf16.mxu0 %v1409
    %8945 = vmatmul.mubr.bf16.gmra.mxu0 %v1408
    %v8946 = vpop.f32.mrf.mxu0
    %v8947 = vadd.f32 %v8906, %v8946
    %v8948 = vpop.f32.mrf.mxu0
    %v8949 = vadd.f32 %v8908, %v8948
    %v8950 = vpop.f32.mrf.mxu0
    %v8951 = vpop.f32.mrf.mxu0
    %8952 = vdwg.mxu0
    %8953 = vmatprep.subr.bf16.mxu0 %v5789
    %8954 = vmatpush1.bf16.msra.mxu0 %v5788
    %8955 = vmatprep.subr.bf16.mxu0 %v5781
    %8956 = vmatpush1.bf16.msra.mxu0 %v5780
    %8957 = vmatprep.subr.bf16.mxu0 %v5773
    %8958 = vmatpush1.bf16.msra.mxu0 %v5772
    %8959 = vmatprep.subr.bf16.mxu0 %v5765
    %8960 = vmatpush1.bf16.msra.mxu0 %v5764
    %8961 = vmatprep.subr.bf16.mxu0 %v5757
    %8962 = vmatpush1.bf16.msra.mxu0 %v5756
    %8963 = vmatprep.subr.bf16.mxu0 %v5749
    %8964 = vmatpush1.bf16.msra.mxu0 %v5748
    %8965 = vmatprep.subr.bf16.mxu0 %v5741
    %8966 = vmatpush1.bf16.msra.mxu0 %v5740
    %8967 = vmatprep.subr.bf16.mxu0 %v5733
    %8968 = vmatpush1.bf16.msra.mxu0 %v5732
    %8969 = vmatprep.subr.bf16.mxu0 %v5853
    %8970 = vmatpush2.bf16.msra.mxu0 %v5852
    %8971 = vmatprep.subr.bf16.mxu0 %v5845
    %8972 = vmatpush2.bf16.msra.mxu0 %v5844
    %8973 = vmatprep.subr.bf16.mxu0 %v5837
    %8974 = vmatpush2.bf16.msra.mxu0 %v5836
    %8975 = vmatprep.subr.bf16.mxu0 %v5829
    %8976 = vmatpush2.bf16.msra.mxu0 %v5828
    %8977 = vmatprep.subr.bf16.mxu0 %v5821
    %8978 = vmatpush2.bf16.msra.mxu0 %v5820
    %8979 = vmatprep.subr.bf16.mxu0 %v5813
    %8980 = vmatpush2.bf16.msra.mxu0 %v5812
    %8981 = vmatprep.subr.bf16.mxu0 %v5805
    %8982 = vmatpush2.bf16.msra.mxu0 %v5804
    %8983 = vmatprep.subr.bf16.mxu0 %v5797
    %8984 = vmatpush2.bf16.msra.mxu0 %v5796
    %8985 = vmatprep.mubr.bf16.mxu0 %v1411
    %8986 = vmatmul.mubr.bf16.gmra.mxu0 %v1410
    %v8987 = vpop.f32.mrf.mxu0
    %v8988 = vadd.f32 %v8947, %v8987
    %v8989 = vpop.f32.mrf.mxu0
    %v8990 = vadd.f32 %v8949, %v8989
    %v8991 = vpop.f32.mrf.mxu0
    %v8992 = vpop.f32.mrf.mxu0
    %8993 = vdwg.mxu0
    %8994 = vmatprep.subr.bf16.mxu0 %v5917
    %8995 = vmatpush1.bf16.msra.mxu0 %v5916
    %8996 = vmatprep.subr.bf16.mxu0 %v5909
    %8997 = vmatpush1.bf16.msra.mxu0 %v5908
    %8998 = vmatprep.subr.bf16.mxu0 %v5901
    %8999 = vmatpush1.bf16.msra.mxu0 %v5900
    %9000 = vmatprep.subr.bf16.mxu0 %v5893
    %9001 = vmatpush1.bf16.msra.mxu0 %v5892
    %9002 = vmatprep.subr.bf16.mxu0 %v5885
    %9003 = vmatpush1.bf16.msra.mxu0 %v5884
    %9004 = vmatprep.subr.bf16.mxu0 %v5877
    %9005 = vmatpush1.bf16.msra.mxu0 %v5876
    %9006 = vmatprep.subr.bf16.mxu0 %v5869
    %9007 = vmatpush1.bf16.msra.mxu0 %v5868
    %9008 = vmatprep.subr.bf16.mxu0 %v5861
    %9009 = vmatpush1.bf16.msra.mxu0 %v5860
    %9010 = vmatprep.subr.bf16.mxu0 %v5981
    %9011 = vmatpush2.bf16.msra.mxu0 %v5980
    %9012 = vmatprep.subr.bf16.mxu0 %v5973
    %9013 = vmatpush2.bf16.msra.mxu0 %v5972
    %9014 = vmatprep.subr.bf16.mxu0 %v5965
    %9015 = vmatpush2.bf16.msra.mxu0 %v5964
    %9016 = vmatprep.subr.bf16.mxu0 %v5957
    %9017 = vmatpush2.bf16.msra.mxu0 %v5956
    %9018 = vmatprep.subr.bf16.mxu0 %v5949
    %9019 = vmatpush2.bf16.msra.mxu0 %v5948
    %9020 = vmatprep.subr.bf16.mxu0 %v5941
    %9021 = vmatpush2.bf16.msra.mxu0 %v5940
    %9022 = vmatprep.subr.bf16.mxu0 %v5933
    %9023 = vmatpush2.bf16.msra.mxu0 %v5932
    %9024 = vmatprep.subr.bf16.mxu0 %v5925
    %9025 = vmatpush2.bf16.msra.mxu0 %v5924
    %9026 = vmatprep.mubr.bf16.mxu0 %v1413
    %9027 = vmatmul.mubr.bf16.gmra.mxu0 %v1412
    %v9028 = vpop.f32.mrf.mxu0
    %v9029 = vadd.f32 %v8988, %v9028
    %v9030 = vpop.f32.mrf.mxu0
    %v9031 = vadd.f32 %v8990, %v9030
    %v9032 = vpop.f32.mrf.mxu0
    %v9033 = vpop.f32.mrf.mxu0
    %9034 = vdwg.mxu0
    %9035 = vmatprep.subr.bf16.mxu0 %v6045
    %9036 = vmatpush1.bf16.msra.mxu0 %v6044
    %9037 = vmatprep.subr.bf16.mxu0 %v6037
    %9038 = vmatpush1.bf16.msra.mxu0 %v6036
    %9039 = vmatprep.subr.bf16.mxu0 %v6029
    %9040 = vmatpush1.bf16.msra.mxu0 %v6028
    %9041 = vmatprep.subr.bf16.mxu0 %v6021
    %9042 = vmatpush1.bf16.msra.mxu0 %v6020
    %9043 = vmatprep.subr.bf16.mxu0 %v6013
    %9044 = vmatpush1.bf16.msra.mxu0 %v6012
    %9045 = vmatprep.subr.bf16.mxu0 %v6005
    %9046 = vmatpush1.bf16.msra.mxu0 %v6004
    %9047 = vmatprep.subr.bf16.mxu0 %v5997
    %9048 = vmatpush1.bf16.msra.mxu0 %v5996
    %9049 = vmatprep.subr.bf16.mxu0 %v5989
    %9050 = vmatpush1.bf16.msra.mxu0 %v5988
    %9051 = vmatprep.subr.bf16.mxu0 %v6109
    %9052 = vmatpush2.bf16.msra.mxu0 %v6108
    %9053 = vmatprep.subr.bf16.mxu0 %v6101
    %9054 = vmatpush2.bf16.msra.mxu0 %v6100
    %9055 = vmatprep.subr.bf16.mxu0 %v6093
    %9056 = vmatpush2.bf16.msra.mxu0 %v6092
    %9057 = vmatprep.subr.bf16.mxu0 %v6085
    %9058 = vmatpush2.bf16.msra.mxu0 %v6084
    %9059 = vmatprep.subr.bf16.mxu0 %v6077
    %9060 = vmatpush2.bf16.msra.mxu0 %v6076
    %9061 = vmatprep.subr.bf16.mxu0 %v6069
    %9062 = vmatpush2.bf16.msra.mxu0 %v6068
    %9063 = vmatprep.subr.bf16.mxu0 %v6061
    %9064 = vmatpush2.bf16.msra.mxu0 %v6060
    %9065 = vmatprep.subr.bf16.mxu0 %v6053
    %9066 = vmatpush2.bf16.msra.mxu0 %v6052
    %9067 = vmatprep.mubr.bf16.mxu0 %v1415
    %9068 = vmatmul.mubr.bf16.gmra.mxu0 %v1414
    %v9069 = vpop.f32.mrf.mxu0
    %v9070 = vadd.f32 %v9029, %v9069
    %v9071 = vpop.f32.mrf.mxu0
    %v9072 = vadd.f32 %v9031, %v9071
    %v9073 = vpop.f32.mrf.mxu0
    %v9074 = vpop.f32.mrf.mxu0
    %9075 = vdwg.mxu0
    %9076 = vmatprep.subr.bf16.mxu0 %v6173
    %9077 = vmatpush1.bf16.msra.mxu0 %v6172
    %9078 = vmatprep.subr.bf16.mxu0 %v6165
    %9079 = vmatpush1.bf16.msra.mxu0 %v6164
    %9080 = vmatprep.subr.bf16.mxu0 %v6157
    %9081 = vmatpush1.bf16.msra.mxu0 %v6156
    %9082 = vmatprep.subr.bf16.mxu0 %v6149
    %9083 = vmatpush1.bf16.msra.mxu0 %v6148
    %9084 = vmatprep.subr.bf16.mxu0 %v6141
    %9085 = vmatpush1.bf16.msra.mxu0 %v6140
    %9086 = vmatprep.subr.bf16.mxu0 %v6133
    %9087 = vmatpush1.bf16.msra.mxu0 %v6132
    %9088 = vmatprep.subr.bf16.mxu0 %v6125
    %9089 = vmatpush1.bf16.msra.mxu0 %v6124
    %9090 = vmatprep.subr.bf16.mxu0 %v6117
    %9091 = vmatpush1.bf16.msra.mxu0 %v6116
    %9092 = vmatprep.subr.bf16.mxu0 %v6237
    %9093 = vmatpush2.bf16.msra.mxu0 %v6236
    %9094 = vmatprep.subr.bf16.mxu0 %v6229
    %9095 = vmatpush2.bf16.msra.mxu0 %v6228
    %9096 = vmatprep.subr.bf16.mxu0 %v6221
    %9097 = vmatpush2.bf16.msra.mxu0 %v6220
    %9098 = vmatprep.subr.bf16.mxu0 %v6213
    %9099 = vmatpush2.bf16.msra.mxu0 %v6212
    %9100 = vmatprep.subr.bf16.mxu0 %v6205
    %9101 = vmatpush2.bf16.msra.mxu0 %v6204
    %9102 = vmatprep.subr.bf16.mxu0 %v6197
    %9103 = vmatpush2.bf16.msra.mxu0 %v6196
    %9104 = vmatprep.subr.bf16.mxu0 %v6189
    %9105 = vmatpush2.bf16.msra.mxu0 %v6188
    %9106 = vmatprep.subr.bf16.mxu0 %v6181
    %9107 = vmatpush2.bf16.msra.mxu0 %v6180
    %9108 = vmatprep.mubr.bf16.mxu0 %v1417
    %9109 = vmatmul.mubr.bf16.gmra.mxu0 %v1416
    %v9110 = vpop.f32.mrf.mxu0
    %v9111 = vadd.f32 %v9070, %v9110
    %v9112 = vpop.f32.mrf.mxu0
    %v9113 = vadd.f32 %v9072, %v9112
    %v9114 = vpop.f32.mrf.mxu0
    %v9115 = vpop.f32.mrf.mxu0
    %9116 = vdwg.mxu0
    %9117 = vmatprep.subr.bf16.mxu0 %v6301
    %9118 = vmatpush1.bf16.msra.mxu0 %v6300
    %9119 = vmatprep.subr.bf16.mxu0 %v6293
    %9120 = vmatpush1.bf16.msra.mxu0 %v6292
    %9121 = vmatprep.subr.bf16.mxu0 %v6285
    %9122 = vmatpush1.bf16.msra.mxu0 %v6284
    %9123 = vmatprep.subr.bf16.mxu0 %v6277
    %9124 = vmatpush1.bf16.msra.mxu0 %v6276
    %9125 = vmatprep.subr.bf16.mxu0 %v6269
    %9126 = vmatpush1.bf16.msra.mxu0 %v6268
    %9127 = vmatprep.subr.bf16.mxu0 %v6261
    %9128 = vmatpush1.bf16.msra.mxu0 %v6260
    %9129 = vmatprep.subr.bf16.mxu0 %v6253
    %9130 = vmatpush1.bf16.msra.mxu0 %v6252
    %9131 = vmatprep.subr.bf16.mxu0 %v6245
    %9132 = vmatpush1.bf16.msra.mxu0 %v6244
    %9133 = vmatprep.subr.bf16.mxu0 0
    %9134 = vmatpush2.bf16.msra.mxu0 0
    %9135 = vmatprep.subr.bf16.mxu0 0
    %9136 = vmatpush2.bf16.msra.mxu0 0
    %9137 = vmatprep.subr.bf16.mxu0 0
    %9138 = vmatpush2.bf16.msra.mxu0 0
    %9139 = vmatprep.subr.bf16.mxu0 0
    %9140 = vmatpush2.bf16.msra.mxu0 0
    %9141 = vmatprep.subr.bf16.mxu0 0
    %9142 = vmatpush2.bf16.msra.mxu0 0
    %9143 = vmatprep.subr.bf16.mxu0 0
    %9144 = vmatpush2.bf16.msra.mxu0 0
    %9145 = vmatprep.subr.bf16.mxu0 0
    %9146 = vmatpush2.bf16.msra.mxu0 0
    %9147 = vmatprep.subr.bf16.mxu0 0
    %9148 = vmatpush2.bf16.msra.mxu0 0
    %9149 = vmatprep.mubr.bf16.mxu0 0
    %9150 = vmatmul.mubr.bf16.gmra.mxu0 %v1418
    %v9151 = vpop.f32.mrf.mxu0
    %v9152 = vadd.f32 %v9111, %v9151
    %v9153 = vpop.f32.mrf.mxu0
    %v9154 = vadd.f32 %v9113, %v9153
    %v9155 = vpop.f32.mrf.mxu0
    %v9156 = vpop.f32.mrf.mxu0
    %9157 = vdwg.mxu0
    %v9158 = vmax.f32 %v7922, 0.0
    %v9159 = vmax.f32 %v7924, 0.0
    %v9160 = vmax.f32 %v8332, 0.0
    %v9161 = vmax.f32 %v8334, 0.0
    %v9162 = vmax.f32 %v8742, 0.0
    %v9163 = vmax.f32 %v8744, 0.0
    %v9164 = vmax.f32 %v9152, 0.0
    %v9165 = vmax.f32 %v9154, 0.0
    %v9166 = vpack.c.bf16 %v9158, %v9158
    %v9167 = vpack.c.bf16 %v9159, %v9159
    %v9168 = vpack.c.bf16 %v9160, %v9160
    %v9169 = vpack.c.bf16 %v9161, %v9161
    %v9170 = vpack.c.bf16 %v9162, %v9162
    %v9171 = vpack.c.bf16 %v9163, %v9163
    %v9172 = vpack.c.bf16 %v9164, %v9164
    %v9173 = vpack.c.bf16 %v9165, %v9165
    %v9174 = vld [vmem:[#allocation6] sm:$0xff]
    %v9175 = vld [vmem:[#allocation6 + $0x8] sm:$0xff]
    %v9176 = vld [vmem:[#allocation6 + $0x10] sm:$0xff]
    %v9177 = vld [vmem:[#allocation6 + $0x18] sm:$0xff]
    %v9178 = vld [vmem:[#allocation6 + $0x20] sm:$0xff]
    %v9179 = vld [vmem:[#allocation6 + $0x28] sm:$0xff]
    %v9180 = vld [vmem:[#allocation6 + $0x30] sm:$0xff]
    %v9181 = vld [vmem:[#allocation6 + $0x38] sm:$0xff]
    %v9182 = vld [vmem:[#allocation6 + $0x40] sm:$0xff]
    %v9183 = vld [vmem:[#allocation6 + $0x48] sm:$0xff]
    %v9184 = vld [vmem:[#allocation6 + $0x50] sm:$0xff]
    %v9185 = vld [vmem:[#allocation6 + $0x58] sm:$0xff]
    %v9186 = vld [vmem:[#allocation6 + $0x60] sm:$0xff]
    %v9187 = vld [vmem:[#allocation6 + $0x68] sm:$0xff]
    %v9188 = vld [vmem:[#allocation6 + $0x70] sm:$0xff]
    %v9189 = vld [vmem:[#allocation6 + $0x78] sm:$0xff]
    %v9190 = vld [vmem:[#allocation6 + $0x80] sm:$0xff]
    %v9191 = vld [vmem:[#allocation6 + $0x88] sm:$0xff]
    %v9192 = vld [vmem:[#allocation6 + $0x90] sm:$0xff]
    %v9193 = vld [vmem:[#allocation6 + $0x98] sm:$0xff]
    %v9194 = vld [vmem:[#allocation6 + $0xa0] sm:$0xff]
    %v9195 = vld [vmem:[#allocation6 + $0xa8] sm:$0xff]
    %v9196 = vld [vmem:[#allocation6 + $0xb0] sm:$0xff]
    %v9197 = vld [vmem:[#allocation6 + $0xb8] sm:$0xff]
    %v9198 = vld [vmem:[#allocation6 + $0xc0] sm:$0xff]
    %v9199 = vld [vmem:[#allocation6 + $0xc8] sm:$0xff]
    %v9200 = vld [vmem:[#allocation6 + $0xd0] sm:$0xff]
    %v9201 = vld [vmem:[#allocation6 + $0xd8] sm:$0xff]
    %v9202 = vld [vmem:[#allocation6 + $0xe0] sm:$0xff]
    %v9203 = vld [vmem:[#allocation6 + $0xe8] sm:$0xff]
    %v9204 = vld [vmem:[#allocation6 + $0xf0] sm:$0xff]
    %v9205 = vld [vmem:[#allocation6 + $0xf8] sm:$0xff]
    %v9206 = vld [vmem:[#allocation6 + $0x100] sm:$0xff]
    %v9207 = vld [vmem:[#allocation6 + $0x108] sm:$0xff]
    %v9208 = vld [vmem:[#allocation6 + $0x110] sm:$0xff]
    %v9209 = vld [vmem:[#allocation6 + $0x118] sm:$0xff]
    %v9210 = vld [vmem:[#allocation6 + $0x120] sm:$0xff]
    %v9211 = vld [vmem:[#allocation6 + $0x128] sm:$0xff]
    %v9212 = vld [vmem:[#allocation6 + $0x130] sm:$0xff]
    %v9213 = vld [vmem:[#allocation6 + $0x138] sm:$0xff]
    %v9214 = vld [vmem:[#allocation6 + $0x140] sm:$0xff]
    %v9215 = vld [vmem:[#allocation6 + $0x148] sm:$0xff]
    %v9216 = vld [vmem:[#allocation6 + $0x150] sm:$0xff]
    %v9217 = vld [vmem:[#allocation6 + $0x158] sm:$0xff]
    %v9218 = vld [vmem:[#allocation6 + $0x160] sm:$0xff]
    %v9219 = vld [vmem:[#allocation6 + $0x168] sm:$0xff]
    %v9220 = vld [vmem:[#allocation6 + $0x170] sm:$0xff]
    %v9221 = vld [vmem:[#allocation6 + $0x178] sm:$0xff]
    %v9222 = vld [vmem:[#allocation6 + $0x180] sm:$0xff]
    %v9223 = vld [vmem:[#allocation6 + $0x188] sm:$0xff]
    %v9224 = vld [vmem:[#allocation6 + $0x190] sm:$0xff]
    %v9225 = vld [vmem:[#allocation6 + $0x198] sm:$0xff]
    %v9226 = vld [vmem:[#allocation6 + $0x1a0] sm:$0xff]
    %v9227 = vld [vmem:[#allocation6 + $0x1a8] sm:$0xff]
    %v9228 = vld [vmem:[#allocation6 + $0x1b0] sm:$0xff]
    %v9229 = vld [vmem:[#allocation6 + $0x1b8] sm:$0xff]
    %v9230 = vld [vmem:[#allocation6 + $0x1c0] sm:$0xff]
    %v9231 = vld [vmem:[#allocation6 + $0x1c8] sm:$0xff]
    %v9232 = vld [vmem:[#allocation6 + $0x1d0] sm:$0xff]
    %v9233 = vld [vmem:[#allocation6 + $0x1d8] sm:$0xff]
    %v9234 = vld [vmem:[#allocation6 + $0x1e0] sm:$0xff]
    %v9235 = vld [vmem:[#allocation6 + $0x1e8] sm:$0xff]
    %v9236 = vld [vmem:[#allocation6 + $0x1f0] sm:$0xff]
    %v9237 = vld [vmem:[#allocation6 + $0x1f8] sm:$0xff]
    %v9238 = vld [vmem:[#allocation6 + $0x200] sm:$0xff]
    %v9239 = vld [vmem:[#allocation6 + $0x208] sm:$0xff]
    %v9240 = vld [vmem:[#allocation6 + $0x210] sm:$0xff]
    %v9241 = vld [vmem:[#allocation6 + $0x218] sm:$0xff]
    %v9242 = vld [vmem:[#allocation6 + $0x220] sm:$0xff]
    %v9243 = vld [vmem:[#allocation6 + $0x228] sm:$0xff]
    %v9244 = vld [vmem:[#allocation6 + $0x230] sm:$0xff]
    %v9245 = vld [vmem:[#allocation6 + $0x238] sm:$0xff]
    %v9246 = vld [vmem:[#allocation6 + $0x240] sm:$0xff]
    %v9247 = vld [vmem:[#allocation6 + $0x248] sm:$0xff]
    %v9248 = vld [vmem:[#allocation6 + $0x250] sm:$0xff]
    %v9249 = vld [vmem:[#allocation6 + $0x258] sm:$0xff]
    %v9250 = vld [vmem:[#allocation6 + $0x260] sm:$0xff]
    %v9251 = vld [vmem:[#allocation6 + $0x268] sm:$0xff]
    %v9252 = vld [vmem:[#allocation6 + $0x270] sm:$0xff]
    %v9253 = vld [vmem:[#allocation6 + $0x278] sm:$0xff]
    %v9254 = vld [vmem:[#allocation6 + $0x280] sm:$0xff]
    %v9255 = vld [vmem:[#allocation6 + $0x288] sm:$0xff]
    %v9256 = vld [vmem:[#allocation6 + $0x290] sm:$0xff]
    %v9257 = vld [vmem:[#allocation6 + $0x298] sm:$0xff]
    %v9258 = vld [vmem:[#allocation6 + $0x2a0] sm:$0xff]
    %v9259 = vld [vmem:[#allocation6 + $0x2a8] sm:$0xff]
    %v9260 = vld [vmem:[#allocation6 + $0x2b0] sm:$0xff]
    %v9261 = vld [vmem:[#allocation6 + $0x2b8] sm:$0xff]
    %v9262 = vld [vmem:[#allocation6 + $0x2c0] sm:$0xff]
    %v9263 = vld [vmem:[#allocation6 + $0x2c8] sm:$0xff]
    %v9264 = vld [vmem:[#allocation6 + $0x2d0] sm:$0xff]
    %v9265 = vld [vmem:[#allocation6 + $0x2d8] sm:$0xff]
    %v9266 = vld [vmem:[#allocation6 + $0x2e0] sm:$0xff]
    %v9267 = vld [vmem:[#allocation6 + $0x2e8] sm:$0xff]
    %v9268 = vld [vmem:[#allocation6 + $0x2f0] sm:$0xff]
    %v9269 = vld [vmem:[#allocation6 + $0x2f8] sm:$0xff]
    %v9270 = vld [vmem:[#allocation6 + $0x300] sm:$0xff]
    %v9271 = vld [vmem:[#allocation6 + $0x308] sm:$0xff]
    %v9272 = vld [vmem:[#allocation6 + $0x310] sm:$0xff]
    %v9273 = vld [vmem:[#allocation6 + $0x318] sm:$0xff]
    %v9274 = vld [vmem:[#allocation6 + $0x320] sm:$0xff]
    %v9275 = vld [vmem:[#allocation6 + $0x328] sm:$0xff]
    %v9276 = vld [vmem:[#allocation6 + $0x330] sm:$0xff]
    %v9277 = vld [vmem:[#allocation6 + $0x338] sm:$0xff]
    %v9278 = vld [vmem:[#allocation6 + $0x340] sm:$0xff]
    %v9279 = vld [vmem:[#allocation6 + $0x348] sm:$0xff]
    %v9280 = vld [vmem:[#allocation6 + $0x350] sm:$0xff]
    %v9281 = vld [vmem:[#allocation6 + $0x358] sm:$0xff]
    %v9282 = vld [vmem:[#allocation6 + $0x360] sm:$0xff]
    %v9283 = vld [vmem:[#allocation6 + $0x368] sm:$0xff]
    %v9284 = vld [vmem:[#allocation6 + $0x370] sm:$0xff]
    %v9285 = vld [vmem:[#allocation6 + $0x378] sm:$0xff]
    %v9286 = vld [vmem:[#allocation6 + $0x380] sm:$0xff]
    %v9287 = vld [vmem:[#allocation6 + $0x388] sm:$0xff]
    %v9288 = vld [vmem:[#allocation6 + $0x390] sm:$0xff]
    %v9289 = vld [vmem:[#allocation6 + $0x398] sm:$0xff]
    %v9290 = vld [vmem:[#allocation6 + $0x3a0] sm:$0xff]
    %v9291 = vld [vmem:[#allocation6 + $0x3a8] sm:$0xff]
    %v9292 = vld [vmem:[#allocation6 + $0x3b0] sm:$0xff]
    %v9293 = vld [vmem:[#allocation6 + $0x3b8] sm:$0xff]
    %v9294 = vld [vmem:[#allocation6 + $0x3c0] sm:$0xff]
    %v9295 = vld [vmem:[#allocation6 + $0x3c8] sm:$0xff]
    %v9296 = vld [vmem:[#allocation6 + $0x3d0] sm:$0xff]
    %v9297 = vld [vmem:[#allocation6 + $0x3d8] sm:$0xff]
    %v9298 = vld [vmem:[#allocation6 + $0x3e0] sm:$0xff]
    %v9299 = vld [vmem:[#allocation6 + $0x3e8] sm:$0xff]
    %v9300 = vld [vmem:[#allocation6 + $0x3f0] sm:$0xff]
    %v9301 = vld [vmem:[#allocation6 + $0x3f8] sm:$0xff]
    %v9302 = vld [vmem:[#allocation6 + $0x400] sm:$0xff]
    %v9303 = vld [vmem:[#allocation6 + $0x408] sm:$0xff]
    %v9304 = vld [vmem:[#allocation6 + $0x410] sm:$0xff]
    %v9305 = vld [vmem:[#allocation6 + $0x418] sm:$0xff]
    %v9306 = vld [vmem:[#allocation6 + $0x420] sm:$0xff]
    %v9307 = vld [vmem:[#allocation6 + $0x428] sm:$0xff]
    %v9308 = vld [vmem:[#allocation6 + $0x430] sm:$0xff]
    %v9309 = vld [vmem:[#allocation6 + $0x438] sm:$0xff]
    %v9310 = vld [vmem:[#allocation6 + $0x440] sm:$0xff]
    %v9311 = vld [vmem:[#allocation6 + $0x448] sm:$0xff]
    %v9312 = vld [vmem:[#allocation6 + $0x450] sm:$0xff]
    %v9313 = vld [vmem:[#allocation6 + $0x458] sm:$0xff]
    %v9314 = vld [vmem:[#allocation6 + $0x460] sm:$0xff]
    %v9315 = vld [vmem:[#allocation6 + $0x468] sm:$0xff]
    %v9316 = vld [vmem:[#allocation6 + $0x470] sm:$0xff]
    %v9317 = vld [vmem:[#allocation6 + $0x478] sm:$0xff]
    %v9318 = vld [vmem:[#allocation6 + $0x480] sm:$0xff]
    %v9319 = vld [vmem:[#allocation6 + $0x488] sm:$0xff]
    %v9320 = vld [vmem:[#allocation6 + $0x490] sm:$0xff]
    %v9321 = vld [vmem:[#allocation6 + $0x498] sm:$0xff]
    %v9322 = vld [vmem:[#allocation6 + $0x4a0] sm:$0xff]
    %v9323 = vld [vmem:[#allocation6 + $0x4a8] sm:$0xff]
    %v9324 = vld [vmem:[#allocation6 + $0x4b0] sm:$0xff]
    %v9325 = vld [vmem:[#allocation6 + $0x4b8] sm:$0xff]
    %v9326 = vld [vmem:[#allocation6 + $0x4c0] sm:$0xff]
    %v9327 = vld [vmem:[#allocation6 + $0x4c8] sm:$0xff]
    %v9328 = vld [vmem:[#allocation6 + $0x4d0] sm:$0xff]
    %v9329 = vld [vmem:[#allocation6 + $0x4d8] sm:$0xff]
    %v9330 = vld [vmem:[#allocation6 + $0x4e0] sm:$0xff]
    %v9331 = vld [vmem:[#allocation6 + $0x4e8] sm:$0xff]
    %v9332 = vld [vmem:[#allocation6 + $0x4f0] sm:$0xff]
    %v9333 = vld [vmem:[#allocation6 + $0x4f8] sm:$0xff]
    %v9334 = vld [vmem:[#allocation6 + $0x500] sm:$0xff]
    %v9335 = vld [vmem:[#allocation6 + $0x508] sm:$0xff]
    %v9336 = vld [vmem:[#allocation6 + $0x510] sm:$0xff]
    %v9337 = vld [vmem:[#allocation6 + $0x518] sm:$0xff]
    %v9338 = vld [vmem:[#allocation6 + $0x520] sm:$0xff]
    %v9339 = vld [vmem:[#allocation6 + $0x528] sm:$0xff]
    %v9340 = vld [vmem:[#allocation6 + $0x530] sm:$0xff]
    %v9341 = vld [vmem:[#allocation6 + $0x538] sm:$0xff]
    %v9342 = vld [vmem:[#allocation6 + $0x540] sm:$0xff]
    %v9343 = vld [vmem:[#allocation6 + $0x548] sm:$0xff]
    %v9344 = vld [vmem:[#allocation6 + $0x550] sm:$0xff]
    %v9345 = vld [vmem:[#allocation6 + $0x558] sm:$0xff]
    %v9346 = vld [vmem:[#allocation6 + $0x560] sm:$0xff]
    %v9347 = vld [vmem:[#allocation6 + $0x568] sm:$0xff]
    %v9348 = vld [vmem:[#allocation6 + $0x570] sm:$0xff]
    %v9349 = vld [vmem:[#allocation6 + $0x578] sm:$0xff]
    %v9350 = vld [vmem:[#allocation6 + $0x580] sm:$0xff]
    %v9351 = vld [vmem:[#allocation6 + $0x588] sm:$0xff]
    %v9352 = vld [vmem:[#allocation6 + $0x590] sm:$0xff]
    %v9353 = vld [vmem:[#allocation6 + $0x598] sm:$0xff]
    %v9354 = vld [vmem:[#allocation6 + $0x5a0] sm:$0xff]
    %v9355 = vld [vmem:[#allocation6 + $0x5a8] sm:$0xff]
    %v9356 = vld [vmem:[#allocation6 + $0x5b0] sm:$0xff]
    %v9357 = vld [vmem:[#allocation6 + $0x5b8] sm:$0xff]
    %v9358 = vld [vmem:[#allocation6 + $0x5c0] sm:$0xff]
    %v9359 = vld [vmem:[#allocation6 + $0x5c8] sm:$0xff]
    %v9360 = vld [vmem:[#allocation6 + $0x5d0] sm:$0xff]
    %v9361 = vld [vmem:[#allocation6 + $0x5d8] sm:$0xff]
    %v9362 = vld [vmem:[#allocation6 + $0x5e0] sm:$0xff]
    %v9363 = vld [vmem:[#allocation6 + $0x5e8] sm:$0xff]
    %v9364 = vld [vmem:[#allocation6 + $0x5f0] sm:$0xff]
    %v9365 = vld [vmem:[#allocation6 + $0x5f8] sm:$0xff]
    %v9366 = vld [vmem:[#allocation6 + $0x600] sm:$0xff]
    %v9367 = vld [vmem:[#allocation6 + $0x608] sm:$0xff]
    %v9368 = vld [vmem:[#allocation6 + $0x610] sm:$0xff]
    %v9369 = vld [vmem:[#allocation6 + $0x618] sm:$0xff]
    %v9370 = vld [vmem:[#allocation6 + $0x620] sm:$0xff]
    %v9371 = vld [vmem:[#allocation6 + $0x628] sm:$0xff]
    %v9372 = vld [vmem:[#allocation6 + $0x630] sm:$0xff]
    %v9373 = vld [vmem:[#allocation6 + $0x638] sm:$0xff]
    %v9374 = vld [vmem:[#allocation6 + $0x640] sm:$0xff]
    %v9375 = vld [vmem:[#allocation6 + $0x648] sm:$0xff]
    %v9376 = vld [vmem:[#allocation6 + $0x650] sm:$0xff]
    %v9377 = vld [vmem:[#allocation6 + $0x658] sm:$0xff]
    %v9378 = vld [vmem:[#allocation6 + $0x660] sm:$0xff]
    %v9379 = vld [vmem:[#allocation6 + $0x668] sm:$0xff]
    %v9380 = vld [vmem:[#allocation6 + $0x670] sm:$0xff]
    %v9381 = vld [vmem:[#allocation6 + $0x678] sm:$0xff]
    %v9382 = vld [vmem:[#allocation6 + $0x680] sm:$0xff]
    %v9383 = vld [vmem:[#allocation6 + $0x688] sm:$0xff]
    %v9384 = vld [vmem:[#allocation6 + $0x690] sm:$0xff]
    %v9385 = vld [vmem:[#allocation6 + $0x698] sm:$0xff]
    %v9386 = vld [vmem:[#allocation6 + $0x6a0] sm:$0xff]
    %v9387 = vld [vmem:[#allocation6 + $0x6a8] sm:$0xff]
    %v9388 = vld [vmem:[#allocation6 + $0x6b0] sm:$0xff]
    %v9389 = vld [vmem:[#allocation6 + $0x6b8] sm:$0xff]
    %v9390 = vld [vmem:[#allocation6 + $0x6c0] sm:$0xff]
    %v9391 = vld [vmem:[#allocation6 + $0x6c8] sm:$0xff]
    %v9392 = vld [vmem:[#allocation6 + $0x6d0] sm:$0xff]
    %v9393 = vld [vmem:[#allocation6 + $0x6d8] sm:$0xff]
    %v9394 = vld [vmem:[#allocation6 + $0x6e0] sm:$0xff]
    %v9395 = vld [vmem:[#allocation6 + $0x6e8] sm:$0xff]
    %v9396 = vld [vmem:[#allocation6 + $0x6f0] sm:$0xff]
    %v9397 = vld [vmem:[#allocation6 + $0x6f8] sm:$0xff]
    %v9398 = vld [vmem:[#allocation6 + $0x700] sm:$0xff]
    %v9399 = vld [vmem:[#allocation6 + $0x708] sm:$0xff]
    %v9400 = vld [vmem:[#allocation6 + $0x710] sm:$0xff]
    %v9401 = vld [vmem:[#allocation6 + $0x718] sm:$0xff]
    %v9402 = vld [vmem:[#allocation6 + $0x720] sm:$0xff]
    %v9403 = vld [vmem:[#allocation6 + $0x728] sm:$0xff]
    %v9404 = vld [vmem:[#allocation6 + $0x730] sm:$0xff]
    %v9405 = vld [vmem:[#allocation6 + $0x738] sm:$0xff]
    %v9406 = vld [vmem:[#allocation6 + $0x740] sm:$0xff]
    %v9407 = vld [vmem:[#allocation6 + $0x748] sm:$0xff]
    %v9408 = vld [vmem:[#allocation6 + $0x750] sm:$0xff]
    %v9409 = vld [vmem:[#allocation6 + $0x758] sm:$0xff]
    %v9410 = vld [vmem:[#allocation6 + $0x760] sm:$0xff]
    %v9411 = vld [vmem:[#allocation6 + $0x768] sm:$0xff]
    %v9412 = vld [vmem:[#allocation6 + $0x770] sm:$0xff]
    %v9413 = vld [vmem:[#allocation6 + $0x778] sm:$0xff]
    %v9414 = vld [vmem:[#allocation6 + $0x780] sm:$0xff]
    %v9415 = vld [vmem:[#allocation6 + $0x788] sm:$0xff]
    %v9416 = vld [vmem:[#allocation6 + $0x790] sm:$0xff]
    %v9417 = vld [vmem:[#allocation6 + $0x798] sm:$0xff]
    %v9418 = vld [vmem:[#allocation6 + $0x7a0] sm:$0xff]
    %v9419 = vld [vmem:[#allocation6 + $0x7a8] sm:$0xff]
    %v9420 = vld [vmem:[#allocation6 + $0x7b0] sm:$0xff]
    %v9421 = vld [vmem:[#allocation6 + $0x7b8] sm:$0xff]
    %v9422 = vld [vmem:[#allocation6 + $0x7c0] sm:$0xff]
    %v9423 = vld [vmem:[#allocation6 + $0x7c8] sm:$0xff]
    %v9424 = vld [vmem:[#allocation6 + $0x7d0] sm:$0xff]
    %v9425 = vld [vmem:[#allocation6 + $0x7d8] sm:$0xff]
    %v9426 = vld [vmem:[#allocation6 + $0x7e0] sm:$0xff]
    %v9427 = vld [vmem:[#allocation6 + $0x7e8] sm:$0xff]
    %v9428 = vld [vmem:[#allocation6 + $0x7f0] sm:$0xff]
    %v9429 = vld [vmem:[#allocation6 + $0x7f8] sm:$0xff]
    %v9430 = vld [vmem:[#allocation6 + $0x800] sm:$0xff]
    %v9431 = vld [vmem:[#allocation6 + $0x808] sm:$0xff]
    %v9432 = vld [vmem:[#allocation6 + $0x810] sm:$0xff]
    %v9433 = vld [vmem:[#allocation6 + $0x818] sm:$0xff]
    %v9434 = vld [vmem:[#allocation6 + $0x820] sm:$0xff]
    %v9435 = vld [vmem:[#allocation6 + $0x828] sm:$0xff]
    %v9436 = vld [vmem:[#allocation6 + $0x830] sm:$0xff]
    %v9437 = vld [vmem:[#allocation6 + $0x838] sm:$0xff]
    %v9438 = vld [vmem:[#allocation6 + $0x840] sm:$0xff]
    %v9439 = vld [vmem:[#allocation6 + $0x848] sm:$0xff]
    %v9440 = vld [vmem:[#allocation6 + $0x850] sm:$0xff]
    %v9441 = vld [vmem:[#allocation6 + $0x858] sm:$0xff]
    %v9442 = vld [vmem:[#allocation6 + $0x860] sm:$0xff]
    %v9443 = vld [vmem:[#allocation6 + $0x868] sm:$0xff]
    %v9444 = vld [vmem:[#allocation6 + $0x870] sm:$0xff]
    %v9445 = vld [vmem:[#allocation6 + $0x878] sm:$0xff]
    %v9446 = vld [vmem:[#allocation6 + $0x880] sm:$0xff]
    %v9447 = vld [vmem:[#allocation6 + $0x888] sm:$0xff]
    %v9448 = vld [vmem:[#allocation6 + $0x890] sm:$0xff]
    %v9449 = vld [vmem:[#allocation6 + $0x898] sm:$0xff]
    %v9450 = vld [vmem:[#allocation6 + $0x8a0] sm:$0xff]
    %v9451 = vld [vmem:[#allocation6 + $0x8a8] sm:$0xff]
    %v9452 = vld [vmem:[#allocation6 + $0x8b0] sm:$0xff]
    %v9453 = vld [vmem:[#allocation6 + $0x8b8] sm:$0xff]
    %v9454 = vld [vmem:[#allocation6 + $0x8c0] sm:$0xff]
    %v9455 = vld [vmem:[#allocation6 + $0x8c8] sm:$0xff]
    %v9456 = vld [vmem:[#allocation6 + $0x8d0] sm:$0xff]
    %v9457 = vld [vmem:[#allocation6 + $0x8d8] sm:$0xff]
    %v9458 = vld [vmem:[#allocation6 + $0x8e0] sm:$0xff]
    %v9459 = vld [vmem:[#allocation6 + $0x8e8] sm:$0xff]
    %v9460 = vld [vmem:[#allocation6 + $0x8f0] sm:$0xff]
    %v9461 = vld [vmem:[#allocation6 + $0x8f8] sm:$0xff]
    %v9462 = vld [vmem:[#allocation6 + $0x900] sm:$0xff]
    %v9463 = vld [vmem:[#allocation6 + $0x908] sm:$0xff]
    %v9464 = vld [vmem:[#allocation6 + $0x910] sm:$0xff]
    %v9465 = vld [vmem:[#allocation6 + $0x918] sm:$0xff]
    %v9466 = vld [vmem:[#allocation6 + $0x920] sm:$0xff]
    %v9467 = vld [vmem:[#allocation6 + $0x928] sm:$0xff]
    %v9468 = vld [vmem:[#allocation6 + $0x930] sm:$0xff]
    %v9469 = vld [vmem:[#allocation6 + $0x938] sm:$0xff]
    %v9470 = vld [vmem:[#allocation6 + $0x940] sm:$0xff]
    %v9471 = vld [vmem:[#allocation6 + $0x948] sm:$0xff]
    %v9472 = vld [vmem:[#allocation6 + $0x950] sm:$0xff]
    %v9473 = vld [vmem:[#allocation6 + $0x958] sm:$0xff]
    %v9474 = vld [vmem:[#allocation6 + $0x960] sm:$0xff]
    %v9475 = vld [vmem:[#allocation6 + $0x968] sm:$0xff]
    %v9476 = vld [vmem:[#allocation6 + $0x970] sm:$0xff]
    %v9477 = vld [vmem:[#allocation6 + $0x978] sm:$0xff]
    %v9478 = vld [vmem:[#allocation6 + $0x980] sm:$0xff]
    %v9479 = vld [vmem:[#allocation6 + $0x988] sm:$0xff]
    %v9480 = vld [vmem:[#allocation6 + $0x990] sm:$0xff]
    %v9481 = vld [vmem:[#allocation6 + $0x998] sm:$0xff]
    %v9482 = vld [vmem:[#allocation6 + $0x9a0] sm:$0xff]
    %v9483 = vld [vmem:[#allocation6 + $0x9a8] sm:$0xff]
    %v9484 = vld [vmem:[#allocation6 + $0x9b0] sm:$0xff]
    %v9485 = vld [vmem:[#allocation6 + $0x9b8] sm:$0xff]
    %v9486 = vld [vmem:[#allocation6 + $0x9c0] sm:$0xff]
    %v9487 = vld [vmem:[#allocation6 + $0x9c8] sm:$0xff]
    %v9488 = vld [vmem:[#allocation6 + $0x9d0] sm:$0xff]
    %v9489 = vld [vmem:[#allocation6 + $0x9d8] sm:$0xff]
    %v9490 = vld [vmem:[#allocation6 + $0x9e0] sm:$0xff]
    %v9491 = vld [vmem:[#allocation6 + $0x9e8] sm:$0xff]
    %v9492 = vld [vmem:[#allocation6 + $0x9f0] sm:$0xff]
    %v9493 = vld [vmem:[#allocation6 + $0x9f8] sm:$0xff]
    %v9494 = vld [vmem:[#allocation6 + $0xa00] sm:$0xff]
    %v9495 = vld [vmem:[#allocation6 + $0xa08] sm:$0xff]
    %v9496 = vld [vmem:[#allocation6 + $0xa10] sm:$0xff]
    %v9497 = vld [vmem:[#allocation6 + $0xa18] sm:$0xff]
    %v9498 = vld [vmem:[#allocation6 + $0xa20] sm:$0xff]
    %v9499 = vld [vmem:[#allocation6 + $0xa28] sm:$0xff]
    %v9500 = vld [vmem:[#allocation6 + $0xa30] sm:$0xff]
    %v9501 = vld [vmem:[#allocation6 + $0xa38] sm:$0xff]
    %v9502 = vld [vmem:[#allocation6 + $0xa40] sm:$0xff]
    %v9503 = vld [vmem:[#allocation6 + $0xa48] sm:$0xff]
    %v9504 = vld [vmem:[#allocation6 + $0xa50] sm:$0xff]
    %v9505 = vld [vmem:[#allocation6 + $0xa58] sm:$0xff]
    %v9506 = vld [vmem:[#allocation6 + $0xa60] sm:$0xff]
    %v9507 = vld [vmem:[#allocation6 + $0xa68] sm:$0xff]
    %v9508 = vld [vmem:[#allocation6 + $0xa70] sm:$0xff]
    %v9509 = vld [vmem:[#allocation6 + $0xa78] sm:$0xff]
    %v9510 = vld [vmem:[#allocation6 + $0xa80] sm:$0xff]
    %v9511 = vld [vmem:[#allocation6 + $0xa88] sm:$0xff]
    %v9512 = vld [vmem:[#allocation6 + $0xa90] sm:$0xff]
    %v9513 = vld [vmem:[#allocation6 + $0xa98] sm:$0xff]
    %v9514 = vld [vmem:[#allocation6 + $0xaa0] sm:$0xff]
    %v9515 = vld [vmem:[#allocation6 + $0xaa8] sm:$0xff]
    %v9516 = vld [vmem:[#allocation6 + $0xab0] sm:$0xff]
    %v9517 = vld [vmem:[#allocation6 + $0xab8] sm:$0xff]
    %v9518 = vld [vmem:[#allocation6 + $0xac0] sm:$0xff]
    %v9519 = vld [vmem:[#allocation6 + $0xac8] sm:$0xff]
    %v9520 = vld [vmem:[#allocation6 + $0xad0] sm:$0xff]
    %v9521 = vld [vmem:[#allocation6 + $0xad8] sm:$0xff]
    %v9522 = vld [vmem:[#allocation6 + $0xae0] sm:$0xff]
    %v9523 = vld [vmem:[#allocation6 + $0xae8] sm:$0xff]
    %v9524 = vld [vmem:[#allocation6 + $0xaf0] sm:$0xff]
    %v9525 = vld [vmem:[#allocation6 + $0xaf8] sm:$0xff]
    %v9526 = vld [vmem:[#allocation6 + $0xb00] sm:$0xff]
    %v9527 = vld [vmem:[#allocation6 + $0xb08] sm:$0xff]
    %v9528 = vld [vmem:[#allocation6 + $0xb10] sm:$0xff]
    %v9529 = vld [vmem:[#allocation6 + $0xb18] sm:$0xff]
    %v9530 = vld [vmem:[#allocation6 + $0xb20] sm:$0xff]
    %v9531 = vld [vmem:[#allocation6 + $0xb28] sm:$0xff]
    %v9532 = vld [vmem:[#allocation6 + $0xb30] sm:$0xff]
    %v9533 = vld [vmem:[#allocation6 + $0xb38] sm:$0xff]
    %v9534 = vld [vmem:[#allocation6 + $0xb40] sm:$0xff]
    %v9535 = vld [vmem:[#allocation6 + $0xb48] sm:$0xff]
    %v9536 = vld [vmem:[#allocation6 + $0xb50] sm:$0xff]
    %v9537 = vld [vmem:[#allocation6 + $0xb58] sm:$0xff]
    %v9538 = vld [vmem:[#allocation6 + $0xb60] sm:$0xff]
    %v9539 = vld [vmem:[#allocation6 + $0xb68] sm:$0xff]
    %v9540 = vld [vmem:[#allocation6 + $0xb70] sm:$0xff]
    %v9541 = vld [vmem:[#allocation6 + $0xb78] sm:$0xff]
    %v9542 = vld [vmem:[#allocation6 + $0xb80] sm:$0xff]
    %v9543 = vld [vmem:[#allocation6 + $0xb88] sm:$0xff]
    %v9544 = vld [vmem:[#allocation6 + $0xb90] sm:$0xff]
    %v9545 = vld [vmem:[#allocation6 + $0xb98] sm:$0xff]
    %v9546 = vld [vmem:[#allocation6 + $0xba0] sm:$0xff]
    %v9547 = vld [vmem:[#allocation6 + $0xba8] sm:$0xff]
    %v9548 = vld [vmem:[#allocation6 + $0xbb0] sm:$0xff]
    %v9549 = vld [vmem:[#allocation6 + $0xbb8] sm:$0xff]
    %v9550 = vld [vmem:[#allocation6 + $0xbc0] sm:$0xff]
    %v9551 = vld [vmem:[#allocation6 + $0xbc8] sm:$0xff]
    %v9552 = vld [vmem:[#allocation6 + $0xbd0] sm:$0xff]
    %v9553 = vld [vmem:[#allocation6 + $0xbd8] sm:$0xff]
    %v9554 = vld [vmem:[#allocation6 + $0xbe0] sm:$0xff]
    %v9555 = vld [vmem:[#allocation6 + $0xbe8] sm:$0xff]
    %v9556 = vld [vmem:[#allocation6 + $0xbf0] sm:$0xff]
    %v9557 = vld [vmem:[#allocation6 + $0xbf8] sm:$0xff]
    %v9558 = vld [vmem:[#allocation6 + $0xc00] sm:$0xff]
    %v9559 = vld [vmem:[#allocation6 + $0xc08] sm:$0xff]
    %v9560 = vld [vmem:[#allocation6 + $0xc10] sm:$0xff]
    %v9561 = vld [vmem:[#allocation6 + $0xc18] sm:$0xff]
    %v9562 = vld [vmem:[#allocation6 + $0xc20] sm:$0xff]
    %v9563 = vld [vmem:[#allocation6 + $0xc28] sm:$0xff]
    %v9564 = vld [vmem:[#allocation6 + $0xc30] sm:$0xff]
    %v9565 = vld [vmem:[#allocation6 + $0xc38] sm:$0xff]
    %v9566 = vld [vmem:[#allocation6 + $0xc40] sm:$0xff]
    %v9567 = vld [vmem:[#allocation6 + $0xc48] sm:$0xff]
    %v9568 = vld [vmem:[#allocation6 + $0xc50] sm:$0xff]
    %v9569 = vld [vmem:[#allocation6 + $0xc58] sm:$0xff]
    %v9570 = vld [vmem:[#allocation6 + $0xc60] sm:$0xff]
    %v9571 = vld [vmem:[#allocation6 + $0xc68] sm:$0xff]
    %v9572 = vld [vmem:[#allocation6 + $0xc70] sm:$0xff]
    %v9573 = vld [vmem:[#allocation6 + $0xc78] sm:$0xff]
    %v9574 = vld [vmem:[#allocation6 + $0xc80] sm:$0xff]
    %v9575 = vld [vmem:[#allocation6 + $0xc88] sm:$0xff]
    %v9576 = vld [vmem:[#allocation6 + $0xc90] sm:$0xff]
    %v9577 = vld [vmem:[#allocation6 + $0xc98] sm:$0xff]
    %v9578 = vld [vmem:[#allocation6 + $0xca0] sm:$0xff]
    %v9579 = vld [vmem:[#allocation6 + $0xca8] sm:$0xff]
    %v9580 = vld [vmem:[#allocation6 + $0xcb0] sm:$0xff]
    %v9581 = vld [vmem:[#allocation6 + $0xcb8] sm:$0xff]
    %v9582 = vld [vmem:[#allocation6 + $0xcc0] sm:$0xff]
    %v9583 = vld [vmem:[#allocation6 + $0xcc8] sm:$0xff]
    %v9584 = vld [vmem:[#allocation6 + $0xcd0] sm:$0xff]
    %v9585 = vld [vmem:[#allocation6 + $0xcd8] sm:$0xff]
    %v9586 = vld [vmem:[#allocation6 + $0xce0] sm:$0xff]
    %v9587 = vld [vmem:[#allocation6 + $0xce8] sm:$0xff]
    %v9588 = vld [vmem:[#allocation6 + $0xcf0] sm:$0xff]
    %v9589 = vld [vmem:[#allocation6 + $0xcf8] sm:$0xff]
    %v9590 = vld [vmem:[#allocation6 + $0xd00] sm:$0xff]
    %v9591 = vld [vmem:[#allocation6 + $0xd08] sm:$0xff]
    %v9592 = vld [vmem:[#allocation6 + $0xd10] sm:$0xff]
    %v9593 = vld [vmem:[#allocation6 + $0xd18] sm:$0xff]
    %v9594 = vld [vmem:[#allocation6 + $0xd20] sm:$0xff]
    %v9595 = vld [vmem:[#allocation6 + $0xd28] sm:$0xff]
    %v9596 = vld [vmem:[#allocation6 + $0xd30] sm:$0xff]
    %v9597 = vld [vmem:[#allocation6 + $0xd38] sm:$0xff]
    %v9598 = vld [vmem:[#allocation6 + $0xd40] sm:$0xff]
    %v9599 = vld [vmem:[#allocation6 + $0xd48] sm:$0xff]
    %v9600 = vld [vmem:[#allocation6 + $0xd50] sm:$0xff]
    %v9601 = vld [vmem:[#allocation6 + $0xd58] sm:$0xff]
    %v9602 = vld [vmem:[#allocation6 + $0xd60] sm:$0xff]
    %v9603 = vld [vmem:[#allocation6 + $0xd68] sm:$0xff]
    %v9604 = vld [vmem:[#allocation6 + $0xd70] sm:$0xff]
    %v9605 = vld [vmem:[#allocation6 + $0xd78] sm:$0xff]
    %v9606 = vld [vmem:[#allocation6 + $0xd80] sm:$0xff]
    %v9607 = vld [vmem:[#allocation6 + $0xd88] sm:$0xff]
    %v9608 = vld [vmem:[#allocation6 + $0xd90] sm:$0xff]
    %v9609 = vld [vmem:[#allocation6 + $0xd98] sm:$0xff]
    %v9610 = vld [vmem:[#allocation6 + $0xda0] sm:$0xff]
    %v9611 = vld [vmem:[#allocation6 + $0xda8] sm:$0xff]
    %v9612 = vld [vmem:[#allocation6 + $0xdb0] sm:$0xff]
    %v9613 = vld [vmem:[#allocation6 + $0xdb8] sm:$0xff]
    %v9614 = vld [vmem:[#allocation6 + $0xdc0] sm:$0xff]
    %v9615 = vld [vmem:[#allocation6 + $0xdc8] sm:$0xff]
    %v9616 = vld [vmem:[#allocation6 + $0xdd0] sm:$0xff]
    %v9617 = vld [vmem:[#allocation6 + $0xdd8] sm:$0xff]
    %v9618 = vld [vmem:[#allocation6 + $0xde0] sm:$0xff]
    %v9619 = vld [vmem:[#allocation6 + $0xde8] sm:$0xff]
    %v9620 = vld [vmem:[#allocation6 + $0xdf0] sm:$0xff]
    %v9621 = vld [vmem:[#allocation6 + $0xdf8] sm:$0xff]
    %v9622 = vld [vmem:[#allocation6 + $0xe00] sm:$0xff]
    %v9623 = vld [vmem:[#allocation6 + $0xe08] sm:$0xff]
    %v9624 = vld [vmem:[#allocation6 + $0xe10] sm:$0xff]
    %v9625 = vld [vmem:[#allocation6 + $0xe18] sm:$0xff]
    %v9626 = vld [vmem:[#allocation6 + $0xe20] sm:$0xff]
    %v9627 = vld [vmem:[#allocation6 + $0xe28] sm:$0xff]
    %v9628 = vld [vmem:[#allocation6 + $0xe30] sm:$0xff]
    %v9629 = vld [vmem:[#allocation6 + $0xe38] sm:$0xff]
    %v9630 = vld [vmem:[#allocation6 + $0xe40] sm:$0xff]
    %v9631 = vld [vmem:[#allocation6 + $0xe48] sm:$0xff]
    %v9632 = vld [vmem:[#allocation6 + $0xe50] sm:$0xff]
    %v9633 = vld [vmem:[#allocation6 + $0xe58] sm:$0xff]
    %v9634 = vld [vmem:[#allocation6 + $0xe60] sm:$0xff]
    %v9635 = vld [vmem:[#allocation6 + $0xe68] sm:$0xff]
    %v9636 = vld [vmem:[#allocation6 + $0xe70] sm:$0xff]
    %v9637 = vld [vmem:[#allocation6 + $0xe78] sm:$0xff]
    %v9638 = vld [vmem:[#allocation6 + $0xe80] sm:$0xff]
    %v9639 = vld [vmem:[#allocation6 + $0xe88] sm:$0xff]
    %v9640 = vld [vmem:[#allocation6 + $0xe90] sm:$0xff]
    %v9641 = vld [vmem:[#allocation6 + $0xe98] sm:$0xff]
    %v9642 = vld [vmem:[#allocation6 + $0xea0] sm:$0xff]
    %v9643 = vld [vmem:[#allocation6 + $0xea8] sm:$0xff]
    %v9644 = vld [vmem:[#allocation6 + $0xeb0] sm:$0xff]
    %v9645 = vld [vmem:[#allocation6 + $0xeb8] sm:$0xff]
    %v9646 = vld [vmem:[#allocation6 + $0xec0] sm:$0xff]
    %v9647 = vld [vmem:[#allocation6 + $0xec8] sm:$0xff]
    %v9648 = vld [vmem:[#allocation6 + $0xed0] sm:$0xff]
    %v9649 = vld [vmem:[#allocation6 + $0xed8] sm:$0xff]
    %v9650 = vld [vmem:[#allocation6 + $0xee0] sm:$0xff]
    %v9651 = vld [vmem:[#allocation6 + $0xee8] sm:$0xff]
    %v9652 = vld [vmem:[#allocation6 + $0xef0] sm:$0xff]
    %v9653 = vld [vmem:[#allocation6 + $0xef8] sm:$0xff]
    %v9654 = vld [vmem:[#allocation6 + $0xf00] sm:$0xff]
    %v9655 = vld [vmem:[#allocation6 + $0xf08] sm:$0xff]
    %v9656 = vld [vmem:[#allocation6 + $0xf10] sm:$0xff]
    %v9657 = vld [vmem:[#allocation6 + $0xf18] sm:$0xff]
    %v9658 = vld [vmem:[#allocation6 + $0xf20] sm:$0xff]
    %v9659 = vld [vmem:[#allocation6 + $0xf28] sm:$0xff]
    %v9660 = vld [vmem:[#allocation6 + $0xf30] sm:$0xff]
    %v9661 = vld [vmem:[#allocation6 + $0xf38] sm:$0xff]
    %v9662 = vld [vmem:[#allocation6 + $0xf40] sm:$0xff]
    %v9663 = vld [vmem:[#allocation6 + $0xf48] sm:$0xff]
    %v9664 = vld [vmem:[#allocation6 + $0xf50] sm:$0xff]
    %v9665 = vld [vmem:[#allocation6 + $0xf58] sm:$0xff]
    %v9666 = vld [vmem:[#allocation6 + $0xf60] sm:$0xff]
    %v9667 = vld [vmem:[#allocation6 + $0xf68] sm:$0xff]
    %v9668 = vld [vmem:[#allocation6 + $0xf70] sm:$0xff]
    %v9669 = vld [vmem:[#allocation6 + $0xf78] sm:$0xff]
    %v9670 = vld [vmem:[#allocation6 + $0xf80] sm:$0xff]
    %v9671 = vld [vmem:[#allocation6 + $0xf88] sm:$0xff]
    %v9672 = vld [vmem:[#allocation6 + $0xf90] sm:$0xff]
    %v9673 = vld [vmem:[#allocation6 + $0xf98] sm:$0xff]
    %v9674 = vld [vmem:[#allocation6 + $0xfa0] sm:$0xff]
    %v9675 = vld [vmem:[#allocation6 + $0xfa8] sm:$0xff]
    %v9676 = vld [vmem:[#allocation6 + $0xfb0] sm:$0xff]
    %v9677 = vld [vmem:[#allocation6 + $0xfb8] sm:$0xff]
    %v9678 = vld [vmem:[#allocation6 + $0xfc0] sm:$0xff]
    %v9679 = vld [vmem:[#allocation6 + $0xfc8] sm:$0xff]
    %v9680 = vld [vmem:[#allocation6 + $0xfd0] sm:$0xff]
    %v9681 = vld [vmem:[#allocation6 + $0xfd8] sm:$0xff]
    %v9682 = vld [vmem:[#allocation6 + $0xfe0] sm:$0xff]
    %v9683 = vld [vmem:[#allocation6 + $0xfe8] sm:$0xff]
    %v9684 = vld [vmem:[#allocation6 + $0xff0] sm:$0xff]
    %v9685 = vld [vmem:[#allocation6 + $0xff8] sm:$0xff]
    %v9686 = vld [vmem:[#allocation7] sm:$0xff]
    %v9688 = vlaneseq
    %v9689 = vshrl.u32 %v9688, 7
    %v9690 = vsub.s32 0, %v9689
    %v9691 = vrot.slane %v9686, %v9690
    %v9692 = vlaneseq
    %v9693 = vshrl.u32 %v9692, 7
    %v9694 = vsub.s32 1, %v9693
    %v9695 = vrot.slane %v9686, %v9694
    %v9696 = vlaneseq
    %v9697 = vshrl.u32 %v9696, 7
    %v9698 = vsub.s32 2, %v9697
    %v9699 = vrot.slane %v9686, %v9698
    %v9700 = vlaneseq
    %v9701 = vshrl.u32 %v9700, 7
    %v9702 = vsub.s32 3, %v9701
    %v9703 = vrot.slane %v9686, %v9702
    %v9704 = vlaneseq
    %v9705 = vshrl.u32 %v9704, 7
    %v9706 = vsub.s32 4, %v9705
    %v9707 = vrot.slane %v9686, %v9706
    %v9708 = vlaneseq
    %v9709 = vshrl.u32 %v9708, 7
    %v9710 = vsub.s32 5, %v9709
    %v9711 = vrot.slane %v9686, %v9710
    %v9712 = vlaneseq
    %v9713 = vshrl.u32 %v9712, 7
    %v9714 = vsub.s32 6, %v9713
    %v9715 = vrot.slane %v9686, %v9714
    %v9716 = vlaneseq
    %v9717 = vshrl.u32 %v9716, 7
    %v9718 = vsub.s32 7, %v9717
    %v9719 = vrot.slane %v9686, %v9718
    %v10240 = vunpack.c.l.b16 %v9174
    %v10241 = vunpack.c.h.b16 %v9174
    %v10242 = vunpack.c.l.b16 %v9175
    %v10243 = vunpack.c.h.b16 %v9175
    %v10244 = vunpack.c.l.b16 %v9176
    %v10245 = vunpack.c.h.b16 %v9176
    %v10246 = vunpack.c.l.b16 %v9177
    %v10247 = vunpack.c.h.b16 %v9177
    %v10248 = vunpack.c.l.b16 %v9178
    %v10249 = vunpack.c.h.b16 %v9178
    %v10250 = vunpack.c.l.b16 %v9179
    %v10251 = vunpack.c.h.b16 %v9179
    %v10252 = vunpack.c.l.b16 %v9180
    %v10253 = vunpack.c.h.b16 %v9180
    %v10254 = vunpack.c.l.b16 %v9181
    %v10255 = vunpack.c.h.b16 %v9181
    %v10256 = vunpack.c.l.b16 %v9182
    %v10257 = vunpack.c.h.b16 %v9182
    %v10258 = vunpack.c.l.b16 %v9183
    %v10259 = vunpack.c.h.b16 %v9183
    %v10260 = vunpack.c.l.b16 %v9184
    %v10261 = vunpack.c.h.b16 %v9184
    %v10262 = vunpack.c.l.b16 %v9185
    %v10263 = vunpack.c.h.b16 %v9185
    %v10264 = vunpack.c.l.b16 %v9186
    %v10265 = vunpack.c.h.b16 %v9186
    %v10266 = vunpack.c.l.b16 %v9187
    %v10267 = vunpack.c.h.b16 %v9187
    %v10268 = vunpack.c.l.b16 %v9188
    %v10269 = vunpack.c.h.b16 %v9188
    %v10270 = vunpack.c.l.b16 %v9189
    %v10271 = vunpack.c.h.b16 %v9189
    %v10272 = vunpack.c.l.b16 %v9190
    %v10273 = vunpack.c.h.b16 %v9190
    %v10274 = vunpack.c.l.b16 %v9191
    %v10275 = vunpack.c.h.b16 %v9191
    %v10276 = vunpack.c.l.b16 %v9192
    %v10277 = vunpack.c.h.b16 %v9192
    %v10278 = vunpack.c.l.b16 %v9193
    %v10279 = vunpack.c.h.b16 %v9193
    %v10280 = vunpack.c.l.b16 %v9194
    %v10281 = vunpack.c.h.b16 %v9194
    %v10282 = vunpack.c.l.b16 %v9195
    %v10283 = vunpack.c.h.b16 %v9195
    %v10284 = vunpack.c.l.b16 %v9196
    %v10285 = vunpack.c.h.b16 %v9196
    %v10286 = vunpack.c.l.b16 %v9197
    %v10287 = vunpack.c.h.b16 %v9197
    %v10288 = vunpack.c.l.b16 %v9198
    %v10289 = vunpack.c.h.b16 %v9198
    %v10290 = vunpack.c.l.b16 %v9199
    %v10291 = vunpack.c.h.b16 %v9199
    %v10292 = vunpack.c.l.b16 %v9200
    %v10293 = vunpack.c.h.b16 %v9200
    %v10294 = vunpack.c.l.b16 %v9201
    %v10295 = vunpack.c.h.b16 %v9201
    %v10296 = vunpack.c.l.b16 %v9202
    %v10297 = vunpack.c.h.b16 %v9202
    %v10298 = vunpack.c.l.b16 %v9203
    %v10299 = vunpack.c.h.b16 %v9203
    %v10300 = vunpack.c.l.b16 %v9204
    %v10301 = vunpack.c.h.b16 %v9204
    %v10302 = vunpack.c.l.b16 %v9205
    %v10303 = vunpack.c.h.b16 %v9205
    %v10304 = vunpack.c.l.b16 %v9206
    %v10305 = vunpack.c.h.b16 %v9206
    %v10306 = vunpack.c.l.b16 %v9207
    %v10307 = vunpack.c.h.b16 %v9207
    %v10308 = vunpack.c.l.b16 %v9208
    %v10309 = vunpack.c.h.b16 %v9208
    %v10310 = vunpack.c.l.b16 %v9209
    %v10311 = vunpack.c.h.b16 %v9209
    %v10312 = vunpack.c.l.b16 %v9210
    %v10313 = vunpack.c.h.b16 %v9210
    %v10314 = vunpack.c.l.b16 %v9211
    %v10315 = vunpack.c.h.b16 %v9211
    %v10316 = vunpack.c.l.b16 %v9212
    %v10317 = vunpack.c.h.b16 %v9212
    %v10318 = vunpack.c.l.b16 %v9213
    %v10319 = vunpack.c.h.b16 %v9213
    %v10320 = vunpack.c.l.b16 %v9214
    %v10321 = vunpack.c.h.b16 %v9214
    %v10322 = vunpack.c.l.b16 %v9215
    %v10323 = vunpack.c.h.b16 %v9215
    %v10324 = vunpack.c.l.b16 %v9216
    %v10325 = vunpack.c.h.b16 %v9216
    %v10326 = vunpack.c.l.b16 %v9217
    %v10327 = vunpack.c.h.b16 %v9217
    %v10328 = vunpack.c.l.b16 %v9218
    %v10329 = vunpack.c.h.b16 %v9218
    %v10330 = vunpack.c.l.b16 %v9219
    %v10331 = vunpack.c.h.b16 %v9219
    %v10332 = vunpack.c.l.b16 %v9220
    %v10333 = vunpack.c.h.b16 %v9220
    %v10334 = vunpack.c.l.b16 %v9221
    %v10335 = vunpack.c.h.b16 %v9221
    %v10336 = vunpack.c.l.b16 %v9222
    %v10337 = vunpack.c.h.b16 %v9222
    %v10338 = vunpack.c.l.b16 %v9223
    %v10339 = vunpack.c.h.b16 %v9223
    %v10340 = vunpack.c.l.b16 %v9224
    %v10341 = vunpack.c.h.b16 %v9224
    %v10342 = vunpack.c.l.b16 %v9225
    %v10343 = vunpack.c.h.b16 %v9225
    %v10344 = vunpack.c.l.b16 %v9226
    %v10345 = vunpack.c.h.b16 %v9226
    %v10346 = vunpack.c.l.b16 %v9227
    %v10347 = vunpack.c.h.b16 %v9227
    %v10348 = vunpack.c.l.b16 %v9228
    %v10349 = vunpack.c.h.b16 %v9228
    %v10350 = vunpack.c.l.b16 %v9229
    %v10351 = vunpack.c.h.b16 %v9229
    %v10352 = vunpack.c.l.b16 %v9230
    %v10353 = vunpack.c.h.b16 %v9230
    %v10354 = vunpack.c.l.b16 %v9231
    %v10355 = vunpack.c.h.b16 %v9231
    %v10356 = vunpack.c.l.b16 %v9232
    %v10357 = vunpack.c.h.b16 %v9232
    %v10358 = vunpack.c.l.b16 %v9233
    %v10359 = vunpack.c.h.b16 %v9233
    %v10360 = vunpack.c.l.b16 %v9234
    %v10361 = vunpack.c.h.b16 %v9234
    %v10362 = vunpack.c.l.b16 %v9235
    %v10363 = vunpack.c.h.b16 %v9235
    %v10364 = vunpack.c.l.b16 %v9236
    %v10365 = vunpack.c.h.b16 %v9236
    %v10366 = vunpack.c.l.b16 %v9237
    %v10367 = vunpack.c.h.b16 %v9237
    %v10368 = vunpack.c.l.b16 %v9238
    %v10369 = vunpack.c.h.b16 %v9238
    %v10370 = vunpack.c.l.b16 %v9239
    %v10371 = vunpack.c.h.b16 %v9239
    %v10372 = vunpack.c.l.b16 %v9240
    %v10373 = vunpack.c.h.b16 %v9240
    %v10374 = vunpack.c.l.b16 %v9241
    %v10375 = vunpack.c.h.b16 %v9241
    %v10376 = vunpack.c.l.b16 %v9242
    %v10377 = vunpack.c.h.b16 %v9242
    %v10378 = vunpack.c.l.b16 %v9243
    %v10379 = vunpack.c.h.b16 %v9243
    %v10380 = vunpack.c.l.b16 %v9244
    %v10381 = vunpack.c.h.b16 %v9244
    %v10382 = vunpack.c.l.b16 %v9245
    %v10383 = vunpack.c.h.b16 %v9245
    %v10384 = vunpack.c.l.b16 %v9246
    %v10385 = vunpack.c.h.b16 %v9246
    %v10386 = vunpack.c.l.b16 %v9247
    %v10387 = vunpack.c.h.b16 %v9247
    %v10388 = vunpack.c.l.b16 %v9248
    %v10389 = vunpack.c.h.b16 %v9248
    %v10390 = vunpack.c.l.b16 %v9249
    %v10391 = vunpack.c.h.b16 %v9249
    %v10392 = vunpack.c.l.b16 %v9250
    %v10393 = vunpack.c.h.b16 %v9250
    %v10394 = vunpack.c.l.b16 %v9251
    %v10395 = vunpack.c.h.b16 %v9251
    %v10396 = vunpack.c.l.b16 %v9252
    %v10397 = vunpack.c.h.b16 %v9252
    %v10398 = vunpack.c.l.b16 %v9253
    %v10399 = vunpack.c.h.b16 %v9253
    %v10400 = vunpack.c.l.b16 %v9254
    %v10401 = vunpack.c.h.b16 %v9254
    %v10402 = vunpack.c.l.b16 %v9255
    %v10403 = vunpack.c.h.b16 %v9255
    %v10404 = vunpack.c.l.b16 %v9256
    %v10405 = vunpack.c.h.b16 %v9256
    %v10406 = vunpack.c.l.b16 %v9257
    %v10407 = vunpack.c.h.b16 %v9257
    %v10408 = vunpack.c.l.b16 %v9258
    %v10409 = vunpack.c.h.b16 %v9258
    %v10410 = vunpack.c.l.b16 %v9259
    %v10411 = vunpack.c.h.b16 %v9259
    %v10412 = vunpack.c.l.b16 %v9260
    %v10413 = vunpack.c.h.b16 %v9260
    %v10414 = vunpack.c.l.b16 %v9261
    %v10415 = vunpack.c.h.b16 %v9261
    %v10416 = vunpack.c.l.b16 %v9262
    %v10417 = vunpack.c.h.b16 %v9262
    %v10418 = vunpack.c.l.b16 %v9263
    %v10419 = vunpack.c.h.b16 %v9263
    %v10420 = vunpack.c.l.b16 %v9264
    %v10421 = vunpack.c.h.b16 %v9264
    %v10422 = vunpack.c.l.b16 %v9265
    %v10423 = vunpack.c.h.b16 %v9265
    %v10424 = vunpack.c.l.b16 %v9266
    %v10425 = vunpack.c.h.b16 %v9266
    %v10426 = vunpack.c.l.b16 %v9267
    %v10427 = vunpack.c.h.b16 %v9267
    %v10428 = vunpack.c.l.b16 %v9268
    %v10429 = vunpack.c.h.b16 %v9268
    %v10430 = vunpack.c.l.b16 %v9269
    %v10431 = vunpack.c.h.b16 %v9269
    %v10432 = vunpack.c.l.b16 %v9270
    %v10433 = vunpack.c.h.b16 %v9270
    %v10434 = vunpack.c.l.b16 %v9271
    %v10435 = vunpack.c.h.b16 %v9271
    %v10436 = vunpack.c.l.b16 %v9272
    %v10437 = vunpack.c.h.b16 %v9272
    %v10438 = vunpack.c.l.b16 %v9273
    %v10439 = vunpack.c.h.b16 %v9273
    %v10440 = vunpack.c.l.b16 %v9274
    %v10441 = vunpack.c.h.b16 %v9274
    %v10442 = vunpack.c.l.b16 %v9275
    %v10443 = vunpack.c.h.b16 %v9275
    %v10444 = vunpack.c.l.b16 %v9276
    %v10445 = vunpack.c.h.b16 %v9276
    %v10446 = vunpack.c.l.b16 %v9277
    %v10447 = vunpack.c.h.b16 %v9277
    %v10448 = vunpack.c.l.b16 %v9278
    %v10449 = vunpack.c.h.b16 %v9278
    %v10450 = vunpack.c.l.b16 %v9279
    %v10451 = vunpack.c.h.b16 %v9279
    %v10452 = vunpack.c.l.b16 %v9280
    %v10453 = vunpack.c.h.b16 %v9280
    %v10454 = vunpack.c.l.b16 %v9281
    %v10455 = vunpack.c.h.b16 %v9281
    %v10456 = vunpack.c.l.b16 %v9282
    %v10457 = vunpack.c.h.b16 %v9282
    %v10458 = vunpack.c.l.b16 %v9283
    %v10459 = vunpack.c.h.b16 %v9283
    %v10460 = vunpack.c.l.b16 %v9284
    %v10461 = vunpack.c.h.b16 %v9284
    %v10462 = vunpack.c.l.b16 %v9285
    %v10463 = vunpack.c.h.b16 %v9285
    %v10464 = vunpack.c.l.b16 %v9286
    %v10465 = vunpack.c.h.b16 %v9286
    %v10466 = vunpack.c.l.b16 %v9287
    %v10467 = vunpack.c.h.b16 %v9287
    %v10468 = vunpack.c.l.b16 %v9288
    %v10469 = vunpack.c.h.b16 %v9288
    %v10470 = vunpack.c.l.b16 %v9289
    %v10471 = vunpack.c.h.b16 %v9289
    %v10472 = vunpack.c.l.b16 %v9290
    %v10473 = vunpack.c.h.b16 %v9290
    %v10474 = vunpack.c.l.b16 %v9291
    %v10475 = vunpack.c.h.b16 %v9291
    %v10476 = vunpack.c.l.b16 %v9292
    %v10477 = vunpack.c.h.b16 %v9292
    %v10478 = vunpack.c.l.b16 %v9293
    %v10479 = vunpack.c.h.b16 %v9293
    %v10480 = vunpack.c.l.b16 %v9294
    %v10481 = vunpack.c.h.b16 %v9294
    %v10482 = vunpack.c.l.b16 %v9295
    %v10483 = vunpack.c.h.b16 %v9295
    %v10484 = vunpack.c.l.b16 %v9296
    %v10485 = vunpack.c.h.b16 %v9296
    %v10486 = vunpack.c.l.b16 %v9297
    %v10487 = vunpack.c.h.b16 %v9297
    %v10488 = vunpack.c.l.b16 %v9298
    %v10489 = vunpack.c.h.b16 %v9298
    %v10490 = vunpack.c.l.b16 %v9299
    %v10491 = vunpack.c.h.b16 %v9299
    %v10492 = vunpack.c.l.b16 %v9300
    %v10493 = vunpack.c.h.b16 %v9300
    %v10494 = vunpack.c.l.b16 %v9301
    %v10495 = vunpack.c.h.b16 %v9301
    %v10496 = vunpack.c.l.b16 %v9302
    %v10497 = vunpack.c.h.b16 %v9302
    %v10498 = vunpack.c.l.b16 %v9303
    %v10499 = vunpack.c.h.b16 %v9303
    %v10500 = vunpack.c.l.b16 %v9304
    %v10501 = vunpack.c.h.b16 %v9304
    %v10502 = vunpack.c.l.b16 %v9305
    %v10503 = vunpack.c.h.b16 %v9305
    %v10504 = vunpack.c.l.b16 %v9306
    %v10505 = vunpack.c.h.b16 %v9306
    %v10506 = vunpack.c.l.b16 %v9307
    %v10507 = vunpack.c.h.b16 %v9307
    %v10508 = vunpack.c.l.b16 %v9308
    %v10509 = vunpack.c.h.b16 %v9308
    %v10510 = vunpack.c.l.b16 %v9309
    %v10511 = vunpack.c.h.b16 %v9309
    %v10512 = vunpack.c.l.b16 %v9310
    %v10513 = vunpack.c.h.b16 %v9310
    %v10514 = vunpack.c.l.b16 %v9311
    %v10515 = vunpack.c.h.b16 %v9311
    %v10516 = vunpack.c.l.b16 %v9312
    %v10517 = vunpack.c.h.b16 %v9312
    %v10518 = vunpack.c.l.b16 %v9313
    %v10519 = vunpack.c.h.b16 %v9313
    %v10520 = vunpack.c.l.b16 %v9314
    %v10521 = vunpack.c.h.b16 %v9314
    %v10522 = vunpack.c.l.b16 %v9315
    %v10523 = vunpack.c.h.b16 %v9315
    %v10524 = vunpack.c.l.b16 %v9316
    %v10525 = vunpack.c.h.b16 %v9316
    %v10526 = vunpack.c.l.b16 %v9317
    %v10527 = vunpack.c.h.b16 %v9317
    %v10528 = vunpack.c.l.b16 %v9318
    %v10529 = vunpack.c.h.b16 %v9318
    %v10530 = vunpack.c.l.b16 %v9319
    %v10531 = vunpack.c.h.b16 %v9319
    %v10532 = vunpack.c.l.b16 %v9320
    %v10533 = vunpack.c.h.b16 %v9320
    %v10534 = vunpack.c.l.b16 %v9321
    %v10535 = vunpack.c.h.b16 %v9321
    %v10536 = vunpack.c.l.b16 %v9322
    %v10537 = vunpack.c.h.b16 %v9322
    %v10538 = vunpack.c.l.b16 %v9323
    %v10539 = vunpack.c.h.b16 %v9323
    %v10540 = vunpack.c.l.b16 %v9324
    %v10541 = vunpack.c.h.b16 %v9324
    %v10542 = vunpack.c.l.b16 %v9325
    %v10543 = vunpack.c.h.b16 %v9325
    %v10544 = vunpack.c.l.b16 %v9326
    %v10545 = vunpack.c.h.b16 %v9326
    %v10546 = vunpack.c.l.b16 %v9327
    %v10547 = vunpack.c.h.b16 %v9327
    %v10548 = vunpack.c.l.b16 %v9328
    %v10549 = vunpack.c.h.b16 %v9328
    %v10550 = vunpack.c.l.b16 %v9329
    %v10551 = vunpack.c.h.b16 %v9329
    %v10552 = vunpack.c.l.b16 %v9330
    %v10553 = vunpack.c.h.b16 %v9330
    %v10554 = vunpack.c.l.b16 %v9331
    %v10555 = vunpack.c.h.b16 %v9331
    %v10556 = vunpack.c.l.b16 %v9332
    %v10557 = vunpack.c.h.b16 %v9332
    %v10558 = vunpack.c.l.b16 %v9333
    %v10559 = vunpack.c.h.b16 %v9333
    %v10560 = vunpack.c.l.b16 %v9334
    %v10561 = vunpack.c.h.b16 %v9334
    %v10562 = vunpack.c.l.b16 %v9335
    %v10563 = vunpack.c.h.b16 %v9335
    %v10564 = vunpack.c.l.b16 %v9336
    %v10565 = vunpack.c.h.b16 %v9336
    %v10566 = vunpack.c.l.b16 %v9337
    %v10567 = vunpack.c.h.b16 %v9337
    %v10568 = vunpack.c.l.b16 %v9338
    %v10569 = vunpack.c.h.b16 %v9338
    %v10570 = vunpack.c.l.b16 %v9339
    %v10571 = vunpack.c.h.b16 %v9339
    %v10572 = vunpack.c.l.b16 %v9340
    %v10573 = vunpack.c.h.b16 %v9340
    %v10574 = vunpack.c.l.b16 %v9341
    %v10575 = vunpack.c.h.b16 %v9341
    %v10576 = vunpack.c.l.b16 %v9342
    %v10577 = vunpack.c.h.b16 %v9342
    %v10578 = vunpack.c.l.b16 %v9343
    %v10579 = vunpack.c.h.b16 %v9343
    %v10580 = vunpack.c.l.b16 %v9344
    %v10581 = vunpack.c.h.b16 %v9344
    %v10582 = vunpack.c.l.b16 %v9345
    %v10583 = vunpack.c.h.b16 %v9345
    %v10584 = vunpack.c.l.b16 %v9346
    %v10585 = vunpack.c.h.b16 %v9346
    %v10586 = vunpack.c.l.b16 %v9347
    %v10587 = vunpack.c.h.b16 %v9347
    %v10588 = vunpack.c.l.b16 %v9348
    %v10589 = vunpack.c.h.b16 %v9348
    %v10590 = vunpack.c.l.b16 %v9349
    %v10591 = vunpack.c.h.b16 %v9349
    %v10592 = vunpack.c.l.b16 %v9350
    %v10593 = vunpack.c.h.b16 %v9350
    %v10594 = vunpack.c.l.b16 %v9351
    %v10595 = vunpack.c.h.b16 %v9351
    %v10596 = vunpack.c.l.b16 %v9352
    %v10597 = vunpack.c.h.b16 %v9352
    %v10598 = vunpack.c.l.b16 %v9353
    %v10599 = vunpack.c.h.b16 %v9353
    %v10600 = vunpack.c.l.b16 %v9354
    %v10601 = vunpack.c.h.b16 %v9354
    %v10602 = vunpack.c.l.b16 %v9355
    %v10603 = vunpack.c.h.b16 %v9355
    %v10604 = vunpack.c.l.b16 %v9356
    %v10605 = vunpack.c.h.b16 %v9356
    %v10606 = vunpack.c.l.b16 %v9357
    %v10607 = vunpack.c.h.b16 %v9357
    %v10608 = vunpack.c.l.b16 %v9358
    %v10609 = vunpack.c.h.b16 %v9358
    %v10610 = vunpack.c.l.b16 %v9359
    %v10611 = vunpack.c.h.b16 %v9359
    %v10612 = vunpack.c.l.b16 %v9360
    %v10613 = vunpack.c.h.b16 %v9360
    %v10614 = vunpack.c.l.b16 %v9361
    %v10615 = vunpack.c.h.b16 %v9361
    %v10616 = vunpack.c.l.b16 %v9362
    %v10617 = vunpack.c.h.b16 %v9362
    %v10618 = vunpack.c.l.b16 %v9363
    %v10619 = vunpack.c.h.b16 %v9363
    %v10620 = vunpack.c.l.b16 %v9364
    %v10621 = vunpack.c.h.b16 %v9364
    %v10622 = vunpack.c.l.b16 %v9365
    %v10623 = vunpack.c.h.b16 %v9365
    %v10624 = vunpack.c.l.b16 %v9366
    %v10625 = vunpack.c.h.b16 %v9366
    %v10626 = vunpack.c.l.b16 %v9367
    %v10627 = vunpack.c.h.b16 %v9367
    %v10628 = vunpack.c.l.b16 %v9368
    %v10629 = vunpack.c.h.b16 %v9368
    %v10630 = vunpack.c.l.b16 %v9369
    %v10631 = vunpack.c.h.b16 %v9369
    %v10632 = vunpack.c.l.b16 %v9370
    %v10633 = vunpack.c.h.b16 %v9370
    %v10634 = vunpack.c.l.b16 %v9371
    %v10635 = vunpack.c.h.b16 %v9371
    %v10636 = vunpack.c.l.b16 %v9372
    %v10637 = vunpack.c.h.b16 %v9372
    %v10638 = vunpack.c.l.b16 %v9373
    %v10639 = vunpack.c.h.b16 %v9373
    %v10640 = vunpack.c.l.b16 %v9374
    %v10641 = vunpack.c.h.b16 %v9374
    %v10642 = vunpack.c.l.b16 %v9375
    %v10643 = vunpack.c.h.b16 %v9375
    %v10644 = vunpack.c.l.b16 %v9376
    %v10645 = vunpack.c.h.b16 %v9376
    %v10646 = vunpack.c.l.b16 %v9377
    %v10647 = vunpack.c.h.b16 %v9377
    %v10648 = vunpack.c.l.b16 %v9378
    %v10649 = vunpack.c.h.b16 %v9378
    %v10650 = vunpack.c.l.b16 %v9379
    %v10651 = vunpack.c.h.b16 %v9379
    %v10652 = vunpack.c.l.b16 %v9380
    %v10653 = vunpack.c.h.b16 %v9380
    %v10654 = vunpack.c.l.b16 %v9381
    %v10655 = vunpack.c.h.b16 %v9381
    %v10656 = vunpack.c.l.b16 %v9382
    %v10657 = vunpack.c.h.b16 %v9382
    %v10658 = vunpack.c.l.b16 %v9383
    %v10659 = vunpack.c.h.b16 %v9383
    %v10660 = vunpack.c.l.b16 %v9384
    %v10661 = vunpack.c.h.b16 %v9384
    %v10662 = vunpack.c.l.b16 %v9385
    %v10663 = vunpack.c.h.b16 %v9385
    %v10664 = vunpack.c.l.b16 %v9386
    %v10665 = vunpack.c.h.b16 %v9386
    %v10666 = vunpack.c.l.b16 %v9387
    %v10667 = vunpack.c.h.b16 %v9387
    %v10668 = vunpack.c.l.b16 %v9388
    %v10669 = vunpack.c.h.b16 %v9388
    %v10670 = vunpack.c.l.b16 %v9389
    %v10671 = vunpack.c.h.b16 %v9389
    %v10672 = vunpack.c.l.b16 %v9390
    %v10673 = vunpack.c.h.b16 %v9390
    %v10674 = vunpack.c.l.b16 %v9391
    %v10675 = vunpack.c.h.b16 %v9391
    %v10676 = vunpack.c.l.b16 %v9392
    %v10677 = vunpack.c.h.b16 %v9392
    %v10678 = vunpack.c.l.b16 %v9393
    %v10679 = vunpack.c.h.b16 %v9393
    %v10680 = vunpack.c.l.b16 %v9394
    %v10681 = vunpack.c.h.b16 %v9394
    %v10682 = vunpack.c.l.b16 %v9395
    %v10683 = vunpack.c.h.b16 %v9395
    %v10684 = vunpack.c.l.b16 %v9396
    %v10685 = vunpack.c.h.b16 %v9396
    %v10686 = vunpack.c.l.b16 %v9397
    %v10687 = vunpack.c.h.b16 %v9397
    %v10688 = vunpack.c.l.b16 %v9398
    %v10689 = vunpack.c.h.b16 %v9398
    %v10690 = vunpack.c.l.b16 %v9399
    %v10691 = vunpack.c.h.b16 %v9399
    %v10692 = vunpack.c.l.b16 %v9400
    %v10693 = vunpack.c.h.b16 %v9400
    %v10694 = vunpack.c.l.b16 %v9401
    %v10695 = vunpack.c.h.b16 %v9401
    %v10696 = vunpack.c.l.b16 %v9402
    %v10697 = vunpack.c.h.b16 %v9402
    %v10698 = vunpack.c.l.b16 %v9403
    %v10699 = vunpack.c.h.b16 %v9403
    %v10700 = vunpack.c.l.b16 %v9404
    %v10701 = vunpack.c.h.b16 %v9404
    %v10702 = vunpack.c.l.b16 %v9405
    %v10703 = vunpack.c.h.b16 %v9405
    %v10704 = vunpack.c.l.b16 %v9406
    %v10705 = vunpack.c.h.b16 %v9406
    %v10706 = vunpack.c.l.b16 %v9407
    %v10707 = vunpack.c.h.b16 %v9407
    %v10708 = vunpack.c.l.b16 %v9408
    %v10709 = vunpack.c.h.b16 %v9408
    %v10710 = vunpack.c.l.b16 %v9409
    %v10711 = vunpack.c.h.b16 %v9409
    %v10712 = vunpack.c.l.b16 %v9410
    %v10713 = vunpack.c.h.b16 %v9410
    %v10714 = vunpack.c.l.b16 %v9411
    %v10715 = vunpack.c.h.b16 %v9411
    %v10716 = vunpack.c.l.b16 %v9412
    %v10717 = vunpack.c.h.b16 %v9412
    %v10718 = vunpack.c.l.b16 %v9413
    %v10719 = vunpack.c.h.b16 %v9413
    %v10720 = vunpack.c.l.b16 %v9414
    %v10721 = vunpack.c.h.b16 %v9414
    %v10722 = vunpack.c.l.b16 %v9415
    %v10723 = vunpack.c.h.b16 %v9415
    %v10724 = vunpack.c.l.b16 %v9416
    %v10725 = vunpack.c.h.b16 %v9416
    %v10726 = vunpack.c.l.b16 %v9417
    %v10727 = vunpack.c.h.b16 %v9417
    %v10728 = vunpack.c.l.b16 %v9418
    %v10729 = vunpack.c.h.b16 %v9418
    %v10730 = vunpack.c.l.b16 %v9419
    %v10731 = vunpack.c.h.b16 %v9419
    %v10732 = vunpack.c.l.b16 %v9420
    %v10733 = vunpack.c.h.b16 %v9420
    %v10734 = vunpack.c.l.b16 %v9421
    %v10735 = vunpack.c.h.b16 %v9421
    %v10736 = vunpack.c.l.b16 %v9422
    %v10737 = vunpack.c.h.b16 %v9422
    %v10738 = vunpack.c.l.b16 %v9423
    %v10739 = vunpack.c.h.b16 %v9423
    %v10740 = vunpack.c.l.b16 %v9424
    %v10741 = vunpack.c.h.b16 %v9424
    %v10742 = vunpack.c.l.b16 %v9425
    %v10743 = vunpack.c.h.b16 %v9425
    %v10744 = vunpack.c.l.b16 %v9426
    %v10745 = vunpack.c.h.b16 %v9426
    %v10746 = vunpack.c.l.b16 %v9427
    %v10747 = vunpack.c.h.b16 %v9427
    %v10748 = vunpack.c.l.b16 %v9428
    %v10749 = vunpack.c.h.b16 %v9428
    %v10750 = vunpack.c.l.b16 %v9429
    %v10751 = vunpack.c.h.b16 %v9429
    %v10752 = vunpack.c.l.b16 %v9430
    %v10753 = vunpack.c.h.b16 %v9430
    %v10754 = vunpack.c.l.b16 %v9431
    %v10755 = vunpack.c.h.b16 %v9431
    %v10756 = vunpack.c.l.b16 %v9432
    %v10757 = vunpack.c.h.b16 %v9432
    %v10758 = vunpack.c.l.b16 %v9433
    %v10759 = vunpack.c.h.b16 %v9433
    %v10760 = vunpack.c.l.b16 %v9434
    %v10761 = vunpack.c.h.b16 %v9434
    %v10762 = vunpack.c.l.b16 %v9435
    %v10763 = vunpack.c.h.b16 %v9435
    %v10764 = vunpack.c.l.b16 %v9436
    %v10765 = vunpack.c.h.b16 %v9436
    %v10766 = vunpack.c.l.b16 %v9437
    %v10767 = vunpack.c.h.b16 %v9437
    %v10768 = vunpack.c.l.b16 %v9438
    %v10769 = vunpack.c.h.b16 %v9438
    %v10770 = vunpack.c.l.b16 %v9439
    %v10771 = vunpack.c.h.b16 %v9439
    %v10772 = vunpack.c.l.b16 %v9440
    %v10773 = vunpack.c.h.b16 %v9440
    %v10774 = vunpack.c.l.b16 %v9441
    %v10775 = vunpack.c.h.b16 %v9441
    %v10776 = vunpack.c.l.b16 %v9442
    %v10777 = vunpack.c.h.b16 %v9442
    %v10778 = vunpack.c.l.b16 %v9443
    %v10779 = vunpack.c.h.b16 %v9443
    %v10780 = vunpack.c.l.b16 %v9444
    %v10781 = vunpack.c.h.b16 %v9444
    %v10782 = vunpack.c.l.b16 %v9445
    %v10783 = vunpack.c.h.b16 %v9445
    %v10784 = vunpack.c.l.b16 %v9446
    %v10785 = vunpack.c.h.b16 %v9446
    %v10786 = vunpack.c.l.b16 %v9447
    %v10787 = vunpack.c.h.b16 %v9447
    %v10788 = vunpack.c.l.b16 %v9448
    %v10789 = vunpack.c.h.b16 %v9448
    %v10790 = vunpack.c.l.b16 %v9449
    %v10791 = vunpack.c.h.b16 %v9449
    %v10792 = vunpack.c.l.b16 %v9450
    %v10793 = vunpack.c.h.b16 %v9450
    %v10794 = vunpack.c.l.b16 %v9451
    %v10795 = vunpack.c.h.b16 %v9451
    %v10796 = vunpack.c.l.b16 %v9452
    %v10797 = vunpack.c.h.b16 %v9452
    %v10798 = vunpack.c.l.b16 %v9453
    %v10799 = vunpack.c.h.b16 %v9453
    %v10800 = vunpack.c.l.b16 %v9454
    %v10801 = vunpack.c.h.b16 %v9454
    %v10802 = vunpack.c.l.b16 %v9455
    %v10803 = vunpack.c.h.b16 %v9455
    %v10804 = vunpack.c.l.b16 %v9456
    %v10805 = vunpack.c.h.b16 %v9456
    %v10806 = vunpack.c.l.b16 %v9457
    %v10807 = vunpack.c.h.b16 %v9457
    %v10808 = vunpack.c.l.b16 %v9458
    %v10809 = vunpack.c.h.b16 %v9458
    %v10810 = vunpack.c.l.b16 %v9459
    %v10811 = vunpack.c.h.b16 %v9459
    %v10812 = vunpack.c.l.b16 %v9460
    %v10813 = vunpack.c.h.b16 %v9460
    %v10814 = vunpack.c.l.b16 %v9461
    %v10815 = vunpack.c.h.b16 %v9461
    %v10816 = vunpack.c.l.b16 %v9462
    %v10817 = vunpack.c.h.b16 %v9462
    %v10818 = vunpack.c.l.b16 %v9463
    %v10819 = vunpack.c.h.b16 %v9463
    %v10820 = vunpack.c.l.b16 %v9464
    %v10821 = vunpack.c.h.b16 %v9464
    %v10822 = vunpack.c.l.b16 %v9465
    %v10823 = vunpack.c.h.b16 %v9465
    %v10824 = vunpack.c.l.b16 %v9466
    %v10825 = vunpack.c.h.b16 %v9466
    %v10826 = vunpack.c.l.b16 %v9467
    %v10827 = vunpack.c.h.b16 %v9467
    %v10828 = vunpack.c.l.b16 %v9468
    %v10829 = vunpack.c.h.b16 %v9468
    %v10830 = vunpack.c.l.b16 %v9469
    %v10831 = vunpack.c.h.b16 %v9469
    %v10832 = vunpack.c.l.b16 %v9470
    %v10833 = vunpack.c.h.b16 %v9470
    %v10834 = vunpack.c.l.b16 %v9471
    %v10835 = vunpack.c.h.b16 %v9471
    %v10836 = vunpack.c.l.b16 %v9472
    %v10837 = vunpack.c.h.b16 %v9472
    %v10838 = vunpack.c.l.b16 %v9473
    %v10839 = vunpack.c.h.b16 %v9473
    %v10840 = vunpack.c.l.b16 %v9474
    %v10841 = vunpack.c.h.b16 %v9474
    %v10842 = vunpack.c.l.b16 %v9475
    %v10843 = vunpack.c.h.b16 %v9475
    %v10844 = vunpack.c.l.b16 %v9476
    %v10845 = vunpack.c.h.b16 %v9476
    %v10846 = vunpack.c.l.b16 %v9477
    %v10847 = vunpack.c.h.b16 %v9477
    %v10848 = vunpack.c.l.b16 %v9478
    %v10849 = vunpack.c.h.b16 %v9478
    %v10850 = vunpack.c.l.b16 %v9479
    %v10851 = vunpack.c.h.b16 %v9479
    %v10852 = vunpack.c.l.b16 %v9480
    %v10853 = vunpack.c.h.b16 %v9480
    %v10854 = vunpack.c.l.b16 %v9481
    %v10855 = vunpack.c.h.b16 %v9481
    %v10856 = vunpack.c.l.b16 %v9482
    %v10857 = vunpack.c.h.b16 %v9482
    %v10858 = vunpack.c.l.b16 %v9483
    %v10859 = vunpack.c.h.b16 %v9483
    %v10860 = vunpack.c.l.b16 %v9484
    %v10861 = vunpack.c.h.b16 %v9484
    %v10862 = vunpack.c.l.b16 %v9485
    %v10863 = vunpack.c.h.b16 %v9485
    %v10864 = vunpack.c.l.b16 %v9486
    %v10865 = vunpack.c.h.b16 %v9486
    %v10866 = vunpack.c.l.b16 %v9487
    %v10867 = vunpack.c.h.b16 %v9487
    %v10868 = vunpack.c.l.b16 %v9488
    %v10869 = vunpack.c.h.b16 %v9488
    %v10870 = vunpack.c.l.b16 %v9489
    %v10871 = vunpack.c.h.b16 %v9489
    %v10872 = vunpack.c.l.b16 %v9490
    %v10873 = vunpack.c.h.b16 %v9490
    %v10874 = vunpack.c.l.b16 %v9491
    %v10875 = vunpack.c.h.b16 %v9491
    %v10876 = vunpack.c.l.b16 %v9492
    %v10877 = vunpack.c.h.b16 %v9492
    %v10878 = vunpack.c.l.b16 %v9493
    %v10879 = vunpack.c.h.b16 %v9493
    %v10880 = vunpack.c.l.b16 %v9494
    %v10881 = vunpack.c.h.b16 %v9494
    %v10882 = vunpack.c.l.b16 %v9495
    %v10883 = vunpack.c.h.b16 %v9495
    %v10884 = vunpack.c.l.b16 %v9496
    %v10885 = vunpack.c.h.b16 %v9496
    %v10886 = vunpack.c.l.b16 %v9497
    %v10887 = vunpack.c.h.b16 %v9497
    %v10888 = vunpack.c.l.b16 %v9498
    %v10889 = vunpack.c.h.b16 %v9498
    %v10890 = vunpack.c.l.b16 %v9499
    %v10891 = vunpack.c.h.b16 %v9499
    %v10892 = vunpack.c.l.b16 %v9500
    %v10893 = vunpack.c.h.b16 %v9500
    %v10894 = vunpack.c.l.b16 %v9501
    %v10895 = vunpack.c.h.b16 %v9501
    %v10896 = vunpack.c.l.b16 %v9502
    %v10897 = vunpack.c.h.b16 %v9502
    %v10898 = vunpack.c.l.b16 %v9503
    %v10899 = vunpack.c.h.b16 %v9503
    %v10900 = vunpack.c.l.b16 %v9504
    %v10901 = vunpack.c.h.b16 %v9504
    %v10902 = vunpack.c.l.b16 %v9505
    %v10903 = vunpack.c.h.b16 %v9505
    %v10904 = vunpack.c.l.b16 %v9506
    %v10905 = vunpack.c.h.b16 %v9506
    %v10906 = vunpack.c.l.b16 %v9507
    %v10907 = vunpack.c.h.b16 %v9507
    %v10908 = vunpack.c.l.b16 %v9508
    %v10909 = vunpack.c.h.b16 %v9508
    %v10910 = vunpack.c.l.b16 %v9509
    %v10911 = vunpack.c.h.b16 %v9509
    %v10912 = vunpack.c.l.b16 %v9510
    %v10913 = vunpack.c.h.b16 %v9510
    %v10914 = vunpack.c.l.b16 %v9511
    %v10915 = vunpack.c.h.b16 %v9511
    %v10916 = vunpack.c.l.b16 %v9512
    %v10917 = vunpack.c.h.b16 %v9512
    %v10918 = vunpack.c.l.b16 %v9513
    %v10919 = vunpack.c.h.b16 %v9513
    %v10920 = vunpack.c.l.b16 %v9514
    %v10921 = vunpack.c.h.b16 %v9514
    %v10922 = vunpack.c.l.b16 %v9515
    %v10923 = vunpack.c.h.b16 %v9515
    %v10924 = vunpack.c.l.b16 %v9516
    %v10925 = vunpack.c.h.b16 %v9516
    %v10926 = vunpack.c.l.b16 %v9517
    %v10927 = vunpack.c.h.b16 %v9517
    %v10928 = vunpack.c.l.b16 %v9518
    %v10929 = vunpack.c.h.b16 %v9518
    %v10930 = vunpack.c.l.b16 %v9519
    %v10931 = vunpack.c.h.b16 %v9519
    %v10932 = vunpack.c.l.b16 %v9520
    %v10933 = vunpack.c.h.b16 %v9520
    %v10934 = vunpack.c.l.b16 %v9521
    %v10935 = vunpack.c.h.b16 %v9521
    %v10936 = vunpack.c.l.b16 %v9522
    %v10937 = vunpack.c.h.b16 %v9522
    %v10938 = vunpack.c.l.b16 %v9523
    %v10939 = vunpack.c.h.b16 %v9523
    %v10940 = vunpack.c.l.b16 %v9524
    %v10941 = vunpack.c.h.b16 %v9524
    %v10942 = vunpack.c.l.b16 %v9525
    %v10943 = vunpack.c.h.b16 %v9525
    %v10944 = vunpack.c.l.b16 %v9526
    %v10945 = vunpack.c.h.b16 %v9526
    %v10946 = vunpack.c.l.b16 %v9527
    %v10947 = vunpack.c.h.b16 %v9527
    %v10948 = vunpack.c.l.b16 %v9528
    %v10949 = vunpack.c.h.b16 %v9528
    %v10950 = vunpack.c.l.b16 %v9529
    %v10951 = vunpack.c.h.b16 %v9529
    %v10952 = vunpack.c.l.b16 %v9530
    %v10953 = vunpack.c.h.b16 %v9530
    %v10954 = vunpack.c.l.b16 %v9531
    %v10955 = vunpack.c.h.b16 %v9531
    %v10956 = vunpack.c.l.b16 %v9532
    %v10957 = vunpack.c.h.b16 %v9532
    %v10958 = vunpack.c.l.b16 %v9533
    %v10959 = vunpack.c.h.b16 %v9533
    %v10960 = vunpack.c.l.b16 %v9534
    %v10961 = vunpack.c.h.b16 %v9534
    %v10962 = vunpack.c.l.b16 %v9535
    %v10963 = vunpack.c.h.b16 %v9535
    %v10964 = vunpack.c.l.b16 %v9536
    %v10965 = vunpack.c.h.b16 %v9536
    %v10966 = vunpack.c.l.b16 %v9537
    %v10967 = vunpack.c.h.b16 %v9537
    %v10968 = vunpack.c.l.b16 %v9538
    %v10969 = vunpack.c.h.b16 %v9538
    %v10970 = vunpack.c.l.b16 %v9539
    %v10971 = vunpack.c.h.b16 %v9539
    %v10972 = vunpack.c.l.b16 %v9540
    %v10973 = vunpack.c.h.b16 %v9540
    %v10974 = vunpack.c.l.b16 %v9541
    %v10975 = vunpack.c.h.b16 %v9541
    %v10976 = vunpack.c.l.b16 %v9542
    %v10977 = vunpack.c.h.b16 %v9542
    %v10978 = vunpack.c.l.b16 %v9543
    %v10979 = vunpack.c.h.b16 %v9543
    %v10980 = vunpack.c.l.b16 %v9544
    %v10981 = vunpack.c.h.b16 %v9544
    %v10982 = vunpack.c.l.b16 %v9545
    %v10983 = vunpack.c.h.b16 %v9545
    %v10984 = vunpack.c.l.b16 %v9546
    %v10985 = vunpack.c.h.b16 %v9546
    %v10986 = vunpack.c.l.b16 %v9547
    %v10987 = vunpack.c.h.b16 %v9547
    %v10988 = vunpack.c.l.b16 %v9548
    %v10989 = vunpack.c.h.b16 %v9548
    %v10990 = vunpack.c.l.b16 %v9549
    %v10991 = vunpack.c.h.b16 %v9549
    %v10992 = vunpack.c.l.b16 %v9550
    %v10993 = vunpack.c.h.b16 %v9550
    %v10994 = vunpack.c.l.b16 %v9551
    %v10995 = vunpack.c.h.b16 %v9551
    %v10996 = vunpack.c.l.b16 %v9552
    %v10997 = vunpack.c.h.b16 %v9552
    %v10998 = vunpack.c.l.b16 %v9553
    %v10999 = vunpack.c.h.b16 %v9553
    %v11000 = vunpack.c.l.b16 %v9554
    %v11001 = vunpack.c.h.b16 %v9554
    %v11002 = vunpack.c.l.b16 %v9555
    %v11003 = vunpack.c.h.b16 %v9555
    %v11004 = vunpack.c.l.b16 %v9556
    %v11005 = vunpack.c.h.b16 %v9556
    %v11006 = vunpack.c.l.b16 %v9557
    %v11007 = vunpack.c.h.b16 %v9557
    %v11008 = vunpack.c.l.b16 %v9558
    %v11009 = vunpack.c.h.b16 %v9558
    %v11010 = vunpack.c.l.b16 %v9559
    %v11011 = vunpack.c.h.b16 %v9559
    %v11012 = vunpack.c.l.b16 %v9560
    %v11013 = vunpack.c.h.b16 %v9560
    %v11014 = vunpack.c.l.b16 %v9561
    %v11015 = vunpack.c.h.b16 %v9561
    %v11016 = vunpack.c.l.b16 %v9562
    %v11017 = vunpack.c.h.b16 %v9562
    %v11018 = vunpack.c.l.b16 %v9563
    %v11019 = vunpack.c.h.b16 %v9563
    %v11020 = vunpack.c.l.b16 %v9564
    %v11021 = vunpack.c.h.b16 %v9564
    %v11022 = vunpack.c.l.b16 %v9565
    %v11023 = vunpack.c.h.b16 %v9565
    %v11024 = vunpack.c.l.b16 %v9566
    %v11025 = vunpack.c.h.b16 %v9566
    %v11026 = vunpack.c.l.b16 %v9567
    %v11027 = vunpack.c.h.b16 %v9567
    %v11028 = vunpack.c.l.b16 %v9568
    %v11029 = vunpack.c.h.b16 %v9568
    %v11030 = vunpack.c.l.b16 %v9569
    %v11031 = vunpack.c.h.b16 %v9569
    %v11032 = vunpack.c.l.b16 %v9570
    %v11033 = vunpack.c.h.b16 %v9570
    %v11034 = vunpack.c.l.b16 %v9571
    %v11035 = vunpack.c.h.b16 %v9571
    %v11036 = vunpack.c.l.b16 %v9572
    %v11037 = vunpack.c.h.b16 %v9572
    %v11038 = vunpack.c.l.b16 %v9573
    %v11039 = vunpack.c.h.b16 %v9573
    %v11040 = vunpack.c.l.b16 %v9574
    %v11041 = vunpack.c.h.b16 %v9574
    %v11042 = vunpack.c.l.b16 %v9575
    %v11043 = vunpack.c.h.b16 %v9575
    %v11044 = vunpack.c.l.b16 %v9576
    %v11045 = vunpack.c.h.b16 %v9576
    %v11046 = vunpack.c.l.b16 %v9577
    %v11047 = vunpack.c.h.b16 %v9577
    %v11048 = vunpack.c.l.b16 %v9578
    %v11049 = vunpack.c.h.b16 %v9578
    %v11050 = vunpack.c.l.b16 %v9579
    %v11051 = vunpack.c.h.b16 %v9579
    %v11052 = vunpack.c.l.b16 %v9580
    %v11053 = vunpack.c.h.b16 %v9580
    %v11054 = vunpack.c.l.b16 %v9581
    %v11055 = vunpack.c.h.b16 %v9581
    %v11056 = vunpack.c.l.b16 %v9582
    %v11057 = vunpack.c.h.b16 %v9582
    %v11058 = vunpack.c.l.b16 %v9583
    %v11059 = vunpack.c.h.b16 %v9583
    %v11060 = vunpack.c.l.b16 %v9584
    %v11061 = vunpack.c.h.b16 %v9584
    %v11062 = vunpack.c.l.b16 %v9585
    %v11063 = vunpack.c.h.b16 %v9585
    %v11064 = vunpack.c.l.b16 %v9586
    %v11065 = vunpack.c.h.b16 %v9586
    %v11066 = vunpack.c.l.b16 %v9587
    %v11067 = vunpack.c.h.b16 %v9587
    %v11068 = vunpack.c.l.b16 %v9588
    %v11069 = vunpack.c.h.b16 %v9588
    %v11070 = vunpack.c.l.b16 %v9589
    %v11071 = vunpack.c.h.b16 %v9589
    %v11072 = vunpack.c.l.b16 %v9590
    %v11073 = vunpack.c.h.b16 %v9590
    %v11074 = vunpack.c.l.b16 %v9591
    %v11075 = vunpack.c.h.b16 %v9591
    %v11076 = vunpack.c.l.b16 %v9592
    %v11077 = vunpack.c.h.b16 %v9592
    %v11078 = vunpack.c.l.b16 %v9593
    %v11079 = vunpack.c.h.b16 %v9593
    %v11080 = vunpack.c.l.b16 %v9594
    %v11081 = vunpack.c.h.b16 %v9594
    %v11082 = vunpack.c.l.b16 %v9595
    %v11083 = vunpack.c.h.b16 %v9595
    %v11084 = vunpack.c.l.b16 %v9596
    %v11085 = vunpack.c.h.b16 %v9596
    %v11086 = vunpack.c.l.b16 %v9597
    %v11087 = vunpack.c.h.b16 %v9597
    %v11088 = vunpack.c.l.b16 %v9598
    %v11089 = vunpack.c.h.b16 %v9598
    %v11090 = vunpack.c.l.b16 %v9599
    %v11091 = vunpack.c.h.b16 %v9599
    %v11092 = vunpack.c.l.b16 %v9600
    %v11093 = vunpack.c.h.b16 %v9600
    %v11094 = vunpack.c.l.b16 %v9601
    %v11095 = vunpack.c.h.b16 %v9601
    %v11096 = vunpack.c.l.b16 %v9602
    %v11097 = vunpack.c.h.b16 %v9602
    %v11098 = vunpack.c.l.b16 %v9603
    %v11099 = vunpack.c.h.b16 %v9603
    %v11100 = vunpack.c.l.b16 %v9604
    %v11101 = vunpack.c.h.b16 %v9604
    %v11102 = vunpack.c.l.b16 %v9605
    %v11103 = vunpack.c.h.b16 %v9605
    %v11104 = vunpack.c.l.b16 %v9606
    %v11105 = vunpack.c.h.b16 %v9606
    %v11106 = vunpack.c.l.b16 %v9607
    %v11107 = vunpack.c.h.b16 %v9607
    %v11108 = vunpack.c.l.b16 %v9608
    %v11109 = vunpack.c.h.b16 %v9608
    %v11110 = vunpack.c.l.b16 %v9609
    %v11111 = vunpack.c.h.b16 %v9609
    %v11112 = vunpack.c.l.b16 %v9610
    %v11113 = vunpack.c.h.b16 %v9610
    %v11114 = vunpack.c.l.b16 %v9611
    %v11115 = vunpack.c.h.b16 %v9611
    %v11116 = vunpack.c.l.b16 %v9612
    %v11117 = vunpack.c.h.b16 %v9612
    %v11118 = vunpack.c.l.b16 %v9613
    %v11119 = vunpack.c.h.b16 %v9613
    %v11120 = vunpack.c.l.b16 %v9614
    %v11121 = vunpack.c.h.b16 %v9614
    %v11122 = vunpack.c.l.b16 %v9615
    %v11123 = vunpack.c.h.b16 %v9615
    %v11124 = vunpack.c.l.b16 %v9616
    %v11125 = vunpack.c.h.b16 %v9616
    %v11126 = vunpack.c.l.b16 %v9617
    %v11127 = vunpack.c.h.b16 %v9617
    %v11128 = vunpack.c.l.b16 %v9618
    %v11129 = vunpack.c.h.b16 %v9618
    %v11130 = vunpack.c.l.b16 %v9619
    %v11131 = vunpack.c.h.b16 %v9619
    %v11132 = vunpack.c.l.b16 %v9620
    %v11133 = vunpack.c.h.b16 %v9620
    %v11134 = vunpack.c.l.b16 %v9621
    %v11135 = vunpack.c.h.b16 %v9621
    %v11136 = vunpack.c.l.b16 %v9622
    %v11137 = vunpack.c.h.b16 %v9622
    %v11138 = vunpack.c.l.b16 %v9623
    %v11139 = vunpack.c.h.b16 %v9623
    %v11140 = vunpack.c.l.b16 %v9624
    %v11141 = vunpack.c.h.b16 %v9624
    %v11142 = vunpack.c.l.b16 %v9625
    %v11143 = vunpack.c.h.b16 %v9625
    %v11144 = vunpack.c.l.b16 %v9626
    %v11145 = vunpack.c.h.b16 %v9626
    %v11146 = vunpack.c.l.b16 %v9627
    %v11147 = vunpack.c.h.b16 %v9627
    %v11148 = vunpack.c.l.b16 %v9628
    %v11149 = vunpack.c.h.b16 %v9628
    %v11150 = vunpack.c.l.b16 %v9629
    %v11151 = vunpack.c.h.b16 %v9629
    %v11152 = vunpack.c.l.b16 %v9630
    %v11153 = vunpack.c.h.b16 %v9630
    %v11154 = vunpack.c.l.b16 %v9631
    %v11155 = vunpack.c.h.b16 %v9631
    %v11156 = vunpack.c.l.b16 %v9632
    %v11157 = vunpack.c.h.b16 %v9632
    %v11158 = vunpack.c.l.b16 %v9633
    %v11159 = vunpack.c.h.b16 %v9633
    %v11160 = vunpack.c.l.b16 %v9634
    %v11161 = vunpack.c.h.b16 %v9634
    %v11162 = vunpack.c.l.b16 %v9635
    %v11163 = vunpack.c.h.b16 %v9635
    %v11164 = vunpack.c.l.b16 %v9636
    %v11165 = vunpack.c.h.b16 %v9636
    %v11166 = vunpack.c.l.b16 %v9637
    %v11167 = vunpack.c.h.b16 %v9637
    %v11168 = vunpack.c.l.b16 %v9638
    %v11169 = vunpack.c.h.b16 %v9638
    %v11170 = vunpack.c.l.b16 %v9639
    %v11171 = vunpack.c.h.b16 %v9639
    %v11172 = vunpack.c.l.b16 %v9640
    %v11173 = vunpack.c.h.b16 %v9640
    %v11174 = vunpack.c.l.b16 %v9641
    %v11175 = vunpack.c.h.b16 %v9641
    %v11176 = vunpack.c.l.b16 %v9642
    %v11177 = vunpack.c.h.b16 %v9642
    %v11178 = vunpack.c.l.b16 %v9643
    %v11179 = vunpack.c.h.b16 %v9643
    %v11180 = vunpack.c.l.b16 %v9644
    %v11181 = vunpack.c.h.b16 %v9644
    %v11182 = vunpack.c.l.b16 %v9645
    %v11183 = vunpack.c.h.b16 %v9645
    %v11184 = vunpack.c.l.b16 %v9646
    %v11185 = vunpack.c.h.b16 %v9646
    %v11186 = vunpack.c.l.b16 %v9647
    %v11187 = vunpack.c.h.b16 %v9647
    %v11188 = vunpack.c.l.b16 %v9648
    %v11189 = vunpack.c.h.b16 %v9648
    %v11190 = vunpack.c.l.b16 %v9649
    %v11191 = vunpack.c.h.b16 %v9649
    %v11192 = vunpack.c.l.b16 %v9650
    %v11193 = vunpack.c.h.b16 %v9650
    %v11194 = vunpack.c.l.b16 %v9651
    %v11195 = vunpack.c.h.b16 %v9651
    %v11196 = vunpack.c.l.b16 %v9652
    %v11197 = vunpack.c.h.b16 %v9652
    %v11198 = vunpack.c.l.b16 %v9653
    %v11199 = vunpack.c.h.b16 %v9653
    %v11200 = vunpack.c.l.b16 %v9654
    %v11201 = vunpack.c.h.b16 %v9654
    %v11202 = vunpack.c.l.b16 %v9655
    %v11203 = vunpack.c.h.b16 %v9655
    %v11204 = vunpack.c.l.b16 %v9656
    %v11205 = vunpack.c.h.b16 %v9656
    %v11206 = vunpack.c.l.b16 %v9657
    %v11207 = vunpack.c.h.b16 %v9657
    %v11208 = vunpack.c.l.b16 %v9658
    %v11209 = vunpack.c.h.b16 %v9658
    %v11210 = vunpack.c.l.b16 %v9659
    %v11211 = vunpack.c.h.b16 %v9659
    %v11212 = vunpack.c.l.b16 %v9660
    %v11213 = vunpack.c.h.b16 %v9660
    %v11214 = vunpack.c.l.b16 %v9661
    %v11215 = vunpack.c.h.b16 %v9661
    %v11216 = vunpack.c.l.b16 %v9662
    %v11217 = vunpack.c.h.b16 %v9662
    %v11218 = vunpack.c.l.b16 %v9663
    %v11219 = vunpack.c.h.b16 %v9663
    %v11220 = vunpack.c.l.b16 %v9664
    %v11221 = vunpack.c.h.b16 %v9664
    %v11222 = vunpack.c.l.b16 %v9665
    %v11223 = vunpack.c.h.b16 %v9665
    %v11224 = vunpack.c.l.b16 %v9666
    %v11225 = vunpack.c.h.b16 %v9666
    %v11226 = vunpack.c.l.b16 %v9667
    %v11227 = vunpack.c.h.b16 %v9667
    %v11228 = vunpack.c.l.b16 %v9668
    %v11229 = vunpack.c.h.b16 %v9668
    %v11230 = vunpack.c.l.b16 %v9669
    %v11231 = vunpack.c.h.b16 %v9669
    %v11232 = vunpack.c.l.b16 %v9670
    %v11233 = vunpack.c.h.b16 %v9670
    %v11234 = vunpack.c.l.b16 %v9671
    %v11235 = vunpack.c.h.b16 %v9671
    %v11236 = vunpack.c.l.b16 %v9672
    %v11237 = vunpack.c.h.b16 %v9672
    %v11238 = vunpack.c.l.b16 %v9673
    %v11239 = vunpack.c.h.b16 %v9673
    %v11240 = vunpack.c.l.b16 %v9674
    %v11241 = vunpack.c.h.b16 %v9674
    %v11242 = vunpack.c.l.b16 %v9675
    %v11243 = vunpack.c.h.b16 %v9675
    %v11244 = vunpack.c.l.b16 %v9676
    %v11245 = vunpack.c.h.b16 %v9676
    %v11246 = vunpack.c.l.b16 %v9677
    %v11247 = vunpack.c.h.b16 %v9677
    %v11248 = vunpack.c.l.b16 %v9678
    %v11249 = vunpack.c.h.b16 %v9678
    %v11250 = vunpack.c.l.b16 %v9679
    %v11251 = vunpack.c.h.b16 %v9679
    %v11252 = vunpack.c.l.b16 %v9680
    %v11253 = vunpack.c.h.b16 %v9680
    %v11254 = vunpack.c.l.b16 %v9681
    %v11255 = vunpack.c.h.b16 %v9681
    %v11256 = vunpack.c.l.b16 %v9682
    %v11257 = vunpack.c.h.b16 %v9682
    %v11258 = vunpack.c.l.b16 %v9683
    %v11259 = vunpack.c.h.b16 %v9683
    %v11260 = vunpack.c.l.b16 %v9684
    %v11261 = vunpack.c.h.b16 %v9684
    %v11262 = vunpack.c.l.b16 %v9685
    %v11263 = vunpack.c.h.b16 %v9685
    %v11264 = vpack.c.b16 %v10248, %v10240
    %v11265 = vpack.c.b16 %v10249, %v10241
    %v11266 = vpack.c.b16 %v10250, %v10242
    %v11267 = vpack.c.b16 %v10251, %v10243
    %v11268 = vpack.c.b16 %v10252, %v10244
    %v11269 = vpack.c.b16 %v10253, %v10245
    %v11270 = vpack.c.b16 %v10254, %v10246
    %v11271 = vpack.c.b16 %v10255, %v10247
    %v11272 = vpack.c.b16 %v10264, %v10256
    %v11273 = vpack.c.b16 %v10265, %v10257
    %v11274 = vpack.c.b16 %v10266, %v10258
    %v11275 = vpack.c.b16 %v10267, %v10259
    %v11276 = vpack.c.b16 %v10268, %v10260
    %v11277 = vpack.c.b16 %v10269, %v10261
    %v11278 = vpack.c.b16 %v10270, %v10262
    %v11279 = vpack.c.b16 %v10271, %v10263
    %v11280 = vpack.c.b16 %v10280, %v10272
    %v11281 = vpack.c.b16 %v10281, %v10273
    %v11282 = vpack.c.b16 %v10282, %v10274
    %v11283 = vpack.c.b16 %v10283, %v10275
    %v11284 = vpack.c.b16 %v10284, %v10276
    %v11285 = vpack.c.b16 %v10285, %v10277
    %v11286 = vpack.c.b16 %v10286, %v10278
    %v11287 = vpack.c.b16 %v10287, %v10279
    %v11288 = vpack.c.b16 %v10296, %v10288
    %v11289 = vpack.c.b16 %v10297, %v10289
    %v11290 = vpack.c.b16 %v10298, %v10290
    %v11291 = vpack.c.b16 %v10299, %v10291
    %v11292 = vpack.c.b16 %v10300, %v10292
    %v11293 = vpack.c.b16 %v10301, %v10293
    %v11294 = vpack.c.b16 %v10302, %v10294
    %v11295 = vpack.c.b16 %v10303, %v10295
    %v11296 = vpack.c.b16 %v10312, %v10304
    %v11297 = vpack.c.b16 %v10313, %v10305
    %v11298 = vpack.c.b16 %v10314, %v10306
    %v11299 = vpack.c.b16 %v10315, %v10307
    %v11300 = vpack.c.b16 %v10316, %v10308
    %v11301 = vpack.c.b16 %v10317, %v10309
    %v11302 = vpack.c.b16 %v10318, %v10310
    %v11303 = vpack.c.b16 %v10319, %v10311
    %v11304 = vpack.c.b16 %v10328, %v10320
    %v11305 = vpack.c.b16 %v10329, %v10321
    %v11306 = vpack.c.b16 %v10330, %v10322
    %v11307 = vpack.c.b16 %v10331, %v10323
    %v11308 = vpack.c.b16 %v10332, %v10324
    %v11309 = vpack.c.b16 %v10333, %v10325
    %v11310 = vpack.c.b16 %v10334, %v10326
    %v11311 = vpack.c.b16 %v10335, %v10327
    %v11312 = vpack.c.b16 %v10344, %v10336
    %v11313 = vpack.c.b16 %v10345, %v10337
    %v11314 = vpack.c.b16 %v10346, %v10338
    %v11315 = vpack.c.b16 %v10347, %v10339
    %v11316 = vpack.c.b16 %v10348, %v10340
    %v11317 = vpack.c.b16 %v10349, %v10341
    %v11318 = vpack.c.b16 %v10350, %v10342
    %v11319 = vpack.c.b16 %v10351, %v10343
    %v11320 = vpack.c.b16 %v10360, %v10352
    %v11321 = vpack.c.b16 %v10361, %v10353
    %v11322 = vpack.c.b16 %v10362, %v10354
    %v11323 = vpack.c.b16 %v10363, %v10355
    %v11324 = vpack.c.b16 %v10364, %v10356
    %v11325 = vpack.c.b16 %v10365, %v10357
    %v11326 = vpack.c.b16 %v10366, %v10358
    %v11327 = vpack.c.b16 %v10367, %v10359
    %v11328 = vpack.c.b16 %v10376, %v10368
    %v11329 = vpack.c.b16 %v10377, %v10369
    %v11330 = vpack.c.b16 %v10378, %v10370
    %v11331 = vpack.c.b16 %v10379, %v10371
    %v11332 = vpack.c.b16 %v10380, %v10372
    %v11333 = vpack.c.b16 %v10381, %v10373
    %v11334 = vpack.c.b16 %v10382, %v10374
    %v11335 = vpack.c.b16 %v10383, %v10375
    %v11336 = vpack.c.b16 %v10392, %v10384
    %v11337 = vpack.c.b16 %v10393, %v10385
    %v11338 = vpack.c.b16 %v10394, %v10386
    %v11339 = vpack.c.b16 %v10395, %v10387
    %v11340 = vpack.c.b16 %v10396, %v10388
    %v11341 = vpack.c.b16 %v10397, %v10389
    %v11342 = vpack.c.b16 %v10398, %v10390
    %v11343 = vpack.c.b16 %v10399, %v10391
    %v11344 = vpack.c.b16 %v10408, %v10400
    %v11345 = vpack.c.b16 %v10409, %v10401
    %v11346 = vpack.c.b16 %v10410, %v10402
    %v11347 = vpack.c.b16 %v10411, %v10403
    %v11348 = vpack.c.b16 %v10412, %v10404
    %v11349 = vpack.c.b16 %v10413, %v10405
    %v11350 = vpack.c.b16 %v10414, %v10406
    %v11351 = vpack.c.b16 %v10415, %v10407
    %v11352 = vpack.c.b16 %v10424, %v10416
    %v11353 = vpack.c.b16 %v10425, %v10417
    %v11354 = vpack.c.b16 %v10426, %v10418
    %v11355 = vpack.c.b16 %v10427, %v10419
    %v11356 = vpack.c.b16 %v10428, %v10420
    %v11357 = vpack.c.b16 %v10429, %v10421
    %v11358 = vpack.c.b16 %v10430, %v10422
    %v11359 = vpack.c.b16 %v10431, %v10423
    %v11360 = vpack.c.b16 %v10440, %v10432
    %v11361 = vpack.c.b16 %v10441, %v10433
    %v11362 = vpack.c.b16 %v10442, %v10434
    %v11363 = vpack.c.b16 %v10443, %v10435
    %v11364 = vpack.c.b16 %v10444, %v10436
    %v11365 = vpack.c.b16 %v10445, %v10437
    %v11366 = vpack.c.b16 %v10446, %v10438
    %v11367 = vpack.c.b16 %v10447, %v10439
    %v11368 = vpack.c.b16 %v10456, %v10448
    %v11369 = vpack.c.b16 %v10457, %v10449
    %v11370 = vpack.c.b16 %v10458, %v10450
    %v11371 = vpack.c.b16 %v10459, %v10451
    %v11372 = vpack.c.b16 %v10460, %v10452
    %v11373 = vpack.c.b16 %v10461, %v10453
    %v11374 = vpack.c.b16 %v10462, %v10454
    %v11375 = vpack.c.b16 %v10463, %v10455
    %v11376 = vpack.c.b16 %v10472, %v10464
    %v11377 = vpack.c.b16 %v10473, %v10465
    %v11378 = vpack.c.b16 %v10474, %v10466
    %v11379 = vpack.c.b16 %v10475, %v10467
    %v11380 = vpack.c.b16 %v10476, %v10468
    %v11381 = vpack.c.b16 %v10477, %v10469
    %v11382 = vpack.c.b16 %v10478, %v10470
    %v11383 = vpack.c.b16 %v10479, %v10471
    %v11384 = vpack.c.b16 %v10488, %v10480
    %v11385 = vpack.c.b16 %v10489, %v10481
    %v11386 = vpack.c.b16 %v10490, %v10482
    %v11387 = vpack.c.b16 %v10491, %v10483
    %v11388 = vpack.c.b16 %v10492, %v10484
    %v11389 = vpack.c.b16 %v10493, %v10485
    %v11390 = vpack.c.b16 %v10494, %v10486
    %v11391 = vpack.c.b16 %v10495, %v10487
    %v11392 = vpack.c.b16 %v10504, %v10496
    %v11393 = vpack.c.b16 %v10505, %v10497
    %v11394 = vpack.c.b16 %v10506, %v10498
    %v11395 = vpack.c.b16 %v10507, %v10499
    %v11396 = vpack.c.b16 %v10508, %v10500
    %v11397 = vpack.c.b16 %v10509, %v10501
    %v11398 = vpack.c.b16 %v10510, %v10502
    %v11399 = vpack.c.b16 %v10511, %v10503
    %v11400 = vpack.c.b16 %v10520, %v10512
    %v11401 = vpack.c.b16 %v10521, %v10513
    %v11402 = vpack.c.b16 %v10522, %v10514
    %v11403 = vpack.c.b16 %v10523, %v10515
    %v11404 = vpack.c.b16 %v10524, %v10516
    %v11405 = vpack.c.b16 %v10525, %v10517
    %v11406 = vpack.c.b16 %v10526, %v10518
    %v11407 = vpack.c.b16 %v10527, %v10519
    %v11408 = vpack.c.b16 %v10536, %v10528
    %v11409 = vpack.c.b16 %v10537, %v10529
    %v11410 = vpack.c.b16 %v10538, %v10530
    %v11411 = vpack.c.b16 %v10539, %v10531
    %v11412 = vpack.c.b16 %v10540, %v10532
    %v11413 = vpack.c.b16 %v10541, %v10533
    %v11414 = vpack.c.b16 %v10542, %v10534
    %v11415 = vpack.c.b16 %v10543, %v10535
    %v11416 = vpack.c.b16 %v10552, %v10544
    %v11417 = vpack.c.b16 %v10553, %v10545
    %v11418 = vpack.c.b16 %v10554, %v10546
    %v11419 = vpack.c.b16 %v10555, %v10547
    %v11420 = vpack.c.b16 %v10556, %v10548
    %v11421 = vpack.c.b16 %v10557, %v10549
    %v11422 = vpack.c.b16 %v10558, %v10550
    %v11423 = vpack.c.b16 %v10559, %v10551
    %v11424 = vpack.c.b16 %v10568, %v10560
    %v11425 = vpack.c.b16 %v10569, %v10561
    %v11426 = vpack.c.b16 %v10570, %v10562
    %v11427 = vpack.c.b16 %v10571, %v10563
    %v11428 = vpack.c.b16 %v10572, %v10564
    %v11429 = vpack.c.b16 %v10573, %v10565
    %v11430 = vpack.c.b16 %v10574, %v10566
    %v11431 = vpack.c.b16 %v10575, %v10567
    %v11432 = vpack.c.b16 %v10584, %v10576
    %v11433 = vpack.c.b16 %v10585, %v10577
    %v11434 = vpack.c.b16 %v10586, %v10578
    %v11435 = vpack.c.b16 %v10587, %v10579
    %v11436 = vpack.c.b16 %v10588, %v10580
    %v11437 = vpack.c.b16 %v10589, %v10581
    %v11438 = vpack.c.b16 %v10590, %v10582
    %v11439 = vpack.c.b16 %v10591, %v10583
    %v11440 = vpack.c.b16 %v10600, %v10592
    %v11441 = vpack.c.b16 %v10601, %v10593
    %v11442 = vpack.c.b16 %v10602, %v10594
    %v11443 = vpack.c.b16 %v10603, %v10595
    %v11444 = vpack.c.b16 %v10604, %v10596
    %v11445 = vpack.c.b16 %v10605, %v10597
    %v11446 = vpack.c.b16 %v10606, %v10598
    %v11447 = vpack.c.b16 %v10607, %v10599
    %v11448 = vpack.c.b16 %v10616, %v10608
    %v11449 = vpack.c.b16 %v10617, %v10609
    %v11450 = vpack.c.b16 %v10618, %v10610
    %v11451 = vpack.c.b16 %v10619, %v10611
    %v11452 = vpack.c.b16 %v10620, %v10612
    %v11453 = vpack.c.b16 %v10621, %v10613
    %v11454 = vpack.c.b16 %v10622, %v10614
    %v11455 = vpack.c.b16 %v10623, %v10615
    %v11456 = vpack.c.b16 %v10632, %v10624
    %v11457 = vpack.c.b16 %v10633, %v10625
    %v11458 = vpack.c.b16 %v10634, %v10626
    %v11459 = vpack.c.b16 %v10635, %v10627
    %v11460 = vpack.c.b16 %v10636, %v10628
    %v11461 = vpack.c.b16 %v10637, %v10629
    %v11462 = vpack.c.b16 %v10638, %v10630
    %v11463 = vpack.c.b16 %v10639, %v10631
    %v11464 = vpack.c.b16 %v10648, %v10640
    %v11465 = vpack.c.b16 %v10649, %v10641
    %v11466 = vpack.c.b16 %v10650, %v10642
    %v11467 = vpack.c.b16 %v10651, %v10643
    %v11468 = vpack.c.b16 %v10652, %v10644
    %v11469 = vpack.c.b16 %v10653, %v10645
    %v11470 = vpack.c.b16 %v10654, %v10646
    %v11471 = vpack.c.b16 %v10655, %v10647
    %v11472 = vpack.c.b16 %v10664, %v10656
    %v11473 = vpack.c.b16 %v10665, %v10657
    %v11474 = vpack.c.b16 %v10666, %v10658
    %v11475 = vpack.c.b16 %v10667, %v10659
    %v11476 = vpack.c.b16 %v10668, %v10660
    %v11477 = vpack.c.b16 %v10669, %v10661
    %v11478 = vpack.c.b16 %v10670, %v10662
    %v11479 = vpack.c.b16 %v10671, %v10663
    %v11480 = vpack.c.b16 %v10680, %v10672
    %v11481 = vpack.c.b16 %v10681, %v10673
    %v11482 = vpack.c.b16 %v10682, %v10674
    %v11483 = vpack.c.b16 %v10683, %v10675
    %v11484 = vpack.c.b16 %v10684, %v10676
    %v11485 = vpack.c.b16 %v10685, %v10677
    %v11486 = vpack.c.b16 %v10686, %v10678
    %v11487 = vpack.c.b16 %v10687, %v10679
    %v11488 = vpack.c.b16 %v10696, %v10688
    %v11489 = vpack.c.b16 %v10697, %v10689
    %v11490 = vpack.c.b16 %v10698, %v10690
    %v11491 = vpack.c.b16 %v10699, %v10691
    %v11492 = vpack.c.b16 %v10700, %v10692
    %v11493 = vpack.c.b16 %v10701, %v10693
    %v11494 = vpack.c.b16 %v10702, %v10694
    %v11495 = vpack.c.b16 %v10703, %v10695
    %v11496 = vpack.c.b16 %v10712, %v10704
    %v11497 = vpack.c.b16 %v10713, %v10705
    %v11498 = vpack.c.b16 %v10714, %v10706
    %v11499 = vpack.c.b16 %v10715, %v10707
    %v11500 = vpack.c.b16 %v10716, %v10708
    %v11501 = vpack.c.b16 %v10717, %v10709
    %v11502 = vpack.c.b16 %v10718, %v10710
    %v11503 = vpack.c.b16 %v10719, %v10711
    %v11504 = vpack.c.b16 %v10728, %v10720
    %v11505 = vpack.c.b16 %v10729, %v10721
    %v11506 = vpack.c.b16 %v10730, %v10722
    %v11507 = vpack.c.b16 %v10731, %v10723
    %v11508 = vpack.c.b16 %v10732, %v10724
    %v11509 = vpack.c.b16 %v10733, %v10725
    %v11510 = vpack.c.b16 %v10734, %v10726
    %v11511 = vpack.c.b16 %v10735, %v10727
    %v11512 = vpack.c.b16 %v10744, %v10736
    %v11513 = vpack.c.b16 %v10745, %v10737
    %v11514 = vpack.c.b16 %v10746, %v10738
    %v11515 = vpack.c.b16 %v10747, %v10739
    %v11516 = vpack.c.b16 %v10748, %v10740
    %v11517 = vpack.c.b16 %v10749, %v10741
    %v11518 = vpack.c.b16 %v10750, %v10742
    %v11519 = vpack.c.b16 %v10751, %v10743
    %v11520 = vpack.c.b16 %v10760, %v10752
    %v11521 = vpack.c.b16 %v10761, %v10753
    %v11522 = vpack.c.b16 %v10762, %v10754
    %v11523 = vpack.c.b16 %v10763, %v10755
    %v11524 = vpack.c.b16 %v10764, %v10756
    %v11525 = vpack.c.b16 %v10765, %v10757
    %v11526 = vpack.c.b16 %v10766, %v10758
    %v11527 = vpack.c.b16 %v10767, %v10759
    %v11528 = vpack.c.b16 %v10776, %v10768
    %v11529 = vpack.c.b16 %v10777, %v10769
    %v11530 = vpack.c.b16 %v10778, %v10770
    %v11531 = vpack.c.b16 %v10779, %v10771
    %v11532 = vpack.c.b16 %v10780, %v10772
    %v11533 = vpack.c.b16 %v10781, %v10773
    %v11534 = vpack.c.b16 %v10782, %v10774
    %v11535 = vpack.c.b16 %v10783, %v10775
    %v11536 = vpack.c.b16 %v10792, %v10784
    %v11537 = vpack.c.b16 %v10793, %v10785
    %v11538 = vpack.c.b16 %v10794, %v10786
    %v11539 = vpack.c.b16 %v10795, %v10787
    %v11540 = vpack.c.b16 %v10796, %v10788
    %v11541 = vpack.c.b16 %v10797, %v10789
    %v11542 = vpack.c.b16 %v10798, %v10790
    %v11543 = vpack.c.b16 %v10799, %v10791
    %v11544 = vpack.c.b16 %v10808, %v10800
    %v11545 = vpack.c.b16 %v10809, %v10801
    %v11546 = vpack.c.b16 %v10810, %v10802
    %v11547 = vpack.c.b16 %v10811, %v10803
    %v11548 = vpack.c.b16 %v10812, %v10804
    %v11549 = vpack.c.b16 %v10813, %v10805
    %v11550 = vpack.c.b16 %v10814, %v10806
    %v11551 = vpack.c.b16 %v10815, %v10807
    %v11552 = vpack.c.b16 %v10824, %v10816
    %v11553 = vpack.c.b16 %v10825, %v10817
    %v11554 = vpack.c.b16 %v10826, %v10818
    %v11555 = vpack.c.b16 %v10827, %v10819
    %v11556 = vpack.c.b16 %v10828, %v10820
    %v11557 = vpack.c.b16 %v10829, %v10821
    %v11558 = vpack.c.b16 %v10830, %v10822
    %v11559 = vpack.c.b16 %v10831, %v10823
    %v11560 = vpack.c.b16 %v10840, %v10832
    %v11561 = vpack.c.b16 %v10841, %v10833
    %v11562 = vpack.c.b16 %v10842, %v10834
    %v11563 = vpack.c.b16 %v10843, %v10835
    %v11564 = vpack.c.b16 %v10844, %v10836
    %v11565 = vpack.c.b16 %v10845, %v10837
    %v11566 = vpack.c.b16 %v10846, %v10838
    %v11567 = vpack.c.b16 %v10847, %v10839
    %v11568 = vpack.c.b16 %v10856, %v10848
    %v11569 = vpack.c.b16 %v10857, %v10849
    %v11570 = vpack.c.b16 %v10858, %v10850
    %v11571 = vpack.c.b16 %v10859, %v10851
    %v11572 = vpack.c.b16 %v10860, %v10852
    %v11573 = vpack.c.b16 %v10861, %v10853
    %v11574 = vpack.c.b16 %v10862, %v10854
    %v11575 = vpack.c.b16 %v10863, %v10855
    %v11576 = vpack.c.b16 %v10872, %v10864
    %v11577 = vpack.c.b16 %v10873, %v10865
    %v11578 = vpack.c.b16 %v10874, %v10866
    %v11579 = vpack.c.b16 %v10875, %v10867
    %v11580 = vpack.c.b16 %v10876, %v10868
    %v11581 = vpack.c.b16 %v10877, %v10869
    %v11582 = vpack.c.b16 %v10878, %v10870
    %v11583 = vpack.c.b16 %v10879, %v10871
    %v11584 = vpack.c.b16 %v10888, %v10880
    %v11585 = vpack.c.b16 %v10889, %v10881
    %v11586 = vpack.c.b16 %v10890, %v10882
    %v11587 = vpack.c.b16 %v10891, %v10883
    %v11588 = vpack.c.b16 %v10892, %v10884
    %v11589 = vpack.c.b16 %v10893, %v10885
    %v11590 = vpack.c.b16 %v10894, %v10886
    %v11591 = vpack.c.b16 %v10895, %v10887
    %v11592 = vpack.c.b16 %v10904, %v10896
    %v11593 = vpack.c.b16 %v10905, %v10897
    %v11594 = vpack.c.b16 %v10906, %v10898
    %v11595 = vpack.c.b16 %v10907, %v10899
    %v11596 = vpack.c.b16 %v10908, %v10900
    %v11597 = vpack.c.b16 %v10909, %v10901
    %v11598 = vpack.c.b16 %v10910, %v10902
    %v11599 = vpack.c.b16 %v10911, %v10903
    %v11600 = vpack.c.b16 %v10920, %v10912
    %v11601 = vpack.c.b16 %v10921, %v10913
    %v11602 = vpack.c.b16 %v10922, %v10914
    %v11603 = vpack.c.b16 %v10923, %v10915
    %v11604 = vpack.c.b16 %v10924, %v10916
    %v11605 = vpack.c.b16 %v10925, %v10917
    %v11606 = vpack.c.b16 %v10926, %v10918
    %v11607 = vpack.c.b16 %v10927, %v10919
    %v11608 = vpack.c.b16 %v10936, %v10928
    %v11609 = vpack.c.b16 %v10937, %v10929
    %v11610 = vpack.c.b16 %v10938, %v10930
    %v11611 = vpack.c.b16 %v10939, %v10931
    %v11612 = vpack.c.b16 %v10940, %v10932
    %v11613 = vpack.c.b16 %v10941, %v10933
    %v11614 = vpack.c.b16 %v10942, %v10934
    %v11615 = vpack.c.b16 %v10943, %v10935
    %v11616 = vpack.c.b16 %v10952, %v10944
    %v11617 = vpack.c.b16 %v10953, %v10945
    %v11618 = vpack.c.b16 %v10954, %v10946
    %v11619 = vpack.c.b16 %v10955, %v10947
    %v11620 = vpack.c.b16 %v10956, %v10948
    %v11621 = vpack.c.b16 %v10957, %v10949
    %v11622 = vpack.c.b16 %v10958, %v10950
    %v11623 = vpack.c.b16 %v10959, %v10951
    %v11624 = vpack.c.b16 %v10968, %v10960
    %v11625 = vpack.c.b16 %v10969, %v10961
    %v11626 = vpack.c.b16 %v10970, %v10962
    %v11627 = vpack.c.b16 %v10971, %v10963
    %v11628 = vpack.c.b16 %v10972, %v10964
    %v11629 = vpack.c.b16 %v10973, %v10965
    %v11630 = vpack.c.b16 %v10974, %v10966
    %v11631 = vpack.c.b16 %v10975, %v10967
    %v11632 = vpack.c.b16 %v10984, %v10976
    %v11633 = vpack.c.b16 %v10985, %v10977
    %v11634 = vpack.c.b16 %v10986, %v10978
    %v11635 = vpack.c.b16 %v10987, %v10979
    %v11636 = vpack.c.b16 %v10988, %v10980
    %v11637 = vpack.c.b16 %v10989, %v10981
    %v11638 = vpack.c.b16 %v10990, %v10982
    %v11639 = vpack.c.b16 %v10991, %v10983
    %v11640 = vpack.c.b16 %v11000, %v10992
    %v11641 = vpack.c.b16 %v11001, %v10993
    %v11642 = vpack.c.b16 %v11002, %v10994
    %v11643 = vpack.c.b16 %v11003, %v10995
    %v11644 = vpack.c.b16 %v11004, %v10996
    %v11645 = vpack.c.b16 %v11005, %v10997
    %v11646 = vpack.c.b16 %v11006, %v10998
    %v11647 = vpack.c.b16 %v11007, %v10999
    %v11648 = vpack.c.b16 %v11016, %v11008
    %v11649 = vpack.c.b16 %v11017, %v11009
    %v11650 = vpack.c.b16 %v11018, %v11010
    %v11651 = vpack.c.b16 %v11019, %v11011
    %v11652 = vpack.c.b16 %v11020, %v11012
    %v11653 = vpack.c.b16 %v11021, %v11013
    %v11654 = vpack.c.b16 %v11022, %v11014
    %v11655 = vpack.c.b16 %v11023, %v11015
    %v11656 = vpack.c.b16 %v11032, %v11024
    %v11657 = vpack.c.b16 %v11033, %v11025
    %v11658 = vpack.c.b16 %v11034, %v11026
    %v11659 = vpack.c.b16 %v11035, %v11027
    %v11660 = vpack.c.b16 %v11036, %v11028
    %v11661 = vpack.c.b16 %v11037, %v11029
    %v11662 = vpack.c.b16 %v11038, %v11030
    %v11663 = vpack.c.b16 %v11039, %v11031
    %v11664 = vpack.c.b16 %v11048, %v11040
    %v11665 = vpack.c.b16 %v11049, %v11041
    %v11666 = vpack.c.b16 %v11050, %v11042
    %v11667 = vpack.c.b16 %v11051, %v11043
    %v11668 = vpack.c.b16 %v11052, %v11044
    %v11669 = vpack.c.b16 %v11053, %v11045
    %v11670 = vpack.c.b16 %v11054, %v11046
    %v11671 = vpack.c.b16 %v11055, %v11047
    %v11672 = vpack.c.b16 %v11064, %v11056
    %v11673 = vpack.c.b16 %v11065, %v11057
    %v11674 = vpack.c.b16 %v11066, %v11058
    %v11675 = vpack.c.b16 %v11067, %v11059
    %v11676 = vpack.c.b16 %v11068, %v11060
    %v11677 = vpack.c.b16 %v11069, %v11061
    %v11678 = vpack.c.b16 %v11070, %v11062
    %v11679 = vpack.c.b16 %v11071, %v11063
    %v11680 = vpack.c.b16 %v11080, %v11072
    %v11681 = vpack.c.b16 %v11081, %v11073
    %v11682 = vpack.c.b16 %v11082, %v11074
    %v11683 = vpack.c.b16 %v11083, %v11075
    %v11684 = vpack.c.b16 %v11084, %v11076
    %v11685 = vpack.c.b16 %v11085, %v11077
    %v11686 = vpack.c.b16 %v11086, %v11078
    %v11687 = vpack.c.b16 %v11087, %v11079
    %v11688 = vpack.c.b16 %v11096, %v11088
    %v11689 = vpack.c.b16 %v11097, %v11089
    %v11690 = vpack.c.b16 %v11098, %v11090
    %v11691 = vpack.c.b16 %v11099, %v11091
    %v11692 = vpack.c.b16 %v11100, %v11092
    %v11693 = vpack.c.b16 %v11101, %v11093
    %v11694 = vpack.c.b16 %v11102, %v11094
    %v11695 = vpack.c.b16 %v11103, %v11095
    %v11696 = vpack.c.b16 %v11112, %v11104
    %v11697 = vpack.c.b16 %v11113, %v11105
    %v11698 = vpack.c.b16 %v11114, %v11106
    %v11699 = vpack.c.b16 %v11115, %v11107
    %v11700 = vpack.c.b16 %v11116, %v11108
    %v11701 = vpack.c.b16 %v11117, %v11109
    %v11702 = vpack.c.b16 %v11118, %v11110
    %v11703 = vpack.c.b16 %v11119, %v11111
    %v11704 = vpack.c.b16 %v11128, %v11120
    %v11705 = vpack.c.b16 %v11129, %v11121
    %v11706 = vpack.c.b16 %v11130, %v11122
    %v11707 = vpack.c.b16 %v11131, %v11123
    %v11708 = vpack.c.b16 %v11132, %v11124
    %v11709 = vpack.c.b16 %v11133, %v11125
    %v11710 = vpack.c.b16 %v11134, %v11126
    %v11711 = vpack.c.b16 %v11135, %v11127
    %v11712 = vpack.c.b16 %v11144, %v11136
    %v11713 = vpack.c.b16 %v11145, %v11137
    %v11714 = vpack.c.b16 %v11146, %v11138
    %v11715 = vpack.c.b16 %v11147, %v11139
    %v11716 = vpack.c.b16 %v11148, %v11140
    %v11717 = vpack.c.b16 %v11149, %v11141
    %v11718 = vpack.c.b16 %v11150, %v11142
    %v11719 = vpack.c.b16 %v11151, %v11143
    %v11720 = vpack.c.b16 %v11160, %v11152
    %v11721 = vpack.c.b16 %v11161, %v11153
    %v11722 = vpack.c.b16 %v11162, %v11154
    %v11723 = vpack.c.b16 %v11163, %v11155
    %v11724 = vpack.c.b16 %v11164, %v11156
    %v11725 = vpack.c.b16 %v11165, %v11157
    %v11726 = vpack.c.b16 %v11166, %v11158
    %v11727 = vpack.c.b16 %v11167, %v11159
    %v11728 = vpack.c.b16 %v11176, %v11168
    %v11729 = vpack.c.b16 %v11177, %v11169
    %v11730 = vpack.c.b16 %v11178, %v11170
    %v11731 = vpack.c.b16 %v11179, %v11171
    %v11732 = vpack.c.b16 %v11180, %v11172
    %v11733 = vpack.c.b16 %v11181, %v11173
    %v11734 = vpack.c.b16 %v11182, %v11174
    %v11735 = vpack.c.b16 %v11183, %v11175
    %v11736 = vpack.c.b16 %v11192, %v11184
    %v11737 = vpack.c.b16 %v11193, %v11185
    %v11738 = vpack.c.b16 %v11194, %v11186
    %v11739 = vpack.c.b16 %v11195, %v11187
    %v11740 = vpack.c.b16 %v11196, %v11188
    %v11741 = vpack.c.b16 %v11197, %v11189
    %v11742 = vpack.c.b16 %v11198, %v11190
    %v11743 = vpack.c.b16 %v11199, %v11191
    %v11744 = vpack.c.b16 %v11208, %v11200
    %v11745 = vpack.c.b16 %v11209, %v11201
    %v11746 = vpack.c.b16 %v11210, %v11202
    %v11747 = vpack.c.b16 %v11211, %v11203
    %v11748 = vpack.c.b16 %v11212, %v11204
    %v11749 = vpack.c.b16 %v11213, %v11205
    %v11750 = vpack.c.b16 %v11214, %v11206
    %v11751 = vpack.c.b16 %v11215, %v11207
    %v11752 = vpack.c.b16 %v11224, %v11216
    %v11753 = vpack.c.b16 %v11225, %v11217
    %v11754 = vpack.c.b16 %v11226, %v11218
    %v11755 = vpack.c.b16 %v11227, %v11219
    %v11756 = vpack.c.b16 %v11228, %v11220
    %v11757 = vpack.c.b16 %v11229, %v11221
    %v11758 = vpack.c.b16 %v11230, %v11222
    %v11759 = vpack.c.b16 %v11231, %v11223
    %v11760 = vpack.c.b16 %v11240, %v11232
    %v11761 = vpack.c.b16 %v11241, %v11233
    %v11762 = vpack.c.b16 %v11242, %v11234
    %v11763 = vpack.c.b16 %v11243, %v11235
    %v11764 = vpack.c.b16 %v11244, %v11236
    %v11765 = vpack.c.b16 %v11245, %v11237
    %v11766 = vpack.c.b16 %v11246, %v11238
    %v11767 = vpack.c.b16 %v11247, %v11239
    %v11768 = vpack.c.b16 %v11256, %v11248
    %v11769 = vpack.c.b16 %v11257, %v11249
    %v11770 = vpack.c.b16 %v11258, %v11250
    %v11771 = vpack.c.b16 %v11259, %v11251
    %v11772 = vpack.c.b16 %v11260, %v11252
    %v11773 = vpack.c.b16 %v11261, %v11253
    %v11774 = vpack.c.b16 %v11262, %v11254
    %v11775 = vpack.c.b16 %v11263, %v11255
    %12288 = vmatprep.subr.bf16.mxu0 %v11321
    %12289 = vmatpush1.bf16.msra.mxu0 %v11320
    %12290 = vmatprep.subr.bf16.mxu0 %v11313
    %12291 = vmatpush1.bf16.msra.mxu0 %v11312
    %12292 = vmatprep.subr.bf16.mxu0 %v11305
    %12293 = vmatpush1.bf16.msra.mxu0 %v11304
    %12294 = vmatprep.subr.bf16.mxu0 %v11297
    %12295 = vmatpush1.bf16.msra.mxu0 %v11296
    %12296 = vmatprep.subr.bf16.mxu0 %v11289
    %12297 = vmatpush1.bf16.msra.mxu0 %v11288
    %12298 = vmatprep.subr.bf16.mxu0 %v11281
    %12299 = vmatpush1.bf16.msra.mxu0 %v11280
    %12300 = vmatprep.subr.bf16.mxu0 %v11273
    %12301 = vmatpush1.bf16.msra.mxu0 %v11272
    %12302 = vmatprep.subr.bf16.mxu0 %v11265
    %12303 = vmatpush1.bf16.msra.mxu0 %v11264
    %12304 = vmatprep.subr.bf16.mxu0 %v11385
    %12305 = vmatpush2.bf16.msra.mxu0 %v11384
    %12306 = vmatprep.subr.bf16.mxu0 %v11377
    %12307 = vmatpush2.bf16.msra.mxu0 %v11376
    %12308 = vmatprep.subr.bf16.mxu0 %v11369
    %12309 = vmatpush2.bf16.msra.mxu0 %v11368
    %12310 = vmatprep.subr.bf16.mxu0 %v11361
    %12311 = vmatpush2.bf16.msra.mxu0 %v11360
    %12312 = vmatprep.subr.bf16.mxu0 %v11353
    %12313 = vmatpush2.bf16.msra.mxu0 %v11352
    %12314 = vmatprep.subr.bf16.mxu0 %v11345
    %12315 = vmatpush2.bf16.msra.mxu0 %v11344
    %12316 = vmatprep.subr.bf16.mxu0 %v11337
    %12317 = vmatpush2.bf16.msra.mxu0 %v11336
    %12318 = vmatprep.subr.bf16.mxu0 %v11329
    %12319 = vmatpush2.bf16.msra.mxu0 %v11328
    %12320 = vmatprep.mubr.bf16.mxu0 %v9167
    %12321 = vmatmul.mubr.bf16.gmra.mxu0 %v9166
    %v12322 = vpop.f32.mrf.mxu0
    %v12323 = vadd.f32 %v9691, %v12322
    %v12324 = vpop.f32.mrf.mxu0
    %v12325 = vadd.f32 %v9695, %v12324
    %v12326 = vpop.f32.mrf.mxu0
    %v12327 = vpop.f32.mrf.mxu0
    %12328 = vdwg.mxu0
    %12329 = vmatprep.subr.bf16.mxu0 %v11449
    %12330 = vmatpush1.bf16.msra.mxu0 %v11448
    %12331 = vmatprep.subr.bf16.mxu0 %v11441
    %12332 = vmatpush1.bf16.msra.mxu0 %v11440
    %12333 = vmatprep.subr.bf16.mxu0 %v11433
    %12334 = vmatpush1.bf16.msra.mxu0 %v11432
    %12335 = vmatprep.subr.bf16.mxu0 %v11425
    %12336 = vmatpush1.bf16.msra.mxu0 %v11424
    %12337 = vmatprep.subr.bf16.mxu0 %v11417
    %12338 = vmatpush1.bf16.msra.mxu0 %v11416
    %12339 = vmatprep.subr.bf16.mxu0 %v11409
    %12340 = vmatpush1.bf16.msra.mxu0 %v11408
    %12341 = vmatprep.subr.bf16.mxu0 %v11401
    %12342 = vmatpush1.bf16.msra.mxu0 %v11400
    %12343 = vmatprep.subr.bf16.mxu0 %v11393
    %12344 = vmatpush1.bf16.msra.mxu0 %v11392
    %12345 = vmatprep.subr.bf16.mxu0 %v11513
    %12346 = vmatpush2.bf16.msra.mxu0 %v11512
    %12347 = vmatprep.subr.bf16.mxu0 %v11505
    %12348 = vmatpush2.bf16.msra.mxu0 %v11504
    %12349 = vmatprep.subr.bf16.mxu0 %v11497
    %12350 = vmatpush2.bf16.msra.mxu0 %v11496
    %12351 = vmatprep.subr.bf16.mxu0 %v11489
    %12352 = vmatpush2.bf16.msra.mxu0 %v11488
    %12353 = vmatprep.subr.bf16.mxu0 %v11481
    %12354 = vmatpush2.bf16.msra.mxu0 %v11480
    %12355 = vmatprep.subr.bf16.mxu0 %v11473
    %12356 = vmatpush2.bf16.msra.mxu0 %v11472
    %12357 = vmatprep.subr.bf16.mxu0 %v11465
    %12358 = vmatpush2.bf16.msra.mxu0 %v11464
    %12359 = vmatprep.subr.bf16.mxu0 %v11457
    %12360 = vmatpush2.bf16.msra.mxu0 %v11456
    %12361 = vmatprep.mubr.bf16.mxu0 %v9169
    %12362 = vmatmul.mubr.bf16.gmra.mxu0 %v9168
    %v12363 = vpop.f32.mrf.mxu0
    %v12364 = vadd.f32 %v12323, %v12363
    %v12365 = vpop.f32.mrf.mxu0
    %v12366 = vadd.f32 %v12325, %v12365
    %v12367 = vpop.f32.mrf.mxu0
    %v12368 = vpop.f32.mrf.mxu0
    %12369 = vdwg.mxu0
    %12370 = vmatprep.subr.bf16.mxu0 %v11577
    %12371 = vmatpush1.bf16.msra.mxu0 %v11576
    %12372 = vmatprep.subr.bf16.mxu0 %v11569
    %12373 = vmatpush1.bf16.msra.mxu0 %v11568
    %12374 = vmatprep.subr.bf16.mxu0 %v11561
    %12375 = vmatpush1.bf16.msra.mxu0 %v11560
    %12376 = vmatprep.subr.bf16.mxu0 %v11553
    %12377 = vmatpush1.bf16.msra.mxu0 %v11552
    %12378 = vmatprep.subr.bf16.mxu0 %v11545
    %12379 = vmatpush1.bf16.msra.mxu0 %v11544
    %12380 = vmatprep.subr.bf16.mxu0 %v11537
    %12381 = vmatpush1.bf16.msra.mxu0 %v11536
    %12382 = vmatprep.subr.bf16.mxu0 %v11529
    %12383 = vmatpush1.bf16.msra.mxu0 %v11528
    %12384 = vmatprep.subr.bf16.mxu0 %v11521
    %12385 = vmatpush1.bf16.msra.mxu0 %v11520
    %12386 = vmatprep.subr.bf16.mxu0 %v11641
    %12387 = vmatpush2.bf16.msra.mxu0 %v11640
    %12388 = vmatprep.subr.bf16.mxu0 %v11633
    %12389 = vmatpush2.bf16.msra.mxu0 %v11632
    %12390 = vmatprep.subr.bf16.mxu0 %v11625
    %12391 = vmatpush2.bf16.msra.mxu0 %v11624
    %12392 = vmatprep.subr.bf16.mxu0 %v11617
    %12393 = vmatpush2.bf16.msra.mxu0 %v11616
    %12394 = vmatprep.subr.bf16.mxu0 %v11609
    %12395 = vmatpush2.bf16.msra.mxu0 %v11608
    %12396 = vmatprep.subr.bf16.mxu0 %v11601
    %12397 = vmatpush2.bf16.msra.mxu0 %v11600
    %12398 = vmatprep.subr.bf16.mxu0 %v11593
    %12399 = vmatpush2.bf16.msra.mxu0 %v11592
    %12400 = vmatprep.subr.bf16.mxu0 %v11585
    %12401 = vmatpush2.bf16.msra.mxu0 %v11584
    %12402 = vmatprep.mubr.bf16.mxu0 %v9171
    %12403 = vmatmul.mubr.bf16.gmra.mxu0 %v9170
    %v12404 = vpop.f32.mrf.mxu0
    %v12405 = vadd.f32 %v12364, %v12404
    %v12406 = vpop.f32.mrf.mxu0
    %v12407 = vadd.f32 %v12366, %v12406
    %v12408 = vpop.f32.mrf.mxu0
    %v12409 = vpop.f32.mrf.mxu0
    %12410 = vdwg.mxu0
    %12411 = vmatprep.subr.bf16.mxu0 %v11705
    %12412 = vmatpush1.bf16.msra.mxu0 %v11704
    %12413 = vmatprep.subr.bf16.mxu0 %v11697
    %12414 = vmatpush1.bf16.msra.mxu0 %v11696
    %12415 = vmatprep.subr.bf16.mxu0 %v11689
    %12416 = vmatpush1.bf16.msra.mxu0 %v11688
    %12417 = vmatprep.subr.bf16.mxu0 %v11681
    %12418 = vmatpush1.bf16.msra.mxu0 %v11680
    %12419 = vmatprep.subr.bf16.mxu0 %v11673
    %12420 = vmatpush1.bf16.msra.mxu0 %v11672
    %12421 = vmatprep.subr.bf16.mxu0 %v11665
    %12422 = vmatpush1.bf16.msra.mxu0 %v11664
    %12423 = vmatprep.subr.bf16.mxu0 %v11657
    %12424 = vmatpush1.bf16.msra.mxu0 %v11656
    %12425 = vmatprep.subr.bf16.mxu0 %v11649
    %12426 = vmatpush1.bf16.msra.mxu0 %v11648
    %12427 = vmatprep.subr.bf16.mxu0 %v11769
    %12428 = vmatpush2.bf16.msra.mxu0 %v11768
    %12429 = vmatprep.subr.bf16.mxu0 %v11761
    %12430 = vmatpush2.bf16.msra.mxu0 %v11760
    %12431 = vmatprep.subr.bf16.mxu0 %v11753
    %12432 = vmatpush2.bf16.msra.mxu0 %v11752
    %12433 = vmatprep.subr.bf16.mxu0 %v11745
    %12434 = vmatpush2.bf16.msra.mxu0 %v11744
    %12435 = vmatprep.subr.bf16.mxu0 %v11737
    %12436 = vmatpush2.bf16.msra.mxu0 %v11736
    %12437 = vmatprep.subr.bf16.mxu0 %v11729
    %12438 = vmatpush2.bf16.msra.mxu0 %v11728
    %12439 = vmatprep.subr.bf16.mxu0 %v11721
    %12440 = vmatpush2.bf16.msra.mxu0 %v11720
    %12441 = vmatprep.subr.bf16.mxu0 %v11713
    %12442 = vmatpush2.bf16.msra.mxu0 %v11712
    %12443 = vmatprep.mubr.bf16.mxu0 %v9173
    %12444 = vmatmul.mubr.bf16.gmra.mxu0 %v9172
    %v12445 = vpop.f32.mrf.mxu0
    %v12446 = vadd.f32 %v12405, %v12445
    %v12447 = vpop.f32.mrf.mxu0
    %v12448 = vadd.f32 %v12407, %v12447
    %v12449 = vpop.f32.mrf.mxu0
    %v12450 = vpop.f32.mrf.mxu0
    %12451 = vdwg.mxu0
    %12452 = vmatprep.subr.bf16.mxu0 %v11323
    %12453 = vmatpush1.bf16.msra.mxu0 %v11322
    %12454 = vmatprep.subr.bf16.mxu0 %v11315
    %12455 = vmatpush1.bf16.msra.mxu0 %v11314
    %12456 = vmatprep.subr.bf16.mxu0 %v11307
    %12457 = vmatpush1.bf16.msra.mxu0 %v11306
    %12458 = vmatprep.subr.bf16.mxu0 %v11299
    %12459 = vmatpush1.bf16.msra.mxu0 %v11298
    %12460 = vmatprep.subr.bf16.mxu0 %v11291
    %12461 = vmatpush1.bf16.msra.mxu0 %v11290
    %12462 = vmatprep.subr.bf16.mxu0 %v11283
    %12463 = vmatpush1.bf16.msra.mxu0 %v11282
    %12464 = vmatprep.subr.bf16.mxu0 %v11275
    %12465 = vmatpush1.bf16.msra.mxu0 %v11274
    %12466 = vmatprep.subr.bf16.mxu0 %v11267
    %12467 = vmatpush1.bf16.msra.mxu0 %v11266
    %12468 = vmatprep.subr.bf16.mxu0 %v11387
    %12469 = vmatpush2.bf16.msra.mxu0 %v11386
    %12470 = vmatprep.subr.bf16.mxu0 %v11379
    %12471 = vmatpush2.bf16.msra.mxu0 %v11378
    %12472 = vmatprep.subr.bf16.mxu0 %v11371
    %12473 = vmatpush2.bf16.msra.mxu0 %v11370
    %12474 = vmatprep.subr.bf16.mxu0 %v11363
    %12475 = vmatpush2.bf16.msra.mxu0 %v11362
    %12476 = vmatprep.subr.bf16.mxu0 %v11355
    %12477 = vmatpush2.bf16.msra.mxu0 %v11354
    %12478 = vmatprep.subr.bf16.mxu0 %v11347
    %12479 = vmatpush2.bf16.msra.mxu0 %v11346
    %12480 = vmatprep.subr.bf16.mxu0 %v11339
    %12481 = vmatpush2.bf16.msra.mxu0 %v11338
    %12482 = vmatprep.subr.bf16.mxu0 %v11331
    %12483 = vmatpush2.bf16.msra.mxu0 %v11330
    %12484 = vmatprep.mubr.bf16.mxu0 %v9167
    %12485 = vmatmul.mubr.bf16.gmra.mxu0 %v9166
    %v12486 = vpop.f32.mrf.mxu0
    %v12487 = vadd.f32 %v9699, %v12486
    %v12488 = vpop.f32.mrf.mxu0
    %v12489 = vadd.f32 %v9703, %v12488
    %v12490 = vpop.f32.mrf.mxu0
    %v12491 = vpop.f32.mrf.mxu0
    %12492 = vdwg.mxu0
    %12493 = vmatprep.subr.bf16.mxu0 %v11451
    %12494 = vmatpush1.bf16.msra.mxu0 %v11450
    %12495 = vmatprep.subr.bf16.mxu0 %v11443
    %12496 = vmatpush1.bf16.msra.mxu0 %v11442
    %12497 = vmatprep.subr.bf16.mxu0 %v11435
    %12498 = vmatpush1.bf16.msra.mxu0 %v11434
    %12499 = vmatprep.subr.bf16.mxu0 %v11427
    %12500 = vmatpush1.bf16.msra.mxu0 %v11426
    %12501 = vmatprep.subr.bf16.mxu0 %v11419
    %12502 = vmatpush1.bf16.msra.mxu0 %v11418
    %12503 = vmatprep.subr.bf16.mxu0 %v11411
    %12504 = vmatpush1.bf16.msra.mxu0 %v11410
    %12505 = vmatprep.subr.bf16.mxu0 %v11403
    %12506 = vmatpush1.bf16.msra.mxu0 %v11402
    %12507 = vmatprep.subr.bf16.mxu0 %v11395
    %12508 = vmatpush1.bf16.msra.mxu0 %v11394
    %12509 = vmatprep.subr.bf16.mxu0 %v11515
    %12510 = vmatpush2.bf16.msra.mxu0 %v11514
    %12511 = vmatprep.subr.bf16.mxu0 %v11507
    %12512 = vmatpush2.bf16.msra.mxu0 %v11506
    %12513 = vmatprep.subr.bf16.mxu0 %v11499
    %12514 = vmatpush2.bf16.msra.mxu0 %v11498
    %12515 = vmatprep.subr.bf16.mxu0 %v11491
    %12516 = vmatpush2.bf16.msra.mxu0 %v11490
    %12517 = vmatprep.subr.bf16.mxu0 %v11483
    %12518 = vmatpush2.bf16.msra.mxu0 %v11482
    %12519 = vmatprep.subr.bf16.mxu0 %v11475
    %12520 = vmatpush2.bf16.msra.mxu0 %v11474
    %12521 = vmatprep.subr.bf16.mxu0 %v11467
    %12522 = vmatpush2.bf16.msra.mxu0 %v11466
    %12523 = vmatprep.subr.bf16.mxu0 %v11459
    %12524 = vmatpush2.bf16.msra.mxu0 %v11458
    %12525 = vmatprep.mubr.bf16.mxu0 %v9169
    %12526 = vmatmul.mubr.bf16.gmra.mxu0 %v9168
    %v12527 = vpop.f32.mrf.mxu0
    %v12528 = vadd.f32 %v12487, %v12527
    %v12529 = vpop.f32.mrf.mxu0
    %v12530 = vadd.f32 %v12489, %v12529
    %v12531 = vpop.f32.mrf.mxu0
    %v12532 = vpop.f32.mrf.mxu0
    %12533 = vdwg.mxu0
    %12534 = vmatprep.subr.bf16.mxu0 %v11579
    %12535 = vmatpush1.bf16.msra.mxu0 %v11578
    %12536 = vmatprep.subr.bf16.mxu0 %v11571
    %12537 = vmatpush1.bf16.msra.mxu0 %v11570
    %12538 = vmatprep.subr.bf16.mxu0 %v11563
    %12539 = vmatpush1.bf16.msra.mxu0 %v11562
    %12540 = vmatprep.subr.bf16.mxu0 %v11555
    %12541 = vmatpush1.bf16.msra.mxu0 %v11554
    %12542 = vmatprep.subr.bf16.mxu0 %v11547
    %12543 = vmatpush1.bf16.msra.mxu0 %v11546
    %12544 = vmatprep.subr.bf16.mxu0 %v11539
    %12545 = vmatpush1.bf16.msra.mxu0 %v11538
    %12546 = vmatprep.subr.bf16.mxu0 %v11531
    %12547 = vmatpush1.bf16.msra.mxu0 %v11530
    %12548 = vmatprep.subr.bf16.mxu0 %v11523
    %12549 = vmatpush1.bf16.msra.mxu0 %v11522
    %12550 = vmatprep.subr.bf16.mxu0 %v11643
    %12551 = vmatpush2.bf16.msra.mxu0 %v11642
    %12552 = vmatprep.subr.bf16.mxu0 %v11635
    %12553 = vmatpush2.bf16.msra.mxu0 %v11634
    %12554 = vmatprep.subr.bf16.mxu0 %v11627
    %12555 = vmatpush2.bf16.msra.mxu0 %v11626
    %12556 = vmatprep.subr.bf16.mxu0 %v11619
    %12557 = vmatpush2.bf16.msra.mxu0 %v11618
    %12558 = vmatprep.subr.bf16.mxu0 %v11611
    %12559 = vmatpush2.bf16.msra.mxu0 %v11610
    %12560 = vmatprep.subr.bf16.mxu0 %v11603
    %12561 = vmatpush2.bf16.msra.mxu0 %v11602
    %12562 = vmatprep.subr.bf16.mxu0 %v11595
    %12563 = vmatpush2.bf16.msra.mxu0 %v11594
    %12564 = vmatprep.subr.bf16.mxu0 %v11587
    %12565 = vmatpush2.bf16.msra.mxu0 %v11586
    %12566 = vmatprep.mubr.bf16.mxu0 %v9171
    %12567 = vmatmul.mubr.bf16.gmra.mxu0 %v9170
    %v12568 = vpop.f32.mrf.mxu0
    %v12569 = vadd.f32 %v12528, %v12568
    %v12570 = vpop.f32.mrf.mxu0
    %v12571 = vadd.f32 %v12530, %v12570
    %v12572 = vpop.f32.mrf.mxu0
    %v12573 = vpop.f32.mrf.mxu0
    %12574 = vdwg.mxu0
    %12575 = vmatprep.subr.bf16.mxu0 %v11707
    %12576 = vmatpush1.bf16.msra.mxu0 %v11706
    %12577 = vmatprep.subr.bf16.mxu0 %v11699
    %12578 = vmatpush1.bf16.msra.mxu0 %v11698
    %12579 = vmatprep.subr.bf16.mxu0 %v11691
    %12580 = vmatpush1.bf16.msra.mxu0 %v11690
    %12581 = vmatprep.subr.bf16.mxu0 %v11683
    %12582 = vmatpush1.bf16.msra.mxu0 %v11682
    %12583 = vmatprep.subr.bf16.mxu0 %v11675
    %12584 = vmatpush1.bf16.msra.mxu0 %v11674
    %12585 = vmatprep.subr.bf16.mxu0 %v11667
    %12586 = vmatpush1.bf16.msra.mxu0 %v11666
    %12587 = vmatprep.subr.bf16.mxu0 %v11659
    %12588 = vmatpush1.bf16.msra.mxu0 %v11658
    %12589 = vmatprep.subr.bf16.mxu0 %v11651
    %12590 = vmatpush1.bf16.msra.mxu0 %v11650
    %12591 = vmatprep.subr.bf16.mxu0 %v11771
    %12592 = vmatpush2.bf16.msra.mxu0 %v11770
    %12593 = vmatprep.subr.bf16.mxu0 %v11763
    %12594 = vmatpush2.bf16.msra.mxu0 %v11762
    %12595 = vmatprep.subr.bf16.mxu0 %v11755
    %12596 = vmatpush2.bf16.msra.mxu0 %v11754
    %12597 = vmatprep.subr.bf16.mxu0 %v11747
    %12598 = vmatpush2.bf16.msra.mxu0 %v11746
    %12599 = vmatprep.subr.bf16.mxu0 %v11739
    %12600 = vmatpush2.bf16.msra.mxu0 %v11738
    %12601 = vmatprep.subr.bf16.mxu0 %v11731
    %12602 = vmatpush2.bf16.msra.mxu0 %v11730
    %12603 = vmatprep.subr.bf16.mxu0 %v11723
    %12604 = vmatpush2.bf16.msra.mxu0 %v11722
    %12605 = vmatprep.subr.bf16.mxu0 %v11715
    %12606 = vmatpush2.bf16.msra.mxu0 %v11714
    %12607 = vmatprep.mubr.bf16.mxu0 %v9173
    %12608 = vmatmul.mubr.bf16.gmra.mxu0 %v9172
    %v12609 = vpop.f32.mrf.mxu0
    %v12610 = vadd.f32 %v12569, %v12609
    %v12611 = vpop.f32.mrf.mxu0
    %v12612 = vadd.f32 %v12571, %v12611
    %v12613 = vpop.f32.mrf.mxu0
    %v12614 = vpop.f32.mrf.mxu0
    %12615 = vdwg.mxu0
    %12616 = vmatprep.subr.bf16.mxu0 %v11325
    %12617 = vmatpush1.bf16.msra.mxu0 %v11324
    %12618 = vmatprep.subr.bf16.mxu0 %v11317
    %12619 = vmatpush1.bf16.msra.mxu0 %v11316
    %12620 = vmatprep.subr.bf16.mxu0 %v11309
    %12621 = vmatpush1.bf16.msra.mxu0 %v11308
    %12622 = vmatprep.subr.bf16.mxu0 %v11301
    %12623 = vmatpush1.bf16.msra.mxu0 %v11300
    %12624 = vmatprep.subr.bf16.mxu0 %v11293
    %12625 = vmatpush1.bf16.msra.mxu0 %v11292
    %12626 = vmatprep.subr.bf16.mxu0 %v11285
    %12627 = vmatpush1.bf16.msra.mxu0 %v11284
    %12628 = vmatprep.subr.bf16.mxu0 %v11277
    %12629 = vmatpush1.bf16.msra.mxu0 %v11276
    %12630 = vmatprep.subr.bf16.mxu0 %v11269
    %12631 = vmatpush1.bf16.msra.mxu0 %v11268
    %12632 = vmatprep.subr.bf16.mxu0 %v11389
    %12633 = vmatpush2.bf16.msra.mxu0 %v11388
    %12634 = vmatprep.subr.bf16.mxu0 %v11381
    %12635 = vmatpush2.bf16.msra.mxu0 %v11380
    %12636 = vmatprep.subr.bf16.mxu0 %v11373
    %12637 = vmatpush2.bf16.msra.mxu0 %v11372
    %12638 = vmatprep.subr.bf16.mxu0 %v11365
    %12639 = vmatpush2.bf16.msra.mxu0 %v11364
    %12640 = vmatprep.subr.bf16.mxu0 %v11357
    %12641 = vmatpush2.bf16.msra.mxu0 %v11356
    %12642 = vmatprep.subr.bf16.mxu0 %v11349
    %12643 = vmatpush2.bf16.msra.mxu0 %v11348
    %12644 = vmatprep.subr.bf16.mxu0 %v11341
    %12645 = vmatpush2.bf16.msra.mxu0 %v11340
    %12646 = vmatprep.subr.bf16.mxu0 %v11333
    %12647 = vmatpush2.bf16.msra.mxu0 %v11332
    %12648 = vmatprep.mubr.bf16.mxu0 %v9167
    %12649 = vmatmul.mubr.bf16.gmra.mxu0 %v9166
    %v12650 = vpop.f32.mrf.mxu0
    %v12651 = vadd.f32 %v9707, %v12650
    %v12652 = vpop.f32.mrf.mxu0
    %v12653 = vadd.f32 %v9711, %v12652
    %v12654 = vpop.f32.mrf.mxu0
    %v12655 = vpop.f32.mrf.mxu0
    %12656 = vdwg.mxu0
    %12657 = vmatprep.subr.bf16.mxu0 %v11453
    %12658 = vmatpush1.bf16.msra.mxu0 %v11452
    %12659 = vmatprep.subr.bf16.mxu0 %v11445
    %12660 = vmatpush1.bf16.msra.mxu0 %v11444
    %12661 = vmatprep.subr.bf16.mxu0 %v11437
    %12662 = vmatpush1.bf16.msra.mxu0 %v11436
    %12663 = vmatprep.subr.bf16.mxu0 %v11429
    %12664 = vmatpush1.bf16.msra.mxu0 %v11428
    %12665 = vmatprep.subr.bf16.mxu0 %v11421
    %12666 = vmatpush1.bf16.msra.mxu0 %v11420
    %12667 = vmatprep.subr.bf16.mxu0 %v11413
    %12668 = vmatpush1.bf16.msra.mxu0 %v11412
    %12669 = vmatprep.subr.bf16.mxu0 %v11405
    %12670 = vmatpush1.bf16.msra.mxu0 %v11404
    %12671 = vmatprep.subr.bf16.mxu0 %v11397
    %12672 = vmatpush1.bf16.msra.mxu0 %v11396
    %12673 = vmatprep.subr.bf16.mxu0 %v11517
    %12674 = vmatpush2.bf16.msra.mxu0 %v11516
    %12675 = vmatprep.subr.bf16.mxu0 %v11509
    %12676 = vmatpush2.bf16.msra.mxu0 %v11508
    %12677 = vmatprep.subr.bf16.mxu0 %v11501
    %12678 = vmatpush2.bf16.msra.mxu0 %v11500
    %12679 = vmatprep.subr.bf16.mxu0 %v11493
    %12680 = vmatpush2.bf16.msra.mxu0 %v11492
    %12681 = vmatprep.subr.bf16.mxu0 %v11485
    %12682 = vmatpush2.bf16.msra.mxu0 %v11484
    %12683 = vmatprep.subr.bf16.mxu0 %v11477
    %12684 = vmatpush2.bf16.msra.mxu0 %v11476
    %12685 = vmatprep.subr.bf16.mxu0 %v11469
    %12686 = vmatpush2.bf16.msra.mxu0 %v11468
    %12687 = vmatprep.subr.bf16.mxu0 %v11461
    %12688 = vmatpush2.bf16.msra.mxu0 %v11460
    %12689 = vmatprep.mubr.bf16.mxu0 %v9169
    %12690 = vmatmul.mubr.bf16.gmra.mxu0 %v9168
    %v12691 = vpop.f32.mrf.mxu0
    %v12692 = vadd.f32 %v12651, %v12691
    %v12693 = vpop.f32.mrf.mxu0
    %v12694 = vadd.f32 %v12653, %v12693
    %v12695 = vpop.f32.mrf.mxu0
    %v12696 = vpop.f32.mrf.mxu0
    %12697 = vdwg.mxu0
    %12698 = vmatprep.subr.bf16.mxu0 %v11581
    %12699 = vmatpush1.bf16.msra.mxu0 %v11580
    %12700 = vmatprep.subr.bf16.mxu0 %v11573
    %12701 = vmatpush1.bf16.msra.mxu0 %v11572
    %12702 = vmatprep.subr.bf16.mxu0 %v11565
    %12703 = vmatpush1.bf16.msra.mxu0 %v11564
    %12704 = vmatprep.subr.bf16.mxu0 %v11557
    %12705 = vmatpush1.bf16.msra.mxu0 %v11556
    %12706 = vmatprep.subr.bf16.mxu0 %v11549
    %12707 = vmatpush1.bf16.msra.mxu0 %v11548
    %12708 = vmatprep.subr.bf16.mxu0 %v11541
    %12709 = vmatpush1.bf16.msra.mxu0 %v11540
    %12710 = vmatprep.subr.bf16.mxu0 %v11533
    %12711 = vmatpush1.bf16.msra.mxu0 %v11532
    %12712 = vmatprep.subr.bf16.mxu0 %v11525
    %12713 = vmatpush1.bf16.msra.mxu0 %v11524
    %12714 = vmatprep.subr.bf16.mxu0 %v11645
    %12715 = vmatpush2.bf16.msra.mxu0 %v11644
    %12716 = vmatprep.subr.bf16.mxu0 %v11637
    %12717 = vmatpush2.bf16.msra.mxu0 %v11636
    %12718 = vmatprep.subr.bf16.mxu0 %v11629
    %12719 = vmatpush2.bf16.msra.mxu0 %v11628
    %12720 = vmatprep.subr.bf16.mxu0 %v11621
    %12721 = vmatpush2.bf16.msra.mxu0 %v11620
    %12722 = vmatprep.subr.bf16.mxu0 %v11613
    %12723 = vmatpush2.bf16.msra.mxu0 %v11612
    %12724 = vmatprep.subr.bf16.mxu0 %v11605
    %12725 = vmatpush2.bf16.msra.mxu0 %v11604
    %12726 = vmatprep.subr.bf16.mxu0 %v11597
    %12727 = vmatpush2.bf16.msra.mxu0 %v11596
    %12728 = vmatprep.subr.bf16.mxu0 %v11589
    %12729 = vmatpush2.bf16.msra.mxu0 %v11588
    %12730 = vmatprep.mubr.bf16.mxu0 %v9171
    %12731 = vmatmul.mubr.bf16.gmra.mxu0 %v9170
    %v12732 = vpop.f32.mrf.mxu0
    %v12733 = vadd.f32 %v12692, %v12732
    %v12734 = vpop.f32.mrf.mxu0
    %v12735 = vadd.f32 %v12694, %v12734
    %v12736 = vpop.f32.mrf.mxu0
    %v12737 = vpop.f32.mrf.mxu0
    %12738 = vdwg.mxu0
    %12739 = vmatprep.subr.bf16.mxu0 %v11709
    %12740 = vmatpush1.bf16.msra.mxu0 %v11708
    %12741 = vmatprep.subr.bf16.mxu0 %v11701
    %12742 = vmatpush1.bf16.msra.mxu0 %v11700
    %12743 = vmatprep.subr.bf16.mxu0 %v11693
    %12744 = vmatpush1.bf16.msra.mxu0 %v11692
    %12745 = vmatprep.subr.bf16.mxu0 %v11685
    %12746 = vmatpush1.bf16.msra.mxu0 %v11684
    %12747 = vmatprep.subr.bf16.mxu0 %v11677
    %12748 = vmatpush1.bf16.msra.mxu0 %v11676
    %12749 = vmatprep.subr.bf16.mxu0 %v11669
    %12750 = vmatpush1.bf16.msra.mxu0 %v11668
    %12751 = vmatprep.subr.bf16.mxu0 %v11661
    %12752 = vmatpush1.bf16.msra.mxu0 %v11660
    %12753 = vmatprep.subr.bf16.mxu0 %v11653
    %12754 = vmatpush1.bf16.msra.mxu0 %v11652
    %12755 = vmatprep.subr.bf16.mxu0 %v11773
    %12756 = vmatpush2.bf16.msra.mxu0 %v11772
    %12757 = vmatprep.subr.bf16.mxu0 %v11765
    %12758 = vmatpush2.bf16.msra.mxu0 %v11764
    %12759 = vmatprep.subr.bf16.mxu0 %v11757
    %12760 = vmatpush2.bf16.msra.mxu0 %v11756
    %12761 = vmatprep.subr.bf16.mxu0 %v11749
    %12762 = vmatpush2.bf16.msra.mxu0 %v11748
    %12763 = vmatprep.subr.bf16.mxu0 %v11741
    %12764 = vmatpush2.bf16.msra.mxu0 %v11740
    %12765 = vmatprep.subr.bf16.mxu0 %v11733
    %12766 = vmatpush2.bf16.msra.mxu0 %v11732
    %12767 = vmatprep.subr.bf16.mxu0 %v11725
    %12768 = vmatpush2.bf16.msra.mxu0 %v11724
    %12769 = vmatprep.subr.bf16.mxu0 %v11717
    %12770 = vmatpush2.bf16.msra.mxu0 %v11716
    %12771 = vmatprep.mubr.bf16.mxu0 %v9173
    %12772 = vmatmul.mubr.bf16.gmra.mxu0 %v9172
    %v12773 = vpop.f32.mrf.mxu0
    %v12774 = vadd.f32 %v12733, %v12773
    %v12775 = vpop.f32.mrf.mxu0
    %v12776 = vadd.f32 %v12735, %v12775
    %v12777 = vpop.f32.mrf.mxu0
    %v12778 = vpop.f32.mrf.mxu0
    %12779 = vdwg.mxu0
    %12780 = vmatprep.subr.bf16.mxu0 %v11327
    %12781 = vmatpush1.bf16.msra.mxu0 %v11326
    %12782 = vmatprep.subr.bf16.mxu0 %v11319
    %12783 = vmatpush1.bf16.msra.mxu0 %v11318
    %12784 = vmatprep.subr.bf16.mxu0 %v11311
    %12785 = vmatpush1.bf16.msra.mxu0 %v11310
    %12786 = vmatprep.subr.bf16.mxu0 %v11303
    %12787 = vmatpush1.bf16.msra.mxu0 %v11302
    %12788 = vmatprep.subr.bf16.mxu0 %v11295
    %12789 = vmatpush1.bf16.msra.mxu0 %v11294
    %12790 = vmatprep.subr.bf16.mxu0 %v11287
    %12791 = vmatpush1.bf16.msra.mxu0 %v11286
    %12792 = vmatprep.subr.bf16.mxu0 %v11279
    %12793 = vmatpush1.bf16.msra.mxu0 %v11278
    %12794 = vmatprep.subr.bf16.mxu0 %v11271
    %12795 = vmatpush1.bf16.msra.mxu0 %v11270
    %12796 = vmatprep.subr.bf16.mxu0 %v11391
    %12797 = vmatpush2.bf16.msra.mxu0 %v11390
    %12798 = vmatprep.subr.bf16.mxu0 %v11383
    %12799 = vmatpush2.bf16.msra.mxu0 %v11382
    %12800 = vmatprep.subr.bf16.mxu0 %v11375
    %12801 = vmatpush2.bf16.msra.mxu0 %v11374
    %12802 = vmatprep.subr.bf16.mxu0 %v11367
    %12803 = vmatpush2.bf16.msra.mxu0 %v11366
    %12804 = vmatprep.subr.bf16.mxu0 %v11359
    %12805 = vmatpush2.bf16.msra.mxu0 %v11358
    %12806 = vmatprep.subr.bf16.mxu0 %v11351
    %12807 = vmatpush2.bf16.msra.mxu0 %v11350
    %12808 = vmatprep.subr.bf16.mxu0 %v11343
    %12809 = vmatpush2.bf16.msra.mxu0 %v11342
    %12810 = vmatprep.subr.bf16.mxu0 %v11335
    %12811 = vmatpush2.bf16.msra.mxu0 %v11334
    %12812 = vmatprep.mubr.bf16.mxu0 %v9167
    %12813 = vmatmul.mubr.bf16.gmra.mxu0 %v9166
    %v12814 = vpop.f32.mrf.mxu0
    %v12815 = vadd.f32 %v9715, %v12814
    %v12816 = vpop.f32.mrf.mxu0
    %v12817 = vadd.f32 %v9719, %v12816
    %v12818 = vpop.f32.mrf.mxu0
    %v12819 = vpop.f32.mrf.mxu0
    %12820 = vdwg.mxu0
    %12821 = vmatprep.subr.bf16.mxu0 %v11455
    %12822 = vmatpush1.bf16.msra.mxu0 %v11454
    %12823 = vmatprep.subr.bf16.mxu0 %v11447
    %12824 = vmatpush1.bf16.msra.mxu0 %v11446
    %12825 = vmatprep.subr.bf16.mxu0 %v11439
    %12826 = vmatpush1.bf16.msra.mxu0 %v11438
    %12827 = vmatprep.subr.bf16.mxu0 %v11431
    %12828 = vmatpush1.bf16.msra.mxu0 %v11430
    %12829 = vmatprep.subr.bf16.mxu0 %v11423
    %12830 = vmatpush1.bf16.msra.mxu0 %v11422
    %12831 = vmatprep.subr.bf16.mxu0 %v11415
    %12832 = vmatpush1.bf16.msra.mxu0 %v11414
    %12833 = vmatprep.subr.bf16.mxu0 %v11407
    %12834 = vmatpush1.bf16.msra.mxu0 %v11406
    %12835 = vmatprep.subr.bf16.mxu0 %v11399
    %12836 = vmatpush1.bf16.msra.mxu0 %v11398
    %12837 = vmatprep.subr.bf16.mxu0 %v11519
    %12838 = vmatpush2.bf16.msra.mxu0 %v11518
    %12839 = vmatprep.subr.bf16.mxu0 %v11511
    %12840 = vmatpush2.bf16.msra.mxu0 %v11510
    %12841 = vmatprep.subr.bf16.mxu0 %v11503
    %12842 = vmatpush2.bf16.msra.mxu0 %v11502
    %12843 = vmatprep.subr.bf16.mxu0 %v11495
    %12844 = vmatpush2.bf16.msra.mxu0 %v11494
    %12845 = vmatprep.subr.bf16.mxu0 %v11487
    %12846 = vmatpush2.bf16.msra.mxu0 %v11486
    %12847 = vmatprep.subr.bf16.mxu0 %v11479
    %12848 = vmatpush2.bf16.msra.mxu0 %v11478
    %12849 = vmatprep.subr.bf16.mxu0 %v11471
    %12850 = vmatpush2.bf16.msra.mxu0 %v11470
    %12851 = vmatprep.subr.bf16.mxu0 %v11463
    %12852 = vmatpush2.bf16.msra.mxu0 %v11462
    %12853 = vmatprep.mubr.bf16.mxu0 %v9169
    %12854 = vmatmul.mubr.bf16.gmra.mxu0 %v9168
    %v12855 = vpop.f32.mrf.mxu0
    %v12856 = vadd.f32 %v12815, %v12855
    %v12857 = vpop.f32.mrf.mxu0
    %v12858 = vadd.f32 %v12817, %v12857
    %v12859 = vpop.f32.mrf.mxu0
    %v12860 = vpop.f32.mrf.mxu0
    %12861 = vdwg.mxu0
    %12862 = vmatprep.subr.bf16.mxu0 %v11583
    %12863 = vmatpush1.bf16.msra.mxu0 %v11582
    %12864 = vmatprep.subr.bf16.mxu0 %v11575
    %12865 = vmatpush1.bf16.msra.mxu0 %v11574
    %12866 = vmatprep.subr.bf16.mxu0 %v11567
    %12867 = vmatpush1.bf16.msra.mxu0 %v11566
    %12868 = vmatprep.subr.bf16.mxu0 %v11559
    %12869 = vmatpush1.bf16.msra.mxu0 %v11558
    %12870 = vmatprep.subr.bf16.mxu0 %v11551
    %12871 = vmatpush1.bf16.msra.mxu0 %v11550
    %12872 = vmatprep.subr.bf16.mxu0 %v11543
    %12873 = vmatpush1.bf16.msra.mxu0 %v11542
    %12874 = vmatprep.subr.bf16.mxu0 %v11535
    %12875 = vmatpush1.bf16.msra.mxu0 %v11534
    %12876 = vmatprep.subr.bf16.mxu0 %v11527
    %12877 = vmatpush1.bf16.msra.mxu0 %v11526
    %12878 = vmatprep.subr.bf16.mxu0 %v11647
    %12879 = vmatpush2.bf16.msra.mxu0 %v11646
    %12880 = vmatprep.subr.bf16.mxu0 %v11639
    %12881 = vmatpush2.bf16.msra.mxu0 %v11638
    %12882 = vmatprep.subr.bf16.mxu0 %v11631
    %12883 = vmatpush2.bf16.msra.mxu0 %v11630
    %12884 = vmatprep.subr.bf16.mxu0 %v11623
    %12885 = vmatpush2.bf16.msra.mxu0 %v11622
    %12886 = vmatprep.subr.bf16.mxu0 %v11615
    %12887 = vmatpush2.bf16.msra.mxu0 %v11614
    %12888 = vmatprep.subr.bf16.mxu0 %v11607
    %12889 = vmatpush2.bf16.msra.mxu0 %v11606
    %12890 = vmatprep.subr.bf16.mxu0 %v11599
    %12891 = vmatpush2.bf16.msra.mxu0 %v11598
    %12892 = vmatprep.subr.bf16.mxu0 %v11591
    %12893 = vmatpush2.bf16.msra.mxu0 %v11590
    %12894 = vmatprep.mubr.bf16.mxu0 %v9171
    %12895 = vmatmul.mubr.bf16.gmra.mxu0 %v9170
    %v12896 = vpop.f32.mrf.mxu0
    %v12897 = vadd.f32 %v12856, %v12896
    %v12898 = vpop.f32.mrf.mxu0
    %v12899 = vadd.f32 %v12858, %v12898
    %v12900 = vpop.f32.mrf.mxu0
    %v12901 = vpop.f32.mrf.mxu0
    %12902 = vdwg.mxu0
    %12903 = vmatprep.subr.bf16.mxu0 %v11711
    %12904 = vmatpush1.bf16.msra.mxu0 %v11710
    %12905 = vmatprep.subr.bf16.mxu0 %v11703
    %12906 = vmatpush1.bf16.msra.mxu0 %v11702
    %12907 = vmatprep.subr.bf16.mxu0 %v11695
    %12908 = vmatpush1.bf16.msra.mxu0 %v11694
    %12909 = vmatprep.subr.bf16.mxu0 %v11687
    %12910 = vmatpush1.bf16.msra.mxu0 %v11686
    %12911 = vmatprep.subr.bf16.mxu0 %v11679
    %12912 = vmatpush1.bf16.msra.mxu0 %v11678
    %12913 = vmatprep.subr.bf16.mxu0 %v11671
    %12914 = vmatpush1.bf16.msra.mxu0 %v11670
    %12915 = vmatprep.subr.bf16.mxu0 %v11663
    %12916 = vmatpush1.bf16.msra.mxu0 %v11662
    %12917 = vmatprep.subr.bf16.mxu0 %v11655
    %12918 = vmatpush1.bf16.msra.mxu0 %v11654
    %12919 = vmatprep.subr.bf16.mxu0 %v11775
    %12920 = vmatpush2.bf16.msra.mxu0 %v11774
    %12921 = vmatprep.subr.bf16.mxu0 %v11767
    %12922 = vmatpush2.bf16.msra.mxu0 %v11766
    %12923 = vmatprep.subr.bf16.mxu0 %v11759
    %12924 = vmatpush2.bf16.msra.mxu0 %v11758
    %12925 = vmatprep.subr.bf16.mxu0 %v11751
    %12926 = vmatpush2.bf16.msra.mxu0 %v11750
    %12927 = vmatprep.subr.bf16.mxu0 %v11743
    %12928 = vmatpush2.bf16.msra.mxu0 %v11742
    %12929 = vmatprep.subr.bf16.mxu0 %v11735
    %12930 = vmatpush2.bf16.msra.mxu0 %v11734
    %12931 = vmatprep.subr.bf16.mxu0 %v11727
    %12932 = vmatpush2.bf16.msra.mxu0 %v11726
    %12933 = vmatprep.subr.bf16.mxu0 %v11719
    %12934 = vmatpush2.bf16.msra.mxu0 %v11718
    %12935 = vmatprep.mubr.bf16.mxu0 %v9173
    %12936 = vmatmul.mubr.bf16.gmra.mxu0 %v9172
    %v12937 = vpop.f32.mrf.mxu0
    %v12938 = vadd.f32 %v12897, %v12937
    %v12939 = vpop.f32.mrf.mxu0
    %v12940 = vadd.f32 %v12899, %v12939
    %v12941 = vpop.f32.mrf.mxu0
    %v12942 = vpop.f32.mrf.mxu0
    %12943 = vdwg.mxu0
    %v12944 = vmax.f32 %v12446, 0.0
    %v12945 = vmax.f32 %v12448, 0.0
    %v12946 = vmax.f32 %v12610, 0.0
    %v12947 = vmax.f32 %v12612, 0.0
    %v12948 = vmax.f32 %v12774, 0.0
    %v12949 = vmax.f32 %v12776, 0.0
    %v12950 = vmax.f32 %v12938, 0.0
    %v12951 = vmax.f32 %v12940, 0.0
    %v12952 = vpack.c.bf16 %v12944, %v12944
    %v12953 = vpack.c.bf16 %v12945, %v12945
    %v12954 = vpack.c.bf16 %v12946, %v12946
    %v12955 = vpack.c.bf16 %v12947, %v12947
    %v12956 = vpack.c.bf16 %v12948, %v12948
    %v12957 = vpack.c.bf16 %v12949, %v12949
    %v12958 = vpack.c.bf16 %v12950, %v12950
    %v12959 = vpack.c.bf16 %v12951, %v12951
    %v12960 = vld [vmem:[#allocation9] sm:$0xf]
    %v12961 = vld [vmem:[#allocation9 + $0x4] sm:$0xf]
    %v12962 = vld [vmem:[#allocation9 + $0x8] sm:$0xf]
    %v12963 = vld [vmem:[#allocation9 + $0xc] sm:$0xf]
    %v12964 = vld [vmem:[#allocation9 + $0x10] sm:$0xf]
    %v12965 = vld [vmem:[#allocation9 + $0x14] sm:$0xf]
    %v12966 = vld [vmem:[#allocation9 + $0x18] sm:$0xf]
    %v12967 = vld [vmem:[#allocation9 + $0x1c] sm:$0xf]
    %v12968 = vld [vmem:[#allocation9 + $0x20] sm:$0xf]
    %v12969 = vld [vmem:[#allocation9 + $0x24] sm:$0xf]
    %v12970 = vld [vmem:[#allocation9 + $0x28] sm:$0xf]
    %v12971 = vld [vmem:[#allocation9 + $0x2c] sm:$0xf]
    %v12972 = vld [vmem:[#allocation9 + $0x30] sm:$0xf]
    %v12973 = vld [vmem:[#allocation9 + $0x34] sm:$0xf]
    %v12974 = vld [vmem:[#allocation9 + $0x38] sm:$0xf]
    %v12975 = vld [vmem:[#allocation9 + $0x3c] sm:$0xf]
    %v12976 = vld [vmem:[#allocation9 + $0x40] sm:$0xf]
    %v12977 = vld [vmem:[#allocation9 + $0x44] sm:$0xf]
    %v12978 = vld [vmem:[#allocation9 + $0x48] sm:$0xf]
    %v12979 = vld [vmem:[#allocation9 + $0x4c] sm:$0xf]
    %v12980 = vld [vmem:[#allocation9 + $0x50] sm:$0xf]
    %v12981 = vld [vmem:[#allocation9 + $0x54] sm:$0xf]
    %v12982 = vld [vmem:[#allocation9 + $0x58] sm:$0xf]
    %v12983 = vld [vmem:[#allocation9 + $0x5c] sm:$0xf]
    %v12984 = vld [vmem:[#allocation9 + $0x60] sm:$0xf]
    %v12985 = vld [vmem:[#allocation9 + $0x64] sm:$0xf]
    %v12986 = vld [vmem:[#allocation9 + $0x68] sm:$0xf]
    %v12987 = vld [vmem:[#allocation9 + $0x6c] sm:$0xf]
    %v12988 = vld [vmem:[#allocation9 + $0x70] sm:$0xf]
    %v12989 = vld [vmem:[#allocation9 + $0x74] sm:$0xf]
    %v12990 = vld [vmem:[#allocation9 + $0x78] sm:$0xf]
    %v12991 = vld [vmem:[#allocation9 + $0x7c] sm:$0xf]
    %v12992 = vld [vmem:[#allocation9 + $0x80] sm:$0xf]
    %v12993 = vld [vmem:[#allocation9 + $0x84] sm:$0xf]
    %v12994 = vld [vmem:[#allocation9 + $0x88] sm:$0xf]
    %v12995 = vld [vmem:[#allocation9 + $0x8c] sm:$0xf]
    %v12996 = vld [vmem:[#allocation9 + $0x90] sm:$0xf]
    %v12997 = vld [vmem:[#allocation9 + $0x94] sm:$0xf]
    %v12998 = vld [vmem:[#allocation9 + $0x98] sm:$0xf]
    %v12999 = vld [vmem:[#allocation9 + $0x9c] sm:$0xf]
    %v13000 = vld [vmem:[#allocation9 + $0xa0] sm:$0xf]
    %v13001 = vld [vmem:[#allocation9 + $0xa4] sm:$0xf]
    %v13002 = vld [vmem:[#allocation9 + $0xa8] sm:$0xf]
    %v13003 = vld [vmem:[#allocation9 + $0xac] sm:$0xf]
    %v13004 = vld [vmem:[#allocation9 + $0xb0] sm:$0xf]
    %v13005 = vld [vmem:[#allocation9 + $0xb4] sm:$0xf]
    %v13006 = vld [vmem:[#allocation9 + $0xb8] sm:$0xf]
    %v13007 = vld [vmem:[#allocation9 + $0xbc] sm:$0xf]
    %v13008 = vld [vmem:[#allocation9 + $0xc0] sm:$0xf]
    %v13009 = vld [vmem:[#allocation9 + $0xc4] sm:$0xf]
    %v13010 = vld [vmem:[#allocation9 + $0xc8] sm:$0xf]
    %v13011 = vld [vmem:[#allocation9 + $0xcc] sm:$0xf]
    %v13012 = vld [vmem:[#allocation9 + $0xd0] sm:$0xf]
    %v13013 = vld [vmem:[#allocation9 + $0xd4] sm:$0xf]
    %v13014 = vld [vmem:[#allocation9 + $0xd8] sm:$0xf]
    %v13015 = vld [vmem:[#allocation9 + $0xdc] sm:$0xf]
    %v13016 = vld [vmem:[#allocation9 + $0xe0] sm:$0xf]
    %v13017 = vld [vmem:[#allocation9 + $0xe4] sm:$0xf]
    %v13018 = vld [vmem:[#allocation9 + $0xe8] sm:$0xf]
    %v13019 = vld [vmem:[#allocation9 + $0xec] sm:$0xf]
    %v13020 = vld [vmem:[#allocation9 + $0xf0] sm:$0xf]
    %v13021 = vld [vmem:[#allocation9 + $0xf4] sm:$0xf]
    %v13022 = vld [vmem:[#allocation9 + $0xf8] sm:$0xf]
    %v13023 = vld [vmem:[#allocation9 + $0xfc] sm:$0xf]
    %v13024 = vld [vmem:[#allocation9 + $0x100] sm:$0xf]
    %v13025 = vld [vmem:[#allocation9 + $0x104] sm:$0xf]
    %v13026 = vld [vmem:[#allocation9 + $0x108] sm:$0xf]
    %v13027 = vld [vmem:[#allocation9 + $0x10c] sm:$0xf]
    %v13028 = vld [vmem:[#allocation9 + $0x110] sm:$0xf]
    %v13029 = vld [vmem:[#allocation9 + $0x114] sm:$0xf]
    %v13030 = vld [vmem:[#allocation9 + $0x118] sm:$0xf]
    %v13031 = vld [vmem:[#allocation9 + $0x11c] sm:$0xf]
    %v13032 = vld [vmem:[#allocation9 + $0x120] sm:$0xf]
    %v13033 = vld [vmem:[#allocation9 + $0x124] sm:$0xf]
    %v13034 = vld [vmem:[#allocation9 + $0x128] sm:$0xf]
    %v13035 = vld [vmem:[#allocation9 + $0x12c] sm:$0xf]
    %v13036 = vld [vmem:[#allocation9 + $0x130] sm:$0xf]
    %v13037 = vld [vmem:[#allocation9 + $0x134] sm:$0xf]
    %v13038 = vld [vmem:[#allocation9 + $0x138] sm:$0xf]
    %v13039 = vld [vmem:[#allocation9 + $0x13c] sm:$0xf]
    %v13040 = vld [vmem:[#allocation9 + $0x140] sm:$0xf]
    %v13041 = vld [vmem:[#allocation9 + $0x144] sm:$0xf]
    %v13042 = vld [vmem:[#allocation9 + $0x148] sm:$0xf]
    %v13043 = vld [vmem:[#allocation9 + $0x14c] sm:$0xf]
    %v13044 = vld [vmem:[#allocation9 + $0x150] sm:$0xf]
    %v13045 = vld [vmem:[#allocation9 + $0x154] sm:$0xf]
    %v13046 = vld [vmem:[#allocation9 + $0x158] sm:$0xf]
    %v13047 = vld [vmem:[#allocation9 + $0x15c] sm:$0xf]
    %v13048 = vld [vmem:[#allocation9 + $0x160] sm:$0xf]
    %v13049 = vld [vmem:[#allocation9 + $0x164] sm:$0xf]
    %v13050 = vld [vmem:[#allocation9 + $0x168] sm:$0xf]
    %v13051 = vld [vmem:[#allocation9 + $0x16c] sm:$0xf]
    %v13052 = vld [vmem:[#allocation9 + $0x170] sm:$0xf]
    %v13053 = vld [vmem:[#allocation9 + $0x174] sm:$0xf]
    %v13054 = vld [vmem:[#allocation9 + $0x178] sm:$0xf]
    %v13055 = vld [vmem:[#allocation9 + $0x17c] sm:$0xf]
    %v13056 = vld [vmem:[#allocation9 + $0x180] sm:$0xf]
    %v13057 = vld [vmem:[#allocation9 + $0x184] sm:$0xf]
    %v13058 = vld [vmem:[#allocation9 + $0x188] sm:$0xf]
    %v13059 = vld [vmem:[#allocation9 + $0x18c] sm:$0xf]
    %v13060 = vld [vmem:[#allocation9 + $0x190] sm:$0xf]
    %v13061 = vld [vmem:[#allocation9 + $0x194] sm:$0xf]
    %v13062 = vld [vmem:[#allocation9 + $0x198] sm:$0xf]
    %v13063 = vld [vmem:[#allocation9 + $0x19c] sm:$0xf]
    %v13064 = vld [vmem:[#allocation9 + $0x1a0] sm:$0xf]
    %v13065 = vld [vmem:[#allocation9 + $0x1a4] sm:$0xf]
    %v13066 = vld [vmem:[#allocation9 + $0x1a8] sm:$0xf]
    %v13067 = vld [vmem:[#allocation9 + $0x1ac] sm:$0xf]
    %v13068 = vld [vmem:[#allocation9 + $0x1b0] sm:$0xf]
    %v13069 = vld [vmem:[#allocation9 + $0x1b4] sm:$0xf]
    %v13070 = vld [vmem:[#allocation9 + $0x1b8] sm:$0xf]
    %v13071 = vld [vmem:[#allocation9 + $0x1bc] sm:$0xf]
    %v13072 = vld [vmem:[#allocation9 + $0x1c0] sm:$0xf]
    %v13073 = vld [vmem:[#allocation9 + $0x1c4] sm:$0xf]
    %v13074 = vld [vmem:[#allocation9 + $0x1c8] sm:$0xf]
    %v13075 = vld [vmem:[#allocation9 + $0x1cc] sm:$0xf]
    %v13076 = vld [vmem:[#allocation9 + $0x1d0] sm:$0xf]
    %v13077 = vld [vmem:[#allocation9 + $0x1d4] sm:$0xf]
    %v13078 = vld [vmem:[#allocation9 + $0x1d8] sm:$0xf]
    %v13079 = vld [vmem:[#allocation9 + $0x1dc] sm:$0xf]
    %v13080 = vld [vmem:[#allocation9 + $0x1e0] sm:$0xf]
    %v13081 = vld [vmem:[#allocation9 + $0x1e4] sm:$0xf]
    %v13082 = vld [vmem:[#allocation9 + $0x1e8] sm:$0xf]
    %v13083 = vld [vmem:[#allocation9 + $0x1ec] sm:$0xf]
    %v13084 = vld [vmem:[#allocation9 + $0x1f0] sm:$0xf]
    %v13085 = vld [vmem:[#allocation9 + $0x1f4] sm:$0xf]
    %v13086 = vld [vmem:[#allocation9 + $0x1f8] sm:$0xf]
    %v13087 = vld [vmem:[#allocation9 + $0x1fc] sm:$0xf]
    %v13088 = vld [vmem:[#allocation10] sm:$0x1]
    %v13090 = vlaneseq
    %v13091 = vshrl.u32 %v13090, 7
    %v13092 = vsub.s32 0, %v13091
    %v13093 = vrot.slane %v13088, %v13092
    %v13223 = vunpack.c.l.b16 %v12960
    %v13224 = vunpack.c.l.b16 %v12961
    %v13225 = vunpack.c.l.b16 %v12962
    %v13226 = vunpack.c.l.b16 %v12963
    %v13227 = vunpack.c.l.b16 %v12964
    %v13228 = vunpack.c.l.b16 %v12965
    %v13229 = vunpack.c.l.b16 %v12966
    %v13230 = vunpack.c.l.b16 %v12967
    %v13231 = vunpack.c.l.b16 %v12968
    %v13232 = vunpack.c.l.b16 %v12969
    %v13233 = vunpack.c.l.b16 %v12970
    %v13234 = vunpack.c.l.b16 %v12971
    %v13235 = vunpack.c.l.b16 %v12972
    %v13236 = vunpack.c.l.b16 %v12973
    %v13237 = vunpack.c.l.b16 %v12974
    %v13238 = vunpack.c.l.b16 %v12975
    %v13239 = vunpack.c.l.b16 %v12976
    %v13240 = vunpack.c.l.b16 %v12977
    %v13241 = vunpack.c.l.b16 %v12978
    %v13242 = vunpack.c.l.b16 %v12979
    %v13243 = vunpack.c.l.b16 %v12980
    %v13244 = vunpack.c.l.b16 %v12981
    %v13245 = vunpack.c.l.b16 %v12982
    %v13246 = vunpack.c.l.b16 %v12983
    %v13247 = vunpack.c.l.b16 %v12984
    %v13248 = vunpack.c.l.b16 %v12985
    %v13249 = vunpack.c.l.b16 %v12986
    %v13250 = vunpack.c.l.b16 %v12987
    %v13251 = vunpack.c.l.b16 %v12988
    %v13252 = vunpack.c.l.b16 %v12989
    %v13253 = vunpack.c.l.b16 %v12990
    %v13254 = vunpack.c.l.b16 %v12991
    %v13255 = vunpack.c.l.b16 %v12992
    %v13256 = vunpack.c.l.b16 %v12993
    %v13257 = vunpack.c.l.b16 %v12994
    %v13258 = vunpack.c.l.b16 %v12995
    %v13259 = vunpack.c.l.b16 %v12996
    %v13260 = vunpack.c.l.b16 %v12997
    %v13261 = vunpack.c.l.b16 %v12998
    %v13262 = vunpack.c.l.b16 %v12999
    %v13263 = vunpack.c.l.b16 %v13000
    %v13264 = vunpack.c.l.b16 %v13001
    %v13265 = vunpack.c.l.b16 %v13002
    %v13266 = vunpack.c.l.b16 %v13003
    %v13267 = vunpack.c.l.b16 %v13004
    %v13268 = vunpack.c.l.b16 %v13005
    %v13269 = vunpack.c.l.b16 %v13006
    %v13270 = vunpack.c.l.b16 %v13007
    %v13271 = vunpack.c.l.b16 %v13008
    %v13272 = vunpack.c.l.b16 %v13009
    %v13273 = vunpack.c.l.b16 %v13010
    %v13274 = vunpack.c.l.b16 %v13011
    %v13275 = vunpack.c.l.b16 %v13012
    %v13276 = vunpack.c.l.b16 %v13013
    %v13277 = vunpack.c.l.b16 %v13014
    %v13278 = vunpack.c.l.b16 %v13015
    %v13279 = vunpack.c.l.b16 %v13016
    %v13280 = vunpack.c.l.b16 %v13017
    %v13281 = vunpack.c.l.b16 %v13018
    %v13282 = vunpack.c.l.b16 %v13019
    %v13283 = vunpack.c.l.b16 %v13020
    %v13284 = vunpack.c.l.b16 %v13021
    %v13285 = vunpack.c.l.b16 %v13022
    %v13286 = vunpack.c.l.b16 %v13023
    %v13287 = vunpack.c.l.b16 %v13024
    %v13288 = vunpack.c.l.b16 %v13025
    %v13289 = vunpack.c.l.b16 %v13026
    %v13290 = vunpack.c.l.b16 %v13027
    %v13291 = vunpack.c.l.b16 %v13028
    %v13292 = vunpack.c.l.b16 %v13029
    %v13293 = vunpack.c.l.b16 %v13030
    %v13294 = vunpack.c.l.b16 %v13031
    %v13295 = vunpack.c.l.b16 %v13032
    %v13296 = vunpack.c.l.b16 %v13033
    %v13297 = vunpack.c.l.b16 %v13034
    %v13298 = vunpack.c.l.b16 %v13035
    %v13299 = vunpack.c.l.b16 %v13036
    %v13300 = vunpack.c.l.b16 %v13037
    %v13301 = vunpack.c.l.b16 %v13038
    %v13302 = vunpack.c.l.b16 %v13039
    %v13303 = vunpack.c.l.b16 %v13040
    %v13304 = vunpack.c.l.b16 %v13041
    %v13305 = vunpack.c.l.b16 %v13042
    %v13306 = vunpack.c.l.b16 %v13043
    %v13307 = vunpack.c.l.b16 %v13044
    %v13308 = vunpack.c.l.b16 %v13045
    %v13309 = vunpack.c.l.b16 %v13046
    %v13310 = vunpack.c.l.b16 %v13047
    %v13311 = vunpack.c.l.b16 %v13048
    %v13312 = vunpack.c.l.b16 %v13049
    %v13313 = vunpack.c.l.b16 %v13050
    %v13314 = vunpack.c.l.b16 %v13051
    %v13315 = vunpack.c.l.b16 %v13052
    %v13316 = vunpack.c.l.b16 %v13053
    %v13317 = vunpack.c.l.b16 %v13054
    %v13318 = vunpack.c.l.b16 %v13055
    %v13319 = vunpack.c.l.b16 %v13056
    %v13320 = vunpack.c.l.b16 %v13057
    %v13321 = vunpack.c.l.b16 %v13058
    %v13322 = vunpack.c.l.b16 %v13059
    %v13323 = vunpack.c.l.b16 %v13060
    %v13324 = vunpack.c.l.b16 %v13061
    %v13325 = vunpack.c.l.b16 %v13062
    %v13326 = vunpack.c.l.b16 %v13063
    %v13327 = vunpack.c.l.b16 %v13064
    %v13328 = vunpack.c.l.b16 %v13065
    %v13329 = vunpack.c.l.b16 %v13066
    %v13330 = vunpack.c.l.b16 %v13067
    %v13331 = vunpack.c.l.b16 %v13068
    %v13332 = vunpack.c.l.b16 %v13069
    %v13333 = vunpack.c.l.b16 %v13070
    %v13334 = vunpack.c.l.b16 %v13071
    %v13335 = vunpack.c.l.b16 %v13072
    %v13336 = vunpack.c.l.b16 %v13073
    %v13337 = vunpack.c.l.b16 %v13074
    %v13338 = vunpack.c.l.b16 %v13075
    %v13339 = vunpack.c.l.b16 %v13076
    %v13340 = vunpack.c.l.b16 %v13077
    %v13341 = vunpack.c.l.b16 %v13078
    %v13342 = vunpack.c.l.b16 %v13079
    %v13343 = vunpack.c.l.b16 %v13080
    %v13344 = vunpack.c.l.b16 %v13081
    %v13345 = vunpack.c.l.b16 %v13082
    %v13346 = vunpack.c.l.b16 %v13083
    %v13347 = vunpack.c.l.b16 %v13084
    %v13348 = vunpack.c.l.b16 %v13085
    %v13349 = vunpack.c.l.b16 %v13086
    %v13350 = vunpack.c.l.b16 %v13087
    %v13351 = vpack.c.b16 %v13224, %v13223
    %v13352 = vpack.c.b16 %v13226, %v13225
    %v13353 = vpack.c.b16 %v13228, %v13227
    %v13354 = vpack.c.b16 %v13230, %v13229
    %v13355 = vpack.c.b16 %v13232, %v13231
    %v13356 = vpack.c.b16 %v13234, %v13233
    %v13357 = vpack.c.b16 %v13236, %v13235
    %v13358 = vpack.c.b16 %v13238, %v13237
    %v13359 = vpack.c.b16 %v13240, %v13239
    %v13360 = vpack.c.b16 %v13242, %v13241
    %v13361 = vpack.c.b16 %v13244, %v13243
    %v13362 = vpack.c.b16 %v13246, %v13245
    %v13363 = vpack.c.b16 %v13248, %v13247
    %v13364 = vpack.c.b16 %v13250, %v13249
    %v13365 = vpack.c.b16 %v13252, %v13251
    %v13366 = vpack.c.b16 %v13254, %v13253
    %v13367 = vpack.c.b16 %v13256, %v13255
    %v13368 = vpack.c.b16 %v13258, %v13257
    %v13369 = vpack.c.b16 %v13260, %v13259
    %v13370 = vpack.c.b16 %v13262, %v13261
    %v13371 = vpack.c.b16 %v13264, %v13263
    %v13372 = vpack.c.b16 %v13266, %v13265
    %v13373 = vpack.c.b16 %v13268, %v13267
    %v13374 = vpack.c.b16 %v13270, %v13269
    %v13375 = vpack.c.b16 %v13272, %v13271
    %v13376 = vpack.c.b16 %v13274, %v13273
    %v13377 = vpack.c.b16 %v13276, %v13275
    %v13378 = vpack.c.b16 %v13278, %v13277
    %v13379 = vpack.c.b16 %v13280, %v13279
    %v13380 = vpack.c.b16 %v13282, %v13281
    %v13381 = vpack.c.b16 %v13284, %v13283
    %v13382 = vpack.c.b16 %v13286, %v13285
    %v13383 = vpack.c.b16 %v13288, %v13287
    %v13384 = vpack.c.b16 %v13290, %v13289
    %v13385 = vpack.c.b16 %v13292, %v13291
    %v13386 = vpack.c.b16 %v13294, %v13293
    %v13387 = vpack.c.b16 %v13296, %v13295
    %v13388 = vpack.c.b16 %v13298, %v13297
    %v13389 = vpack.c.b16 %v13300, %v13299
    %v13390 = vpack.c.b16 %v13302, %v13301
    %v13391 = vpack.c.b16 %v13304, %v13303
    %v13392 = vpack.c.b16 %v13306, %v13305
    %v13393 = vpack.c.b16 %v13308, %v13307
    %v13394 = vpack.c.b16 %v13310, %v13309
    %v13395 = vpack.c.b16 %v13312, %v13311
    %v13396 = vpack.c.b16 %v13314, %v13313
    %v13397 = vpack.c.b16 %v13316, %v13315
    %v13398 = vpack.c.b16 %v13318, %v13317
    %v13399 = vpack.c.b16 %v13320, %v13319
    %v13400 = vpack.c.b16 %v13322, %v13321
    %v13401 = vpack.c.b16 %v13324, %v13323
    %v13402 = vpack.c.b16 %v13326, %v13325
    %v13403 = vpack.c.b16 %v13328, %v13327
    %v13404 = vpack.c.b16 %v13330, %v13329
    %v13405 = vpack.c.b16 %v13332, %v13331
    %v13406 = vpack.c.b16 %v13334, %v13333
    %v13407 = vpack.c.b16 %v13336, %v13335
    %v13408 = vpack.c.b16 %v13338, %v13337
    %v13409 = vpack.c.b16 %v13340, %v13339
    %v13410 = vpack.c.b16 %v13342, %v13341
    %v13411 = vpack.c.b16 %v13344, %v13343
    %v13412 = vpack.c.b16 %v13346, %v13345
    %v13413 = vpack.c.b16 %v13348, %v13347
    %v13414 = vpack.c.b16 %v13350, %v13349
    %13479 = vmatprep.subr.bf16.mxu0 0
    %13480 = vmatpush1.bf16.msra.mxu0 %v13358
    %13481 = vmatprep.subr.bf16.mxu0 0
    %13482 = vmatpush1.bf16.msra.mxu0 %v13357
    %13483 = vmatprep.subr.bf16.mxu0 0
    %13484 = vmatpush1.bf16.msra.mxu0 %v13356
    %13485 = vmatprep.subr.bf16.mxu0 0
    %13486 = vmatpush1.bf16.msra.mxu0 %v13355
    %13487 = vmatprep.subr.bf16.mxu0 0
    %13488 = vmatpush1.bf16.msra.mxu0 %v13354
    %13489 = vmatprep.subr.bf16.mxu0 0
    %13490 = vmatpush1.bf16.msra.mxu0 %v13353
    %13491 = vmatprep.subr.bf16.mxu0 0
    %13492 = vmatpush1.bf16.msra.mxu0 %v13352
    %13493 = vmatprep.subr.bf16.mxu0 0
    %13494 = vmatpush1.bf16.msra.mxu0 %v13351
    %13495 = vmatprep.subr.bf16.mxu0 0
    %13496 = vmatpush2.bf16.msra.mxu0 %v13366
    %13497 = vmatprep.subr.bf16.mxu0 0
    %13498 = vmatpush2.bf16.msra.mxu0 %v13365
    %13499 = vmatprep.subr.bf16.mxu0 0
    %13500 = vmatpush2.bf16.msra.mxu0 %v13364
    %13501 = vmatprep.subr.bf16.mxu0 0
    %13502 = vmatpush2.bf16.msra.mxu0 %v13363
    %13503 = vmatprep.subr.bf16.mxu0 0
    %13504 = vmatpush2.bf16.msra.mxu0 %v13362
    %13505 = vmatprep.subr.bf16.mxu0 0
    %13506 = vmatpush2.bf16.msra.mxu0 %v13361
    %13507 = vmatprep.subr.bf16.mxu0 0
    %13508 = vmatpush2.bf16.msra.mxu0 %v13360
    %13509 = vmatprep.subr.bf16.mxu0 0
    %13510 = vmatpush2.bf16.msra.mxu0 %v13359
    %13511 = vmatprep.mubr.bf16.mxu0 %v12953
    %13512 = vmatmul.mubr.bf16.gmra.mxu0 %v12952
    %v13513 = vpop.f32.mrf.mxu0
    %v13514 = vadd.f32 %v13093, %v13513
    %v13515 = vpop.f32.mrf.mxu0
    %v13516 = vpop.f32.mrf.mxu0
    %v13517 = vpop.f32.mrf.mxu0
    %13518 = vdwg.mxu0
    %13519 = vmatprep.subr.bf16.mxu0 0
    %13520 = vmatpush1.bf16.msra.mxu0 %v13374
    %13521 = vmatprep.subr.bf16.mxu0 0
    %13522 = vmatpush1.bf16.msra.mxu0 %v13373
    %13523 = vmatprep.subr.bf16.mxu0 0
    %13524 = vmatpush1.bf16.msra.mxu0 %v13372
    %13525 = vmatprep.subr.bf16.mxu0 0
    %13526 = vmatpush1.bf16.msra.mxu0 %v13371
    %13527 = vmatprep.subr.bf16.mxu0 0
    %13528 = vmatpush1.bf16.msra.mxu0 %v13370
    %13529 = vmatprep.subr.bf16.mxu0 0
    %13530 = vmatpush1.bf16.msra.mxu0 %v13369
    %13531 = vmatprep.subr.bf16.mxu0 0
    %13532 = vmatpush1.bf16.msra.mxu0 %v13368
    %13533 = vmatprep.subr.bf16.mxu0 0
    %13534 = vmatpush1.bf16.msra.mxu0 %v13367
    %13535 = vmatprep.subr.bf16.mxu0 0
    %13536 = vmatpush2.bf16.msra.mxu0 %v13382
    %13537 = vmatprep.subr.bf16.mxu0 0
    %13538 = vmatpush2.bf16.msra.mxu0 %v13381
    %13539 = vmatprep.subr.bf16.mxu0 0
    %13540 = vmatpush2.bf16.msra.mxu0 %v13380
    %13541 = vmatprep.subr.bf16.mxu0 0
    %13542 = vmatpush2.bf16.msra.mxu0 %v13379
    %13543 = vmatprep.subr.bf16.mxu0 0
    %13544 = vmatpush2.bf16.msra.mxu0 %v13378
    %13545 = vmatprep.subr.bf16.mxu0 0
    %13546 = vmatpush2.bf16.msra.mxu0 %v13377
    %13547 = vmatprep.subr.bf16.mxu0 0
    %13548 = vmatpush2.bf16.msra.mxu0 %v13376
    %13549 = vmatprep.subr.bf16.mxu0 0
    %13550 = vmatpush2.bf16.msra.mxu0 %v13375
    %13551 = vmatprep.mubr.bf16.mxu0 %v12955
    %13552 = vmatmul.mubr.bf16.gmra.mxu0 %v12954
    %v13553 = vpop.f32.mrf.mxu0
    %v13554 = vadd.f32 %v13514, %v13553
    %v13555 = vpop.f32.mrf.mxu0
    %v13556 = vpop.f32.mrf.mxu0
    %v13557 = vpop.f32.mrf.mxu0
    %13558 = vdwg.mxu0
    %13559 = vmatprep.subr.bf16.mxu0 0
    %13560 = vmatpush1.bf16.msra.mxu0 %v13390
    %13561 = vmatprep.subr.bf16.mxu0 0
    %13562 = vmatpush1.bf16.msra.mxu0 %v13389
    %13563 = vmatprep.subr.bf16.mxu0 0
    %13564 = vmatpush1.bf16.msra.mxu0 %v13388
    %13565 = vmatprep.subr.bf16.mxu0 0
    %13566 = vmatpush1.bf16.msra.mxu0 %v13387
    %13567 = vmatprep.subr.bf16.mxu0 0
    %13568 = vmatpush1.bf16.msra.mxu0 %v13386
    %13569 = vmatprep.subr.bf16.mxu0 0
    %13570 = vmatpush1.bf16.msra.mxu0 %v13385
    %13571 = vmatprep.subr.bf16.mxu0 0
    %13572 = vmatpush1.bf16.msra.mxu0 %v13384
    %13573 = vmatprep.subr.bf16.mxu0 0
    %13574 = vmatpush1.bf16.msra.mxu0 %v13383
    %13575 = vmatprep.subr.bf16.mxu0 0
    %13576 = vmatpush2.bf16.msra.mxu0 %v13398
    %13577 = vmatprep.subr.bf16.mxu0 0
    %13578 = vmatpush2.bf16.msra.mxu0 %v13397
    %13579 = vmatprep.subr.bf16.mxu0 0
    %13580 = vmatpush2.bf16.msra.mxu0 %v13396
    %13581 = vmatprep.subr.bf16.mxu0 0
    %13582 = vmatpush2.bf16.msra.mxu0 %v13395
    %13583 = vmatprep.subr.bf16.mxu0 0
    %13584 = vmatpush2.bf16.msra.mxu0 %v13394
    %13585 = vmatprep.subr.bf16.mxu0 0
    %13586 = vmatpush2.bf16.msra.mxu0 %v13393
    %13587 = vmatprep.subr.bf16.mxu0 0
    %13588 = vmatpush2.bf16.msra.mxu0 %v13392
    %13589 = vmatprep.subr.bf16.mxu0 0
    %13590 = vmatpush2.bf16.msra.mxu0 %v13391
    %13591 = vmatprep.mubr.bf16.mxu0 %v12957
    %13592 = vmatmul.mubr.bf16.gmra.mxu0 %v12956
    %v13593 = vpop.f32.mrf.mxu0
    %v13594 = vadd.f32 %v13554, %v13593
    %v13595 = vpop.f32.mrf.mxu0
    %v13596 = vpop.f32.mrf.mxu0
    %v13597 = vpop.f32.mrf.mxu0
    %13598 = vdwg.mxu0
    %13599 = vmatprep.subr.bf16.mxu0 0
    %13600 = vmatpush1.bf16.msra.mxu0 %v13406
    %13601 = vmatprep.subr.bf16.mxu0 0
    %13602 = vmatpush1.bf16.msra.mxu0 %v13405
    %13603 = vmatprep.subr.bf16.mxu0 0
    %13604 = vmatpush1.bf16.msra.mxu0 %v13404
    %13605 = vmatprep.subr.bf16.mxu0 0
    %13606 = vmatpush1.bf16.msra.mxu0 %v13403
    %13607 = vmatprep.subr.bf16.mxu0 0
    %13608 = vmatpush1.bf16.msra.mxu0 %v13402
    %13609 = vmatprep.subr.bf16.mxu0 0
    %13610 = vmatpush1.bf16.msra.mxu0 %v13401
    %13611 = vmatprep.subr.bf16.mxu0 0
    %13612 = vmatpush1.bf16.msra.mxu0 %v13400
    %13613 = vmatprep.subr.bf16.mxu0 0
    %13614 = vmatpush1.bf16.msra.mxu0 %v13399
    %13615 = vmatprep.subr.bf16.mxu0 0
    %13616 = vmatpush2.bf16.msra.mxu0 %v13414
    %13617 = vmatprep.subr.bf16.mxu0 0
    %13618 = vmatpush2.bf16.msra.mxu0 %v13413
    %13619 = vmatprep.subr.bf16.mxu0 0
    %13620 = vmatpush2.bf16.msra.mxu0 %v13412
    %13621 = vmatprep.subr.bf16.mxu0 0
    %13622 = vmatpush2.bf16.msra.mxu0 %v13411
    %13623 = vmatprep.subr.bf16.mxu0 0
    %13624 = vmatpush2.bf16.msra.mxu0 %v13410
    %13625 = vmatprep.subr.bf16.mxu0 0
    %13626 = vmatpush2.bf16.msra.mxu0 %v13409
    %13627 = vmatprep.subr.bf16.mxu0 0
    %13628 = vmatpush2.bf16.msra.mxu0 %v13408
    %13629 = vmatprep.subr.bf16.mxu0 0
    %13630 = vmatpush2.bf16.msra.mxu0 %v13407
    %13631 = vmatprep.mubr.bf16.mxu0 %v12959
    %13632 = vmatmul.mubr.bf16.gmra.mxu0 %v12958
    %v13633 = vpop.f32.mrf.mxu0
    %v13634 = vadd.f32 %v13594, %v13633
    %v13635 = vpop.f32.mrf.mxu0
    %v13636 = vpop.f32.mrf.mxu0
    %v13637 = vpop.f32.mrf.mxu0
    %13638 = vdwg.mxu0
    %13639 = vst [vmem:[%s7] sm:$0xff] %v13634
    // Predicated region
    $region54: #{dqn_forward.1} parent=1 // pred_check
      _
    $region55: #{dqn_forward.1} parent=1 // pred_check_branch
      %13641 = sbr.rel (0) target = $region57
    $region56: #{dqn_forward.1} parent=1 // pred_region
      _
    $region57: #{dqn_forward.1} parent=1 // pred_fallthru
      _
    // Predicated region
    $region58: #{dqn_forward.1} parent=1 // pred_check
      _
    $region59: #{dqn_forward.1} parent=1 // pred_check_branch
      %13643 = sbr.rel (0) target = $region61
    $region60: #{dqn_forward.1} parent=1 // pred_region
      _
    $region61: #{dqn_forward.1} parent=1 // pred_fallthru
      _
    %13644 = vsyncpa [#allocation3], 1
    %13645 = vsyncpa [#allocation5], 1
    %13646 = vsyncpa [#allocation8], 1
    %13647 = vsyncpa [#allocation11], 1

</llo_original>
